<compile_context>
chip_gen: v6e
topology: v6e:2x2x1
jax: 0.10.0
libtpu: 0.0.40
codegen_flags: <defaults>
</compile_context>

<pallas_src>
import jax
import jax.numpy as jnp
from jax.experimental import pallas as pl
from jax.experimental.pallas import tpu as pltpu

_HALO = 2  # max conv halo (5x5 -> pad 2); the 3x3 path uses an offset of 1.


# ---------------------------------------------------------------------------
# In-kernel helpers
# ---------------------------------------------------------------------------

def _fill_padded(pad_ref, main_ref, above_ref, below_ref, row_blk, n_row_blks):
    """Assemble a zero-padded (TH+4, W+4, C) tile in VMEM from main + row halos."""
    th, wd, _ = main_ref.shape
    pad_ref[...] = jnp.zeros(pad_ref.shape, pad_ref.dtype)
    pad_ref[_HALO:_HALO + th, _HALO:_HALO + wd, :] = main_ref[...]

    @pl.when(row_blk > 0)                       # real rows above (else stay zero)
    def _():
        pad_ref[0:_HALO, _HALO:_HALO + wd, :] = above_ref[...]

    @pl.when(row_blk < n_row_blks - 1)          # real rows below (else stay zero)
    def _():
        pad_ref[_HALO + th:_HALO + th + _HALO, _HALO:_HALO + wd, :] = below_ref[...]


def _dw_conv(pad_ref, k, w_taps, bias, th, wd, c):
    """Depthwise KxK conv over the padded tile.  w_taps: (K,K,C), bias: (1,1,C)."""
    off = _HALO - (k // 2)                      # center KxK window in halo-2 pad
    acc = jnp.zeros((th, wd, c), jnp.float32)
    for dy in range(k):                         # static unrolled taps (VPU)
        for dx in range(k):
            acc = acc + (pad_ref[off + dy:off + dy + th, off + dx:off + dx + wd, :]
                         * w_taps[dy:dy + 1, dx:dx + 1, :])
    return acc + bias


# ---------------------------------------------------------------------------
# Stage 1: x -> (o31, o51)        [dw3x3 + 1x1 + ReLU | dw5x5 + 1x1 + ReLU]
# ---------------------------------------------------------------------------

def _msrb_stage1_kernel(x_main, x_above, x_below,
                        w3, b3, p3, pb3,
                        w5, b5, p5, pb5,
                        o3_ref, o5_ref, xpad):
    row, nrow = pl.program_id(1), pl.num_programs(1)
    th, wd, c = x_main.shape

    _fill_padded(xpad, x_main, x_above, x_below, row, nrow)

    d3 = _dw_conv(xpad, 3, w3[...], b3[...], th, wd, c)
    d5 = _dw_conv(xpad, 5, w5[...], b5[...], th, wd, c)

    def pw_relu(h, p_ref, pb_ref):
        y = jnp.dot(h.reshape(th * wd, c), p_ref[...],
                    preferred_element_type=jnp.float32) + pb_ref[...]
        return jnp.maximum(y, 0.0).reshape(th, wd, -1)

    o3_ref[...] = pw_relu(d3, p3, pb3)
    o5_ref[...] = pw_relu(d5, p5, pb5)


# ---------------------------------------------------------------------------
# Stage 2+3: (o31, o51, x) -> out
#   dw convs on concat[o31|o51] (split weights), 1x1+ReLU, confusion 1x1, +x
# ---------------------------------------------------------------------------

def _msrb_stage2_kernel(a_main, a_above, a_below,      # o31 tiles
                        b_main, b_above, b_below,      # o51 tiles
                        x_main,
                        w3s, b3s, p3s, pb3,
                        w5s, b5s, p5s, pb5,
                        wcs, bc,
                        out_ref, pad_a, pad_b):
    row, nrow = pl.program_id(1), pl.num_programs(1)
    th, wd, c = x_main.shape

    _fill_padded(pad_a, a_main, a_above, a_below, row, nrow)
    _fill_padded(pad_b, b_main, b_above, b_below, row, nrow)

    def branch(k, ws, bs, ps, pb):
        # depthwise over the (virtual) 2C-channel concat, split into the two halves
        da = _dw_conv(pad_a, k, ws[0], bs[0:1], th, wd, c)
        db = _dw_conv(pad_b, k, ws[1], bs[1:2], th, wd, c)
        # pointwise (2C -> 2C) as two summed matmuls, + bias, ReLU
        y = (jnp.dot(da.reshape(th * wd, c), ps[0], preferred_element_type=jnp.float32)
             + jnp.dot(db.reshape(th * wd, c), ps[1], preferred_element_type=jnp.float32)
             + pb[...])
        return jnp.maximum(y, 0.0)                           # (th*wd, 2C)

    h3 = branch(3, w3s, b3s, p3s, pb3)
    h5 = branch(5, w5s, b5s, p5s, pb5)

    # confusion 1x1 (4C -> C) as two summed matmuls, + bias, + residual
    y = (jnp.dot(h3, wcs[0], preferred_element_type=jnp.float32)
         + jnp.dot(h5, wcs[1], preferred_element_type=jnp.float32)
         + bc[...])                                          # (th*wd, C)
    out_ref[...] = (y.reshape(th, wd, c) + x_main[...]).astype(out_ref.dtype)


# ---------------------------------------------------------------------------
# Weight reshaping helpers (PyTorch Conv2d layouts -> kernel layouts)
# ---------------------------------------------------------------------------

def _dw_weight(w):   # (C,1,K,K) -> (K,K,C)
    return jnp.transpose(w[:, 0], (1, 2, 0))


def _pw_weight(w):   # (Co,Ci,1,1) -> (Ci,Co)
    return jnp.transpose(w[:, :, 0, 0], (1, 0))


# ---------------------------------------------------------------------------
# MSRB forward (Pallas)
# ---------------------------------------------------------------------------

def msrb_forward(x_nchw, p, row_block=8):
    x = jnp.transpose(x_nchw, (0, 2, 3, 1)).astype(jnp.float32)    # NCHW -> NHWC
    N, H, W, C = x.shape
    assert H % _HALO == 0, "H must be even for the 2-row halo blocks"
    th = row_block if (H % row_block == 0 and row_block % _HALO == 0) else H
    nH = H // th
    r = th // _HALO
    f32 = jnp.float32

    # ---- stage-1 weights ----
    w3 = _dw_weight(p['conv_3_1_w']); b3 = p['conv_3_1_b'].reshape(1, 1, C)
    p31 = _pw_weight(p['pw_3_1_w']);  pb31 = p['pw_3_1_b'].reshape(1, C)
    w5 = _dw_weight(p['conv_5_1_w']); b5 = p['conv_5_1_b'].reshape(1, 1, C)
    p51 = _pw_weight(p['pw_5_1_w']);  pb51 = p['pw_5_1_b'].reshape(1, C)

    # ---- stage-2 weights, split along the concat axis [o31 | o51] ----
    def split_dw(w, b):           # (2C,1,K,K),(2C,) -> (2,K,K,C),(2,1,C)
        t = _dw_weight(w)
        return (jnp.stack([t[..., :C], t[..., C:]], 0),
                jnp.stack([b[:C], b[C:]], 0).reshape(2, 1, C))

    def split_pw(w):              # (Co,2C,1,1) -> (2,C,Co)
        t = _pw_weight(w)
        return jnp.stack([t[:C], t[C:]], 0)

    w3s, b3s = split_dw(p['conv_3_2_w'], p['conv_3_2_b'])
    p3s = split_pw(p['pw_3_2_w']); pb3 = p['pw_3_2_b'].reshape(1, 2 * C)
    w5s, b5s = split_dw(p['conv_5_2_w'], p['conv_5_2_b'])
    p5s = split_pw(p['pw_5_2_w']); pb5 = p['pw_5_2_b'].reshape(1, 2 * C)

    tc = _pw_weight(p['confusion_w'])                   # (4C, C)
    wcs = jnp.stack([tc[:2 * C], tc[2 * C:]], 0)        # (2, 2C, C)
    bc = p['confusion_b'].reshape(1, C)

    # ---- BlockSpecs: main row tile + 2-row halo tiles above/below ----
    def main_spec():
        return pl.BlockSpec((None, th, W, C), lambda n, i: (n, i, 0, 0))

    def above_spec():
        return pl.BlockSpec((None, _HALO, W, C),
                            lambda n, i: (n, jnp.maximum(i * r - 1, 0), 0, 0))

    def below_spec():
        return pl.BlockSpec((None, _HALO, W, C),
                            lambda n, i: (n, jnp.minimum((i + 1) * r, H // _HALO - 1), 0, 0))

    def full_spec(a):
        return pl.BlockSpec(a.shape, lambda n, i, _nd=a.ndim: (0,) * _nd)

    cp = pltpu.CompilerParams(
        dimension_semantics=("parallel", "parallel"),     # shard over 2 TCs on v7x
        vmem_limit_bytes=32 * 1024 * 1024,                # safe on v5e/v6e/v7x
    )

    # ---- stage 1 ----
    o31, o51 = pl.pallas_call(
        _msrb_stage1_kernel,
        grid=(N, nH),
        in_specs=[main_spec(), above_spec(), below_spec()]
                 + [full_spec(a) for a in (w3, b3, p31, pb31, w5, b5, p51, pb51)],
        out_specs=(main_spec(), main_spec()),
        out_shape=(jax.ShapeDtypeStruct((N, H, W, C), f32),
                   jax.ShapeDtypeStruct((N, H, W, C), f32)),
        scratch_shapes=[pltpu.VMEM((th + 2 * _HALO, W + 2 * _HALO, C), f32)],
        compiler_params=cp,
    )(x, x, x, w3, b3, p31, pb31, w5, b5, p51, pb51)

    # ---- stage 2 + confusion + residual ----
    out = pl.pallas_call(
        _msrb_stage2_kernel,
        grid=(N, nH),
        in_specs=[main_spec(), above_spec(), below_spec(),
                  main_spec(), above_spec(), below_spec(),
                  main_spec()]
                 + [full_spec(a) for a in (w3s, b3s, p3s, pb3,
                                           w5s, b5s, p5s, pb5, wcs, bc)],
        out_specs=main_spec(),
        out_shape=jax.ShapeDtypeStruct((N, H, W, C), f32),
        scratch_shapes=[pltpu.VMEM((th + 2 * _HALO, W + 2 * _HALO, C), f32),
                        pltpu.VMEM((th + 2 * _HALO, W + 2 * _HALO, C), f32)],
        compiler_params=cp,
    )(o31, o31, o31, o51, o51, o51, x,
      w3s, b3s, p3s, pb3, w5s, b5s, p5s, pb5, wcs, bc)

    return jnp.transpose(out, (0, 3, 1, 2))               # NHWC -> NCHW


# ---------------------------------------------------------------------------
# Parameters (PyTorch Conv2d layouts), deterministic init
# ---------------------------------------------------------------------------

def init_params(key, n_feats):
    C = n_feats
    keys = jax.random.split(key, 18)
    w = lambda k, shape: jax.random.normal(k, shape, jnp.float32) * 0.1
    p = {}
    p['conv_3_1_w'] = w(keys[0], (C, 1, 3, 3));          p['conv_3_1_b'] = w(keys[1], (C,))
    p['pw_3_1_w']   = w(keys[2], (C, C, 1, 1));          p['pw_3_1_b']   = w(keys[3], (C,))
    p['conv_5_1_w'] = w(keys[4], (C, 1, 5, 5));          p['conv_5_1_b'] = w(keys[5], (C,))
    p['pw_5_1_w']   = w(keys[6], (C, C, 1, 1));          p['pw_5_1_b']   = w(keys[7], (C,))
    p['conv_3_2_w'] = w(keys[8], (2 * C, 1, 3, 3));      p['conv_3_2_b'] = w(keys[9], (2 * C,))
    p['pw_3_2_w']   = w(keys[10], (2 * C, 2 * C, 1, 1)); p['pw_3_2_b']   = w(keys[11], (2 * C,))
    p['conv_5_2_w'] = w(keys[12], (2 * C, 1, 5, 5));     p['conv_5_2_b'] = w(keys[13], (2 * C,))
    p['pw_5_2_w']   = w(keys[14], (2 * C, 2 * C, 1, 1)); p['pw_5_2_b']   = w(keys[15], (2 * C,))
    p['confusion_w'] = w(keys[16], (C, 4 * C, 1, 1));    p['confusion_b'] = w(keys[17], (C,))
    return p


# ---------------------------------------------------------------------------
# Pure-JAX reference (mirrors the PyTorch module exactly)
# ---------------------------------------------------------------------------

def ref_forward(x, p):
    def conv(t, w, b, pad, groups):
        y = jax.lax.conv_general_dilated(
            t, w, window_strides=(1, 1), padding=((pad, pad), (pad, pad)),
            dimension_numbers=('NCHW', 'OIHW', 'NCHW'), feature_group_count=groups)
        return y + b.reshape(1, -1, 1, 1)
    relu = lambda t: jnp.maximum(t, 0.0)
    C = x.shape[1]
    o31 = relu(conv(conv(x, p['conv_3_1_w'], p['conv_3_1_b'], 1, C),
                    p['pw_3_1_w'], p['pw_3_1_b'], 0, 1))
    o51 = relu(conv(conv(x, p['conv_5_1_w'], p['conv_5_1_b'], 2, C),
                    p['pw_5_1_w'], p['pw_5_1_b'], 0, 1))
    in2 = jnp.concatenate([o31, o51], 1)
    o32 = relu(conv(conv(in2, p['conv_3_2_w'], p['conv_3_2_b'], 1, 2 * C),
                    p['pw_3_2_w'], p['pw_3_2_b'], 0, 1))
    o52 = relu(conv(conv(in2, p['conv_5_2_w'], p['conv_5_2_b'], 2, 2 * C),
                    p['pw_5_2_w'], p['pw_5_2_b'], 0, 1))
    in3 = jnp.concatenate([o32, o52], 1)
    return conv(in3, p['confusion_w'], p['confusion_b'], 0, 1) + x


if __name__ == "__main__":
    key = jax.random.PRNGKey(0)
    k_x, k_p = jax.random.split(key)

    N, C, H, W = 2, 4, 16, 16            # small n_feats=4 instance of MSRB
    x = jax.random.normal(k_x, (N, C, H, W), jnp.float32)
    params = init_params(k_p, n_feats=C)

    fwd = jax.jit(msrb_forward)
    out = jax.block_until_ready(fwd(x, params))

    ref = jax.block_until_ready(ref_forward(x, params))
    assert out.shape == (N, C, H, W)
    assert jnp.allclose(out, ref, atol=1e-4, rtol=1e-4), "Pallas output mismatch vs reference"

    print("KERNEL_OK")
</pallas_src>

<mosaic_0001>
module attributes {stable_mosaic.version = 11 : i64} {
  func.func @_msrb_stage1_kernel(%arg0: i32, %arg1: i32, %arg2: memref<1x8x16x4xf32, #tpu.memory_space<vmem>>, %arg3: memref<1x2x16x4xf32, #tpu.memory_space<vmem>>, %arg4: memref<1x2x16x4xf32, #tpu.memory_space<vmem>>, %arg5: memref<3x3x4xf32, #tpu.memory_space<vmem>>, %arg6: memref<1x1x4xf32, #tpu.memory_space<vmem>>, %arg7: memref<4x4xf32, #tpu.memory_space<vmem>>, %arg8: memref<1x4xf32, #tpu.memory_space<vmem>>, %arg9: memref<5x5x4xf32, #tpu.memory_space<vmem>>, %arg10: memref<1x1x4xf32, #tpu.memory_space<vmem>>, %arg11: memref<4x4xf32, #tpu.memory_space<vmem>>, %arg12: memref<1x4xf32, #tpu.memory_space<vmem>>, %arg13: memref<1x8x16x4xf32, #tpu.memory_space<vmem>>, %arg14: memref<1x8x16x4xf32, #tpu.memory_space<vmem>>, %arg15: memref<12x20x4xf32, #tpu.memory_space<vmem>>) attributes {dimension_semantics = [#tpu.dimension_semantics<parallel>, #tpu.dimension_semantics<parallel>], iteration_bounds = array<i64: 2, 2>, scalar_prefetch = 0 : i64, scratch_operands = 1 : i64, tpu.core_type = #tpu.core_type<tc>, window_params = [{transform_indices = @transform_0, window_bounds = array<i64: 1, 8, 16, 4>}, {transform_indices = @transform_1, window_bounds = array<i64: 1, 2, 16, 4>}, {transform_indices = @transform_2, window_bounds = array<i64: 1, 2, 16, 4>}, {pipeline_mode = #tpu.pipeline_mode<synchronous>, transform_indices = @transform_3, window_bounds = array<i64: 3, 3, 4>}, {pipeline_mode = #tpu.pipeline_mode<synchronous>, transform_indices = @transform_4, window_bounds = array<i64: 1, 1, 4>}, {pipeline_mode = #tpu.pipeline_mode<synchronous>, transform_indices = @transform_5, window_bounds = array<i64: 4, 4>}, {pipeline_mode = #tpu.pipeline_mode<synchronous>, transform_indices = @transform_6, window_bounds = array<i64: 1, 4>}, {pipeline_mode = #tpu.pipeline_mode<synchronous>, transform_indices = @transform_7, window_bounds = array<i64: 5, 5, 4>}, {pipeline_mode = #tpu.pipeline_mode<synchronous>, transform_indices = @transform_8, window_bounds = array<i64: 1, 1, 4>}, {pipeline_mode = #tpu.pipeline_mode<synchronous>, transform_indices = @transform_9, window_bounds = array<i64: 4, 4>}, {pipeline_mode = #tpu.pipeline_mode<synchronous>, transform_indices = @transform_10, window_bounds = array<i64: 1, 4>}, {transform_indices = @transform_11, window_bounds = array<i64: 1, 8, 16, 4>}, {transform_indices = @transform_12, window_bounds = array<i64: 1, 8, 16, 4>}]} {
    %cst = arith.constant 0.000000e+00 : f32
    %0 = vector.broadcast %cst : f32 to vector<12x20x4xf32>
    %c0 = arith.constant 0 : index
    %c0_0 = arith.constant 0 : index
    %c0_1 = arith.constant 0 : index
    %1 = vector.load %arg15[%c0, %c0_0, %c0_1] : memref<12x20x4xf32, #tpu.memory_space<vmem>>, vector<12x20x4xf32>
    tpu.vector_store %arg15[%c0, %c0_0, %c0_1], %0 {strides = array<i32>} : memref<12x20x4xf32, #tpu.memory_space<vmem>>, vector<12x20x4xf32>,
    %c0_2 = arith.constant 0 : index
    %c0_3 = arith.constant 0 : index
    %c0_4 = arith.constant 0 : index
    %c0_5 = arith.constant 0 : index
    %2 = vector.load %arg2[%c0_2, %c0_3, %c0_4, %c0_5] : memref<1x8x16x4xf32, #tpu.memory_space<vmem>>, vector<1x8x16x4xf32>
    %3 = vector.shape_cast %2 : vector<1x8x16x4xf32> to vector<8x16x4xf32>
    %c2 = arith.constant 2 : index
    %c2_6 = arith.constant 2 : index
    %c0_7 = arith.constant 0 : index
    %4 = vector.load %arg15[%c2, %c2_6, %c0_7] : memref<12x20x4xf32, #tpu.memory_space<vmem>>, vector<8x16x4xf32>
    tpu.vector_store %arg15[%c2, %c2_6, %c0_7], %3 {strides = array<i32>} : memref<12x20x4xf32, #tpu.memory_space<vmem>>, vector<8x16x4xf32>,
    %c0_i32 = arith.constant 0 : i32
    %5 = arith.cmpi sgt, %arg1, %c0_i32 : i32
    %6 = arith.extui %5 : i1 to i32
    %c0_i32_8 = arith.constant 0 : i32
    %7 = arith.cmpi ne, %6, %c0_i32_8 : i32
    scf.if %7 {
      %c0_143 = arith.constant 0 : index
      %c0_144 = arith.constant 0 : index
      %c0_145 = arith.constant 0 : index
      %c0_146 = arith.constant 0 : index
      %215 = vector.load %arg3[%c0_143, %c0_144, %c0_145, %c0_146] : memref<1x2x16x4xf32, #tpu.memory_space<vmem>>, vector<1x2x16x4xf32>
      %216 = vector.shape_cast %215 : vector<1x2x16x4xf32> to vector<2x16x4xf32>
      %c0_147 = arith.constant 0 : index
      %c2_148 = arith.constant 2 : index
      %c0_149 = arith.constant 0 : index
      %217 = vector.load %arg15[%c0_147, %c2_148, %c0_149] : memref<12x20x4xf32, #tpu.memory_space<vmem>>, vector<2x16x4xf32>
      tpu.vector_store %arg15[%c0_147, %c2_148, %c0_149], %216 {strides = array<i32>} : memref<12x20x4xf32, #tpu.memory_space<vmem>>, vector<2x16x4xf32>,
    } else {
    }
    %c1_i32 = arith.constant 1 : i32
    %8 = arith.cmpi slt, %arg1, %c1_i32 : i32
    %9 = arith.extui %8 : i1 to i32
    %c0_i32_9 = arith.constant 0 : i32
    %10 = arith.cmpi ne, %9, %c0_i32_9 : i32
    scf.if %10 {
      %c0_143 = arith.constant 0 : index
      %c0_144 = arith.constant 0 : index
      %c0_145 = arith.constant 0 : index
      %c0_146 = arith.constant 0 : index
      %215 = vector.load %arg4[%c0_143, %c0_144, %c0_145, %c0_146] : memref<1x2x16x4xf32, #tpu.memory_space<vmem>>, vector<1x2x16x4xf32>
      %216 = vector.shape_cast %215 : vector<1x2x16x4xf32> to vector<2x16x4xf32>
      %c10 = arith.constant 10 : index
      %c2_147 = arith.constant 2 : index
      %c0_148 = arith.constant 0 : index
      %217 = vector.load %arg15[%c10, %c2_147, %c0_148] : memref<12x20x4xf32, #tpu.memory_space<vmem>>, vector<2x16x4xf32>
      tpu.vector_store %arg15[%c10, %c2_147, %c0_148], %216 {strides = array<i32>} : memref<12x20x4xf32, #tpu.memory_space<vmem>>, vector<2x16x4xf32>,
    } else {
    }
    %c0_10 = arith.constant 0 : index
    %c0_11 = arith.constant 0 : index
    %c0_12 = arith.constant 0 : index
    %11 = vector.load %arg5[%c0_10, %c0_11, %c0_12] : memref<3x3x4xf32, #tpu.memory_space<vmem>>, vector<3x3x4xf32>
    %c0_13 = arith.constant 0 : index
    %c0_14 = arith.constant 0 : index
    %c0_15 = arith.constant 0 : index
    %12 = vector.load %arg6[%c0_13, %c0_14, %c0_15] : memref<1x1x4xf32, #tpu.memory_space<vmem>>, vector<1x1x4xf32>
    %cst_16 = arith.constant 0.000000e+00 : f32
    %13 = vector.broadcast %cst_16 : f32 to vector<8x16x4xf32>
    %c1 = arith.constant 1 : index
    %c1_17 = arith.constant 1 : index
    %c0_18 = arith.constant 0 : index
    %14 = vector.load %arg15[%c1, %c1_17, %c0_18] : memref<12x20x4xf32, #tpu.memory_space<vmem>>, vector<8x16x4xf32>
    %15 = vector.extract_strided_slice %11 {offsets = [0, 0, 0], sizes = [1, 1, 4], strides = [1, 1, 1]} : vector<3x3x4xf32> to vector<1x1x4xf32>
    %16 = vector.broadcast %15 : vector<1x1x4xf32> to vector<8x16x4xf32>
    %17 = arith.mulf %14, %16 : vector<8x16x4xf32>
    %18 = arith.addf %13, %17 : vector<8x16x4xf32>
    %c1_19 = arith.constant 1 : index
    %c2_20 = arith.constant 2 : index
    %c0_21 = arith.constant 0 : index
    %19 = vector.load %arg15[%c1_19, %c2_20, %c0_21] : memref<12x20x4xf32, #tpu.memory_space<vmem>>, vector<8x16x4xf32>
    %20 = vector.extract_strided_slice %11 {offsets = [0, 1, 0], sizes = [1, 1, 4], strides = [1, 1, 1]} : vector<3x3x4xf32> to vector<1x1x4xf32>
    %21 = vector.broadcast %20 : vector<1x1x4xf32> to vector<8x16x4xf32>
    %22 = arith.mulf %19, %21 : vector<8x16x4xf32>
    %23 = arith.addf %18, %22 : vector<8x16x4xf32>
    %c1_22 = arith.constant 1 : index
    %c3 = arith.constant 3 : index
    %c0_23 = arith.constant 0 : index
    %24 = vector.load %arg15[%c1_22, %c3, %c0_23] : memref<12x20x4xf32, #tpu.memory_space<vmem>>, vector<8x16x4xf32>
    %25 = vector.extract_strided_slice %11 {offsets = [0, 2, 0], sizes = [1, 1, 4], strides = [1, 1, 1]} : vector<3x3x4xf32> to vector<1x1x4xf32>
    %26 = vector.broadcast %25 : vector<1x1x4xf32> to vector<8x16x4xf32>
    %27 = arith.mulf %24, %26 : vector<8x16x4xf32>
    %28 = arith.addf %23, %27 : vector<8x16x4xf32>
    %c2_24 = arith.constant 2 : index
    %c1_25 = arith.constant 1 : index
    %c0_26 = arith.constant 0 : index
    %29 = vector.load %arg15[%c2_24, %c1_25, %c0_26] : memref<12x20x4xf32, #tpu.memory_space<vmem>>, vector<8x16x4xf32>
    %30 = vector.extract_strided_slice %11 {offsets = [1, 0, 0], sizes = [1, 1, 4], strides = [1, 1, 1]} : vector<3x3x4xf32> to vector<1x1x4xf32>
    %31 = vector.broadcast %30 : vector<1x1x4xf32> to vector<8x16x4xf32>
    %32 = arith.mulf %29, %31 : vector<8x16x4xf32>
    %33 = arith.addf %28, %32 : vector<8x16x4xf32>
    %c2_27 = arith.constant 2 : index
    %c2_28 = arith.constant 2 : index
    %c0_29 = arith.constant 0 : index
    %34 = vector.load %arg15[%c2_27, %c2_28, %c0_29] : memref<12x20x4xf32, #tpu.memory_space<vmem>>, vector<8x16x4xf32>
    %35 = vector.extract_strided_slice %11 {offsets = [1, 1, 0], sizes = [1, 1, 4], strides = [1, 1, 1]} : vector<3x3x4xf32> to vector<1x1x4xf32>
    %36 = vector.broadcast %35 : vector<1x1x4xf32> to vector<8x16x4xf32>
    %37 = arith.mulf %34, %36 : vector<8x16x4xf32>
    %38 = arith.addf %33, %37 : vector<8x16x4xf32>
    %c2_30 = arith.constant 2 : index
    %c3_31 = arith.constant 3 : index
    %c0_32 = arith.constant 0 : index
    %39 = vector.load %arg15[%c2_30, %c3_31, %c0_32] : memref<12x20x4xf32, #tpu.memory_space<vmem>>, vector<8x16x4xf32>
    %40 = vector.extract_strided_slice %11 {offsets = [1, 2, 0], sizes = [1, 1, 4], strides = [1, 1, 1]} : vector<3x3x4xf32> to vector<1x1x4xf32>
    %41 = vector.broadcast %40 : vector<1x1x4xf32> to vector<8x16x4xf32>
    %42 = arith.mulf %39, %41 : vector<8x16x4xf32>
    %43 = arith.addf %38, %42 : vector<8x16x4xf32>
    %c3_33 = arith.constant 3 : index
    %c1_34 = arith.constant 1 : index
    %c0_35 = arith.constant 0 : index
    %44 = vector.load %arg15[%c3_33, %c1_34, %c0_35] : memref<12x20x4xf32, #tpu.memory_space<vmem>>, vector<8x16x4xf32>
    %45 = vector.extract_strided_slice %11 {offsets = [2, 0, 0], sizes = [1, 1, 4], strides = [1, 1, 1]} : vector<3x3x4xf32> to vector<1x1x4xf32>
    %46 = vector.broadcast %45 : vector<1x1x4xf32> to vector<8x16x4xf32>
    %47 = arith.mulf %44, %46 : vector<8x16x4xf32>
    %48 = arith.addf %43, %47 : vector<8x16x4xf32>
    %c3_36 = arith.constant 3 : index
    %c2_37 = arith.constant 2 : index
    %c0_38 = arith.constant 0 : index
    %49 = vector.load %arg15[%c3_36, %c2_37, %c0_38] : memref<12x20x4xf32, #tpu.memory_space<vmem>>, vector<8x16x4xf32>
    %50 = vector.extract_strided_slice %11 {offsets = [2, 1, 0], sizes = [1, 1, 4], strides = [1, 1, 1]} : vector<3x3x4xf32> to vector<1x1x4xf32>
    %51 = vector.broadcast %50 : vector<1x1x4xf32> to vector<8x16x4xf32>
    %52 = arith.mulf %49, %51 : vector<8x16x4xf32>
    %53 = arith.addf %48, %52 : vector<8x16x4xf32>
    %c3_39 = arith.constant 3 : index
    %c3_40 = arith.constant 3 : index
    %c0_41 = arith.constant 0 : index
    %54 = vector.load %arg15[%c3_39, %c3_40, %c0_41] : memref<12x20x4xf32, #tpu.memory_space<vmem>>, vector<8x16x4xf32>
    %55 = vector.extract_strided_slice %11 {offsets = [2, 2, 0], sizes = [1, 1, 4], strides = [1, 1, 1]} : vector<3x3x4xf32> to vector<1x1x4xf32>
    %56 = vector.broadcast %55 : vector<1x1x4xf32> to vector<8x16x4xf32>
    %57 = arith.mulf %54, %56 : vector<8x16x4xf32>
    %58 = arith.addf %53, %57 : vector<8x16x4xf32>
    %59 = vector.broadcast %12 : vector<1x1x4xf32> to vector<8x16x4xf32>
    %60 = arith.addf %58, %59 : vector<8x16x4xf32>
    %c0_42 = arith.constant 0 : index
    %c0_43 = arith.constant 0 : index
    %c0_44 = arith.constant 0 : index
    %61 = vector.load %arg9[%c0_42, %c0_43, %c0_44] : memref<5x5x4xf32, #tpu.memory_space<vmem>>, vector<5x5x4xf32>
    %c0_45 = arith.constant 0 : index
    %c0_46 = arith.constant 0 : index
    %c0_47 = arith.constant 0 : index
    %62 = vector.load %arg10[%c0_45, %c0_46, %c0_47] : memref<1x1x4xf32, #tpu.memory_space<vmem>>, vector<1x1x4xf32>
    %cst_48 = arith.constant 0.000000e+00 : f32
    %63 = vector.broadcast %cst_48 : f32 to vector<8x16x4xf32>
    %c0_49 = arith.constant 0 : index
    %c0_50 = arith.constant 0 : index
    %c0_51 = arith.constant 0 : index
    %64 = vector.load %arg15[%c0_49, %c0_50, %c0_51] : memref<12x20x4xf32, #tpu.memory_space<vmem>>, vector<8x16x4xf32>
    %65 = vector.extract_strided_slice %61 {offsets = [0, 0, 0], sizes = [1, 1, 4], strides = [1, 1, 1]} : vector<5x5x4xf32> to vector<1x1x4xf32>
    %66 = vector.broadcast %65 : vector<1x1x4xf32> to vector<8x16x4xf32>
    %67 = arith.mulf %64, %66 : vector<8x16x4xf32>
    %68 = arith.addf %63, %67 : vector<8x16x4xf32>
    %c0_52 = arith.constant 0 : index
    %c1_53 = arith.constant 1 : index
    %c0_54 = arith.constant 0 : index
    %69 = vector.load %arg15[%c0_52, %c1_53, %c0_54] : memref<12x20x4xf32, #tpu.memory_space<vmem>>, vector<8x16x4xf32>
    %70 = vector.extract_strided_slice %61 {offsets = [0, 1, 0], sizes = [1, 1, 4], strides = [1, 1, 1]} : vector<5x5x4xf32> to vector<1x1x4xf32>
    %71 = vector.broadcast %70 : vector<1x1x4xf32> to vector<8x16x4xf32>
    %72 = arith.mulf %69, %71 : vector<8x16x4xf32>
    %73 = arith.addf %68, %72 : vector<8x16x4xf32>
    %c0_55 = arith.constant 0 : index
    %c2_56 = arith.constant 2 : index
    %c0_57 = arith.constant 0 : index
    %74 = vector.load %arg15[%c0_55, %c2_56, %c0_57] : memref<12x20x4xf32, #tpu.memory_space<vmem>>, vector<8x16x4xf32>
    %75 = vector.extract_strided_slice %61 {offsets = [0, 2, 0], sizes = [1, 1, 4], strides = [1, 1, 1]} : vector<5x5x4xf32> to vector<1x1x4xf32>
    %76 = vector.broadcast %75 : vector<1x1x4xf32> to vector<8x16x4xf32>
    %77 = arith.mulf %74, %76 : vector<8x16x4xf32>
    %78 = arith.addf %73, %77 : vector<8x16x4xf32>
    %c0_58 = arith.constant 0 : index
    %c3_59 = arith.constant 3 : index
    %c0_60 = arith.constant 0 : index
    %79 = vector.load %arg15[%c0_58, %c3_59, %c0_60] : memref<12x20x4xf32, #tpu.memory_space<vmem>>, vector<8x16x4xf32>
    %80 = vector.extract_strided_slice %61 {offsets = [0, 3, 0], sizes = [1, 1, 4], strides = [1, 1, 1]} : vector<5x5x4xf32> to vector<1x1x4xf32>
    %81 = vector.broadcast %80 : vector<1x1x4xf32> to vector<8x16x4xf32>
    %82 = arith.mulf %79, %81 : vector<8x16x4xf32>
    %83 = arith.addf %78, %82 : vector<8x16x4xf32>
    %c0_61 = arith.constant 0 : index
    %c4 = arith.constant 4 : index
    %c0_62 = arith.constant 0 : index
    %84 = vector.load %arg15[%c0_61, %c4, %c0_62] : memref<12x20x4xf32, #tpu.memory_space<vmem>>, vector<8x16x4xf32>
    %85 = vector.extract_strided_slice %61 {offsets = [0, 4, 0], sizes = [1, 1, 4], strides = [1, 1, 1]} : vector<5x5x4xf32> to vector<1x1x4xf32>
    %86 = vector.broadcast %85 : vector<1x1x4xf32> to vector<8x16x4xf32>
    %87 = arith.mulf %84, %86 : vector<8x16x4xf32>
    %88 = arith.addf %83, %87 : vector<8x16x4xf32>
    %c1_63 = arith.constant 1 : index
    %c0_64 = arith.constant 0 : index
    %c0_65 = arith.constant 0 : index
    %89 = vector.load %arg15[%c1_63, %c0_64, %c0_65] : memref<12x20x4xf32, #tpu.memory_space<vmem>>, vector<8x16x4xf32>
    %90 = vector.extract_strided_slice %61 {offsets = [1, 0, 0], sizes = [1, 1, 4], strides = [1, 1, 1]} : vector<5x5x4xf32> to vector<1x1x4xf32>
    %91 = vector.broadcast %90 : vector<1x1x4xf32> to vector<8x16x4xf32>
    %92 = arith.mulf %89, %91 : vector<8x16x4xf32>
    %93 = arith.addf %88, %92 : vector<8x16x4xf32>
    %c1_66 = arith.constant 1 : index
    %c1_67 = arith.constant 1 : index
    %c0_68 = arith.constant 0 : index
    %94 = vector.load %arg15[%c1_66, %c1_67, %c0_68] : memref<12x20x4xf32, #tpu.memory_space<vmem>>, vector<8x16x4xf32>
    %95 = vector.extract_strided_slice %61 {offsets = [1, 1, 0], sizes = [1, 1, 4], strides = [1, 1, 1]} : vector<5x5x4xf32> to vector<1x1x4xf32>
    %96 = vector.broadcast %95 : vector<1x1x4xf32> to vector<8x16x4xf32>
    %97 = arith.mulf %94, %96 : vector<8x16x4xf32>
    %98 = arith.addf %93, %97 : vector<8x16x4xf32>
    %c1_69 = arith.constant 1 : index
    %c2_70 = arith.constant 2 : index
    %c0_71 = arith.constant 0 : index
    %99 = vector.load %arg15[%c1_69, %c2_70, %c0_71] : memref<12x20x4xf32, #tpu.memory_space<vmem>>, vector<8x16x4xf32>
    %100 = vector.extract_strided_slice %61 {offsets = [1, 2, 0], sizes = [1, 1, 4], strides = [1, 1, 1]} : vector<5x5x4xf32> to vector<1x1x4xf32>
    %101 = vector.broadcast %100 : vector<1x1x4xf32> to vector<8x16x4xf32>
    %102 = arith.mulf %99, %101 : vector<8x16x4xf32>
    %103 = arith.addf %98, %102 : vector<8x16x4xf32>
    %c1_72 = arith.constant 1 : index
    %c3_73 = arith.constant 3 : index
    %c0_74 = arith.constant 0 : index
    %104 = vector.load %arg15[%c1_72, %c3_73, %c0_74] : memref<12x20x4xf32, #tpu.memory_space<vmem>>, vector<8x16x4xf32>
    %105 = vector.extract_strided_slice %61 {offsets = [1, 3, 0], sizes = [1, 1, 4], strides = [1, 1, 1]} : vector<5x5x4xf32> to vector<1x1x4xf32>
    %106 = vector.broadcast %105 : vector<1x1x4xf32> to vector<8x16x4xf32>
    %107 = arith.mulf %104, %106 : vector<8x16x4xf32>
    %108 = arith.addf %103, %107 : vector<8x16x4xf32>
    %c1_75 = arith.constant 1 : index
    %c4_76 = arith.constant 4 : index
    %c0_77 = arith.constant 0 : index
    %109 = vector.load %arg15[%c1_75, %c4_76, %c0_77] : memref<12x20x4xf32, #tpu.memory_space<vmem>>, vector<8x16x4xf32>
    %110 = vector.extract_strided_slice %61 {offsets = [1, 4, 0], sizes = [1, 1, 4], strides = [1, 1, 1]} : vector<5x5x4xf32> to vector<1x1x4xf32>
    %111 = vector.broadcast %110 : vector<1x1x4xf32> to vector<8x16x4xf32>
    %112 = arith.mulf %109, %111 : vector<8x16x4xf32>
    %113 = arith.addf %108, %112 : vector<8x16x4xf32>
    %c2_78 = arith.constant 2 : index
    %c0_79 = arith.constant 0 : index
    %c0_80 = arith.constant 0 : index
    %114 = vector.load %arg15[%c2_78, %c0_79, %c0_80] : memref<12x20x4xf32, #tpu.memory_space<vmem>>, vector<8x16x4xf32>
    %115 = vector.extract_strided_slice %61 {offsets = [2, 0, 0], sizes = [1, 1, 4], strides = [1, 1, 1]} : vector<5x5x4xf32> to vector<1x1x4xf32>
    %116 = vector.broadcast %115 : vector<1x1x4xf32> to vector<8x16x4xf32>
    %117 = arith.mulf %114, %116 : vector<8x16x4xf32>
    %118 = arith.addf %113, %117 : vector<8x16x4xf32>
    %c2_81 = arith.constant 2 : index
    %c1_82 = arith.constant 1 : index
    %c0_83 = arith.constant 0 : index
    %119 = vector.load %arg15[%c2_81, %c1_82, %c0_83] : memref<12x20x4xf32, #tpu.memory_space<vmem>>, vector<8x16x4xf32>
    %120 = vector.extract_strided_slice %61 {offsets = [2, 1, 0], sizes = [1, 1, 4], strides = [1, 1, 1]} : vector<5x5x4xf32> to vector<1x1x4xf32>
    %121 = vector.broadcast %120 : vector<1x1x4xf32> to vector<8x16x4xf32>
    %122 = arith.mulf %119, %121 : vector<8x16x4xf32>
    %123 = arith.addf %118, %122 : vector<8x16x4xf32>
    %c2_84 = arith.constant 2 : index
    %c2_85 = arith.constant 2 : index
    %c0_86 = arith.constant 0 : index
    %124 = vector.load %arg15[%c2_84, %c2_85, %c0_86] : memref<12x20x4xf32, #tpu.memory_space<vmem>>, vector<8x16x4xf32>
    %125 = vector.extract_strided_slice %61 {offsets = [2, 2, 0], sizes = [1, 1, 4], strides = [1, 1, 1]} : vector<5x5x4xf32> to vector<1x1x4xf32>
    %126 = vector.broadcast %125 : vector<1x1x4xf32> to vector<8x16x4xf32>
    %127 = arith.mulf %124, %126 : vector<8x16x4xf32>
    %128 = arith.addf %123, %127 : vector<8x16x4xf32>
    %c2_87 = arith.constant 2 : index
    %c3_88 = arith.constant 3 : index
    %c0_89 = arith.constant 0 : index
    %129 = vector.load %arg15[%c2_87, %c3_88, %c0_89] : memref<12x20x4xf32, #tpu.memory_space<vmem>>, vector<8x16x4xf32>
    %130 = vector.extract_strided_slice %61 {offsets = [2, 3, 0], sizes = [1, 1, 4], strides = [1, 1, 1]} : vector<5x5x4xf32> to vector<1x1x4xf32>
    %131 = vector.broadcast %130 : vector<1x1x4xf32> to vector<8x16x4xf32>
    %132 = arith.mulf %129, %131 : vector<8x16x4xf32>
    %133 = arith.addf %128, %132 : vector<8x16x4xf32>
    %c2_90 = arith.constant 2 : index
    %c4_91 = arith.constant 4 : index
    %c0_92 = arith.constant 0 : index
    %134 = vector.load %arg15[%c2_90, %c4_91, %c0_92] : memref<12x20x4xf32, #tpu.memory_space<vmem>>, vector<8x16x4xf32>
    %135 = vector.extract_strided_slice %61 {offsets = [2, 4, 0], sizes = [1, 1, 4], strides = [1, 1, 1]} : vector<5x5x4xf32> to vector<1x1x4xf32>
    %136 = vector.broadcast %135 : vector<1x1x4xf32> to vector<8x16x4xf32>
    %137 = arith.mulf %134, %136 : vector<8x16x4xf32>
    %138 = arith.addf %133, %137 : vector<8x16x4xf32>
    %c3_93 = arith.constant 3 : index
    %c0_94 = arith.constant 0 : index
    %c0_95 = arith.constant 0 : index
    %139 = vector.load %arg15[%c3_93, %c0_94, %c0_95] : memref<12x20x4xf32, #tpu.memory_space<vmem>>, vector<8x16x4xf32>
    %140 = vector.extract_strided_slice %61 {offsets = [3, 0, 0], sizes = [1, 1, 4], strides = [1, 1, 1]} : vector<5x5x4xf32> to vector<1x1x4xf32>
    %141 = vector.broadcast %140 : vector<1x1x4xf32> to vector<8x16x4xf32>
    %142 = arith.mulf %139, %141 : vector<8x16x4xf32>
    %143 = arith.addf %138, %142 : vector<8x16x4xf32>
    %c3_96 = arith.constant 3 : index
    %c1_97 = arith.constant 1 : index
    %c0_98 = arith.constant 0 : index
    %144 = vector.load %arg15[%c3_96, %c1_97, %c0_98] : memref<12x20x4xf32, #tpu.memory_space<vmem>>, vector<8x16x4xf32>
    %145 = vector.extract_strided_slice %61 {offsets = [3, 1, 0], sizes = [1, 1, 4], strides = [1, 1, 1]} : vector<5x5x4xf32> to vector<1x1x4xf32>
    %146 = vector.broadcast %145 : vector<1x1x4xf32> to vector<8x16x4xf32>
    %147 = arith.mulf %144, %146 : vector<8x16x4xf32>
    %148 = arith.addf %143, %147 : vector<8x16x4xf32>
    %c3_99 = arith.constant 3 : index
    %c2_100 = arith.constant 2 : index
    %c0_101 = arith.constant 0 : index
    %149 = vector.load %arg15[%c3_99, %c2_100, %c0_101] : memref<12x20x4xf32, #tpu.memory_space<vmem>>, vector<8x16x4xf32>
    %150 = vector.extract_strided_slice %61 {offsets = [3, 2, 0], sizes = [1, 1, 4], strides = [1, 1, 1]} : vector<5x5x4xf32> to vector<1x1x4xf32>
    %151 = vector.broadcast %150 : vector<1x1x4xf32> to vector<8x16x4xf32>
    %152 = arith.mulf %149, %151 : vector<8x16x4xf32>
    %153 = arith.addf %148, %152 : vector<8x16x4xf32>
    %c3_102 = arith.constant 3 : index
    %c3_103 = arith.constant 3 : index
    %c0_104 = arith.constant 0 : index
    %154 = vector.load %arg15[%c3_102, %c3_103, %c0_104] : memref<12x20x4xf32, #tpu.memory_space<vmem>>, vector<8x16x4xf32>
    %155 = vector.extract_strided_slice %61 {offsets = [3, 3, 0], sizes = [1, 1, 4], strides = [1, 1, 1]} : vector<5x5x4xf32> to vector<1x1x4xf32>
    %156 = vector.broadcast %155 : vector<1x1x4xf32> to vector<8x16x4xf32>
    %157 = arith.mulf %154, %156 : vector<8x16x4xf32>
    %158 = arith.addf %153, %157 : vector<8x16x4xf32>
    %c3_105 = arith.constant 3 : index
    %c4_106 = arith.constant 4 : index
    %c0_107 = arith.constant 0 : index
    %159 = vector.load %arg15[%c3_105, %c4_106, %c0_107] : memref<12x20x4xf32, #tpu.memory_space<vmem>>, vector<8x16x4xf32>
    %160 = vector.extract_strided_slice %61 {offsets = [3, 4, 0], sizes = [1, 1, 4], strides = [1, 1, 1]} : vector<5x5x4xf32> to vector<1x1x4xf32>
    %161 = vector.broadcast %160 : vector<1x1x4xf32> to vector<8x16x4xf32>
    %162 = arith.mulf %159, %161 : vector<8x16x4xf32>
    %163 = arith.addf %158, %162 : vector<8x16x4xf32>
    %c4_108 = arith.constant 4 : index
    %c0_109 = arith.constant 0 : index
    %c0_110 = arith.constant 0 : index
    %164 = vector.load %arg15[%c4_108, %c0_109, %c0_110] : memref<12x20x4xf32, #tpu.memory_space<vmem>>, vector<8x16x4xf32>
    %165 = vector.extract_strided_slice %61 {offsets = [4, 0, 0], sizes = [1, 1, 4], strides = [1, 1, 1]} : vector<5x5x4xf32> to vector<1x1x4xf32>
    %166 = vector.broadcast %165 : vector<1x1x4xf32> to vector<8x16x4xf32>
    %167 = arith.mulf %164, %166 : vector<8x16x4xf32>
    %168 = arith.addf %163, %167 : vector<8x16x4xf32>
    %c4_111 = arith.constant 4 : index
    %c1_112 = arith.constant 1 : index
    %c0_113 = arith.constant 0 : index
    %169 = vector.load %arg15[%c4_111, %c1_112, %c0_113] : memref<12x20x4xf32, #tpu.memory_space<vmem>>, vector<8x16x4xf32>
    %170 = vector.extract_strided_slice %61 {offsets = [4, 1, 0], sizes = [1, 1, 4], strides = [1, 1, 1]} : vector<5x5x4xf32> to vector<1x1x4xf32>
    %171 = vector.broadcast %170 : vector<1x1x4xf32> to vector<8x16x4xf32>
    %172 = arith.mulf %169, %171 : vector<8x16x4xf32>
    %173 = arith.addf %168, %172 : vector<8x16x4xf32>
    %c4_114 = arith.constant 4 : index
    %c2_115 = arith.constant 2 : index
    %c0_116 = arith.constant 0 : index
    %174 = vector.load %arg15[%c4_114, %c2_115, %c0_116] : memref<12x20x4xf32, #tpu.memory_space<vmem>>, vector<8x16x4xf32>
    %175 = vector.extract_strided_slice %61 {offsets = [4, 2, 0], sizes = [1, 1, 4], strides = [1, 1, 1]} : vector<5x5x4xf32> to vector<1x1x4xf32>
    %176 = vector.broadcast %175 : vector<1x1x4xf32> to vector<8x16x4xf32>
    %177 = arith.mulf %174, %176 : vector<8x16x4xf32>
    %178 = arith.addf %173, %177 : vector<8x16x4xf32>
    %c4_117 = arith.constant 4 : index
    %c3_118 = arith.constant 3 : index
    %c0_119 = arith.constant 0 : index
    %179 = vector.load %arg15[%c4_117, %c3_118, %c0_119] : memref<12x20x4xf32, #tpu.memory_space<vmem>>, vector<8x16x4xf32>
    %180 = vector.extract_strided_slice %61 {offsets = [4, 3, 0], sizes = [1, 1, 4], strides = [1, 1, 1]} : vector<5x5x4xf32> to vector<1x1x4xf32>
    %181 = vector.broadcast %180 : vector<1x1x4xf32> to vector<8x16x4xf32>
    %182 = arith.mulf %179, %181 : vector<8x16x4xf32>
    %183 = arith.addf %178, %182 : vector<8x16x4xf32>
    %c4_120 = arith.constant 4 : index
    %c4_121 = arith.constant 4 : index
    %c0_122 = arith.constant 0 : index
    %184 = vector.load %arg15[%c4_120, %c4_121, %c0_122] : memref<12x20x4xf32, #tpu.memory_space<vmem>>, vector<8x16x4xf32>
    %185 = vector.extract_strided_slice %61 {offsets = [4, 4, 0], sizes = [1, 1, 4], strides = [1, 1, 1]} : vector<5x5x4xf32> to vector<1x1x4xf32>
    %186 = vector.broadcast %185 : vector<1x1x4xf32> to vector<8x16x4xf32>
    %187 = arith.mulf %184, %186 : vector<8x16x4xf32>
    %188 = arith.addf %183, %187 : vector<8x16x4xf32>
    %189 = vector.broadcast %62 : vector<1x1x4xf32> to vector<8x16x4xf32>
    %190 = arith.addf %188, %189 : vector<8x16x4xf32>
    %191 = vector.shape_cast %60 : vector<8x16x4xf32> to vector<128x4xf32>
    %c0_123 = arith.constant 0 : index
    %c0_124 = arith.constant 0 : index
    %192 = vector.load %arg7[%c0_123, %c0_124] : memref<4x4xf32, #tpu.memory_space<vmem>>, vector<4x4xf32>
    %cst_125 = arith.constant dense<0.000000e+00> : vector<128x4xf32>
    %193 = tpu.matmul %191, %192, %cst_125 {dimension_numbers = #tpu.dot_dimension_numbers<[1], [0], [0], [1], [0, 0, 1, 1], [], []>} : vector<128x4xf32>, vector<4x4xf32>, vector<128x4xf32> -> vector<128x4xf32>
    %c0_126 = arith.constant 0 : index
    %c0_127 = arith.constant 0 : index
    %194 = vector.load %arg8[%c0_126, %c0_127] : memref<1x4xf32, #tpu.memory_space<vmem>>, vector<1x4xf32>
    %195 = vector.broadcast %194 : vector<1x4xf32> to vector<128x4xf32>
    %196 = arith.addf %193, %195 : vector<128x4xf32>
    %cst_128 = arith.constant 0.000000e+00 : f32
    %197 = vector.broadcast %cst_128 : f32 to vector<128x4xf32>
    %198 = arith.maximumf %196, %197 : vector<128x4xf32>
    %199 = vector.shape_cast %198 : vector<128x4xf32> to vector<8x16x4xf32>
    %c0_129 = arith.constant 0 : index
    %c0_130 = arith.constant 0 : index
    %c0_131 = arith.constant 0 : index
    %c0_132 = arith.constant 0 : index
    %200 = vector.load %arg13[%c0_129, %c0_130, %c0_131, %c0_132] : memref<1x8x16x4xf32, #tpu.memory_space<vmem>>, vector<1x8x16x4xf32>
    %201 = vector.shape_cast %200 : vector<1x8x16x4xf32> to vector<8x16x4xf32>
    %202 = vector.shape_cast %199 : vector<8x16x4xf32> to vector<1x8x16x4xf32>
    tpu.vector_store %arg13[%c0_129, %c0_130, %c0_131, %c0_132], %202 {strides = array<i32>} : memref<1x8x16x4xf32, #tpu.memory_space<vmem>>, vector<1x8x16x4xf32>,
    %203 = vector.shape_cast %190 : vector<8x16x4xf32> to vector<128x4xf32>
    %c0_133 = arith.constant 0 : index
    %c0_134 = arith.constant 0 : index
    %204 = vector.load %arg11[%c0_133, %c0_134] : memref<4x4xf32, #tpu.memory_space<vmem>>, vector<4x4xf32>
    %cst_135 = arith.constant dense<0.000000e+00> : vector<128x4xf32>
    %205 = tpu.matmul %203, %204, %cst_135 {dimension_numbers = #tpu.dot_dimension_numbers<[1], [0], [0], [1], [0, 0, 1, 1], [], []>} : vector<128x4xf32>, vector<4x4xf32>, vector<128x4xf32> -> vector<128x4xf32>
    %c0_136 = arith.constant 0 : index
    %c0_137 = arith.constant 0 : index
    %206 = vector.load %arg12[%c0_136, %c0_137] : memref<1x4xf32, #tpu.memory_space<vmem>>, vector<1x4xf32>
    %207 = vector.broadcast %206 : vector<1x4xf32> to vector<128x4xf32>
    %208 = arith.addf %205, %207 : vector<128x4xf32>
    %cst_138 = arith.constant 0.000000e+00 : f32
    %209 = vector.broadcast %cst_138 : f32 to vector<128x4xf32>
    %210 = arith.maximumf %208, %209 : vector<128x4xf32>
    %211 = vector.shape_cast %210 : vector<128x4xf32> to vector<8x16x4xf32>
    %c0_139 = arith.constant 0 : index
    %c0_140 = arith.constant 0 : index
    %c0_141 = arith.constant 0 : index
    %c0_142 = arith.constant 0 : index
    %212 = vector.load %arg14[%c0_139, %c0_140, %c0_141, %c0_142] : memref<1x8x16x4xf32, #tpu.memory_space<vmem>>, vector<1x8x16x4xf32>
    %213 = vector.shape_cast %212 : vector<1x8x16x4xf32> to vector<8x16x4xf32>
    %214 = vector.shape_cast %211 : vector<8x16x4xf32> to vector<1x8x16x4xf32>
    tpu.vector_store %arg14[%c0_139, %c0_140, %c0_141, %c0_142], %214 {strides = array<i32>} : memref<1x8x16x4xf32, #tpu.memory_space<vmem>>, vector<1x8x16x4xf32>,
    return
  }
  func.func @transform_0(%arg0: i32, %arg1: i32) -> (i32, i32, i32, i32) {
    %c0_i32 = arith.constant 0 : i32
    %c0_i32_0 = arith.constant 0 : i32
    %c0_i32_1 = arith.constant 0 : i32
    return %arg0, %arg1, %c0_i32, %c0_i32_0 : i32, i32, i32, i32
  }
  func.func @transform_1(%arg0: i32, %arg1: i32) -> (i32, i32, i32, i32) {
    %c4_i32 = arith.constant 4 : i32
    %0 = arith.muli %arg1, %c4_i32 : i32
    %c1_i32 = arith.constant 1 : i32
    %1 = arith.subi %0, %c1_i32 : i32
    %c0_i32 = arith.constant 0 : i32
    %2 = arith.maxsi %1, %c0_i32 : i32
    %c0_i32_0 = arith.constant 0 : i32
    %c0_i32_1 = arith.constant 0 : i32
    %c0_i32_2 = arith.constant 0 : i32
    return %arg0, %2, %c0_i32_0, %c0_i32_1 : i32, i32, i32, i32
  }
  func.func @transform_2(%arg0: i32, %arg1: i32) -> (i32, i32, i32, i32) {
    %c1_i32 = arith.constant 1 : i32
    %0 = arith.addi %arg1, %c1_i32 : i32
    %c4_i32 = arith.constant 4 : i32
    %1 = arith.muli %0, %c4_i32 : i32
    %c7_i32 = arith.constant 7 : i32
    %2 = arith.minsi %1, %c7_i32 : i32
    %c0_i32 = arith.constant 0 : i32
    %c0_i32_0 = arith.constant 0 : i32
    %c0_i32_1 = arith.constant 0 : i32
    return %arg0, %2, %c0_i32, %c0_i32_0 : i32, i32, i32, i32
  }
  func.func @transform_3(%arg0: i32, %arg1: i32) -> (i32, i32, i32) {
    %c0_i32 = arith.constant 0 : i32
    %c0_i32_0 = arith.constant 0 : i32
    %c0_i32_1 = arith.constant 0 : i32
    %c0_i32_2 = arith.constant 0 : i32
    return %c0_i32, %c0_i32_0, %c0_i32_1 : i32, i32, i32
  }
  func.func @transform_4(%arg0: i32, %arg1: i32) -> (i32, i32, i32) {
    %c0_i32 = arith.constant 0 : i32
    %c0_i32_0 = arith.constant 0 : i32
    %c0_i32_1 = arith.constant 0 : i32
    %c0_i32_2 = arith.constant 0 : i32
    return %c0_i32, %c0_i32_0, %c0_i32_1 : i32, i32, i32
  }
  func.func @transform_5(%arg0: i32, %arg1: i32) -> (i32, i32) {
    %c0_i32 = arith.constant 0 : i32
    %c0_i32_0 = arith.constant 0 : i32
    %c0_i32_1 = arith.constant 0 : i32
    return %c0_i32, %c0_i32_0 : i32, i32
  }
  func.func @transform_6(%arg0: i32, %arg1: i32) -> (i32, i32) {
    %c0_i32 = arith.constant 0 : i32
    %c0_i32_0 = arith.constant 0 : i32
    %c0_i32_1 = arith.constant 0 : i32
    return %c0_i32, %c0_i32_0 : i32, i32
  }
  func.func @transform_7(%arg0: i32, %arg1: i32) -> (i32, i32, i32) {
    %c0_i32 = arith.constant 0 : i32
    %c0_i32_0 = arith.constant 0 : i32
    %c0_i32_1 = arith.constant 0 : i32
    %c0_i32_2 = arith.constant 0 : i32
    return %c0_i32, %c0_i32_0, %c0_i32_1 : i32, i32, i32
  }
  func.func @transform_8(%arg0: i32, %arg1: i32) -> (i32, i32, i32) {
    %c0_i32 = arith.constant 0 : i32
    %c0_i32_0 = arith.constant 0 : i32
    %c0_i32_1 = arith.constant 0 : i32
    %c0_i32_2 = arith.constant 0 : i32
    return %c0_i32, %c0_i32_0, %c0_i32_1 : i32, i32, i32
  }
  func.func @transform_9(%arg0: i32, %arg1: i32) -> (i32, i32) {
    %c0_i32 = arith.constant 0 : i32
    %c0_i32_0 = arith.constant 0 : i32
    %c0_i32_1 = arith.constant 0 : i32
    return %c0_i32, %c0_i32_0 : i32, i32
  }
  func.func @transform_10(%arg0: i32, %arg1: i32) -> (i32, i32) {
    %c0_i32 = arith.constant 0 : i32
    %c0_i32_0 = arith.constant 0 : i32
    %c0_i32_1 = arith.constant 0 : i32
    return %c0_i32, %c0_i32_0 : i32, i32
  }
  func.func @transform_11(%arg0: i32, %arg1: i32) -> (i32, i32, i32, i32) {
    %c0_i32 = arith.constant 0 : i32
    %c0_i32_0 = arith.constant 0 : i32
    %c0_i32_1 = arith.constant 0 : i32
    return %arg0, %arg1, %c0_i32, %c0_i32_0 : i32, i32, i32, i32
  }
  func.func @transform_12(%arg0: i32, %arg1: i32) -> (i32, i32, i32, i32) {
    %c0_i32 = arith.constant 0 : i32
    %c0_i32_0 = arith.constant 0 : i32
    %c0_i32_1 = arith.constant 0 : i32
    return %arg0, %arg1, %c0_i32, %c0_i32_0 : i32, i32, i32, i32
  }
}

module attributes {stable_mosaic.version = 11 : i64} {
  func.func @_msrb_stage2_kernel(%arg0: i32, %arg1: i32, %arg2: memref<1x8x16x4xf32, #tpu.memory_space<vmem>>, %arg3: memref<1x2x16x4xf32, #tpu.memory_space<vmem>>, %arg4: memref<1x2x16x4xf32, #tpu.memory_space<vmem>>, %arg5: memref<1x8x16x4xf32, #tpu.memory_space<vmem>>, %arg6: memref<1x2x16x4xf32, #tpu.memory_space<vmem>>, %arg7: memref<1x2x16x4xf32, #tpu.memory_space<vmem>>, %arg8: memref<1x8x16x4xf32, #tpu.memory_space<vmem>>, %arg9: memref<2x3x3x4xf32, #tpu.memory_space<vmem>>, %arg10: memref<2x1x4xf32, #tpu.memory_space<vmem>>, %arg11: memref<2x4x8xf32, #tpu.memory_space<vmem>>, %arg12: memref<1x8xf32, #tpu.memory_space<vmem>>, %arg13: memref<2x5x5x4xf32, #tpu.memory_space<vmem>>, %arg14: memref<2x1x4xf32, #tpu.memory_space<vmem>>, %arg15: memref<2x4x8xf32, #tpu.memory_space<vmem>>, %arg16: memref<1x8xf32, #tpu.memory_space<vmem>>, %arg17: memref<2x8x4xf32, #tpu.memory_space<vmem>>, %arg18: memref<1x4xf32, #tpu.memory_space<vmem>>, %arg19: memref<1x8x16x4xf32, #tpu.memory_space<vmem>>, %arg20: memref<12x20x4xf32, #tpu.memory_space<vmem>>, %arg21: memref<12x20x4xf32, #tpu.memory_space<vmem>>) attributes {dimension_semantics = [#tpu.dimension_semantics<parallel>, #tpu.dimension_semantics<parallel>], iteration_bounds = array<i64: 2, 2>, scalar_prefetch = 0 : i64, scratch_operands = 2 : i64, tpu.core_type = #tpu.core_type<tc>, window_params = [{transform_indices = @transform_0, window_bounds = array<i64: 1, 8, 16, 4>}, {transform_indices = @transform_1, window_bounds = array<i64: 1, 2, 16, 4>}, {transform_indices = @transform_2, window_bounds = array<i64: 1, 2, 16, 4>}, {transform_indices = @transform_3, window_bounds = array<i64: 1, 8, 16, 4>}, {transform_indices = @transform_4, window_bounds = array<i64: 1, 2, 16, 4>}, {transform_indices = @transform_5, window_bounds = array<i64: 1, 2, 16, 4>}, {transform_indices = @transform_6, window_bounds = array<i64: 1, 8, 16, 4>}, {pipeline_mode = #tpu.pipeline_mode<synchronous>, transform_indices = @transform_7, window_bounds = array<i64: 2, 3, 3, 4>}, {pipeline_mode = #tpu.pipeline_mode<synchronous>, transform_indices = @transform_8, window_bounds = array<i64: 2, 1, 4>}, {pipeline_mode = #tpu.pipeline_mode<synchronous>, transform_indices = @transform_9, window_bounds = array<i64: 2, 4, 8>}, {pipeline_mode = #tpu.pipeline_mode<synchronous>, transform_indices = @transform_10, window_bounds = array<i64: 1, 8>}, {pipeline_mode = #tpu.pipeline_mode<synchronous>, transform_indices = @transform_11, window_bounds = array<i64: 2, 5, 5, 4>}, {pipeline_mode = #tpu.pipeline_mode<synchronous>, transform_indices = @transform_12, window_bounds = array<i64: 2, 1, 4>}, {pipeline_mode = #tpu.pipeline_mode<synchronous>, transform_indices = @transform_13, window_bounds = array<i64: 2, 4, 8>}, {pipeline_mode = #tpu.pipeline_mode<synchronous>, transform_indices = @transform_14, window_bounds = array<i64: 1, 8>}, {pipeline_mode = #tpu.pipeline_mode<synchronous>, transform_indices = @transform_15, window_bounds = array<i64: 2, 8, 4>}, {pipeline_mode = #tpu.pipeline_mode<synchronous>, transform_indices = @transform_16, window_bounds = array<i64: 1, 4>}, {transform_indices = @transform_17, window_bounds = array<i64: 1, 8, 16, 4>}]} {
    %cst = arith.constant 0.000000e+00 : f32
    %0 = vector.broadcast %cst : f32 to vector<12x20x4xf32>
    %c0 = arith.constant 0 : index
    %c0_0 = arith.constant 0 : index
    %c0_1 = arith.constant 0 : index
    %1 = vector.load %arg20[%c0, %c0_0, %c0_1] : memref<12x20x4xf32, #tpu.memory_space<vmem>>, vector<12x20x4xf32>
    tpu.vector_store %arg20[%c0, %c0_0, %c0_1], %0 {strides = array<i32>} : memref<12x20x4xf32, #tpu.memory_space<vmem>>, vector<12x20x4xf32>,
    %c0_2 = arith.constant 0 : index
    %c0_3 = arith.constant 0 : index
    %c0_4 = arith.constant 0 : index
    %c0_5 = arith.constant 0 : index
    %2 = vector.load %arg2[%c0_2, %c0_3, %c0_4, %c0_5] : memref<1x8x16x4xf32, #tpu.memory_space<vmem>>, vector<1x8x16x4xf32>
    %3 = vector.shape_cast %2 : vector<1x8x16x4xf32> to vector<8x16x4xf32>
    %c2 = arith.constant 2 : index
    %c2_6 = arith.constant 2 : index
    %c0_7 = arith.constant 0 : index
    %4 = vector.load %arg20[%c2, %c2_6, %c0_7] : memref<12x20x4xf32, #tpu.memory_space<vmem>>, vector<8x16x4xf32>
    tpu.vector_store %arg20[%c2, %c2_6, %c0_7], %3 {strides = array<i32>} : memref<12x20x4xf32, #tpu.memory_space<vmem>>, vector<8x16x4xf32>,
    %c0_i32 = arith.constant 0 : i32
    %5 = arith.cmpi sgt, %arg1, %c0_i32 : i32
    %6 = arith.extui %5 : i1 to i32
    %c0_i32_8 = arith.constant 0 : i32
    %7 = arith.cmpi ne, %6, %c0_i32_8 : i32
    scf.if %7 {
      %c0_298 = arith.constant 0 : index
      %c0_299 = arith.constant 0 : index
      %c0_300 = arith.constant 0 : index
      %c0_301 = arith.constant 0 : index
      %431 = vector.load %arg3[%c0_298, %c0_299, %c0_300, %c0_301] : memref<1x2x16x4xf32, #tpu.memory_space<vmem>>, vector<1x2x16x4xf32>
      %432 = vector.shape_cast %431 : vector<1x2x16x4xf32> to vector<2x16x4xf32>
      %c0_302 = arith.constant 0 : index
      %c2_303 = arith.constant 2 : index
      %c0_304 = arith.constant 0 : index
      %433 = vector.load %arg20[%c0_302, %c2_303, %c0_304] : memref<12x20x4xf32, #tpu.memory_space<vmem>>, vector<2x16x4xf32>
      tpu.vector_store %arg20[%c0_302, %c2_303, %c0_304], %432 {strides = array<i32>} : memref<12x20x4xf32, #tpu.memory_space<vmem>>, vector<2x16x4xf32>,
    } else {
    }
    %c1_i32 = arith.constant 1 : i32
    %8 = arith.cmpi slt, %arg1, %c1_i32 : i32
    %9 = arith.extui %8 : i1 to i32
    %c0_i32_9 = arith.constant 0 : i32
    %10 = arith.cmpi ne, %9, %c0_i32_9 : i32
    scf.if %10 {
      %c0_298 = arith.constant 0 : index
      %c0_299 = arith.constant 0 : index
      %c0_300 = arith.constant 0 : index
      %c0_301 = arith.constant 0 : index
      %431 = vector.load %arg4[%c0_298, %c0_299, %c0_300, %c0_301] : memref<1x2x16x4xf32, #tpu.memory_space<vmem>>, vector<1x2x16x4xf32>
      %432 = vector.shape_cast %431 : vector<1x2x16x4xf32> to vector<2x16x4xf32>
      %c10 = arith.constant 10 : index
      %c2_302 = arith.constant 2 : index
      %c0_303 = arith.constant 0 : index
      %433 = vector.load %arg20[%c10, %c2_302, %c0_303] : memref<12x20x4xf32, #tpu.memory_space<vmem>>, vector<2x16x4xf32>
      tpu.vector_store %arg20[%c10, %c2_302, %c0_303], %432 {strides = array<i32>} : memref<12x20x4xf32, #tpu.memory_space<vmem>>, vector<2x16x4xf32>,
    } else {
    }
    %cst_10 = arith.constant 0.000000e+00 : f32
    %11 = vector.broadcast %cst_10 : f32 to vector<12x20x4xf32>
    %c0_11 = arith.constant 0 : index
    %c0_12 = arith.constant 0 : index
    %c0_13 = arith.constant 0 : index
    %12 = vector.load %arg21[%c0_11, %c0_12, %c0_13] : memref<12x20x4xf32, #tpu.memory_space<vmem>>, vector<12x20x4xf32>
    tpu.vector_store %arg21[%c0_11, %c0_12, %c0_13], %11 {strides = array<i32>} : memref<12x20x4xf32, #tpu.memory_space<vmem>>, vector<12x20x4xf32>,
    %c0_14 = arith.constant 0 : index
    %c0_15 = arith.constant 0 : index
    %c0_16 = arith.constant 0 : index
    %c0_17 = arith.constant 0 : index
    %13 = vector.load %arg5[%c0_14, %c0_15, %c0_16, %c0_17] : memref<1x8x16x4xf32, #tpu.memory_space<vmem>>, vector<1x8x16x4xf32>
    %14 = vector.shape_cast %13 : vector<1x8x16x4xf32> to vector<8x16x4xf32>
    %c2_18 = arith.constant 2 : index
    %c2_19 = arith.constant 2 : index
    %c0_20 = arith.constant 0 : index
    %15 = vector.load %arg21[%c2_18, %c2_19, %c0_20] : memref<12x20x4xf32, #tpu.memory_space<vmem>>, vector<8x16x4xf32>
    tpu.vector_store %arg21[%c2_18, %c2_19, %c0_20], %14 {strides = array<i32>} : memref<12x20x4xf32, #tpu.memory_space<vmem>>, vector<8x16x4xf32>,
    %c0_i32_21 = arith.constant 0 : i32
    %16 = arith.cmpi sgt, %arg1, %c0_i32_21 : i32
    %17 = arith.extui %16 : i1 to i32
    %c0_i32_22 = arith.constant 0 : i32
    %18 = arith.cmpi ne, %17, %c0_i32_22 : i32
    scf.if %18 {
      %c0_298 = arith.constant 0 : index
      %c0_299 = arith.constant 0 : index
      %c0_300 = arith.constant 0 : index
      %c0_301 = arith.constant 0 : index
      %431 = vector.load %arg6[%c0_298, %c0_299, %c0_300, %c0_301] : memref<1x2x16x4xf32, #tpu.memory_space<vmem>>, vector<1x2x16x4xf32>
      %432 = vector.shape_cast %431 : vector<1x2x16x4xf32> to vector<2x16x4xf32>
      %c0_302 = arith.constant 0 : index
      %c2_303 = arith.constant 2 : index
      %c0_304 = arith.constant 0 : index
      %433 = vector.load %arg21[%c0_302, %c2_303, %c0_304] : memref<12x20x4xf32, #tpu.memory_space<vmem>>, vector<2x16x4xf32>
      tpu.vector_store %arg21[%c0_302, %c2_303, %c0_304], %432 {strides = array<i32>} : memref<12x20x4xf32, #tpu.memory_space<vmem>>, vector<2x16x4xf32>,
    } else {
    }
    %c1_i32_23 = arith.constant 1 : i32
    %19 = arith.cmpi slt, %arg1, %c1_i32_23 : i32
    %20 = arith.extui %19 : i1 to i32
    %c0_i32_24 = arith.constant 0 : i32
    %21 = arith.cmpi ne, %20, %c0_i32_24 : i32
    scf.if %21 {
      %c0_298 = arith.constant 0 : index
      %c0_299 = arith.constant 0 : index
      %c0_300 = arith.constant 0 : index
      %c0_301 = arith.constant 0 : index
      %431 = vector.load %arg7[%c0_298, %c0_299, %c0_300, %c0_301] : memref<1x2x16x4xf32, #tpu.memory_space<vmem>>, vector<1x2x16x4xf32>
      %432 = vector.shape_cast %431 : vector<1x2x16x4xf32> to vector<2x16x4xf32>
      %c10 = arith.constant 10 : index
      %c2_302 = arith.constant 2 : index
      %c0_303 = arith.constant 0 : index
      %433 = vector.load %arg21[%c10, %c2_302, %c0_303] : memref<12x20x4xf32, #tpu.memory_space<vmem>>, vector<2x16x4xf32>
      tpu.vector_store %arg21[%c10, %c2_302, %c0_303], %432 {strides = array<i32>} : memref<12x20x4xf32, #tpu.memory_space<vmem>>, vector<2x16x4xf32>,
    } else {
    }
    %c0_25 = arith.constant 0 : index
    %c0_26 = arith.constant 0 : index
    %c0_27 = arith.constant 0 : index
    %c0_28 = arith.constant 0 : index
    %22 = vector.load %arg9[%c0_25, %c0_26, %c0_27, %c0_28] : memref<2x3x3x4xf32, #tpu.memory_space<vmem>>, vector<1x3x3x4xf32>
    %23 = vector.shape_cast %22 : vector<1x3x3x4xf32> to vector<3x3x4xf32>
    %c0_29 = arith.constant 0 : index
    %c0_30 = arith.constant 0 : index
    %c0_31 = arith.constant 0 : index
    %24 = vector.load %arg10[%c0_29, %c0_30, %c0_31] : memref<2x1x4xf32, #tpu.memory_space<vmem>>, vector<1x1x4xf32>
    %cst_32 = arith.constant 0.000000e+00 : f32
    %25 = vector.broadcast %cst_32 : f32 to vector<8x16x4xf32>
    %c1 = arith.constant 1 : index
    %c1_33 = arith.constant 1 : index
    %c0_34 = arith.constant 0 : index
    %26 = vector.load %arg20[%c1, %c1_33, %c0_34] : memref<12x20x4xf32, #tpu.memory_space<vmem>>, vector<8x16x4xf32>
    %27 = vector.extract_strided_slice %23 {offsets = [0, 0, 0], sizes = [1, 1, 4], strides = [1, 1, 1]} : vector<3x3x4xf32> to vector<1x1x4xf32>
    %28 = vector.broadcast %27 : vector<1x1x4xf32> to vector<8x16x4xf32>
    %29 = arith.mulf %26, %28 : vector<8x16x4xf32>
    %30 = arith.addf %25, %29 : vector<8x16x4xf32>
    %c1_35 = arith.constant 1 : index
    %c2_36 = arith.constant 2 : index
    %c0_37 = arith.constant 0 : index
    %31 = vector.load %arg20[%c1_35, %c2_36, %c0_37] : memref<12x20x4xf32, #tpu.memory_space<vmem>>, vector<8x16x4xf32>
    %32 = vector.extract_strided_slice %23 {offsets = [0, 1, 0], sizes = [1, 1, 4], strides = [1, 1, 1]} : vector<3x3x4xf32> to vector<1x1x4xf32>
    %33 = vector.broadcast %32 : vector<1x1x4xf32> to vector<8x16x4xf32>
    %34 = arith.mulf %31, %33 : vector<8x16x4xf32>
    %35 = arith.addf %30, %34 : vector<8x16x4xf32>
    %c1_38 = arith.constant 1 : index
    %c3 = arith.constant 3 : index
    %c0_39 = arith.constant 0 : index
    %36 = vector.load %arg20[%c1_38, %c3, %c0_39] : memref<12x20x4xf32, #tpu.memory_space<vmem>>, vector<8x16x4xf32>
    %37 = vector.extract_strided_slice %23 {offsets = [0, 2, 0], sizes = [1, 1, 4], strides = [1, 1, 1]} : vector<3x3x4xf32> to vector<1x1x4xf32>
    %38 = vector.broadcast %37 : vector<1x1x4xf32> to vector<8x16x4xf32>
    %39 = arith.mulf %36, %38 : vector<8x16x4xf32>
    %40 = arith.addf %35, %39 : vector<8x16x4xf32>
    %c2_40 = arith.constant 2 : index
    %c1_41 = arith.constant 1 : index
    %c0_42 = arith.constant 0 : index
    %41 = vector.load %arg20[%c2_40, %c1_41, %c0_42] : memref<12x20x4xf32, #tpu.memory_space<vmem>>, vector<8x16x4xf32>
    %42 = vector.extract_strided_slice %23 {offsets = [1, 0, 0], sizes = [1, 1, 4], strides = [1, 1, 1]} : vector<3x3x4xf32> to vector<1x1x4xf32>
    %43 = vector.broadcast %42 : vector<1x1x4xf32> to vector<8x16x4xf32>
    %44 = arith.mulf %41, %43 : vector<8x16x4xf32>
    %45 = arith.addf %40, %44 : vector<8x16x4xf32>
    %c2_43 = arith.constant 2 : index
    %c2_44 = arith.constant 2 : index
    %c0_45 = arith.constant 0 : index
    %46 = vector.load %arg20[%c2_43, %c2_44, %c0_45] : memref<12x20x4xf32, #tpu.memory_space<vmem>>, vector<8x16x4xf32>
    %47 = vector.extract_strided_slice %23 {offsets = [1, 1, 0], sizes = [1, 1, 4], strides = [1, 1, 1]} : vector<3x3x4xf32> to vector<1x1x4xf32>
    %48 = vector.broadcast %47 : vector<1x1x4xf32> to vector<8x16x4xf32>
    %49 = arith.mulf %46, %48 : vector<8x16x4xf32>
    %50 = arith.addf %45, %49 : vector<8x16x4xf32>
    %c2_46 = arith.constant 2 : index
    %c3_47 = arith.constant 3 : index
    %c0_48 = arith.constant 0 : index
    %51 = vector.load %arg20[%c2_46, %c3_47, %c0_48] : memref<12x20x4xf32, #tpu.memory_space<vmem>>, vector<8x16x4xf32>
    %52 = vector.extract_strided_slice %23 {offsets = [1, 2, 0], sizes = [1, 1, 4], strides = [1, 1, 1]} : vector<3x3x4xf32> to vector<1x1x4xf32>
    %53 = vector.broadcast %52 : vector<1x1x4xf32> to vector<8x16x4xf32>
    %54 = arith.mulf %51, %53 : vector<8x16x4xf32>
    %55 = arith.addf %50, %54 : vector<8x16x4xf32>
    %c3_49 = arith.constant 3 : index
    %c1_50 = arith.constant 1 : index
    %c0_51 = arith.constant 0 : index
    %56 = vector.load %arg20[%c3_49, %c1_50, %c0_51] : memref<12x20x4xf32, #tpu.memory_space<vmem>>, vector<8x16x4xf32>
    %57 = vector.extract_strided_slice %23 {offsets = [2, 0, 0], sizes = [1, 1, 4], strides = [1, 1, 1]} : vector<3x3x4xf32> to vector<1x1x4xf32>
    %58 = vector.broadcast %57 : vector<1x1x4xf32> to vector<8x16x4xf32>
    %59 = arith.mulf %56, %58 : vector<8x16x4xf32>
    %60 = arith.addf %55, %59 : vector<8x16x4xf32>
    %c3_52 = arith.constant 3 : index
    %c2_53 = arith.constant 2 : index
    %c0_54 = arith.constant 0 : index
    %61 = vector.load %arg20[%c3_52, %c2_53, %c0_54] : memref<12x20x4xf32, #tpu.memory_space<vmem>>, vector<8x16x4xf32>
    %62 = vector.extract_strided_slice %23 {offsets = [2, 1, 0], sizes = [1, 1, 4], strides = [1, 1, 1]} : vector<3x3x4xf32> to vector<1x1x4xf32>
    %63 = vector.broadcast %62 : vector<1x1x4xf32> to vector<8x16x4xf32>
    %64 = arith.mulf %61, %63 : vector<8x16x4xf32>
    %65 = arith.addf %60, %64 : vector<8x16x4xf32>
    %c3_55 = arith.constant 3 : index
    %c3_56 = arith.constant 3 : index
    %c0_57 = arith.constant 0 : index
    %66 = vector.load %arg20[%c3_55, %c3_56, %c0_57] : memref<12x20x4xf32, #tpu.memory_space<vmem>>, vector<8x16x4xf32>
    %67 = vector.extract_strided_slice %23 {offsets = [2, 2, 0], sizes = [1, 1, 4], strides = [1, 1, 1]} : vector<3x3x4xf32> to vector<1x1x4xf32>
    %68 = vector.broadcast %67 : vector<1x1x4xf32> to vector<8x16x4xf32>
    %69 = arith.mulf %66, %68 : vector<8x16x4xf32>
    %70 = arith.addf %65, %69 : vector<8x16x4xf32>
    %71 = vector.broadcast %24 : vector<1x1x4xf32> to vector<8x16x4xf32>
    %72 = arith.addf %70, %71 : vector<8x16x4xf32>
    %c1_58 = arith.constant 1 : index
    %c0_59 = arith.constant 0 : index
    %c0_60 = arith.constant 0 : index
    %c0_61 = arith.constant 0 : index
    %73 = vector.load %arg9[%c1_58, %c0_59, %c0_60, %c0_61] : memref<2x3x3x4xf32, #tpu.memory_space<vmem>>, vector<1x3x3x4xf32>
    %74 = vector.shape_cast %73 : vector<1x3x3x4xf32> to vector<3x3x4xf32>
    %c1_62 = arith.constant 1 : index
    %c0_63 = arith.constant 0 : index
    %c0_64 = arith.constant 0 : index
    %75 = vector.load %arg10[%c1_62, %c0_63, %c0_64] : memref<2x1x4xf32, #tpu.memory_space<vmem>>, vector<1x1x4xf32>
    %cst_65 = arith.constant 0.000000e+00 : f32
    %76 = vector.broadcast %cst_65 : f32 to vector<8x16x4xf32>
    %c1_66 = arith.constant 1 : index
    %c1_67 = arith.constant 1 : index
    %c0_68 = arith.constant 0 : index
    %77 = vector.load %arg21[%c1_66, %c1_67, %c0_68] : memref<12x20x4xf32, #tpu.memory_space<vmem>>, vector<8x16x4xf32>
    %78 = vector.extract_strided_slice %74 {offsets = [0, 0, 0], sizes = [1, 1, 4], strides = [1, 1, 1]} : vector<3x3x4xf32> to vector<1x1x4xf32>
    %79 = vector.broadcast %78 : vector<1x1x4xf32> to vector<8x16x4xf32>
    %80 = arith.mulf %77, %79 : vector<8x16x4xf32>
    %81 = arith.addf %76, %80 : vector<8x16x4xf32>
    %c1_69 = arith.constant 1 : index
    %c2_70 = arith.constant 2 : index
    %c0_71 = arith.constant 0 : index
    %82 = vector.load %arg21[%c1_69, %c2_70, %c0_71] : memref<12x20x4xf32, #tpu.memory_space<vmem>>, vector<8x16x4xf32>
    %83 = vector.extract_strided_slice %74 {offsets = [0, 1, 0], sizes = [1, 1, 4], strides = [1, 1, 1]} : vector<3x3x4xf32> to vector<1x1x4xf32>
    %84 = vector.broadcast %83 : vector<1x1x4xf32> to vector<8x16x4xf32>
    %85 = arith.mulf %82, %84 : vector<8x16x4xf32>
    %86 = arith.addf %81, %85 : vector<8x16x4xf32>
    %c1_72 = arith.constant 1 : index
    %c3_73 = arith.constant 3 : index
    %c0_74 = arith.constant 0 : index
    %87 = vector.load %arg21[%c1_72, %c3_73, %c0_74] : memref<12x20x4xf32, #tpu.memory_space<vmem>>, vector<8x16x4xf32>
    %88 = vector.extract_strided_slice %74 {offsets = [0, 2, 0], sizes = [1, 1, 4], strides = [1, 1, 1]} : vector<3x3x4xf32> to vector<1x1x4xf32>
    %89 = vector.broadcast %88 : vector<1x1x4xf32> to vector<8x16x4xf32>
    %90 = arith.mulf %87, %89 : vector<8x16x4xf32>
    %91 = arith.addf %86, %90 : vector<8x16x4xf32>
    %c2_75 = arith.constant 2 : index
    %c1_76 = arith.constant 1 : index
    %c0_77 = arith.constant 0 : index
    %92 = vector.load %arg21[%c2_75, %c1_76, %c0_77] : memref<12x20x4xf32, #tpu.memory_space<vmem>>, vector<8x16x4xf32>
    %93 = vector.extract_strided_slice %74 {offsets = [1, 0, 0], sizes = [1, 1, 4], strides = [1, 1, 1]} : vector<3x3x4xf32> to vector<1x1x4xf32>
    %94 = vector.broadcast %93 : vector<1x1x4xf32> to vector<8x16x4xf32>
    %95 = arith.mulf %92, %94 : vector<8x16x4xf32>
    %96 = arith.addf %91, %95 : vector<8x16x4xf32>
    %c2_78 = arith.constant 2 : index
    %c2_79 = arith.constant 2 : index
    %c0_80 = arith.constant 0 : index
    %97 = vector.load %arg21[%c2_78, %c2_79, %c0_80] : memref<12x20x4xf32, #tpu.memory_space<vmem>>, vector<8x16x4xf32>
    %98 = vector.extract_strided_slice %74 {offsets = [1, 1, 0], sizes = [1, 1, 4], strides = [1, 1, 1]} : vector<3x3x4xf32> to vector<1x1x4xf32>
    %99 = vector.broadcast %98 : vector<1x1x4xf32> to vector<8x16x4xf32>
    %100 = arith.mulf %97, %99 : vector<8x16x4xf32>
    %101 = arith.addf %96, %100 : vector<8x16x4xf32>
    %c2_81 = arith.constant 2 : index
    %c3_82 = arith.constant 3 : index
    %c0_83 = arith.constant 0 : index
    %102 = vector.load %arg21[%c2_81, %c3_82, %c0_83] : memref<12x20x4xf32, #tpu.memory_space<vmem>>, vector<8x16x4xf32>
    %103 = vector.extract_strided_slice %74 {offsets = [1, 2, 0], sizes = [1, 1, 4], strides = [1, 1, 1]} : vector<3x3x4xf32> to vector<1x1x4xf32>
    %104 = vector.broadcast %103 : vector<1x1x4xf32> to vector<8x16x4xf32>
    %105 = arith.mulf %102, %104 : vector<8x16x4xf32>
    %106 = arith.addf %101, %105 : vector<8x16x4xf32>
    %c3_84 = arith.constant 3 : index
    %c1_85 = arith.constant 1 : index
    %c0_86 = arith.constant 0 : index
    %107 = vector.load %arg21[%c3_84, %c1_85, %c0_86] : memref<12x20x4xf32, #tpu.memory_space<vmem>>, vector<8x16x4xf32>
    %108 = vector.extract_strided_slice %74 {offsets = [2, 0, 0], sizes = [1, 1, 4], strides = [1, 1, 1]} : vector<3x3x4xf32> to vector<1x1x4xf32>
    %109 = vector.broadcast %108 : vector<1x1x4xf32> to vector<8x16x4xf32>
    %110 = arith.mulf %107, %109 : vector<8x16x4xf32>
    %111 = arith.addf %106, %110 : vector<8x16x4xf32>
    %c3_87 = arith.constant 3 : index
    %c2_88 = arith.constant 2 : index
    %c0_89 = arith.constant 0 : index
    %112 = vector.load %arg21[%c3_87, %c2_88, %c0_89] : memref<12x20x4xf32, #tpu.memory_space<vmem>>, vector<8x16x4xf32>
    %113 = vector.extract_strided_slice %74 {offsets = [2, 1, 0], sizes = [1, 1, 4], strides = [1, 1, 1]} : vector<3x3x4xf32> to vector<1x1x4xf32>
    %114 = vector.broadcast %113 : vector<1x1x4xf32> to vector<8x16x4xf32>
    %115 = arith.mulf %112, %114 : vector<8x16x4xf32>
    %116 = arith.addf %111, %115 : vector<8x16x4xf32>
    %c3_90 = arith.constant 3 : index
    %c3_91 = arith.constant 3 : index
    %c0_92 = arith.constant 0 : index
    %117 = vector.load %arg21[%c3_90, %c3_91, %c0_92] : memref<12x20x4xf32, #tpu.memory_space<vmem>>, vector<8x16x4xf32>
    %118 = vector.extract_strided_slice %74 {offsets = [2, 2, 0], sizes = [1, 1, 4], strides = [1, 1, 1]} : vector<3x3x4xf32> to vector<1x1x4xf32>
    %119 = vector.broadcast %118 : vector<1x1x4xf32> to vector<8x16x4xf32>
    %120 = arith.mulf %117, %119 : vector<8x16x4xf32>
    %121 = arith.addf %116, %120 : vector<8x16x4xf32>
    %122 = vector.broadcast %75 : vector<1x1x4xf32> to vector<8x16x4xf32>
    %123 = arith.addf %121, %122 : vector<8x16x4xf32>
    %124 = vector.shape_cast %72 : vector<8x16x4xf32> to vector<128x4xf32>
    %c0_93 = arith.constant 0 : index
    %c0_94 = arith.constant 0 : index
    %c0_95 = arith.constant 0 : index
    %125 = vector.load %arg11[%c0_93, %c0_94, %c0_95] : memref<2x4x8xf32, #tpu.memory_space<vmem>>, vector<1x4x8xf32>
    %126 = vector.shape_cast %125 : vector<1x4x8xf32> to vector<4x8xf32>
    %cst_96 = arith.constant dense<0.000000e+00> : vector<128x8xf32>
    %127 = tpu.matmul %124, %126, %cst_96 {dimension_numbers = #tpu.dot_dimension_numbers<[1], [0], [0], [1], [0, 0, 1, 1], [], []>} : vector<128x4xf32>, vector<4x8xf32>, vector<128x8xf32> -> vector<128x8xf32>
    %128 = vector.shape_cast %123 : vector<8x16x4xf32> to vector<128x4xf32>
    %c1_97 = arith.constant 1 : index
    %c0_98 = arith.constant 0 : index
    %c0_99 = arith.constant 0 : index
    %129 = vector.load %arg11[%c1_97, %c0_98, %c0_99] : memref<2x4x8xf32, #tpu.memory_space<vmem>>, vector<1x4x8xf32>
    %130 = vector.shape_cast %129 : vector<1x4x8xf32> to vector<4x8xf32>
    %cst_100 = arith.constant dense<0.000000e+00> : vector<128x8xf32>
    %131 = tpu.matmul %128, %130, %cst_100 {dimension_numbers = #tpu.dot_dimension_numbers<[1], [0], [0], [1], [0, 0, 1, 1], [], []>} : vector<128x4xf32>, vector<4x8xf32>, vector<128x8xf32> -> vector<128x8xf32>
    %132 = arith.addf %127, %131 : vector<128x8xf32>
    %c0_101 = arith.constant 0 : index
    %c0_102 = arith.constant 0 : index
    %133 = vector.load %arg12[%c0_101, %c0_102] : memref<1x8xf32, #tpu.memory_space<vmem>>, vector<1x8xf32>
    %134 = vector.broadcast %133 : vector<1x8xf32> to vector<128x8xf32>
    %135 = arith.addf %132, %134 : vector<128x8xf32>
    %cst_103 = arith.constant 0.000000e+00 : f32
    %136 = vector.broadcast %cst_103 : f32 to vector<128x8xf32>
    %137 = arith.maximumf %135, %136 : vector<128x8xf32>
    %c0_104 = arith.constant 0 : index
    %c0_105 = arith.constant 0 : index
    %c0_106 = arith.constant 0 : index
    %c0_107 = arith.constant 0 : index
    %138 = vector.load %arg13[%c0_104, %c0_105, %c0_106, %c0_107] : memref<2x5x5x4xf32, #tpu.memory_space<vmem>>, vector<1x5x5x4xf32>
    %139 = vector.shape_cast %138 : vector<1x5x5x4xf32> to vector<5x5x4xf32>
    %c0_108 = arith.constant 0 : index
    %c0_109 = arith.constant 0 : index
    %c0_110 = arith.constant 0 : index
    %140 = vector.load %arg14[%c0_108, %c0_109, %c0_110] : memref<2x1x4xf32, #tpu.memory_space<vmem>>, vector<1x1x4xf32>
    %cst_111 = arith.constant 0.000000e+00 : f32
    %141 = vector.broadcast %cst_111 : f32 to vector<8x16x4xf32>
    %c0_112 = arith.constant 0 : index
    %c0_113 = arith.constant 0 : index
    %c0_114 = arith.constant 0 : index
    %142 = vector.load %arg20[%c0_112, %c0_113, %c0_114] : memref<12x20x4xf32, #tpu.memory_space<vmem>>, vector<8x16x4xf32>
    %143 = vector.extract_strided_slice %139 {offsets = [0, 0, 0], sizes = [1, 1, 4], strides = [1, 1, 1]} : vector<5x5x4xf32> to vector<1x1x4xf32>
    %144 = vector.broadcast %143 : vector<1x1x4xf32> to vector<8x16x4xf32>
    %145 = arith.mulf %142, %144 : vector<8x16x4xf32>
    %146 = arith.addf %141, %145 : vector<8x16x4xf32>
    %c0_115 = arith.constant 0 : index
    %c1_116 = arith.constant 1 : index
    %c0_117 = arith.constant 0 : index
    %147 = vector.load %arg20[%c0_115, %c1_116, %c0_117] : memref<12x20x4xf32, #tpu.memory_space<vmem>>, vector<8x16x4xf32>
    %148 = vector.extract_strided_slice %139 {offsets = [0, 1, 0], sizes = [1, 1, 4], strides = [1, 1, 1]} : vector<5x5x4xf32> to vector<1x1x4xf32>
    %149 = vector.broadcast %148 : vector<1x1x4xf32> to vector<8x16x4xf32>
    %150 = arith.mulf %147, %149 : vector<8x16x4xf32>
    %151 = arith.addf %146, %150 : vector<8x16x4xf32>
    %c0_118 = arith.constant 0 : index
    %c2_119 = arith.constant 2 : index
    %c0_120 = arith.constant 0 : index
    %152 = vector.load %arg20[%c0_118, %c2_119, %c0_120] : memref<12x20x4xf32, #tpu.memory_space<vmem>>, vector<8x16x4xf32>
    %153 = vector.extract_strided_slice %139 {offsets = [0, 2, 0], sizes = [1, 1, 4], strides = [1, 1, 1]} : vector<5x5x4xf32> to vector<1x1x4xf32>
    %154 = vector.broadcast %153 : vector<1x1x4xf32> to vector<8x16x4xf32>
    %155 = arith.mulf %152, %154 : vector<8x16x4xf32>
    %156 = arith.addf %151, %155 : vector<8x16x4xf32>
    %c0_121 = arith.constant 0 : index
    %c3_122 = arith.constant 3 : index
    %c0_123 = arith.constant 0 : index
    %157 = vector.load %arg20[%c0_121, %c3_122, %c0_123] : memref<12x20x4xf32, #tpu.memory_space<vmem>>, vector<8x16x4xf32>
    %158 = vector.extract_strided_slice %139 {offsets = [0, 3, 0], sizes = [1, 1, 4], strides = [1, 1, 1]} : vector<5x5x4xf32> to vector<1x1x4xf32>
    %159 = vector.broadcast %158 : vector<1x1x4xf32> to vector<8x16x4xf32>
    %160 = arith.mulf %157, %159 : vector<8x16x4xf32>
    %161 = arith.addf %156, %160 : vector<8x16x4xf32>
    %c0_124 = arith.constant 0 : index
    %c4 = arith.constant 4 : index
    %c0_125 = arith.constant 0 : index
    %162 = vector.load %arg20[%c0_124, %c4, %c0_125] : memref<12x20x4xf32, #tpu.memory_space<vmem>>, vector<8x16x4xf32>
    %163 = vector.extract_strided_slice %139 {offsets = [0, 4, 0], sizes = [1, 1, 4], strides = [1, 1, 1]} : vector<5x5x4xf32> to vector<1x1x4xf32>
    %164 = vector.broadcast %163 : vector<1x1x4xf32> to vector<8x16x4xf32>
    %165 = arith.mulf %162, %164 : vector<8x16x4xf32>
    %166 = arith.addf %161, %165 : vector<8x16x4xf32>
    %c1_126 = arith.constant 1 : index
    %c0_127 = arith.constant 0 : index
    %c0_128 = arith.constant 0 : index
    %167 = vector.load %arg20[%c1_126, %c0_127, %c0_128] : memref<12x20x4xf32, #tpu.memory_space<vmem>>, vector<8x16x4xf32>
    %168 = vector.extract_strided_slice %139 {offsets = [1, 0, 0], sizes = [1, 1, 4], strides = [1, 1, 1]} : vector<5x5x4xf32> to vector<1x1x4xf32>
    %169 = vector.broadcast %168 : vector<1x1x4xf32> to vector<8x16x4xf32>
    %170 = arith.mulf %167, %169 : vector<8x16x4xf32>
    %171 = arith.addf %166, %170 : vector<8x16x4xf32>
    %c1_129 = arith.constant 1 : index
    %c1_130 = arith.constant 1 : index
    %c0_131 = arith.constant 0 : index
    %172 = vector.load %arg20[%c1_129, %c1_130, %c0_131] : memref<12x20x4xf32, #tpu.memory_space<vmem>>, vector<8x16x4xf32>
    %173 = vector.extract_strided_slice %139 {offsets = [1, 1, 0], sizes = [1, 1, 4], strides = [1, 1, 1]} : vector<5x5x4xf32> to vector<1x1x4xf32>
    %174 = vector.broadcast %173 : vector<1x1x4xf32> to vector<8x16x4xf32>
    %175 = arith.mulf %172, %174 : vector<8x16x4xf32>
    %176 = arith.addf %171, %175 : vector<8x16x4xf32>
    %c1_132 = arith.constant 1 : index
    %c2_133 = arith.constant 2 : index
    %c0_134 = arith.constant 0 : index
    %177 = vector.load %arg20[%c1_132, %c2_133, %c0_134] : memref<12x20x4xf32, #tpu.memory_space<vmem>>, vector<8x16x4xf32>
    %178 = vector.extract_strided_slice %139 {offsets = [1, 2, 0], sizes = [1, 1, 4], strides = [1, 1, 1]} : vector<5x5x4xf32> to vector<1x1x4xf32>
    %179 = vector.broadcast %178 : vector<1x1x4xf32> to vector<8x16x4xf32>
    %180 = arith.mulf %177, %179 : vector<8x16x4xf32>
    %181 = arith.addf %176, %180 : vector<8x16x4xf32>
    %c1_135 = arith.constant 1 : index
    %c3_136 = arith.constant 3 : index
    %c0_137 = arith.constant 0 : index
    %182 = vector.load %arg20[%c1_135, %c3_136, %c0_137] : memref<12x20x4xf32, #tpu.memory_space<vmem>>, vector<8x16x4xf32>
    %183 = vector.extract_strided_slice %139 {offsets = [1, 3, 0], sizes = [1, 1, 4], strides = [1, 1, 1]} : vector<5x5x4xf32> to vector<1x1x4xf32>
    %184 = vector.broadcast %183 : vector<1x1x4xf32> to vector<8x16x4xf32>
    %185 = arith.mulf %182, %184 : vector<8x16x4xf32>
    %186 = arith.addf %181, %185 : vector<8x16x4xf32>
    %c1_138 = arith.constant 1 : index
    %c4_139 = arith.constant 4 : index
    %c0_140 = arith.constant 0 : index
    %187 = vector.load %arg20[%c1_138, %c4_139, %c0_140] : memref<12x20x4xf32, #tpu.memory_space<vmem>>, vector<8x16x4xf32>
    %188 = vector.extract_strided_slice %139 {offsets = [1, 4, 0], sizes = [1, 1, 4], strides = [1, 1, 1]} : vector<5x5x4xf32> to vector<1x1x4xf32>
    %189 = vector.broadcast %188 : vector<1x1x4xf32> to vector<8x16x4xf32>
    %190 = arith.mulf %187, %189 : vector<8x16x4xf32>
    %191 = arith.addf %186, %190 : vector<8x16x4xf32>
    %c2_141 = arith.constant 2 : index
    %c0_142 = arith.constant 0 : index
    %c0_143 = arith.constant 0 : index
    %192 = vector.load %arg20[%c2_141, %c0_142, %c0_143] : memref<12x20x4xf32, #tpu.memory_space<vmem>>, vector<8x16x4xf32>
    %193 = vector.extract_strided_slice %139 {offsets = [2, 0, 0], sizes = [1, 1, 4], strides = [1, 1, 1]} : vector<5x5x4xf32> to vector<1x1x4xf32>
    %194 = vector.broadcast %193 : vector<1x1x4xf32> to vector<8x16x4xf32>
    %195 = arith.mulf %192, %194 : vector<8x16x4xf32>
    %196 = arith.addf %191, %195 : vector<8x16x4xf32>
    %c2_144 = arith.constant 2 : index
    %c1_145 = arith.constant 1 : index
    %c0_146 = arith.constant 0 : index
    %197 = vector.load %arg20[%c2_144, %c1_145, %c0_146] : memref<12x20x4xf32, #tpu.memory_space<vmem>>, vector<8x16x4xf32>
    %198 = vector.extract_strided_slice %139 {offsets = [2, 1, 0], sizes = [1, 1, 4], strides = [1, 1, 1]} : vector<5x5x4xf32> to vector<1x1x4xf32>
    %199 = vector.broadcast %198 : vector<1x1x4xf32> to vector<8x16x4xf32>
    %200 = arith.mulf %197, %199 : vector<8x16x4xf32>
    %201 = arith.addf %196, %200 : vector<8x16x4xf32>
    %c2_147 = arith.constant 2 : index
    %c2_148 = arith.constant 2 : index
    %c0_149 = arith.constant 0 : index
    %202 = vector.load %arg20[%c2_147, %c2_148, %c0_149] : memref<12x20x4xf32, #tpu.memory_space<vmem>>, vector<8x16x4xf32>
    %203 = vector.extract_strided_slice %139 {offsets = [2, 2, 0], sizes = [1, 1, 4], strides = [1, 1, 1]} : vector<5x5x4xf32> to vector<1x1x4xf32>
    %204 = vector.broadcast %203 : vector<1x1x4xf32> to vector<8x16x4xf32>
    %205 = arith.mulf %202, %204 : vector<8x16x4xf32>
    %206 = arith.addf %201, %205 : vector<8x16x4xf32>
    %c2_150 = arith.constant 2 : index
    %c3_151 = arith.constant 3 : index
    %c0_152 = arith.constant 0 : index
    %207 = vector.load %arg20[%c2_150, %c3_151, %c0_152] : memref<12x20x4xf32, #tpu.memory_space<vmem>>, vector<8x16x4xf32>
    %208 = vector.extract_strided_slice %139 {offsets = [2, 3, 0], sizes = [1, 1, 4], strides = [1, 1, 1]} : vector<5x5x4xf32> to vector<1x1x4xf32>
    %209 = vector.broadcast %208 : vector<1x1x4xf32> to vector<8x16x4xf32>
    %210 = arith.mulf %207, %209 : vector<8x16x4xf32>
    %211 = arith.addf %206, %210 : vector<8x16x4xf32>
    %c2_153 = arith.constant 2 : index
    %c4_154 = arith.constant 4 : index
    %c0_155 = arith.constant 0 : index
    %212 = vector.load %arg20[%c2_153, %c4_154, %c0_155] : memref<12x20x4xf32, #tpu.memory_space<vmem>>, vector<8x16x4xf32>
    %213 = vector.extract_strided_slice %139 {offsets = [2, 4, 0], sizes = [1, 1, 4], strides = [1, 1, 1]} : vector<5x5x4xf32> to vector<1x1x4xf32>
    %214 = vector.broadcast %213 : vector<1x1x4xf32> to vector<8x16x4xf32>
    %215 = arith.mulf %212, %214 : vector<8x16x4xf32>
    %216 = arith.addf %211, %215 : vector<8x16x4xf32>
    %c3_156 = arith.constant 3 : index
    %c0_157 = arith.constant 0 : index
    %c0_158 = arith.constant 0 : index
    %217 = vector.load %arg20[%c3_156, %c0_157, %c0_158] : memref<12x20x4xf32, #tpu.memory_space<vmem>>, vector<8x16x4xf32>
    %218 = vector.extract_strided_slice %139 {offsets = [3, 0, 0], sizes = [1, 1, 4], strides = [1, 1, 1]} : vector<5x5x4xf32> to vector<1x1x4xf32>
    %219 = vector.broadcast %218 : vector<1x1x4xf32> to vector<8x16x4xf32>
    %220 = arith.mulf %217, %219 : vector<8x16x4xf32>
    %221 = arith.addf %216, %220 : vector<8x16x4xf32>
    %c3_159 = arith.constant 3 : index
    %c1_160 = arith.constant 1 : index
    %c0_161 = arith.constant 0 : index
    %222 = vector.load %arg20[%c3_159, %c1_160, %c0_161] : memref<12x20x4xf32, #tpu.memory_space<vmem>>, vector<8x16x4xf32>
    %223 = vector.extract_strided_slice %139 {offsets = [3, 1, 0], sizes = [1, 1, 4], strides = [1, 1, 1]} : vector<5x5x4xf32> to vector<1x1x4xf32>
    %224 = vector.broadcast %223 : vector<1x1x4xf32> to vector<8x16x4xf32>
    %225 = arith.mulf %222, %224 : vector<8x16x4xf32>
    %226 = arith.addf %221, %225 : vector<8x16x4xf32>
    %c3_162 = arith.constant 3 : index
    %c2_163 = arith.constant 2 : index
    %c0_164 = arith.constant 0 : index
    %227 = vector.load %arg20[%c3_162, %c2_163, %c0_164] : memref<12x20x4xf32, #tpu.memory_space<vmem>>, vector<8x16x4xf32>
    %228 = vector.extract_strided_slice %139 {offsets = [3, 2, 0], sizes = [1, 1, 4], strides = [1, 1, 1]} : vector<5x5x4xf32> to vector<1x1x4xf32>
    %229 = vector.broadcast %228 : vector<1x1x4xf32> to vector<8x16x4xf32>
    %230 = arith.mulf %227, %229 : vector<8x16x4xf32>
    %231 = arith.addf %226, %230 : vector<8x16x4xf32>
    %c3_165 = arith.constant 3 : index
    %c3_166 = arith.constant 3 : index
    %c0_167 = arith.constant 0 : index
    %232 = vector.load %arg20[%c3_165, %c3_166, %c0_167] : memref<12x20x4xf32, #tpu.memory_space<vmem>>, vector<8x16x4xf32>
    %233 = vector.extract_strided_slice %139 {offsets = [3, 3, 0], sizes = [1, 1, 4], strides = [1, 1, 1]} : vector<5x5x4xf32> to vector<1x1x4xf32>
    %234 = vector.broadcast %233 : vector<1x1x4xf32> to vector<8x16x4xf32>
    %235 = arith.mulf %232, %234 : vector<8x16x4xf32>
    %236 = arith.addf %231, %235 : vector<8x16x4xf32>
    %c3_168 = arith.constant 3 : index
    %c4_169 = arith.constant 4 : index
    %c0_170 = arith.constant 0 : index
    %237 = vector.load %arg20[%c3_168, %c4_169, %c0_170] : memref<12x20x4xf32, #tpu.memory_space<vmem>>, vector<8x16x4xf32>
    %238 = vector.extract_strided_slice %139 {offsets = [3, 4, 0], sizes = [1, 1, 4], strides = [1, 1, 1]} : vector<5x5x4xf32> to vector<1x1x4xf32>
    %239 = vector.broadcast %238 : vector<1x1x4xf32> to vector<8x16x4xf32>
    %240 = arith.mulf %237, %239 : vector<8x16x4xf32>
    %241 = arith.addf %236, %240 : vector<8x16x4xf32>
    %c4_171 = arith.constant 4 : index
    %c0_172 = arith.constant 0 : index
    %c0_173 = arith.constant 0 : index
    %242 = vector.load %arg20[%c4_171, %c0_172, %c0_173] : memref<12x20x4xf32, #tpu.memory_space<vmem>>, vector<8x16x4xf32>
    %243 = vector.extract_strided_slice %139 {offsets = [4, 0, 0], sizes = [1, 1, 4], strides = [1, 1, 1]} : vector<5x5x4xf32> to vector<1x1x4xf32>
    %244 = vector.broadcast %243 : vector<1x1x4xf32> to vector<8x16x4xf32>
    %245 = arith.mulf %242, %244 : vector<8x16x4xf32>
    %246 = arith.addf %241, %245 : vector<8x16x4xf32>
    %c4_174 = arith.constant 4 : index
    %c1_175 = arith.constant 1 : index
    %c0_176 = arith.constant 0 : index
    %247 = vector.load %arg20[%c4_174, %c1_175, %c0_176] : memref<12x20x4xf32, #tpu.memory_space<vmem>>, vector<8x16x4xf32>
    %248 = vector.extract_strided_slice %139 {offsets = [4, 1, 0], sizes = [1, 1, 4], strides = [1, 1, 1]} : vector<5x5x4xf32> to vector<1x1x4xf32>
    %249 = vector.broadcast %248 : vector<1x1x4xf32> to vector<8x16x4xf32>
    %250 = arith.mulf %247, %249 : vector<8x16x4xf32>
    %251 = arith.addf %246, %250 : vector<8x16x4xf32>
    %c4_177 = arith.constant 4 : index
    %c2_178 = arith.constant 2 : index
    %c0_179 = arith.constant 0 : index
    %252 = vector.load %arg20[%c4_177, %c2_178, %c0_179] : memref<12x20x4xf32, #tpu.memory_space<vmem>>, vector<8x16x4xf32>
    %253 = vector.extract_strided_slice %139 {offsets = [4, 2, 0], sizes = [1, 1, 4], strides = [1, 1, 1]} : vector<5x5x4xf32> to vector<1x1x4xf32>
    %254 = vector.broadcast %253 : vector<1x1x4xf32> to vector<8x16x4xf32>
    %255 = arith.mulf %252, %254 : vector<8x16x4xf32>
    %256 = arith.addf %251, %255 : vector<8x16x4xf32>
    %c4_180 = arith.constant 4 : index
    %c3_181 = arith.constant 3 : index
    %c0_182 = arith.constant 0 : index
    %257 = vector.load %arg20[%c4_180, %c3_181, %c0_182] : memref<12x20x4xf32, #tpu.memory_space<vmem>>, vector<8x16x4xf32>
    %258 = vector.extract_strided_slice %139 {offsets = [4, 3, 0], sizes = [1, 1, 4], strides = [1, 1, 1]} : vector<5x5x4xf32> to vector<1x1x4xf32>
    %259 = vector.broadcast %258 : vector<1x1x4xf32> to vector<8x16x4xf32>
    %260 = arith.mulf %257, %259 : vector<8x16x4xf32>
    %261 = arith.addf %256, %260 : vector<8x16x4xf32>
    %c4_183 = arith.constant 4 : index
    %c4_184 = arith.constant 4 : index
    %c0_185 = arith.constant 0 : index
    %262 = vector.load %arg20[%c4_183, %c4_184, %c0_185] : memref<12x20x4xf32, #tpu.memory_space<vmem>>, vector<8x16x4xf32>
    %263 = vector.extract_strided_slice %139 {offsets = [4, 4, 0], sizes = [1, 1, 4], strides = [1, 1, 1]} : vector<5x5x4xf32> to vector<1x1x4xf32>
    %264 = vector.broadcast %263 : vector<1x1x4xf32> to vector<8x16x4xf32>
    %265 = arith.mulf %262, %264 : vector<8x16x4xf32>
    %266 = arith.addf %261, %265 : vector<8x16x4xf32>
    %267 = vector.broadcast %140 : vector<1x1x4xf32> to vector<8x16x4xf32>
    %268 = arith.addf %266, %267 : vector<8x16x4xf32>
    %c1_186 = arith.constant 1 : index
    %c0_187 = arith.constant 0 : index
    %c0_188 = arith.constant 0 : index
    %c0_189 = arith.constant 0 : index
    %269 = vector.load %arg13[%c1_186, %c0_187, %c0_188, %c0_189] : memref<2x5x5x4xf32, #tpu.memory_space<vmem>>, vector<1x5x5x4xf32>
    %270 = vector.shape_cast %269 : vector<1x5x5x4xf32> to vector<5x5x4xf32>
    %c1_190 = arith.constant 1 : index
    %c0_191 = arith.constant 0 : index
    %c0_192 = arith.constant 0 : index
    %271 = vector.load %arg14[%c1_190, %c0_191, %c0_192] : memref<2x1x4xf32, #tpu.memory_space<vmem>>, vector<1x1x4xf32>
    %cst_193 = arith.constant 0.000000e+00 : f32
    %272 = vector.broadcast %cst_193 : f32 to vector<8x16x4xf32>
    %c0_194 = arith.constant 0 : index
    %c0_195 = arith.constant 0 : index
    %c0_196 = arith.constant 0 : index
    %273 = vector.load %arg21[%c0_194, %c0_195, %c0_196] : memref<12x20x4xf32, #tpu.memory_space<vmem>>, vector<8x16x4xf32>
    %274 = vector.extract_strided_slice %270 {offsets = [0, 0, 0], sizes = [1, 1, 4], strides = [1, 1, 1]} : vector<5x5x4xf32> to vector<1x1x4xf32>
    %275 = vector.broadcast %274 : vector<1x1x4xf32> to vector<8x16x4xf32>
    %276 = arith.mulf %273, %275 : vector<8x16x4xf32>
    %277 = arith.addf %272, %276 : vector<8x16x4xf32>
    %c0_197 = arith.constant 0 : index
    %c1_198 = arith.constant 1 : index
    %c0_199 = arith.constant 0 : index
    %278 = vector.load %arg21[%c0_197, %c1_198, %c0_199] : memref<12x20x4xf32, #tpu.memory_space<vmem>>, vector<8x16x4xf32>
    %279 = vector.extract_strided_slice %270 {offsets = [0, 1, 0], sizes = [1, 1, 4], strides = [1, 1, 1]} : vector<5x5x4xf32> to vector<1x1x4xf32>
    %280 = vector.broadcast %279 : vector<1x1x4xf32> to vector<8x16x4xf32>
    %281 = arith.mulf %278, %280 : vector<8x16x4xf32>
    %282 = arith.addf %277, %281 : vector<8x16x4xf32>
    %c0_200 = arith.constant 0 : index
    %c2_201 = arith.constant 2 : index
    %c0_202 = arith.constant 0 : index
    %283 = vector.load %arg21[%c0_200, %c2_201, %c0_202] : memref<12x20x4xf32, #tpu.memory_space<vmem>>, vector<8x16x4xf32>
    %284 = vector.extract_strided_slice %270 {offsets = [0, 2, 0], sizes = [1, 1, 4], strides = [1, 1, 1]} : vector<5x5x4xf32> to vector<1x1x4xf32>
    %285 = vector.broadcast %284 : vector<1x1x4xf32> to vector<8x16x4xf32>
    %286 = arith.mulf %283, %285 : vector<8x16x4xf32>
    %287 = arith.addf %282, %286 : vector<8x16x4xf32>
    %c0_203 = arith.constant 0 : index
    %c3_204 = arith.constant 3 : index
    %c0_205 = arith.constant 0 : index
    %288 = vector.load %arg21[%c0_203, %c3_204, %c0_205] : memref<12x20x4xf32, #tpu.memory_space<vmem>>, vector<8x16x4xf32>
    %289 = vector.extract_strided_slice %270 {offsets = [0, 3, 0], sizes = [1, 1, 4], strides = [1, 1, 1]} : vector<5x5x4xf32> to vector<1x1x4xf32>
    %290 = vector.broadcast %289 : vector<1x1x4xf32> to vector<8x16x4xf32>
    %291 = arith.mulf %288, %290 : vector<8x16x4xf32>
    %292 = arith.addf %287, %291 : vector<8x16x4xf32>
    %c0_206 = arith.constant 0 : index
    %c4_207 = arith.constant 4 : index
    %c0_208 = arith.constant 0 : index
    %293 = vector.load %arg21[%c0_206, %c4_207, %c0_208] : memref<12x20x4xf32, #tpu.memory_space<vmem>>, vector<8x16x4xf32>
    %294 = vector.extract_strided_slice %270 {offsets = [0, 4, 0], sizes = [1, 1, 4], strides = [1, 1, 1]} : vector<5x5x4xf32> to vector<1x1x4xf32>
    %295 = vector.broadcast %294 : vector<1x1x4xf32> to vector<8x16x4xf32>
    %296 = arith.mulf %293, %295 : vector<8x16x4xf32>
    %297 = arith.addf %292, %296 : vector<8x16x4xf32>
    %c1_209 = arith.constant 1 : index
    %c0_210 = arith.constant 0 : index
    %c0_211 = arith.constant 0 : index
    %298 = vector.load %arg21[%c1_209, %c0_210, %c0_211] : memref<12x20x4xf32, #tpu.memory_space<vmem>>, vector<8x16x4xf32>
    %299 = vector.extract_strided_slice %270 {offsets = [1, 0, 0], sizes = [1, 1, 4], strides = [1, 1, 1]} : vector<5x5x4xf32> to vector<1x1x4xf32>
    %300 = vector.broadcast %299 : vector<1x1x4xf32> to vector<8x16x4xf32>
    %301 = arith.mulf %298, %300 : vector<8x16x4xf32>
    %302 = arith.addf %297, %301 : vector<8x16x4xf32>
    %c1_212 = arith.constant 1 : index
    %c1_213 = arith.constant 1 : index
    %c0_214 = arith.constant 0 : index
    %303 = vector.load %arg21[%c1_212, %c1_213, %c0_214] : memref<12x20x4xf32, #tpu.memory_space<vmem>>, vector<8x16x4xf32>
    %304 = vector.extract_strided_slice %270 {offsets = [1, 1, 0], sizes = [1, 1, 4], strides = [1, 1, 1]} : vector<5x5x4xf32> to vector<1x1x4xf32>
    %305 = vector.broadcast %304 : vector<1x1x4xf32> to vector<8x16x4xf32>
    %306 = arith.mulf %303, %305 : vector<8x16x4xf32>
    %307 = arith.addf %302, %306 : vector<8x16x4xf32>
    %c1_215 = arith.constant 1 : index
    %c2_216 = arith.constant 2 : index
    %c0_217 = arith.constant 0 : index
    %308 = vector.load %arg21[%c1_215, %c2_216, %c0_217] : memref<12x20x4xf32, #tpu.memory_space<vmem>>, vector<8x16x4xf32>
    %309 = vector.extract_strided_slice %270 {offsets = [1, 2, 0], sizes = [1, 1, 4], strides = [1, 1, 1]} : vector<5x5x4xf32> to vector<1x1x4xf32>
    %310 = vector.broadcast %309 : vector<1x1x4xf32> to vector<8x16x4xf32>
    %311 = arith.mulf %308, %310 : vector<8x16x4xf32>
    %312 = arith.addf %307, %311 : vector<8x16x4xf32>
    %c1_218 = arith.constant 1 : index
    %c3_219 = arith.constant 3 : index
    %c0_220 = arith.constant 0 : index
    %313 = vector.load %arg21[%c1_218, %c3_219, %c0_220] : memref<12x20x4xf32, #tpu.memory_space<vmem>>, vector<8x16x4xf32>
    %314 = vector.extract_strided_slice %270 {offsets = [1, 3, 0], sizes = [1, 1, 4], strides = [1, 1, 1]} : vector<5x5x4xf32> to vector<1x1x4xf32>
    %315 = vector.broadcast %314 : vector<1x1x4xf32> to vector<8x16x4xf32>
    %316 = arith.mulf %313, %315 : vector<8x16x4xf32>
    %317 = arith.addf %312, %316 : vector<8x16x4xf32>
    %c1_221 = arith.constant 1 : index
    %c4_222 = arith.constant 4 : index
    %c0_223 = arith.constant 0 : index
    %318 = vector.load %arg21[%c1_221, %c4_222, %c0_223] : memref<12x20x4xf32, #tpu.memory_space<vmem>>, vector<8x16x4xf32>
    %319 = vector.extract_strided_slice %270 {offsets = [1, 4, 0], sizes = [1, 1, 4], strides = [1, 1, 1]} : vector<5x5x4xf32> to vector<1x1x4xf32>
    %320 = vector.broadcast %319 : vector<1x1x4xf32> to vector<8x16x4xf32>
    %321 = arith.mulf %318, %320 : vector<8x16x4xf32>
    %322 = arith.addf %317, %321 : vector<8x16x4xf32>
    %c2_224 = arith.constant 2 : index
    %c0_225 = arith.constant 0 : index
    %c0_226 = arith.constant 0 : index
    %323 = vector.load %arg21[%c2_224, %c0_225, %c0_226] : memref<12x20x4xf32, #tpu.memory_space<vmem>>, vector<8x16x4xf32>
    %324 = vector.extract_strided_slice %270 {offsets = [2, 0, 0], sizes = [1, 1, 4], strides = [1, 1, 1]} : vector<5x5x4xf32> to vector<1x1x4xf32>
    %325 = vector.broadcast %324 : vector<1x1x4xf32> to vector<8x16x4xf32>
    %326 = arith.mulf %323, %325 : vector<8x16x4xf32>
    %327 = arith.addf %322, %326 : vector<8x16x4xf32>
    %c2_227 = arith.constant 2 : index
    %c1_228 = arith.constant 1 : index
    %c0_229 = arith.constant 0 : index
    %328 = vector.load %arg21[%c2_227, %c1_228, %c0_229] : memref<12x20x4xf32, #tpu.memory_space<vmem>>, vector<8x16x4xf32>
    %329 = vector.extract_strided_slice %270 {offsets = [2, 1, 0], sizes = [1, 1, 4], strides = [1, 1, 1]} : vector<5x5x4xf32> to vector<1x1x4xf32>
    %330 = vector.broadcast %329 : vector<1x1x4xf32> to vector<8x16x4xf32>
    %331 = arith.mulf %328, %330 : vector<8x16x4xf32>
    %332 = arith.addf %327, %331 : vector<8x16x4xf32>
    %c2_230 = arith.constant 2 : index
    %c2_231 = arith.constant 2 : index
    %c0_232 = arith.constant 0 : index
    %333 = vector.load %arg21[%c2_230, %c2_231, %c0_232] : memref<12x20x4xf32, #tpu.memory_space<vmem>>, vector<8x16x4xf32>
    %334 = vector.extract_strided_slice %270 {offsets = [2, 2, 0], sizes = [1, 1, 4], strides = [1, 1, 1]} : vector<5x5x4xf32> to vector<1x1x4xf32>
    %335 = vector.broadcast %334 : vector<1x1x4xf32> to vector<8x16x4xf32>
    %336 = arith.mulf %333, %335 : vector<8x16x4xf32>
    %337 = arith.addf %332, %336 : vector<8x16x4xf32>
    %c2_233 = arith.constant 2 : index
    %c3_234 = arith.constant 3 : index
    %c0_235 = arith.constant 0 : index
    %338 = vector.load %arg21[%c2_233, %c3_234, %c0_235] : memref<12x20x4xf32, #tpu.memory_space<vmem>>, vector<8x16x4xf32>
    %339 = vector.extract_strided_slice %270 {offsets = [2, 3, 0], sizes = [1, 1, 4], strides = [1, 1, 1]} : vector<5x5x4xf32> to vector<1x1x4xf32>
    %340 = vector.broadcast %339 : vector<1x1x4xf32> to vector<8x16x4xf32>
    %341 = arith.mulf %338, %340 : vector<8x16x4xf32>
    %342 = arith.addf %337, %341 : vector<8x16x4xf32>
    %c2_236 = arith.constant 2 : index
    %c4_237 = arith.constant 4 : index
    %c0_238 = arith.constant 0 : index
    %343 = vector.load %arg21[%c2_236, %c4_237, %c0_238] : memref<12x20x4xf32, #tpu.memory_space<vmem>>, vector<8x16x4xf32>
    %344 = vector.extract_strided_slice %270 {offsets = [2, 4, 0], sizes = [1, 1, 4], strides = [1, 1, 1]} : vector<5x5x4xf32> to vector<1x1x4xf32>
    %345 = vector.broadcast %344 : vector<1x1x4xf32> to vector<8x16x4xf32>
    %346 = arith.mulf %343, %345 : vector<8x16x4xf32>
    %347 = arith.addf %342, %346 : vector<8x16x4xf32>
    %c3_239 = arith.constant 3 : index
    %c0_240 = arith.constant 0 : index
    %c0_241 = arith.constant 0 : index
    %348 = vector.load %arg21[%c3_239, %c0_240, %c0_241] : memref<12x20x4xf32, #tpu.memory_space<vmem>>, vector<8x16x4xf32>
    %349 = vector.extract_strided_slice %270 {offsets = [3, 0, 0], sizes = [1, 1, 4], strides = [1, 1, 1]} : vector<5x5x4xf32> to vector<1x1x4xf32>
    %350 = vector.broadcast %349 : vector<1x1x4xf32> to vector<8x16x4xf32>
    %351 = arith.mulf %348, %350 : vector<8x16x4xf32>
    %352 = arith.addf %347, %351 : vector<8x16x4xf32>
    %c3_242 = arith.constant 3 : index
    %c1_243 = arith.constant 1 : index
    %c0_244 = arith.constant 0 : index
    %353 = vector.load %arg21[%c3_242, %c1_243, %c0_244] : memref<12x20x4xf32, #tpu.memory_space<vmem>>, vector<8x16x4xf32>
    %354 = vector.extract_strided_slice %270 {offsets = [3, 1, 0], sizes = [1, 1, 4], strides = [1, 1, 1]} : vector<5x5x4xf32> to vector<1x1x4xf32>
    %355 = vector.broadcast %354 : vector<1x1x4xf32> to vector<8x16x4xf32>
    %356 = arith.mulf %353, %355 : vector<8x16x4xf32>
    %357 = arith.addf %352, %356 : vector<8x16x4xf32>
    %c3_245 = arith.constant 3 : index
    %c2_246 = arith.constant 2 : index
    %c0_247 = arith.constant 0 : index
    %358 = vector.load %arg21[%c3_245, %c2_246, %c0_247] : memref<12x20x4xf32, #tpu.memory_space<vmem>>, vector<8x16x4xf32>
    %359 = vector.extract_strided_slice %270 {offsets = [3, 2, 0], sizes = [1, 1, 4], strides = [1, 1, 1]} : vector<5x5x4xf32> to vector<1x1x4xf32>
    %360 = vector.broadcast %359 : vector<1x1x4xf32> to vector<8x16x4xf32>
    %361 = arith.mulf %358, %360 : vector<8x16x4xf32>
    %362 = arith.addf %357, %361 : vector<8x16x4xf32>
    %c3_248 = arith.constant 3 : index
    %c3_249 = arith.constant 3 : index
    %c0_250 = arith.constant 0 : index
    %363 = vector.load %arg21[%c3_248, %c3_249, %c0_250] : memref<12x20x4xf32, #tpu.memory_space<vmem>>, vector<8x16x4xf32>
    %364 = vector.extract_strided_slice %270 {offsets = [3, 3, 0], sizes = [1, 1, 4], strides = [1, 1, 1]} : vector<5x5x4xf32> to vector<1x1x4xf32>
    %365 = vector.broadcast %364 : vector<1x1x4xf32> to vector<8x16x4xf32>
    %366 = arith.mulf %363, %365 : vector<8x16x4xf32>
    %367 = arith.addf %362, %366 : vector<8x16x4xf32>
    %c3_251 = arith.constant 3 : index
    %c4_252 = arith.constant 4 : index
    %c0_253 = arith.constant 0 : index
    %368 = vector.load %arg21[%c3_251, %c4_252, %c0_253] : memref<12x20x4xf32, #tpu.memory_space<vmem>>, vector<8x16x4xf32>
    %369 = vector.extract_strided_slice %270 {offsets = [3, 4, 0], sizes = [1, 1, 4], strides = [1, 1, 1]} : vector<5x5x4xf32> to vector<1x1x4xf32>
    %370 = vector.broadcast %369 : vector<1x1x4xf32> to vector<8x16x4xf32>
    %371 = arith.mulf %368, %370 : vector<8x16x4xf32>
    %372 = arith.addf %367, %371 : vector<8x16x4xf32>
    %c4_254 = arith.constant 4 : index
    %c0_255 = arith.constant 0 : index
    %c0_256 = arith.constant 0 : index
    %373 = vector.load %arg21[%c4_254, %c0_255, %c0_256] : memref<12x20x4xf32, #tpu.memory_space<vmem>>, vector<8x16x4xf32>
    %374 = vector.extract_strided_slice %270 {offsets = [4, 0, 0], sizes = [1, 1, 4], strides = [1, 1, 1]} : vector<5x5x4xf32> to vector<1x1x4xf32>
    %375 = vector.broadcast %374 : vector<1x1x4xf32> to vector<8x16x4xf32>
    %376 = arith.mulf %373, %375 : vector<8x16x4xf32>
    %377 = arith.addf %372, %376 : vector<8x16x4xf32>
    %c4_257 = arith.constant 4 : index
    %c1_258 = arith.constant 1 : index
    %c0_259 = arith.constant 0 : index
    %378 = vector.load %arg21[%c4_257, %c1_258, %c0_259] : memref<12x20x4xf32, #tpu.memory_space<vmem>>, vector<8x16x4xf32>
    %379 = vector.extract_strided_slice %270 {offsets = [4, 1, 0], sizes = [1, 1, 4], strides = [1, 1, 1]} : vector<5x5x4xf32> to vector<1x1x4xf32>
    %380 = vector.broadcast %379 : vector<1x1x4xf32> to vector<8x16x4xf32>
    %381 = arith.mulf %378, %380 : vector<8x16x4xf32>
    %382 = arith.addf %377, %381 : vector<8x16x4xf32>
    %c4_260 = arith.constant 4 : index
    %c2_261 = arith.constant 2 : index
    %c0_262 = arith.constant 0 : index
    %383 = vector.load %arg21[%c4_260, %c2_261, %c0_262] : memref<12x20x4xf32, #tpu.memory_space<vmem>>, vector<8x16x4xf32>
    %384 = vector.extract_strided_slice %270 {offsets = [4, 2, 0], sizes = [1, 1, 4], strides = [1, 1, 1]} : vector<5x5x4xf32> to vector<1x1x4xf32>
    %385 = vector.broadcast %384 : vector<1x1x4xf32> to vector<8x16x4xf32>
    %386 = arith.mulf %383, %385 : vector<8x16x4xf32>
    %387 = arith.addf %382, %386 : vector<8x16x4xf32>
    %c4_263 = arith.constant 4 : index
    %c3_264 = arith.constant 3 : index
    %c0_265 = arith.constant 0 : index
    %388 = vector.load %arg21[%c4_263, %c3_264, %c0_265] : memref<12x20x4xf32, #tpu.memory_space<vmem>>, vector<8x16x4xf32>
    %389 = vector.extract_strided_slice %270 {offsets = [4, 3, 0], sizes = [1, 1, 4], strides = [1, 1, 1]} : vector<5x5x4xf32> to vector<1x1x4xf32>
    %390 = vector.broadcast %389 : vector<1x1x4xf32> to vector<8x16x4xf32>
    %391 = arith.mulf %388, %390 : vector<8x16x4xf32>
    %392 = arith.addf %387, %391 : vector<8x16x4xf32>
    %c4_266 = arith.constant 4 : index
    %c4_267 = arith.constant 4 : index
    %c0_268 = arith.constant 0 : index
    %393 = vector.load %arg21[%c4_266, %c4_267, %c0_268] : memref<12x20x4xf32, #tpu.memory_space<vmem>>, vector<8x16x4xf32>
    %394 = vector.extract_strided_slice %270 {offsets = [4, 4, 0], sizes = [1, 1, 4], strides = [1, 1, 1]} : vector<5x5x4xf32> to vector<1x1x4xf32>
    %395 = vector.broadcast %394 : vector<1x1x4xf32> to vector<8x16x4xf32>
    %396 = arith.mulf %393, %395 : vector<8x16x4xf32>
    %397 = arith.addf %392, %396 : vector<8x16x4xf32>
    %398 = vector.broadcast %271 : vector<1x1x4xf32> to vector<8x16x4xf32>
    %399 = arith.addf %397, %398 : vector<8x16x4xf32>
    %400 = vector.shape_cast %268 : vector<8x16x4xf32> to vector<128x4xf32>
    %c0_269 = arith.constant 0 : index
    %c0_270 = arith.constant 0 : index
    %c0_271 = arith.constant 0 : index
    %401 = vector.load %arg15[%c0_269, %c0_270, %c0_271] : memref<2x4x8xf32, #tpu.memory_space<vmem>>, vector<1x4x8xf32>
    %402 = vector.shape_cast %401 : vector<1x4x8xf32> to vector<4x8xf32>
    %cst_272 = arith.constant dense<0.000000e+00> : vector<128x8xf32>
    %403 = tpu.matmul %400, %402, %cst_272 {dimension_numbers = #tpu.dot_dimension_numbers<[1], [0], [0], [1], [0, 0, 1, 1], [], []>} : vector<128x4xf32>, vector<4x8xf32>, vector<128x8xf32> -> vector<128x8xf32>
    %404 = vector.shape_cast %399 : vector<8x16x4xf32> to vector<128x4xf32>
    %c1_273 = arith.constant 1 : index
    %c0_274 = arith.constant 0 : index
    %c0_275 = arith.constant 0 : index
    %405 = vector.load %arg15[%c1_273, %c0_274, %c0_275] : memref<2x4x8xf32, #tpu.memory_space<vmem>>, vector<1x4x8xf32>
    %406 = vector.shape_cast %405 : vector<1x4x8xf32> to vector<4x8xf32>
    %cst_276 = arith.constant dense<0.000000e+00> : vector<128x8xf32>
    %407 = tpu.matmul %404, %406, %cst_276 {dimension_numbers = #tpu.dot_dimension_numbers<[1], [0], [0], [1], [0, 0, 1, 1], [], []>} : vector<128x4xf32>, vector<4x8xf32>, vector<128x8xf32> -> vector<128x8xf32>
    %408 = arith.addf %403, %407 : vector<128x8xf32>
    %c0_277 = arith.constant 0 : index
    %c0_278 = arith.constant 0 : index
    %409 = vector.load %arg16[%c0_277, %c0_278] : memref<1x8xf32, #tpu.memory_space<vmem>>, vector<1x8xf32>
    %410 = vector.broadcast %409 : vector<1x8xf32> to vector<128x8xf32>
    %411 = arith.addf %408, %410 : vector<128x8xf32>
    %cst_279 = arith.constant 0.000000e+00 : f32
    %412 = vector.broadcast %cst_279 : f32 to vector<128x8xf32>
    %413 = arith.maximumf %411, %412 : vector<128x8xf32>
    %c0_280 = arith.constant 0 : index
    %c0_281 = arith.constant 0 : index
    %c0_282 = arith.constant 0 : index
    %414 = vector.load %arg17[%c0_280, %c0_281, %c0_282] : memref<2x8x4xf32, #tpu.memory_space<vmem>>, vector<1x8x4xf32>
    %415 = vector.shape_cast %414 : vector<1x8x4xf32> to vector<8x4xf32>
    %cst_283 = arith.constant dense<0.000000e+00> : vector<128x4xf32>
    %416 = tpu.matmul %137, %415, %cst_283 {dimension_numbers = #tpu.dot_dimension_numbers<[1], [0], [0], [1], [0, 0, 1, 1], [], []>} : vector<128x8xf32>, vector<8x4xf32>, vector<128x4xf32> -> vector<128x4xf32>
    %c1_284 = arith.constant 1 : index
    %c0_285 = arith.constant 0 : index
    %c0_286 = arith.constant 0 : index
    %417 = vector.load %arg17[%c1_284, %c0_285, %c0_286] : memref<2x8x4xf32, #tpu.memory_space<vmem>>, vector<1x8x4xf32>
    %418 = vector.shape_cast %417 : vector<1x8x4xf32> to vector<8x4xf32>
    %cst_287 = arith.constant dense<0.000000e+00> : vector<128x4xf32>
    %419 = tpu.matmul %413, %418, %cst_287 {dimension_numbers = #tpu.dot_dimension_numbers<[1], [0], [0], [1], [0, 0, 1, 1], [], []>} : vector<128x8xf32>, vector<8x4xf32>, vector<128x4xf32> -> vector<128x4xf32>
    %420 = arith.addf %416, %419 : vector<128x4xf32>
    %c0_288 = arith.constant 0 : index
    %c0_289 = arith.constant 0 : index
    %421 = vector.load %arg18[%c0_288, %c0_289] : memref<1x4xf32, #tpu.memory_space<vmem>>, vector<1x4xf32>
    %422 = vector.broadcast %421 : vector<1x4xf32> to vector<128x4xf32>
    %423 = arith.addf %420, %422 : vector<128x4xf32>
    %424 = vector.shape_cast %423 : vector<128x4xf32> to vector<8x16x4xf32>
    %c0_290 = arith.constant 0 : index
    %c0_291 = arith.constant 0 : index
    %c0_292 = arith.constant 0 : index
    %c0_293 = arith.constant 0 : index
    %425 = vector.load %arg8[%c0_290, %c0_291, %c0_292, %c0_293] : memref<1x8x16x4xf32, #tpu.memory_space<vmem>>, vector<1x8x16x4xf32>
    %426 = vector.shape_cast %425 : vector<1x8x16x4xf32> to vector<8x16x4xf32>
    %427 = arith.addf %424, %426 : vector<8x16x4xf32>
    %c0_294 = arith.constant 0 : index
    %c0_295 = arith.constant 0 : index
    %c0_296 = arith.constant 0 : index
    %c0_297 = arith.constant 0 : index
    %428 = vector.load %arg19[%c0_294, %c0_295, %c0_296, %c0_297] : memref<1x8x16x4xf32, #tpu.memory_space<vmem>>, vector<1x8x16x4xf32>
    %429 = vector.shape_cast %428 : vector<1x8x16x4xf32> to vector<8x16x4xf32>
    %430 = vector.shape_cast %427 : vector<8x16x4xf32> to vector<1x8x16x4xf32>
    tpu.vector_store %arg19[%c0_294, %c0_295, %c0_296, %c0_297], %430 {strides = array<i32>} : memref<1x8x16x4xf32, #tpu.memory_space<vmem>>, vector<1x8x16x4xf32>,
    return
  }
  func.func @transform_0(%arg0: i32, %arg1: i32) -> (i32, i32, i32, i32) {
    %c0_i32 = arith.constant 0 : i32
    %c0_i32_0 = arith.constant 0 : i32
    %c0_i32_1 = arith.constant 0 : i32
    return %arg0, %arg1, %c0_i32, %c0_i32_0 : i32, i32, i32, i32
  }
  func.func @transform_1(%arg0: i32, %arg1: i32) -> (i32, i32, i32, i32) {
    %c4_i32 = arith.constant 4 : i32
    %0 = arith.muli %arg1, %c4_i32 : i32
    %c1_i32 = arith.constant 1 : i32
    %1 = arith.subi %0, %c1_i32 : i32
    %c0_i32 = arith.constant 0 : i32
    %2 = arith.maxsi %1, %c0_i32 : i32
    %c0_i32_0 = arith.constant 0 : i32
    %c0_i32_1 = arith.constant 0 : i32
    %c0_i32_2 = arith.constant 0 : i32
    return %arg0, %2, %c0_i32_0, %c0_i32_1 : i32, i32, i32, i32
  }
  func.func @transform_2(%arg0: i32, %arg1: i32) -> (i32, i32, i32, i32) {
    %c1_i32 = arith.constant 1 : i32
    %0 = arith.addi %arg1, %c1_i32 : i32
    %c4_i32 = arith.constant 4 : i32
    %1 = arith.muli %0, %c4_i32 : i32
    %c7_i32 = arith.constant 7 : i32
    %2 = arith.minsi %1, %c7_i32 : i32
    %c0_i32 = arith.constant 0 : i32
    %c0_i32_0 = arith.constant 0 : i32
    %c0_i32_1 = arith.constant 0 : i32
    return %arg0, %2, %c0_i32, %c0_i32_0 : i32, i32, i32, i32
  }
  func.func @transform_3(%arg0: i32, %arg1: i32) -> (i32, i32, i32, i32) {
    %c0_i32 = arith.constant 0 : i32
    %c0_i32_0 = arith.constant 0 : i32
    %c0_i32_1 = arith.constant 0 : i32
    return %arg0, %arg1, %c0_i32, %c0_i32_0 : i32, i32, i32, i32
  }
  func.func @transform_4(%arg0: i32, %arg1: i32) -> (i32, i32, i32, i32) {
    %c4_i32 = arith.constant 4 : i32
    %0 = arith.muli %arg1, %c4_i32 : i32
    %c1_i32 = arith.constant 1 : i32
    %1 = arith.subi %0, %c1_i32 : i32
    %c0_i32 = arith.constant 0 : i32
    %2 = arith.maxsi %1, %c0_i32 : i32
    %c0_i32_0 = arith.constant 0 : i32
    %c0_i32_1 = arith.constant 0 : i32
    %c0_i32_2 = arith.constant 0 : i32
    return %arg0, %2, %c0_i32_0, %c0_i32_1 : i32, i32, i32, i32
  }
  func.func @transform_5(%arg0: i32, %arg1: i32) -> (i32, i32, i32, i32) {
    %c1_i32 = arith.constant 1 : i32
    %0 = arith.addi %arg1, %c1_i32 : i32
    %c4_i32 = arith.constant 4 : i32
    %1 = arith.muli %0, %c4_i32 : i32
    %c7_i32 = arith.constant 7 : i32
    %2 = arith.minsi %1, %c7_i32 : i32
    %c0_i32 = arith.constant 0 : i32
    %c0_i32_0 = arith.constant 0 : i32
    %c0_i32_1 = arith.constant 0 : i32
    return %arg0, %2, %c0_i32, %c0_i32_0 : i32, i32, i32, i32
  }
  func.func @transform_6(%arg0: i32, %arg1: i32) -> (i32, i32, i32, i32) {
    %c0_i32 = arith.constant 0 : i32
    %c0_i32_0 = arith.constant 0 : i32
    %c0_i32_1 = arith.constant 0 : i32
    return %arg0, %arg1, %c0_i32, %c0_i32_0 : i32, i32, i32, i32
  }
  func.func @transform_7(%arg0: i32, %arg1: i32) -> (i32, i32, i32, i32) {
    %c0_i32 = arith.constant 0 : i32
    %c0_i32_0 = arith.constant 0 : i32
    %c0_i32_1 = arith.constant 0 : i32
    %c0_i32_2 = arith.constant 0 : i32
    %c0_i32_3 = arith.constant 0 : i32
    return %c0_i32, %c0_i32_0, %c0_i32_1, %c0_i32_2 : i32, i32, i32, i32
  }
  func.func @transform_8(%arg0: i32, %arg1: i32) -> (i32, i32, i32) {
    %c0_i32 = arith.constant 0 : i32
    %c0_i32_0 = arith.constant 0 : i32
    %c0_i32_1 = arith.constant 0 : i32
    %c0_i32_2 = arith.constant 0 : i32
    return %c0_i32, %c0_i32_0, %c0_i32_1 : i32, i32, i32
  }
  func.func @transform_9(%arg0: i32, %arg1: i32) -> (i32, i32, i32) {
    %c0_i32 = arith.constant 0 : i32
    %c0_i32_0 = arith.constant 0 : i32
    %c0_i32_1 = arith.constant 0 : i32
    %c0_i32_2 = arith.constant 0 : i32
    return %c0_i32, %c0_i32_0, %c0_i32_1 : i32, i32, i32
  }
  func.func @transform_10(%arg0: i32, %arg1: i32) -> (i32, i32) {
    %c0_i32 = arith.constant 0 : i32
    %c0_i32_0 = arith.constant 0 : i32
    %c0_i32_1 = arith.constant 0 : i32
    return %c0_i32, %c0_i32_0 : i32, i32
  }
  func.func @transform_11(%arg0: i32, %arg1: i32) -> (i32, i32, i32, i32) {
    %c0_i32 = arith.constant 0 : i32
    %c0_i32_0 = arith.constant 0 : i32
    %c0_i32_1 = arith.constant 0 : i32
    %c0_i32_2 = arith.constant 0 : i32
    %c0_i32_3 = arith.constant 0 : i32
    return %c0_i32, %c0_i32_0, %c0_i32_1, %c0_i32_2 : i32, i32, i32, i32
  }
  func.func @transform_12(%arg0: i32, %arg1: i32) -> (i32, i32, i32) {
    %c0_i32 = arith.constant 0 : i32
    %c0_i32_0 = arith.constant 0 : i32
    %c0_i32_1 = arith.constant 0 : i32
    %c0_i32_2 = arith.constant 0 : i32
    return %c0_i32, %c0_i32_0, %c0_i32_1 : i32, i32, i32
  }
  func.func @transform_13(%arg0: i32, %arg1: i32) -> (i32, i32, i32) {
    %c0_i32 = arith.constant 0 : i32
    %c0_i32_0 = arith.constant 0 : i32
    %c0_i32_1 = arith.constant 0 : i32
    %c0_i32_2 = arith.constant 0 : i32
    return %c0_i32, %c0_i32_0, %c0_i32_1 : i32, i32, i32
  }
  func.func @transform_14(%arg0: i32, %arg1: i32) -> (i32, i32) {
    %c0_i32 = arith.constant 0 : i32
    %c0_i32_0 = arith.constant 0 : i32
    %c0_i32_1 = arith.constant 0 : i32
    return %c0_i32, %c0_i32_0 : i32, i32
  }
  func.func @transform_15(%arg0: i32, %arg1: i32) -> (i32, i32, i32) {
    %c0_i32 = arith.constant 0 : i32
    %c0_i32_0 = arith.constant 0 : i32
    %c0_i32_1 = arith.constant 0 : i32
    %c0_i32_2 = arith.constant 0 : i32
    return %c0_i32, %c0_i32_0, %c0_i32_1 : i32, i32, i32
  }
  func.func @transform_16(%arg0: i32, %arg1: i32) -> (i32, i32) {
    %c0_i32 = arith.constant 0 : i32
    %c0_i32_0 = arith.constant 0 : i32
    %c0_i32_1 = arith.constant 0 : i32
    return %c0_i32, %c0_i32_0 : i32, i32
  }
  func.func @transform_17(%arg0: i32, %arg1: i32) -> (i32, i32, i32, i32) {
    %c0_i32 = arith.constant 0 : i32
    %c0_i32_0 = arith.constant 0 : i32
    %c0_i32_1 = arith.constant 0 : i32
    return %arg0, %arg1, %c0_i32, %c0_i32_0 : i32, i32, i32, i32
  }
}

</mosaic_0001>

<llo_original>
// kernel: msrb_forward.2
$region0: #{msrb_forward.2}
  #allocation0 [shape = 'u32[]', space=smem, size = 0x4, offset = 0x4, fixed_abs, tag = 'smem constant byte address 0x4 - core index']
  #allocation1 [shape = 'u32[144,128]{1,0:T(1,128)}', space=vmem, size = 0x12000, scoped, tag = 'internal scratch']
  #allocation2 [shape = 'f32[12,20,4]{2,1,0:T(8,128)}', space=vmem, size = 0x24000, scoped, tag = 'scratch operand']
  %s0 = inlined_call_operand.vmem [shape: f32[2,16,16,4], index: 0, kind: input, shape index: {}, may-alias: {0,1,2}]
  %s1 = inlined_call_operand.vmem [shape: f32[2,16,16,4], index: 1, kind: input, shape index: {}, may-alias: {0,1,2}]
  %s2 = inlined_call_operand.vmem [shape: f32[2,16,16,4], index: 2, kind: input, shape index: {}, may-alias: {0,1,2}]
  %s3 = inlined_call_operand.vmem [shape: f32[3,3,4], index: 3, kind: input, shape index: {}]
  %s4 = inlined_call_operand.vmem [shape: f32[1,1,4], index: 4, kind: input, shape index: {}]
  %s5 = inlined_call_operand.vmem [shape: f32[4,4], index: 5, kind: input, shape index: {}]
  %s6 = inlined_call_operand.vmem [shape: f32[1,4], index: 6, kind: input, shape index: {}]
  %s7 = inlined_call_operand.vmem [shape: f32[5,5,4], index: 7, kind: input, shape index: {}]
  %s8 = inlined_call_operand.vmem [shape: f32[1,1,4], index: 8, kind: input, shape index: {}]
  %s9 = inlined_call_operand.vmem [shape: f32[4,4], index: 9, kind: input, shape index: {}]
  %s10 = inlined_call_operand.vmem [shape: f32[1,4], index: 10, kind: input, shape index: {}]
  %s11 = inlined_call_operand.vmem [shape: f32[2,16,16,4], index: 11, kind: output, shape index: {0}]
  %s12 = inlined_call_operand.vmem [shape: f32[2,16,16,4], index: 12, kind: output, shape index: {1}]
  %13 = xla_tuple %s11, %s12
  %s14 = sld [smem:[#allocation0]]
  $region93: #{msrb_forward.2} parent=0
    _
  %s16 = ssub.s32 1, %s14
  %s17 = scalar_select 0, %s16, %s14
  loop: start=0, step=1, limit=6
  $region2: #{msrb_forward.2} parent=0 // loop_pre_header
    _
  $region3: #{msrb_forward.2} parent=0 // loop_header
    %s19 = sphi 0, %s23
    %p20 = scmp.ge.s32.totalorder %s19, 6
    %s26 = sphi 0, %s38
    %s27 = sphi 0, %s34
    %s28 = sphi 0, %s26
    %s29 = sphi 0, %s27
    %s30 = sphi 0, %s28
    %s31 = sphi 0, %s29
    %s43 = sphi 0, %s45
    %s46 = sphi 0, %s43
    %s47 = sphi 0, %s46
    %s63 = sphi 0, %s47
    %s79 = sphi 0, %s81
    %s82 = sphi 0, %s79
    %s83 = sphi 0, %s82
    %s99 = sphi 0, %s83
    %s115 = sphi 0, %s117
    %s118 = sphi 0, %s115
    %s119 = sphi 0, %s118
    %s135 = sphi 0, %s119
    %s139 = sphi 0, %s139
    %s141 = sphi 0, %s139
    %s142 = sphi 0, %s141
    %s156 = sphi 0, %s142
    %s160 = sphi 0, %s160
    %s162 = sphi 0, %s160
    %s163 = sphi 0, %s162
    %s177 = sphi 0, %s163
    %s181 = sphi 0, %s181
    %s183 = sphi 0, %s181
    %s184 = sphi 0, %s183
    %s198 = sphi 0, %s184
    %s202 = sphi 0, %s202
    %s204 = sphi 0, %s202
    %s205 = sphi 0, %s204
    %s219 = sphi 0, %s205
    %s223 = sphi 0, %s223
    %s225 = sphi 0, %s223
    %s226 = sphi 0, %s225
    %s240 = sphi 0, %s226
    %s244 = sphi 0, %s244
    %s246 = sphi 0, %s244
    %s247 = sphi 0, %s246
    %s261 = sphi 0, %s247
    %s265 = sphi 0, %s265
    %s267 = sphi 0, %s265
    %s268 = sphi 0, %s267
    %s282 = sphi 0, %s268
    %s286 = sphi 0, %s286
    %s288 = sphi 0, %s286
    %s289 = sphi 0, %s288
    %s303 = sphi 0, %s289
    %s311 = sphi 0, %s313
    %s314 = sphi 0, %s311
    %s315 = sphi 0, %s314
    %s331 = sphi 0, %s315
    %s339 = sphi 0, %s341
    %s342 = sphi 0, %s339
    %s343 = sphi 0, %s342
    %s359 = sphi 0, %s343
  $region4: #{msrb_forward.2} parent=0 // loop_header_branch
    %22 = sbr.rel (%p20) target = $region8
  $region5: #{msrb_forward.2} parent=0 // loop_body
    %s24 = ssub.s32 %s19, 1
    %s25 = ssub.s32 %s19, 2
    %s32 = sadd.s32 1, %s27
    %p33 = scmp.ge.s32.totalorder %s32, 2
    %s34 = scalar_select %p33, 0, %s32
    %s35 = sadd.s32 1, %s26
    %s36 = scalar_select %p33, %s35, %s26
    %p37 = scmp.ge.s32.totalorder %s36, 2
    %s38 = scalar_select %p37, 0, %s36
    %s39 = ssub.s32 %s26, %s38
    %s40 = ssub.s32 %s27, %s34
    %s41 = sor.u32 %s39, %s40
    %p42 = scmp.eq.s32.totalorder %s41, 0
    %s44 = sadd.s32 %s43, 1
    %s45 = scalar_select %p42, %s43, %s44
    %p48 = pneg %p42
    %p49 = scmp.eq.s32.totalorder %s19, 3
    %p50 = por %p48, %p49
    %p51 = scmp.ne.s32.totalorder %s43, %s46
    %p52 = scmp.eq.s32.totalorder %s19, 0
    %p53 = por %p51, %p52
    %p54 = scmp.ne.s32.totalorder %s43, %s46
    %p55 = scmp.eq.s32.totalorder %s24, 3
    %p56 = por %p54, %p55
    %p57 = scmp.ne.s32.totalorder %s46, %s47
    %p58 = scmp.eq.s32.totalorder %s24, 0
    %p59 = por %p57, %p58
    %p60 = scmp.ne.s32.totalorder %s46, %s47
    %p61 = scmp.eq.s32.totalorder %s25, 3
    %p62 = por %p60, %p61
    %p64 = scmp.ne.s32.totalorder %s47, %s63
    %p65 = scmp.eq.s32.totalorder %s25, 0
    %p66 = por %p64, %p65
    %s67 = smul.u32 %s27, 4
    %s68 = ssub.s32 %s67, 1
    %p69 = scmp.gt.s32.totalorder %s68, 0
    %s70 = scalar_select %p69, %s68, 0
    %s71 = smul.u32 %s34, 4
    %s72 = ssub.s32 %s71, 1
    %p73 = scmp.gt.s32.totalorder %s72, 0
    %s74 = scalar_select %p73, %s72, 0
    %s75 = ssub.s32 %s26, %s38
    %s76 = ssub.s32 %s70, %s74
    %s77 = sor.u32 %s75, %s76
    %p78 = scmp.eq.s32.totalorder %s77, 0
    %s80 = sadd.s32 %s79, 1
    %s81 = scalar_select %p78, %s79, %s80
    %p84 = pneg %p78
    %p85 = scmp.eq.s32.totalorder %s19, 3
    %p86 = por %p84, %p85
    %p87 = scmp.ne.s32.totalorder %s79, %s82
    %p88 = scmp.eq.s32.totalorder %s19, 0
    %p89 = por %p87, %p88
    %p90 = scmp.ne.s32.totalorder %s79, %s82
    %p91 = scmp.eq.s32.totalorder %s24, 3
    %p92 = por %p90, %p91
    %p93 = scmp.ne.s32.totalorder %s82, %s83
    %p94 = scmp.eq.s32.totalorder %s24, 0
    %p95 = por %p93, %p94
    %p96 = scmp.ne.s32.totalorder %s82, %s83
    %p97 = scmp.eq.s32.totalorder %s25, 3
    %p98 = por %p96, %p97
    %p100 = scmp.ne.s32.totalorder %s83, %s99
    %p101 = scmp.eq.s32.totalorder %s25, 0
    %p102 = por %p100, %p101
    %s103 = sadd.s32 %s27, 1
    %s104 = smul.u32 %s103, 4
    %p105 = scmp.lt.s32.totalorder %s104, 7
    %s106 = scalar_select %p105, %s104, 7
    %s107 = sadd.s32 %s34, 1
    %s108 = smul.u32 %s107, 4
    %p109 = scmp.lt.s32.totalorder %s108, 7
    %s110 = scalar_select %p109, %s108, 7
    %s111 = ssub.s32 %s26, %s38
    %s112 = ssub.s32 %s106, %s110
    %s113 = sor.u32 %s111, %s112
    %p114 = scmp.eq.s32.totalorder %s113, 0
    %s116 = sadd.s32 %s115, 1
    %s117 = scalar_select %p114, %s115, %s116
    %p120 = pneg %p114
    %p121 = scmp.eq.s32.totalorder %s19, 3
    %p122 = por %p120, %p121
    %p123 = scmp.ne.s32.totalorder %s115, %s118
    %p124 = scmp.eq.s32.totalorder %s19, 0
    %p125 = por %p123, %p124
    %p126 = scmp.ne.s32.totalorder %s115, %s118
    %p127 = scmp.eq.s32.totalorder %s24, 3
    %p128 = por %p126, %p127
    %p129 = scmp.ne.s32.totalorder %s118, %s119
    %p130 = scmp.eq.s32.totalorder %s24, 0
    %p131 = por %p129, %p130
    %p132 = scmp.ne.s32.totalorder %s118, %s119
    %p133 = scmp.eq.s32.totalorder %s25, 3
    %p134 = por %p132, %p133
    %p136 = scmp.ne.s32.totalorder %s119, %s135
    %p137 = scmp.eq.s32.totalorder %s25, 0
    %p138 = por %p136, %p137
    %s140 = sadd.s32 %s139, 1
    %p143 = scmp.eq.s32.totalorder %s19, 3
    %p144 = scmp.ne.s32.totalorder %s139, %s141
    %p145 = scmp.eq.s32.totalorder %s19, 0
    %p146 = por %p144, %p145
    %p147 = scmp.ne.s32.totalorder %s139, %s141
    %p148 = scmp.eq.s32.totalorder %s24, 3
    %p149 = por %p147, %p148
    %p150 = scmp.ne.s32.totalorder %s141, %s142
    %p151 = scmp.eq.s32.totalorder %s24, 0
    %p152 = por %p150, %p151
    %p153 = scmp.ne.s32.totalorder %s141, %s142
    %p154 = scmp.eq.s32.totalorder %s25, 3
    %p155 = por %p153, %p154
    %p157 = scmp.ne.s32.totalorder %s142, %s156
    %p158 = scmp.eq.s32.totalorder %s25, 0
    %p159 = por %p157, %p158
    %s161 = sadd.s32 %s160, 1
    %p164 = scmp.eq.s32.totalorder %s19, 3
    %p165 = scmp.ne.s32.totalorder %s160, %s162
    %p166 = scmp.eq.s32.totalorder %s19, 0
    %p167 = por %p165, %p166
    %p168 = scmp.ne.s32.totalorder %s160, %s162
    %p169 = scmp.eq.s32.totalorder %s24, 3
    %p170 = por %p168, %p169
    %p171 = scmp.ne.s32.totalorder %s162, %s163
    %p172 = scmp.eq.s32.totalorder %s24, 0
    %p173 = por %p171, %p172
    %p174 = scmp.ne.s32.totalorder %s162, %s163
    %p175 = scmp.eq.s32.totalorder %s25, 3
    %p176 = por %p174, %p175
    %p178 = scmp.ne.s32.totalorder %s163, %s177
    %p179 = scmp.eq.s32.totalorder %s25, 0
    %p180 = por %p178, %p179
    %s182 = sadd.s32 %s181, 1
    %p185 = scmp.eq.s32.totalorder %s19, 3
    %p186 = scmp.ne.s32.totalorder %s181, %s183
    %p187 = scmp.eq.s32.totalorder %s19, 0
    %p188 = por %p186, %p187
    %p189 = scmp.ne.s32.totalorder %s181, %s183
    %p190 = scmp.eq.s32.totalorder %s24, 3
    %p191 = por %p189, %p190
    %p192 = scmp.ne.s32.totalorder %s183, %s184
    %p193 = scmp.eq.s32.totalorder %s24, 0
    %p194 = por %p192, %p193
    %p195 = scmp.ne.s32.totalorder %s183, %s184
    %p196 = scmp.eq.s32.totalorder %s25, 3
    %p197 = por %p195, %p196
    %p199 = scmp.ne.s32.totalorder %s184, %s198
    %p200 = scmp.eq.s32.totalorder %s25, 0
    %p201 = por %p199, %p200
    %s203 = sadd.s32 %s202, 1
    %p206 = scmp.eq.s32.totalorder %s19, 3
    %p207 = scmp.ne.s32.totalorder %s202, %s204
    %p208 = scmp.eq.s32.totalorder %s19, 0
    %p209 = por %p207, %p208
    %p210 = scmp.ne.s32.totalorder %s202, %s204
    %p211 = scmp.eq.s32.totalorder %s24, 3
    %p212 = por %p210, %p211
    %p213 = scmp.ne.s32.totalorder %s204, %s205
    %p214 = scmp.eq.s32.totalorder %s24, 0
    %p215 = por %p213, %p214
    %p216 = scmp.ne.s32.totalorder %s204, %s205
    %p217 = scmp.eq.s32.totalorder %s25, 3
    %p218 = por %p216, %p217
    %p220 = scmp.ne.s32.totalorder %s205, %s219
    %p221 = scmp.eq.s32.totalorder %s25, 0
    %p222 = por %p220, %p221
    %s224 = sadd.s32 %s223, 1
    %p227 = scmp.eq.s32.totalorder %s19, 3
    %p228 = scmp.ne.s32.totalorder %s223, %s225
    %p229 = scmp.eq.s32.totalorder %s19, 0
    %p230 = por %p228, %p229
    %p231 = scmp.ne.s32.totalorder %s223, %s225
    %p232 = scmp.eq.s32.totalorder %s24, 3
    %p233 = por %p231, %p232
    %p234 = scmp.ne.s32.totalorder %s225, %s226
    %p235 = scmp.eq.s32.totalorder %s24, 0
    %p236 = por %p234, %p235
    %p237 = scmp.ne.s32.totalorder %s225, %s226
    %p238 = scmp.eq.s32.totalorder %s25, 3
    %p239 = por %p237, %p238
    %p241 = scmp.ne.s32.totalorder %s226, %s240
    %p242 = scmp.eq.s32.totalorder %s25, 0
    %p243 = por %p241, %p242
    %s245 = sadd.s32 %s244, 1
    %p248 = scmp.eq.s32.totalorder %s19, 3
    %p249 = scmp.ne.s32.totalorder %s244, %s246
    %p250 = scmp.eq.s32.totalorder %s19, 0
    %p251 = por %p249, %p250
    %p252 = scmp.ne.s32.totalorder %s244, %s246
    %p253 = scmp.eq.s32.totalorder %s24, 3
    %p254 = por %p252, %p253
    %p255 = scmp.ne.s32.totalorder %s246, %s247
    %p256 = scmp.eq.s32.totalorder %s24, 0
    %p257 = por %p255, %p256
    %p258 = scmp.ne.s32.totalorder %s246, %s247
    %p259 = scmp.eq.s32.totalorder %s25, 3
    %p260 = por %p258, %p259
    %p262 = scmp.ne.s32.totalorder %s247, %s261
    %p263 = scmp.eq.s32.totalorder %s25, 0
    %p264 = por %p262, %p263
    %s266 = sadd.s32 %s265, 1
    %p269 = scmp.eq.s32.totalorder %s19, 3
    %p270 = scmp.ne.s32.totalorder %s265, %s267
    %p271 = scmp.eq.s32.totalorder %s19, 0
    %p272 = por %p270, %p271
    %p273 = scmp.ne.s32.totalorder %s265, %s267
    %p274 = scmp.eq.s32.totalorder %s24, 3
    %p275 = por %p273, %p274
    %p276 = scmp.ne.s32.totalorder %s267, %s268
    %p277 = scmp.eq.s32.totalorder %s24, 0
    %p278 = por %p276, %p277
    %p279 = scmp.ne.s32.totalorder %s267, %s268
    %p280 = scmp.eq.s32.totalorder %s25, 3
    %p281 = por %p279, %p280
    %p283 = scmp.ne.s32.totalorder %s268, %s282
    %p284 = scmp.eq.s32.totalorder %s25, 0
    %p285 = por %p283, %p284
    %s287 = sadd.s32 %s286, 1
    %p290 = scmp.eq.s32.totalorder %s19, 3
    %p291 = scmp.ne.s32.totalorder %s286, %s288
    %p292 = scmp.eq.s32.totalorder %s19, 0
    %p293 = por %p291, %p292
    %p294 = scmp.ne.s32.totalorder %s286, %s288
    %p295 = scmp.eq.s32.totalorder %s24, 3
    %p296 = por %p294, %p295
    %p297 = scmp.ne.s32.totalorder %s288, %s289
    %p298 = scmp.eq.s32.totalorder %s24, 0
    %p299 = por %p297, %p298
    %p300 = scmp.ne.s32.totalorder %s288, %s289
    %p301 = scmp.eq.s32.totalorder %s25, 3
    %p302 = por %p300, %p301
    %p304 = scmp.ne.s32.totalorder %s289, %s303
    %p305 = scmp.eq.s32.totalorder %s25, 0
    %p306 = por %p304, %p305
    %s307 = ssub.s32 %s26, %s38
    %s308 = ssub.s32 %s27, %s34
    %s309 = sor.u32 %s307, %s308
    %p310 = scmp.eq.s32.totalorder %s309, 0
    %s312 = sadd.s32 %s311, 1
    %s313 = scalar_select %p310, %s311, %s312
    %p316 = pneg %p310
    %p317 = scmp.eq.s32.totalorder %s19, 3
    %p318 = por %p316, %p317
    %p319 = scmp.ne.s32.totalorder %s311, %s314
    %p320 = scmp.eq.s32.totalorder %s19, 0
    %p321 = por %p319, %p320
    %p322 = scmp.ne.s32.totalorder %s311, %s314
    %p323 = scmp.eq.s32.totalorder %s24, 3
    %p324 = por %p322, %p323
    %p325 = scmp.ne.s32.totalorder %s314, %s315
    %p326 = scmp.eq.s32.totalorder %s24, 0
    %p327 = por %p325, %p326
    %p328 = scmp.ne.s32.totalorder %s314, %s315
    %p329 = scmp.eq.s32.totalorder %s25, 3
    %p330 = por %p328, %p329
    %p332 = scmp.ne.s32.totalorder %s315, %s331
    %p333 = scmp.eq.s32.totalorder %s25, 0
    %p334 = por %p332, %p333
    %s335 = ssub.s32 %s26, %s38
    %s336 = ssub.s32 %s27, %s34
    %s337 = sor.u32 %s335, %s336
    %p338 = scmp.eq.s32.totalorder %s337, 0
    %s340 = sadd.s32 %s339, 1
    %s341 = scalar_select %p338, %s339, %s340
    %p344 = pneg %p338
    %p345 = scmp.eq.s32.totalorder %s19, 3
    %p346 = por %p344, %p345
    %p347 = scmp.ne.s32.totalorder %s339, %s342
    %p348 = scmp.eq.s32.totalorder %s19, 0
    %p349 = por %p347, %p348
    %p350 = scmp.ne.s32.totalorder %s339, %s342
    %p351 = scmp.eq.s32.totalorder %s24, 3
    %p352 = por %p350, %p351
    %p353 = scmp.ne.s32.totalorder %s342, %s343
    %p354 = scmp.eq.s32.totalorder %s24, 0
    %p355 = por %p353, %p354
    %p356 = scmp.ne.s32.totalorder %s342, %s343
    %p357 = scmp.eq.s32.totalorder %s25, 3
    %p358 = por %p356, %p357
    %p360 = scmp.ne.s32.totalorder %s343, %s359
    %p361 = scmp.eq.s32.totalorder %s25, 0
    %p362 = por %p360, %p361
    %p363 = scmp.le.s32.totalorder 1, %s19
    %p364 = scmp.lt.s32.totalorder %s19, 5
    %p365 = pnand %p363, %p364
    %p366 = pneg %p365
    // Predicated region
    $region9: #{msrb_forward.2} parent=5 // pred_check
      _
    $region10: #{msrb_forward.2} parent=5 // pred_check_branch
      %368 = sbr.rel (%p365) target = $region12
    $region11: #{msrb_forward.2} parent=5 // pred_region
      %s369 = ssub.s32 %s19, 1
      // Predicated region
      $region13: #{msrb_forward.2} parent=11 // pred_check
        %p370 = pneg %p152
      $region14: #{msrb_forward.2} parent=11 // pred_check_branch
        %372 = sbr.rel (%p370) target = $region16
      $region15: #{msrb_forward.2} parent=11 // pred_region
        _
      $region16: #{msrb_forward.2} parent=11 // pred_fallthru
        _
      // Predicated region
      $region17: #{msrb_forward.2} parent=11 // pred_check
        %p373 = pneg %p173
      $region18: #{msrb_forward.2} parent=11 // pred_check_branch
        %375 = sbr.rel (%p373) target = $region20
      $region19: #{msrb_forward.2} parent=11 // pred_region
        _
      $region20: #{msrb_forward.2} parent=11 // pred_fallthru
        _
      // Predicated region
      $region21: #{msrb_forward.2} parent=11 // pred_check
        %p376 = pneg %p194
      $region22: #{msrb_forward.2} parent=11 // pred_check_branch
        %378 = sbr.rel (%p376) target = $region24
      $region23: #{msrb_forward.2} parent=11 // pred_region
        _
      $region24: #{msrb_forward.2} parent=11 // pred_fallthru
        _
      // Predicated region
      $region25: #{msrb_forward.2} parent=11 // pred_check
        %p379 = pneg %p215
      $region26: #{msrb_forward.2} parent=11 // pred_check_branch
        %381 = sbr.rel (%p379) target = $region28
      $region27: #{msrb_forward.2} parent=11 // pred_region
        _
      $region28: #{msrb_forward.2} parent=11 // pred_fallthru
        _
      // Predicated region
      $region29: #{msrb_forward.2} parent=11 // pred_check
        %p382 = pneg %p236
      $region30: #{msrb_forward.2} parent=11 // pred_check_branch
        %384 = sbr.rel (%p382) target = $region32
      $region31: #{msrb_forward.2} parent=11 // pred_region
        _
      $region32: #{msrb_forward.2} parent=11 // pred_fallthru
        _
      // Predicated region
      $region33: #{msrb_forward.2} parent=11 // pred_check
        %p385 = pneg %p257
      $region34: #{msrb_forward.2} parent=11 // pred_check_branch
        %387 = sbr.rel (%p385) target = $region36
      $region35: #{msrb_forward.2} parent=11 // pred_region
        _
      $region36: #{msrb_forward.2} parent=11 // pred_fallthru
        _
      // Predicated region
      $region37: #{msrb_forward.2} parent=11 // pred_check
        %p388 = pneg %p278
      $region38: #{msrb_forward.2} parent=11 // pred_check_branch
        %390 = sbr.rel (%p388) target = $region40
      $region39: #{msrb_forward.2} parent=11 // pred_region
        _
      $region40: #{msrb_forward.2} parent=11 // pred_fallthru
        _
      // Predicated region
      $region41: #{msrb_forward.2} parent=11 // pred_check
        %p391 = pneg %p299
      $region42: #{msrb_forward.2} parent=11 // pred_check_branch
        %393 = sbr.rel (%p391) target = $region44
      $region43: #{msrb_forward.2} parent=11 // pred_region
        _
      $region44: #{msrb_forward.2} parent=11 // pred_fallthru
        _
    $region12: #{msrb_forward.2} parent=5 // pred_fallthru
      _
    %p394 = scmp.lt.s32.totalorder %s19, 4
    // Predicated region
    $region45: #{msrb_forward.2} parent=5 // pred_check
      %p395 = pneg %p394
    $region46: #{msrb_forward.2} parent=5 // pred_check_branch
      %397 = sbr.rel (%p395) target = $region48
    $region47: #{msrb_forward.2} parent=5 // pred_region
      // Predicated region
      $region49: #{msrb_forward.2} parent=47 // pred_check
        %p398 = pneg %p53
      $region50: #{msrb_forward.2} parent=47 // pred_check_branch
        %400 = sbr.rel (%p398) target = $region52
      $region51: #{msrb_forward.2} parent=47 // pred_region
        %s401 = smul.u32 8, %s27
        %p402 = scmp.lt.s32.totalorder %s26, 1
        %s403 = scalar_select %p402, %s26, 1
        %p404 = scmp.lt.s32.totalorder %s401, 15
        %s405 = scalar_select %p404, %s401, 15
        %s406 = smul.addr %s405, 2
        %s407 = smul.addr %s403, 32
        %s408 = sadd.s32 %s406, %s407
        %s409 = smul.addr %s408, 8
        %s410 = scalar_lea.vmem %s0, %s409
        %s411 = smul.u32 8, %s27
      $region52: #{msrb_forward.2} parent=47 // pred_fallthru
        _
      // Predicated region
      $region53: #{msrb_forward.2} parent=47 // pred_check
        %p412 = pneg %p89
      $region54: #{msrb_forward.2} parent=47 // pred_check_branch
        %414 = sbr.rel (%p412) target = $region56
      $region55: #{msrb_forward.2} parent=47 // pred_region
        %s415 = smul.u32 %s27, 4
        %s416 = ssub.s32 %s415, 1
        %p417 = scmp.gt.s32.totalorder %s416, 0
        %s418 = scalar_select %p417, %s416, 0
        %s419 = smul.u32 2, %s418
        %p420 = scmp.lt.s32.totalorder %s26, 1
        %s421 = scalar_select %p420, %s26, 1
        %p422 = scmp.lt.s32.totalorder %s419, 15
        %s423 = scalar_select %p422, %s419, 15
        %s424 = smul.addr %s423, 2
        %s425 = smul.addr %s421, 32
        %s426 = sadd.s32 %s424, %s425
        %s427 = smul.addr %s426, 8
        %s428 = scalar_lea.vmem %s1, %s427
        %s429 = smul.u32 %s27, 4
        %s430 = ssub.s32 %s429, 1
        %p431 = scmp.gt.s32.totalorder %s430, 0
        %s432 = scalar_select %p431, %s430, 0
        %s433 = smul.u32 2, %s432
      $region56: #{msrb_forward.2} parent=47 // pred_fallthru
        _
      // Predicated region
      $region57: #{msrb_forward.2} parent=47 // pred_check
        %p434 = pneg %p125
      $region58: #{msrb_forward.2} parent=47 // pred_check_branch
        %436 = sbr.rel (%p434) target = $region60
      $region59: #{msrb_forward.2} parent=47 // pred_region
        %s437 = sadd.s32 %s27, 1
        %s438 = smul.u32 %s437, 4
        %p439 = scmp.lt.s32.totalorder %s438, 7
        %s440 = scalar_select %p439, %s438, 7
        %s441 = smul.u32 2, %s440
        %p442 = scmp.lt.s32.totalorder %s26, 1
        %s443 = scalar_select %p442, %s26, 1
        %p444 = scmp.lt.s32.totalorder %s441, 15
        %s445 = scalar_select %p444, %s441, 15
        %s446 = smul.addr %s445, 2
        %s447 = smul.addr %s443, 32
        %s448 = sadd.s32 %s446, %s447
        %s449 = smul.addr %s448, 8
        %s450 = scalar_lea.vmem %s2, %s449
        %s451 = sadd.s32 %s27, 1
        %s452 = smul.u32 %s451, 4
        %p453 = scmp.lt.s32.totalorder %s452, 7
        %s454 = scalar_select %p453, %s452, 7
        %s455 = smul.u32 2, %s454
      $region60: #{msrb_forward.2} parent=47 // pred_fallthru
        _
    $region48: #{msrb_forward.2} parent=5 // pred_fallthru
      _
    %p456 = scmp.le.s32.totalorder 1, %s19
    %p457 = scmp.lt.s32.totalorder %s19, 5
    %p458 = pnand %p456, %p457
    %p459 = pneg %p458
    // Predicated region
    $region61: #{msrb_forward.2} parent=5 // pred_check
      _
    $region62: #{msrb_forward.2} parent=5 // pred_check_branch
      %461 = sbr.rel (%p458) target = $region64
    $region63: #{msrb_forward.2} parent=5 // pred_region
      %s462 = ssub.s32 %s19, 1
      %s463 = smul.u32 8, %s29
      %p464 = scmp.lt.s32.totalorder %s28, 1
      %s465 = scalar_select %p464, %s28, 1
      %p466 = scmp.lt.s32.totalorder %s463, 15
      %s467 = scalar_select %p466, %s463, 15
      %s468 = smul.addr %s467, 2
      %s469 = smul.addr %s465, 32
      %s470 = sadd.s32 %s468, %s469
      %s471 = smul.addr %s470, 8
      %s472 = scalar_lea.vmem %s0, %s471
      %p473 = pneg %p59
      %p474 = pneg %p56
      %s475 = smul.u32 %s29, 4
      %s476 = ssub.s32 %s475, 1
      %p477 = scmp.gt.s32.totalorder %s476, 0
      %s478 = scalar_select %p477, %s476, 0
      %s479 = smul.u32 2, %s478
      %p480 = scmp.lt.s32.totalorder %s28, 1
      %s481 = scalar_select %p480, %s28, 1
      %p482 = scmp.lt.s32.totalorder %s479, 15
      %s483 = scalar_select %p482, %s479, 15
      %s484 = smul.addr %s483, 2
      %s485 = smul.addr %s481, 32
      %s486 = sadd.s32 %s484, %s485
      %s487 = smul.addr %s486, 8
      %s488 = scalar_lea.vmem %s1, %s487
      %p489 = pneg %p95
      %p490 = pneg %p92
      %s491 = sadd.s32 %s29, 1
      %s492 = smul.u32 %s491, 4
      %p493 = scmp.lt.s32.totalorder %s492, 7
      %s494 = scalar_select %p493, %s492, 7
      %s495 = smul.u32 2, %s494
      %p496 = scmp.lt.s32.totalorder %s28, 1
      %s497 = scalar_select %p496, %s28, 1
      %p498 = scmp.lt.s32.totalorder %s495, 15
      %s499 = scalar_select %p498, %s495, 15
      %s500 = smul.addr %s499, 2
      %s501 = smul.addr %s497, 32
      %s502 = sadd.s32 %s500, %s501
      %s503 = smul.addr %s502, 8
      %s504 = scalar_lea.vmem %s2, %s503
      %p505 = pneg %p131
      %p506 = pneg %p128
      %p507 = pneg %p152
      %p508 = pneg %p149
      %p509 = pneg %p173
      %p510 = pneg %p170
      %p511 = pneg %p194
      %p512 = pneg %p191
      %p513 = pneg %p215
      %p514 = pneg %p212
      %p515 = pneg %p236
      %p516 = pneg %p233
      %p517 = pneg %p257
      %p518 = pneg %p254
      %p519 = pneg %p278
      %p520 = pneg %p275
      %p521 = pneg %p299
      %p522 = pneg %p296
      %p523 = pneg %p327
      %p524 = pneg %p324
      %s525 = smul.u32 8, %s29
      %p526 = scmp.lt.s32.totalorder %s28, 1
      %s527 = scalar_select %p526, %s28, 1
      %p528 = scmp.lt.s32.totalorder %s525, 15
      %s529 = scalar_select %p528, %s525, 15
      %s530 = smul.addr %s529, 2
      %s531 = smul.addr %s527, 32
      %s532 = sadd.s32 %s530, %s531
      %s533 = smul.addr %s532, 8
      %s534 = scalar_lea.vmem %s11, %s533
      %p535 = pneg %p355
      %p536 = pneg %p352
      %s537 = smul.u32 8, %s29
      %p538 = scmp.lt.s32.totalorder %s28, 1
      %s539 = scalar_select %p538, %s28, 1
      %p540 = scmp.lt.s32.totalorder %s537, 15
      %s541 = scalar_select %p540, %s537, 15
      %s542 = smul.addr %s541, 2
      %s543 = smul.addr %s539, 32
      %s544 = sadd.s32 %s542, %s543
      %s545 = smul.addr %s544, 8
      %s546 = scalar_lea.vmem %s12, %s545
      %s547 = smul.u32 8, %s29
      %p548 = scmp.lt.s32.totalorder %s28, 1
      %s549 = scalar_select %p548, %s28, 1
      %p550 = scmp.lt.s32.totalorder %s547, 15
      %s551 = scalar_select %p550, %s547, 15
      %s552 = smul.addr %s551, 2
      %s553 = smul.addr %s549, 32
      %s554 = sadd.s32 %s552, %s553
      %s555 = smul.addr %s554, 8
      %s556 = scalar_lea.vmem %s0, %s555
      %s557 = smul.u32 8, %s29
      %s558 = smul.u32 %s29, 4
      %s559 = ssub.s32 %s558, 1
      %p560 = scmp.gt.s32.totalorder %s559, 0
      %s561 = scalar_select %p560, %s559, 0
      %s562 = smul.u32 2, %s561
      %p563 = scmp.lt.s32.totalorder %s28, 1
      %s564 = scalar_select %p563, %s28, 1
      %p565 = scmp.lt.s32.totalorder %s562, 15
      %s566 = scalar_select %p565, %s562, 15
      %s567 = smul.addr %s566, 2
      %s568 = smul.addr %s564, 32
      %s569 = sadd.s32 %s567, %s568
      %s570 = smul.addr %s569, 8
      %s571 = scalar_lea.vmem %s1, %s570
      %s572 = smul.u32 %s29, 4
      %s573 = ssub.s32 %s572, 1
      %p574 = scmp.gt.s32.totalorder %s573, 0
      %s575 = scalar_select %p574, %s573, 0
      %s576 = smul.u32 2, %s575
      %s577 = sadd.s32 %s29, 1
      %s578 = smul.u32 %s577, 4
      %p579 = scmp.lt.s32.totalorder %s578, 7
      %s580 = scalar_select %p579, %s578, 7
      %s581 = smul.u32 2, %s580
      %p582 = scmp.lt.s32.totalorder %s28, 1
      %s583 = scalar_select %p582, %s28, 1
      %p584 = scmp.lt.s32.totalorder %s581, 15
      %s585 = scalar_select %p584, %s581, 15
      %s586 = smul.addr %s585, 2
      %s587 = smul.addr %s583, 32
      %s588 = sadd.s32 %s586, %s587
      %s589 = smul.addr %s588, 8
      %s590 = scalar_lea.vmem %s2, %s589
      %s591 = sadd.s32 %s29, 1
      %s592 = smul.u32 %s591, 4
      %p593 = scmp.lt.s32.totalorder %s592, 7
      %s594 = scalar_select %p593, %s592, 7
      %s595 = smul.u32 2, %s594
      %s596 = smul.u32 8, %s29
      %p597 = scmp.lt.s32.totalorder %s28, 1
      %s598 = scalar_select %p597, %s28, 1
      %p599 = scmp.lt.s32.totalorder %s596, 15
      %s600 = scalar_select %p599, %s596, 15
      %s601 = smul.addr %s600, 2
      %s602 = smul.addr %s598, 32
      %s603 = sadd.s32 %s601, %s602
      %s604 = smul.addr %s603, 8
      %s605 = scalar_lea.vmem %s11, %s604
      %s606 = smul.u32 8, %s29
      %s607 = smul.u32 8, %s29
      %p608 = scmp.lt.s32.totalorder %s28, 1
      %s609 = scalar_select %p608, %s28, 1
      %p610 = scmp.lt.s32.totalorder %s607, 15
      %s611 = scalar_select %p610, %s607, 15
      %s612 = smul.addr %s611, 2
      %s613 = smul.addr %s609, 32
      %s614 = sadd.s32 %s612, %s613
      %s615 = smul.addr %s614, 8
      %s616 = scalar_lea.vmem %s12, %s615
      %s617 = smul.u32 8, %s29
      %vm618 = vcmask 31744
      %619 = vst.msk [vmem:[#allocation2] sm:$0xff] %vm618, 0.0
      %620 = vst.msk [vmem:[#allocation2 + $0x8] sm:$0xff] %vm618, 0.0
      %vm621 = vcmask 27648
      %622 = vst.msk [vmem:[#allocation2 + $0x10] sm:$0xf] %vm621, 0.0
      %623 = vst.msk [vmem:[#allocation2 + $0x18] sm:$0xff] %vm618, 0.0
      %624 = vst.msk [vmem:[#allocation2 + $0x20] sm:$0xff] %vm618, 0.0
      %625 = vst.msk [vmem:[#allocation2 + $0x28] sm:$0xf] %vm621, 0.0
      %626 = vst.msk [vmem:[#allocation2 + $0x30] sm:$0xff] %vm618, 0.0
      %627 = vst.msk [vmem:[#allocation2 + $0x38] sm:$0xff] %vm618, 0.0
      %628 = vst.msk [vmem:[#allocation2 + $0x40] sm:$0xf] %vm621, 0.0
      %629 = vst.msk [vmem:[#allocation2 + $0x48] sm:$0xff] %vm618, 0.0
      %630 = vst.msk [vmem:[#allocation2 + $0x50] sm:$0xff] %vm618, 0.0
      %631 = vst.msk [vmem:[#allocation2 + $0x58] sm:$0xf] %vm621, 0.0
      %632 = vst.msk [vmem:[#allocation2 + $0x60] sm:$0xff] %vm618, 0.0
      %633 = vst.msk [vmem:[#allocation2 + $0x68] sm:$0xff] %vm618, 0.0
      %634 = vst.msk [vmem:[#allocation2 + $0x70] sm:$0xf] %vm621, 0.0
      %635 = vst.msk [vmem:[#allocation2 + $0x78] sm:$0xff] %vm618, 0.0
      %636 = vst.msk [vmem:[#allocation2 + $0x80] sm:$0xff] %vm618, 0.0
      %637 = vst.msk [vmem:[#allocation2 + $0x88] sm:$0xf] %vm621, 0.0
      %638 = vst.msk [vmem:[#allocation2 + $0x90] sm:$0xff] %vm618, 0.0
      %639 = vst.msk [vmem:[#allocation2 + $0x98] sm:$0xff] %vm618, 0.0
      %640 = vst.msk [vmem:[#allocation2 + $0xa0] sm:$0xf] %vm621, 0.0
      %641 = vst.msk [vmem:[#allocation2 + $0xa8] sm:$0xff] %vm618, 0.0
      %642 = vst.msk [vmem:[#allocation2 + $0xb0] sm:$0xff] %vm618, 0.0
      %643 = vst.msk [vmem:[#allocation2 + $0xb8] sm:$0xf] %vm621, 0.0
      %644 = vst.msk [vmem:[#allocation2 + $0xc0] sm:$0xff] %vm618, 0.0
      %645 = vst.msk [vmem:[#allocation2 + $0xc8] sm:$0xff] %vm618, 0.0
      %646 = vst.msk [vmem:[#allocation2 + $0xd0] sm:$0xf] %vm621, 0.0
      %647 = vst.msk [vmem:[#allocation2 + $0xd8] sm:$0xff] %vm618, 0.0
      %648 = vst.msk [vmem:[#allocation2 + $0xe0] sm:$0xff] %vm618, 0.0
      %649 = vst.msk [vmem:[#allocation2 + $0xe8] sm:$0xf] %vm621, 0.0
      %650 = vst.msk [vmem:[#allocation2 + $0xf0] sm:$0xff] %vm618, 0.0
      %651 = vst.msk [vmem:[#allocation2 + $0xf8] sm:$0xff] %vm618, 0.0
      %652 = vst.msk [vmem:[#allocation2 + $0x100] sm:$0xf] %vm621, 0.0
      %653 = vst.msk [vmem:[#allocation2 + $0x108] sm:$0xff] %vm618, 0.0
      %654 = vst.msk [vmem:[#allocation2 + $0x110] sm:$0xff] %vm618, 0.0
      %655 = vst.msk [vmem:[#allocation2 + $0x118] sm:$0xf] %vm621, 0.0
      %v656 = vld [vmem:[%s556] sm:$0xff]
      %v657 = vld [vmem:[%s556 + $0x8] sm:$0xff]
      %v658 = vld [vmem:[%s556 + $0x10] sm:$0xff]
      %v659 = vld [vmem:[%s556 + $0x18] sm:$0xff]
      %v660 = vld [vmem:[%s556 + $0x20] sm:$0xff]
      %v661 = vld [vmem:[%s556 + $0x28] sm:$0xff]
      %v662 = vld [vmem:[%s556 + $0x30] sm:$0xff]
      %v663 = vld [vmem:[%s556 + $0x38] sm:$0xff]
      %v664 = vld [vmem:[%s556 + $0x40] sm:$0xff]
      %v665 = vld [vmem:[%s556 + $0x48] sm:$0xff]
      %v666 = vld [vmem:[%s556 + $0x50] sm:$0xff]
      %v667 = vld [vmem:[%s556 + $0x58] sm:$0xff]
      %v668 = vld [vmem:[%s556 + $0x60] sm:$0xff]
      %v669 = vld [vmem:[%s556 + $0x68] sm:$0xff]
      %v670 = vld [vmem:[%s556 + $0x70] sm:$0xff]
      %v671 = vld [vmem:[%s556 + $0x78] sm:$0xff]
      %s672 = scalar_lea.vmem [#allocation2], 48
      %673 = vst.msk [vmem:[%s672 + $0x2] sm:$0xff] %vm618, %v656
      %674 = vst.msk [vmem:[%s672 + $0xa] sm:$0xff] %vm618, %v657
      %675 = vst.msk [vmem:[%s672 + $0x1a] sm:$0xff] %vm618, %v658
      %676 = vst.msk [vmem:[%s672 + $0x22] sm:$0xff] %vm618, %v659
      %677 = vst.msk [vmem:[%s672 + $0x32] sm:$0xff] %vm618, %v660
      %678 = vst.msk [vmem:[%s672 + $0x3a] sm:$0xff] %vm618, %v661
      %679 = vst.msk [vmem:[%s672 + $0x4a] sm:$0xff] %vm618, %v662
      %680 = vst.msk [vmem:[%s672 + $0x52] sm:$0xff] %vm618, %v663
      %681 = vst.msk [vmem:[%s672 + $0x62] sm:$0xff] %vm618, %v664
      %682 = vst.msk [vmem:[%s672 + $0x6a] sm:$0xff] %vm618, %v665
      %683 = vst.msk [vmem:[%s672 + $0x7a] sm:$0xff] %vm618, %v666
      %684 = vst.msk [vmem:[%s672 + $0x82] sm:$0xff] %vm618, %v667
      %685 = vst.msk [vmem:[%s672 + $0x92] sm:$0xff] %vm618, %v668
      %686 = vst.msk [vmem:[%s672 + $0x9a] sm:$0xff] %vm618, %v669
      %687 = vst.msk [vmem:[%s672 + $0xaa] sm:$0xff] %vm618, %v670
      %688 = vst.msk [vmem:[%s672 + $0xb2] sm:$0xff] %vm618, %v671
      %p689 = scmp.gt.s32.totalorder %s29, 0
      // Predicated region
      $region65: #{msrb_forward.2} parent=63 // pred_check
        %p690 = pneg %p689
      $region66: #{msrb_forward.2} parent=63 // pred_check_branch
        %692 = sbr.rel (%p690) target = $region68
      $region67: #{msrb_forward.2} parent=63 // pred_region
        %v693 = vld [vmem:[%s571] sm:$0xff]
        %v694 = vld [vmem:[%s571 + $0x8] sm:$0xff]
        %v695 = vld [vmem:[%s571 + $0x10] sm:$0xff]
        %v696 = vld [vmem:[%s571 + $0x18] sm:$0xff]
        %697 = vst.msk [vmem:[#allocation2 + $0x2] sm:$0xff] %vm618, %v693
        %698 = vst.msk [vmem:[#allocation2 + $0xa] sm:$0xff] %vm618, %v694
        %699 = vst.msk [vmem:[#allocation2 + $0x1a] sm:$0xff] %vm618, %v695
        %700 = vst.msk [vmem:[#allocation2 + $0x22] sm:$0xff] %vm618, %v696
      $region68: #{msrb_forward.2} parent=63 // pred_fallthru
        _
      %p701 = scmp.lt.s32.totalorder %s29, 1
      // Predicated region
      $region69: #{msrb_forward.2} parent=63 // pred_check
        %p702 = pneg %p701
      $region70: #{msrb_forward.2} parent=63 // pred_check_branch
        %704 = sbr.rel (%p702) target = $region72
      $region71: #{msrb_forward.2} parent=63 // pred_region
        %v705 = vld [vmem:[%s590] sm:$0xff]
        %v706 = vld [vmem:[%s590 + $0x8] sm:$0xff]
        %v707 = vld [vmem:[%s590 + $0x10] sm:$0xff]
        %v708 = vld [vmem:[%s590 + $0x18] sm:$0xff]
        %s709 = scalar_lea.vmem [#allocation2], 240
        %710 = vst.msk [vmem:[%s709 + $0x2] sm:$0xff] %vm618, %v705
        %711 = vst.msk [vmem:[%s709 + $0xa] sm:$0xff] %vm618, %v706
        %712 = vst.msk [vmem:[%s709 + $0x1a] sm:$0xff] %vm618, %v707
        %713 = vst.msk [vmem:[%s709 + $0x22] sm:$0xff] %vm618, %v708
      $region72: #{msrb_forward.2} parent=63 // pred_fallthru
        _
      %v714 = vld [vmem:[%s3] sm:$0x7]
      %v715 = vld [vmem:[%s3 + $0x4] sm:$0x7]
      %v716 = vld [vmem:[%s3 + $0x8] sm:$0x7]
      %v717 = vld [vmem:[%s4] sm:$0x1]
      %s718 = scalar_lea.vmem [#allocation2], 24
      %v719 = vld [vmem:[%s718 + $0x1] sm:$0xff]
      %v720 = vld [vmem:[%s718 + $0x9] sm:$0xff]
      %v721 = vld [vmem:[%s718 + $0x19] sm:$0xff]
      %v722 = vld [vmem:[%s718 + $0x21] sm:$0xff]
      %v723 = vld [vmem:[%s718 + $0x31] sm:$0xff]
      %v724 = vld [vmem:[%s718 + $0x39] sm:$0xff]
      %v725 = vld [vmem:[%s718 + $0x49] sm:$0xff]
      %v726 = vld [vmem:[%s718 + $0x51] sm:$0xff]
      %v727 = vld [vmem:[%s718 + $0x61] sm:$0xff]
      %v728 = vld [vmem:[%s718 + $0x69] sm:$0xff]
      %v729 = vld [vmem:[%s718 + $0x79] sm:$0xff]
      %v730 = vld [vmem:[%s718 + $0x81] sm:$0xff]
      %v731 = vld [vmem:[%s718 + $0x91] sm:$0xff]
      %v732 = vld [vmem:[%s718 + $0x99] sm:$0xff]
      %v733 = vld [vmem:[%s718 + $0xa9] sm:$0xff]
      %v734 = vld [vmem:[%s718 + $0xb1] sm:$0xff]
      %v735 = vlaneseq
      %v736 = vshrl.u32 %v735, 7
      %v737 = vsub.s32 0, %v736
      %v738 = vrot.slane %v714, %v737
      %v739 = vmul.f32 %v719, %v738
      %v740 = vmul.f32 %v720, %v738
      %v741 = vmul.f32 %v721, %v738
      %v742 = vmul.f32 %v722, %v738
      %v743 = vmul.f32 %v723, %v738
      %v744 = vmul.f32 %v724, %v738
      %v745 = vmul.f32 %v725, %v738
      %v746 = vmul.f32 %v726, %v738
      %v747 = vmul.f32 %v727, %v738
      %v748 = vmul.f32 %v728, %v738
      %v749 = vmul.f32 %v729, %v738
      %v750 = vmul.f32 %v730, %v738
      %v751 = vmul.f32 %v731, %v738
      %v752 = vmul.f32 %v732, %v738
      %v753 = vmul.f32 %v733, %v738
      %v754 = vmul.f32 %v734, %v738
      %v755 = vadd.f32 %v739, 0.0
      %v756 = vadd.f32 %v740, 0.0
      %v757 = vadd.f32 %v741, 0.0
      %v758 = vadd.f32 %v742, 0.0
      %v759 = vadd.f32 %v743, 0.0
      %v760 = vadd.f32 %v744, 0.0
      %v761 = vadd.f32 %v745, 0.0
      %v762 = vadd.f32 %v746, 0.0
      %v763 = vadd.f32 %v747, 0.0
      %v764 = vadd.f32 %v748, 0.0
      %v765 = vadd.f32 %v749, 0.0
      %v766 = vadd.f32 %v750, 0.0
      %v767 = vadd.f32 %v751, 0.0
      %v768 = vadd.f32 %v752, 0.0
      %v769 = vadd.f32 %v753, 0.0
      %v770 = vadd.f32 %v754, 0.0
      %v771 = vld [vmem:[%s718 + $0x2] sm:$0xff]
      %v772 = vld [vmem:[%s718 + $0xa] sm:$0xff]
      %v773 = vld [vmem:[%s718 + $0x1a] sm:$0xff]
      %v774 = vld [vmem:[%s718 + $0x22] sm:$0xff]
      %v775 = vld [vmem:[%s718 + $0x32] sm:$0xff]
      %v776 = vld [vmem:[%s718 + $0x3a] sm:$0xff]
      %v777 = vld [vmem:[%s718 + $0x4a] sm:$0xff]
      %v778 = vld [vmem:[%s718 + $0x52] sm:$0xff]
      %v779 = vld [vmem:[%s718 + $0x62] sm:$0xff]
      %v780 = vld [vmem:[%s718 + $0x6a] sm:$0xff]
      %v781 = vld [vmem:[%s718 + $0x7a] sm:$0xff]
      %v782 = vld [vmem:[%s718 + $0x82] sm:$0xff]
      %v783 = vld [vmem:[%s718 + $0x92] sm:$0xff]
      %v784 = vld [vmem:[%s718 + $0x9a] sm:$0xff]
      %v785 = vld [vmem:[%s718 + $0xaa] sm:$0xff]
      %v786 = vld [vmem:[%s718 + $0xb2] sm:$0xff]
      %v787 = vlaneseq
      %v788 = vshrl.u32 %v787, 7
      %v789 = vsub.s32 1, %v788
      %v790 = vrot.slane %v714, %v789
      %v791 = vmul.f32 %v771, %v790
      %v792 = vmul.f32 %v772, %v790
      %v793 = vmul.f32 %v773, %v790
      %v794 = vmul.f32 %v774, %v790
      %v795 = vmul.f32 %v775, %v790
      %v796 = vmul.f32 %v776, %v790
      %v797 = vmul.f32 %v777, %v790
      %v798 = vmul.f32 %v778, %v790
      %v799 = vmul.f32 %v779, %v790
      %v800 = vmul.f32 %v780, %v790
      %v801 = vmul.f32 %v781, %v790
      %v802 = vmul.f32 %v782, %v790
      %v803 = vmul.f32 %v783, %v790
      %v804 = vmul.f32 %v784, %v790
      %v805 = vmul.f32 %v785, %v790
      %v806 = vmul.f32 %v786, %v790
      %v807 = vadd.f32 %v755, %v791
      %v808 = vadd.f32 %v756, %v792
      %v809 = vadd.f32 %v757, %v793
      %v810 = vadd.f32 %v758, %v794
      %v811 = vadd.f32 %v759, %v795
      %v812 = vadd.f32 %v760, %v796
      %v813 = vadd.f32 %v761, %v797
      %v814 = vadd.f32 %v762, %v798
      %v815 = vadd.f32 %v763, %v799
      %v816 = vadd.f32 %v764, %v800
      %v817 = vadd.f32 %v765, %v801
      %v818 = vadd.f32 %v766, %v802
      %v819 = vadd.f32 %v767, %v803
      %v820 = vadd.f32 %v768, %v804
      %v821 = vadd.f32 %v769, %v805
      %v822 = vadd.f32 %v770, %v806
      %v823 = vld [vmem:[%s718 + $0x3] sm:$0xff]
      %v824 = vld [vmem:[%s718 + $0xb] sm:$0xff]
      %v825 = vld [vmem:[%s718 + $0x1b] sm:$0xff]
      %v826 = vld [vmem:[%s718 + $0x23] sm:$0xff]
      %v827 = vld [vmem:[%s718 + $0x33] sm:$0xff]
      %v828 = vld [vmem:[%s718 + $0x3b] sm:$0xff]
      %v829 = vld [vmem:[%s718 + $0x4b] sm:$0xff]
      %v830 = vld [vmem:[%s718 + $0x53] sm:$0xff]
      %v831 = vld [vmem:[%s718 + $0x63] sm:$0xff]
      %v832 = vld [vmem:[%s718 + $0x6b] sm:$0xff]
      %v833 = vld [vmem:[%s718 + $0x7b] sm:$0xff]
      %v834 = vld [vmem:[%s718 + $0x83] sm:$0xff]
      %v835 = vld [vmem:[%s718 + $0x93] sm:$0xff]
      %v836 = vld [vmem:[%s718 + $0x9b] sm:$0xff]
      %v837 = vld [vmem:[%s718 + $0xab] sm:$0xff]
      %v838 = vld [vmem:[%s718 + $0xb3] sm:$0xff]
      %v839 = vlaneseq
      %v840 = vshrl.u32 %v839, 7
      %v841 = vsub.s32 2, %v840
      %v842 = vrot.slane %v714, %v841
      %v843 = vmul.f32 %v823, %v842
      %v844 = vmul.f32 %v824, %v842
      %v845 = vmul.f32 %v825, %v842
      %v846 = vmul.f32 %v826, %v842
      %v847 = vmul.f32 %v827, %v842
      %v848 = vmul.f32 %v828, %v842
      %v849 = vmul.f32 %v829, %v842
      %v850 = vmul.f32 %v830, %v842
      %v851 = vmul.f32 %v831, %v842
      %v852 = vmul.f32 %v832, %v842
      %v853 = vmul.f32 %v833, %v842
      %v854 = vmul.f32 %v834, %v842
      %v855 = vmul.f32 %v835, %v842
      %v856 = vmul.f32 %v836, %v842
      %v857 = vmul.f32 %v837, %v842
      %v858 = vmul.f32 %v838, %v842
      %v859 = vadd.f32 %v807, %v843
      %v860 = vadd.f32 %v808, %v844
      %v861 = vadd.f32 %v809, %v845
      %v862 = vadd.f32 %v810, %v846
      %v863 = vadd.f32 %v811, %v847
      %v864 = vadd.f32 %v812, %v848
      %v865 = vadd.f32 %v813, %v849
      %v866 = vadd.f32 %v814, %v850
      %v867 = vadd.f32 %v815, %v851
      %v868 = vadd.f32 %v816, %v852
      %v869 = vadd.f32 %v817, %v853
      %v870 = vadd.f32 %v818, %v854
      %v871 = vadd.f32 %v819, %v855
      %v872 = vadd.f32 %v820, %v856
      %v873 = vadd.f32 %v821, %v857
      %v874 = vadd.f32 %v822, %v858
      %v875 = vld [vmem:[%s672 + $0x1] sm:$0xff]
      %v876 = vld [vmem:[%s672 + $0x9] sm:$0xff]
      %v877 = vld [vmem:[%s672 + $0x19] sm:$0xff]
      %v878 = vld [vmem:[%s672 + $0x21] sm:$0xff]
      %v879 = vld [vmem:[%s672 + $0x31] sm:$0xff]
      %v880 = vld [vmem:[%s672 + $0x39] sm:$0xff]
      %v881 = vld [vmem:[%s672 + $0x49] sm:$0xff]
      %v882 = vld [vmem:[%s672 + $0x51] sm:$0xff]
      %v883 = vld [vmem:[%s672 + $0x61] sm:$0xff]
      %v884 = vld [vmem:[%s672 + $0x69] sm:$0xff]
      %v885 = vld [vmem:[%s672 + $0x79] sm:$0xff]
      %v886 = vld [vmem:[%s672 + $0x81] sm:$0xff]
      %v887 = vld [vmem:[%s672 + $0x91] sm:$0xff]
      %v888 = vld [vmem:[%s672 + $0x99] sm:$0xff]
      %v889 = vld [vmem:[%s672 + $0xa9] sm:$0xff]
      %v890 = vld [vmem:[%s672 + $0xb1] sm:$0xff]
      %v891 = vlaneseq
      %v892 = vshrl.u32 %v891, 7
      %v893 = vsub.s32 0, %v892
      %v894 = vrot.slane %v715, %v893
      %v895 = vmul.f32 %v875, %v894
      %v896 = vmul.f32 %v876, %v894
      %v897 = vmul.f32 %v877, %v894
      %v898 = vmul.f32 %v878, %v894
      %v899 = vmul.f32 %v879, %v894
      %v900 = vmul.f32 %v880, %v894
      %v901 = vmul.f32 %v881, %v894
      %v902 = vmul.f32 %v882, %v894
      %v903 = vmul.f32 %v883, %v894
      %v904 = vmul.f32 %v884, %v894
      %v905 = vmul.f32 %v885, %v894
      %v906 = vmul.f32 %v886, %v894
      %v907 = vmul.f32 %v887, %v894
      %v908 = vmul.f32 %v888, %v894
      %v909 = vmul.f32 %v889, %v894
      %v910 = vmul.f32 %v890, %v894
      %v911 = vadd.f32 %v859, %v895
      %v912 = vadd.f32 %v860, %v896
      %v913 = vadd.f32 %v861, %v897
      %v914 = vadd.f32 %v862, %v898
      %v915 = vadd.f32 %v863, %v899
      %v916 = vadd.f32 %v864, %v900
      %v917 = vadd.f32 %v865, %v901
      %v918 = vadd.f32 %v866, %v902
      %v919 = vadd.f32 %v867, %v903
      %v920 = vadd.f32 %v868, %v904
      %v921 = vadd.f32 %v869, %v905
      %v922 = vadd.f32 %v870, %v906
      %v923 = vadd.f32 %v871, %v907
      %v924 = vadd.f32 %v872, %v908
      %v925 = vadd.f32 %v873, %v909
      %v926 = vadd.f32 %v874, %v910
      %v927 = vld [vmem:[%s672 + $0x2] sm:$0xff]
      %v928 = vld [vmem:[%s672 + $0xa] sm:$0xff]
      %v929 = vld [vmem:[%s672 + $0x1a] sm:$0xff]
      %v930 = vld [vmem:[%s672 + $0x22] sm:$0xff]
      %v931 = vld [vmem:[%s672 + $0x32] sm:$0xff]
      %v932 = vld [vmem:[%s672 + $0x3a] sm:$0xff]
      %v933 = vld [vmem:[%s672 + $0x4a] sm:$0xff]
      %v934 = vld [vmem:[%s672 + $0x52] sm:$0xff]
      %v935 = vld [vmem:[%s672 + $0x62] sm:$0xff]
      %v936 = vld [vmem:[%s672 + $0x6a] sm:$0xff]
      %v937 = vld [vmem:[%s672 + $0x7a] sm:$0xff]
      %v938 = vld [vmem:[%s672 + $0x82] sm:$0xff]
      %v939 = vld [vmem:[%s672 + $0x92] sm:$0xff]
      %v940 = vld [vmem:[%s672 + $0x9a] sm:$0xff]
      %v941 = vld [vmem:[%s672 + $0xaa] sm:$0xff]
      %v942 = vld [vmem:[%s672 + $0xb2] sm:$0xff]
      %v943 = vlaneseq
      %v944 = vshrl.u32 %v943, 7
      %v945 = vsub.s32 1, %v944
      %v946 = vrot.slane %v715, %v945
      %v947 = vmul.f32 %v927, %v946
      %v948 = vmul.f32 %v928, %v946
      %v949 = vmul.f32 %v929, %v946
      %v950 = vmul.f32 %v930, %v946
      %v951 = vmul.f32 %v931, %v946
      %v952 = vmul.f32 %v932, %v946
      %v953 = vmul.f32 %v933, %v946
      %v954 = vmul.f32 %v934, %v946
      %v955 = vmul.f32 %v935, %v946
      %v956 = vmul.f32 %v936, %v946
      %v957 = vmul.f32 %v937, %v946
      %v958 = vmul.f32 %v938, %v946
      %v959 = vmul.f32 %v939, %v946
      %v960 = vmul.f32 %v940, %v946
      %v961 = vmul.f32 %v941, %v946
      %v962 = vmul.f32 %v942, %v946
      %v963 = vadd.f32 %v911, %v947
      %v964 = vadd.f32 %v912, %v948
      %v965 = vadd.f32 %v913, %v949
      %v966 = vadd.f32 %v914, %v950
      %v967 = vadd.f32 %v915, %v951
      %v968 = vadd.f32 %v916, %v952
      %v969 = vadd.f32 %v917, %v953
      %v970 = vadd.f32 %v918, %v954
      %v971 = vadd.f32 %v919, %v955
      %v972 = vadd.f32 %v920, %v956
      %v973 = vadd.f32 %v921, %v957
      %v974 = vadd.f32 %v922, %v958
      %v975 = vadd.f32 %v923, %v959
      %v976 = vadd.f32 %v924, %v960
      %v977 = vadd.f32 %v925, %v961
      %v978 = vadd.f32 %v926, %v962
      %v979 = vld [vmem:[%s672 + $0x3] sm:$0xff]
      %v980 = vld [vmem:[%s672 + $0xb] sm:$0xff]
      %v981 = vld [vmem:[%s672 + $0x1b] sm:$0xff]
      %v982 = vld [vmem:[%s672 + $0x23] sm:$0xff]
      %v983 = vld [vmem:[%s672 + $0x33] sm:$0xff]
      %v984 = vld [vmem:[%s672 + $0x3b] sm:$0xff]
      %v985 = vld [vmem:[%s672 + $0x4b] sm:$0xff]
      %v986 = vld [vmem:[%s672 + $0x53] sm:$0xff]
      %v987 = vld [vmem:[%s672 + $0x63] sm:$0xff]
      %v988 = vld [vmem:[%s672 + $0x6b] sm:$0xff]
      %v989 = vld [vmem:[%s672 + $0x7b] sm:$0xff]
      %v990 = vld [vmem:[%s672 + $0x83] sm:$0xff]
      %v991 = vld [vmem:[%s672 + $0x93] sm:$0xff]
      %v992 = vld [vmem:[%s672 + $0x9b] sm:$0xff]
      %v993 = vld [vmem:[%s672 + $0xab] sm:$0xff]
      %v994 = vld [vmem:[%s672 + $0xb3] sm:$0xff]
      %v995 = vlaneseq
      %v996 = vshrl.u32 %v995, 7
      %v997 = vsub.s32 2, %v996
      %v998 = vrot.slane %v715, %v997
      %v999 = vmul.f32 %v979, %v998
      %v1000 = vmul.f32 %v980, %v998
      %v1001 = vmul.f32 %v981, %v998
      %v1002 = vmul.f32 %v982, %v998
      %v1003 = vmul.f32 %v983, %v998
      %v1004 = vmul.f32 %v984, %v998
      %v1005 = vmul.f32 %v985, %v998
      %v1006 = vmul.f32 %v986, %v998
      %v1007 = vmul.f32 %v987, %v998
      %v1008 = vmul.f32 %v988, %v998
      %v1009 = vmul.f32 %v989, %v998
      %v1010 = vmul.f32 %v990, %v998
      %v1011 = vmul.f32 %v991, %v998
      %v1012 = vmul.f32 %v992, %v998
      %v1013 = vmul.f32 %v993, %v998
      %v1014 = vmul.f32 %v994, %v998
      %v1015 = vadd.f32 %v963, %v999
      %v1016 = vadd.f32 %v964, %v1000
      %v1017 = vadd.f32 %v965, %v1001
      %v1018 = vadd.f32 %v966, %v1002
      %v1019 = vadd.f32 %v967, %v1003
      %v1020 = vadd.f32 %v968, %v1004
      %v1021 = vadd.f32 %v969, %v1005
      %v1022 = vadd.f32 %v970, %v1006
      %v1023 = vadd.f32 %v971, %v1007
      %v1024 = vadd.f32 %v972, %v1008
      %v1025 = vadd.f32 %v973, %v1009
      %v1026 = vadd.f32 %v974, %v1010
      %v1027 = vadd.f32 %v975, %v1011
      %v1028 = vadd.f32 %v976, %v1012
      %v1029 = vadd.f32 %v977, %v1013
      %v1030 = vadd.f32 %v978, %v1014
      %s1031 = scalar_lea.vmem [#allocation2], 72
      %v1032 = vld [vmem:[%s1031 + $0x1] sm:$0xff]
      %v1033 = vld [vmem:[%s1031 + $0x9] sm:$0xff]
      %v1034 = vld [vmem:[%s1031 + $0x19] sm:$0xff]
      %v1035 = vld [vmem:[%s1031 + $0x21] sm:$0xff]
      %v1036 = vld [vmem:[%s1031 + $0x31] sm:$0xff]
      %v1037 = vld [vmem:[%s1031 + $0x39] sm:$0xff]
      %v1038 = vld [vmem:[%s1031 + $0x49] sm:$0xff]
      %v1039 = vld [vmem:[%s1031 + $0x51] sm:$0xff]
      %v1040 = vld [vmem:[%s1031 + $0x61] sm:$0xff]
      %v1041 = vld [vmem:[%s1031 + $0x69] sm:$0xff]
      %v1042 = vld [vmem:[%s1031 + $0x79] sm:$0xff]
      %v1043 = vld [vmem:[%s1031 + $0x81] sm:$0xff]
      %v1044 = vld [vmem:[%s1031 + $0x91] sm:$0xff]
      %v1045 = vld [vmem:[%s1031 + $0x99] sm:$0xff]
      %v1046 = vld [vmem:[%s1031 + $0xa9] sm:$0xff]
      %v1047 = vld [vmem:[%s1031 + $0xb1] sm:$0xff]
      %v1048 = vlaneseq
      %v1049 = vshrl.u32 %v1048, 7
      %v1050 = vsub.s32 0, %v1049
      %v1051 = vrot.slane %v716, %v1050
      %v1052 = vmul.f32 %v1032, %v1051
      %v1053 = vmul.f32 %v1033, %v1051
      %v1054 = vmul.f32 %v1034, %v1051
      %v1055 = vmul.f32 %v1035, %v1051
      %v1056 = vmul.f32 %v1036, %v1051
      %v1057 = vmul.f32 %v1037, %v1051
      %v1058 = vmul.f32 %v1038, %v1051
      %v1059 = vmul.f32 %v1039, %v1051
      %v1060 = vmul.f32 %v1040, %v1051
      %v1061 = vmul.f32 %v1041, %v1051
      %v1062 = vmul.f32 %v1042, %v1051
      %v1063 = vmul.f32 %v1043, %v1051
      %v1064 = vmul.f32 %v1044, %v1051
      %v1065 = vmul.f32 %v1045, %v1051
      %v1066 = vmul.f32 %v1046, %v1051
      %v1067 = vmul.f32 %v1047, %v1051
      %v1068 = vadd.f32 %v1015, %v1052
      %v1069 = vadd.f32 %v1016, %v1053
      %v1070 = vadd.f32 %v1017, %v1054
      %v1071 = vadd.f32 %v1018, %v1055
      %v1072 = vadd.f32 %v1019, %v1056
      %v1073 = vadd.f32 %v1020, %v1057
      %v1074 = vadd.f32 %v1021, %v1058
      %v1075 = vadd.f32 %v1022, %v1059
      %v1076 = vadd.f32 %v1023, %v1060
      %v1077 = vadd.f32 %v1024, %v1061
      %v1078 = vadd.f32 %v1025, %v1062
      %v1079 = vadd.f32 %v1026, %v1063
      %v1080 = vadd.f32 %v1027, %v1064
      %v1081 = vadd.f32 %v1028, %v1065
      %v1082 = vadd.f32 %v1029, %v1066
      %v1083 = vadd.f32 %v1030, %v1067
      %v1084 = vld [vmem:[%s1031 + $0x2] sm:$0xff]
      %v1085 = vld [vmem:[%s1031 + $0xa] sm:$0xff]
      %v1086 = vld [vmem:[%s1031 + $0x1a] sm:$0xff]
      %v1087 = vld [vmem:[%s1031 + $0x22] sm:$0xff]
      %v1088 = vld [vmem:[%s1031 + $0x32] sm:$0xff]
      %v1089 = vld [vmem:[%s1031 + $0x3a] sm:$0xff]
      %v1090 = vld [vmem:[%s1031 + $0x4a] sm:$0xff]
      %v1091 = vld [vmem:[%s1031 + $0x52] sm:$0xff]
      %v1092 = vld [vmem:[%s1031 + $0x62] sm:$0xff]
      %v1093 = vld [vmem:[%s1031 + $0x6a] sm:$0xff]
      %v1094 = vld [vmem:[%s1031 + $0x7a] sm:$0xff]
      %v1095 = vld [vmem:[%s1031 + $0x82] sm:$0xff]
      %v1096 = vld [vmem:[%s1031 + $0x92] sm:$0xff]
      %v1097 = vld [vmem:[%s1031 + $0x9a] sm:$0xff]
      %v1098 = vld [vmem:[%s1031 + $0xaa] sm:$0xff]
      %v1099 = vld [vmem:[%s1031 + $0xb2] sm:$0xff]
      %v1100 = vlaneseq
      %v1101 = vshrl.u32 %v1100, 7
      %v1102 = vsub.s32 1, %v1101
      %v1103 = vrot.slane %v716, %v1102
      %v1104 = vmul.f32 %v1084, %v1103
      %v1105 = vmul.f32 %v1085, %v1103
      %v1106 = vmul.f32 %v1086, %v1103
      %v1107 = vmul.f32 %v1087, %v1103
      %v1108 = vmul.f32 %v1088, %v1103
      %v1109 = vmul.f32 %v1089, %v1103
      %v1110 = vmul.f32 %v1090, %v1103
      %v1111 = vmul.f32 %v1091, %v1103
      %v1112 = vmul.f32 %v1092, %v1103
      %v1113 = vmul.f32 %v1093, %v1103
      %v1114 = vmul.f32 %v1094, %v1103
      %v1115 = vmul.f32 %v1095, %v1103
      %v1116 = vmul.f32 %v1096, %v1103
      %v1117 = vmul.f32 %v1097, %v1103
      %v1118 = vmul.f32 %v1098, %v1103
      %v1119 = vmul.f32 %v1099, %v1103
      %v1120 = vadd.f32 %v1068, %v1104
      %v1121 = vadd.f32 %v1069, %v1105
      %v1122 = vadd.f32 %v1070, %v1106
      %v1123 = vadd.f32 %v1071, %v1107
      %v1124 = vadd.f32 %v1072, %v1108
      %v1125 = vadd.f32 %v1073, %v1109
      %v1126 = vadd.f32 %v1074, %v1110
      %v1127 = vadd.f32 %v1075, %v1111
      %v1128 = vadd.f32 %v1076, %v1112
      %v1129 = vadd.f32 %v1077, %v1113
      %v1130 = vadd.f32 %v1078, %v1114
      %v1131 = vadd.f32 %v1079, %v1115
      %v1132 = vadd.f32 %v1080, %v1116
      %v1133 = vadd.f32 %v1081, %v1117
      %v1134 = vadd.f32 %v1082, %v1118
      %v1135 = vadd.f32 %v1083, %v1119
      %v1136 = vld [vmem:[%s1031 + $0x3] sm:$0xff]
      %v1137 = vld [vmem:[%s1031 + $0xb] sm:$0xff]
      %v1138 = vld [vmem:[%s1031 + $0x1b] sm:$0xff]
      %v1139 = vld [vmem:[%s1031 + $0x23] sm:$0xff]
      %v1140 = vld [vmem:[%s1031 + $0x33] sm:$0xff]
      %v1141 = vld [vmem:[%s1031 + $0x3b] sm:$0xff]
      %v1142 = vld [vmem:[%s1031 + $0x4b] sm:$0xff]
      %v1143 = vld [vmem:[%s1031 + $0x53] sm:$0xff]
      %v1144 = vld [vmem:[%s1031 + $0x63] sm:$0xff]
      %v1145 = vld [vmem:[%s1031 + $0x6b] sm:$0xff]
      %v1146 = vld [vmem:[%s1031 + $0x7b] sm:$0xff]
      %v1147 = vld [vmem:[%s1031 + $0x83] sm:$0xff]
      %v1148 = vld [vmem:[%s1031 + $0x93] sm:$0xff]
      %v1149 = vld [vmem:[%s1031 + $0x9b] sm:$0xff]
      %v1150 = vld [vmem:[%s1031 + $0xab] sm:$0xff]
      %v1151 = vld [vmem:[%s1031 + $0xb3] sm:$0xff]
      %v1152 = vlaneseq
      %v1153 = vshrl.u32 %v1152, 7
      %v1154 = vsub.s32 2, %v1153
      %v1155 = vrot.slane %v716, %v1154
      %v1156 = vmul.f32 %v1136, %v1155
      %v1157 = vmul.f32 %v1137, %v1155
      %v1158 = vmul.f32 %v1138, %v1155
      %v1159 = vmul.f32 %v1139, %v1155
      %v1160 = vmul.f32 %v1140, %v1155
      %v1161 = vmul.f32 %v1141, %v1155
      %v1162 = vmul.f32 %v1142, %v1155
      %v1163 = vmul.f32 %v1143, %v1155
      %v1164 = vmul.f32 %v1144, %v1155
      %v1165 = vmul.f32 %v1145, %v1155
      %v1166 = vmul.f32 %v1146, %v1155
      %v1167 = vmul.f32 %v1147, %v1155
      %v1168 = vmul.f32 %v1148, %v1155
      %v1169 = vmul.f32 %v1149, %v1155
      %v1170 = vmul.f32 %v1150, %v1155
      %v1171 = vmul.f32 %v1151, %v1155
      %v1172 = vadd.f32 %v1120, %v1156
      %v1173 = vadd.f32 %v1121, %v1157
      %v1174 = vadd.f32 %v1122, %v1158
      %v1175 = vadd.f32 %v1123, %v1159
      %v1176 = vadd.f32 %v1124, %v1160
      %v1177 = vadd.f32 %v1125, %v1161
      %v1178 = vadd.f32 %v1126, %v1162
      %v1179 = vadd.f32 %v1127, %v1163
      %v1180 = vadd.f32 %v1128, %v1164
      %v1181 = vadd.f32 %v1129, %v1165
      %v1182 = vadd.f32 %v1130, %v1166
      %v1183 = vadd.f32 %v1131, %v1167
      %v1184 = vadd.f32 %v1132, %v1168
      %v1185 = vadd.f32 %v1133, %v1169
      %v1186 = vadd.f32 %v1134, %v1170
      %v1187 = vadd.f32 %v1135, %v1171
      %v1189 = vlaneseq
      %v1190 = vshrl.u32 %v1189, 7
      %v1191 = vsub.s32 0, %v1190
      %v1192 = vrot.slane %v717, %v1191
      %v1194 = vadd.f32 %v1172, %v1192
      %v1195 = vadd.f32 %v1173, %v1192
      %v1196 = vadd.f32 %v1174, %v1192
      %v1197 = vadd.f32 %v1175, %v1192
      %v1198 = vadd.f32 %v1176, %v1192
      %v1199 = vadd.f32 %v1177, %v1192
      %v1200 = vadd.f32 %v1178, %v1192
      %v1201 = vadd.f32 %v1179, %v1192
      %v1202 = vadd.f32 %v1180, %v1192
      %v1203 = vadd.f32 %v1181, %v1192
      %v1204 = vadd.f32 %v1182, %v1192
      %v1205 = vadd.f32 %v1183, %v1192
      %v1206 = vadd.f32 %v1184, %v1192
      %v1207 = vadd.f32 %v1185, %v1192
      %v1208 = vadd.f32 %v1186, %v1192
      %v1209 = vadd.f32 %v1187, %v1192
      %v1210 = vld [vmem:[%s7] sm:$0x1f]
      %v1211 = vld [vmem:[%s7 + $0x8] sm:$0x1f]
      %v1212 = vld [vmem:[%s7 + $0x10] sm:$0x1f]
      %v1213 = vld [vmem:[%s7 + $0x18] sm:$0x1f]
      %v1214 = vld [vmem:[%s7 + $0x20] sm:$0x1f]
      %v1215 = vld [vmem:[%s8] sm:$0x1]
      %v1216 = vld [vmem:[#allocation2] sm:$0xff]
      %v1217 = vld [vmem:[#allocation2 + $0x8] sm:$0xff]
      %v1218 = vld [vmem:[#allocation2 + $0x18] sm:$0xff]
      %v1219 = vld [vmem:[#allocation2 + $0x20] sm:$0xff]
      %v1220 = vld [vmem:[#allocation2 + $0x30] sm:$0xff]
      %v1221 = vld [vmem:[#allocation2 + $0x38] sm:$0xff]
      %v1222 = vld [vmem:[#allocation2 + $0x48] sm:$0xff]
      %v1223 = vld [vmem:[#allocation2 + $0x50] sm:$0xff]
      %v1224 = vld [vmem:[#allocation2 + $0x60] sm:$0xff]
      %v1225 = vld [vmem:[#allocation2 + $0x68] sm:$0xff]
      %v1226 = vld [vmem:[#allocation2 + $0x78] sm:$0xff]
      %v1227 = vld [vmem:[#allocation2 + $0x80] sm:$0xff]
      %v1228 = vld [vmem:[#allocation2 + $0x90] sm:$0xff]
      %v1229 = vld [vmem:[#allocation2 + $0x98] sm:$0xff]
      %v1230 = vld [vmem:[#allocation2 + $0xa8] sm:$0xff]
      %v1231 = vld [vmem:[#allocation2 + $0xb0] sm:$0xff]
      %v1232 = vlaneseq
      %v1233 = vshrl.u32 %v1232, 7
      %v1234 = vsub.s32 0, %v1233
      %v1235 = vrot.slane %v1210, %v1234
      %v1236 = vmul.f32 %v1216, %v1235
      %v1237 = vmul.f32 %v1217, %v1235
      %v1238 = vmul.f32 %v1218, %v1235
      %v1239 = vmul.f32 %v1219, %v1235
      %v1240 = vmul.f32 %v1220, %v1235
      %v1241 = vmul.f32 %v1221, %v1235
      %v1242 = vmul.f32 %v1222, %v1235
      %v1243 = vmul.f32 %v1223, %v1235
      %v1244 = vmul.f32 %v1224, %v1235
      %v1245 = vmul.f32 %v1225, %v1235
      %v1246 = vmul.f32 %v1226, %v1235
      %v1247 = vmul.f32 %v1227, %v1235
      %v1248 = vmul.f32 %v1228, %v1235
      %v1249 = vmul.f32 %v1229, %v1235
      %v1250 = vmul.f32 %v1230, %v1235
      %v1251 = vmul.f32 %v1231, %v1235
      %v1252 = vadd.f32 %v1236, 0.0
      %v1253 = vadd.f32 %v1237, 0.0
      %v1254 = vadd.f32 %v1238, 0.0
      %v1255 = vadd.f32 %v1239, 0.0
      %v1256 = vadd.f32 %v1240, 0.0
      %v1257 = vadd.f32 %v1241, 0.0
      %v1258 = vadd.f32 %v1242, 0.0
      %v1259 = vadd.f32 %v1243, 0.0
      %v1260 = vadd.f32 %v1244, 0.0
      %v1261 = vadd.f32 %v1245, 0.0
      %v1262 = vadd.f32 %v1246, 0.0
      %v1263 = vadd.f32 %v1247, 0.0
      %v1264 = vadd.f32 %v1248, 0.0
      %v1265 = vadd.f32 %v1249, 0.0
      %v1266 = vadd.f32 %v1250, 0.0
      %v1267 = vadd.f32 %v1251, 0.0
      %v1268 = vld [vmem:[#allocation2 + $0x1] sm:$0xff]
      %v1269 = vld [vmem:[#allocation2 + $0x9] sm:$0xff]
      %v1270 = vld [vmem:[#allocation2 + $0x19] sm:$0xff]
      %v1271 = vld [vmem:[#allocation2 + $0x21] sm:$0xff]
      %v1272 = vld [vmem:[#allocation2 + $0x31] sm:$0xff]
      %v1273 = vld [vmem:[#allocation2 + $0x39] sm:$0xff]
      %v1274 = vld [vmem:[#allocation2 + $0x49] sm:$0xff]
      %v1275 = vld [vmem:[#allocation2 + $0x51] sm:$0xff]
      %v1276 = vld [vmem:[#allocation2 + $0x61] sm:$0xff]
      %v1277 = vld [vmem:[#allocation2 + $0x69] sm:$0xff]
      %v1278 = vld [vmem:[#allocation2 + $0x79] sm:$0xff]
      %v1279 = vld [vmem:[#allocation2 + $0x81] sm:$0xff]
      %v1280 = vld [vmem:[#allocation2 + $0x91] sm:$0xff]
      %v1281 = vld [vmem:[#allocation2 + $0x99] sm:$0xff]
      %v1282 = vld [vmem:[#allocation2 + $0xa9] sm:$0xff]
      %v1283 = vld [vmem:[#allocation2 + $0xb1] sm:$0xff]
      %v1284 = vlaneseq
      %v1285 = vshrl.u32 %v1284, 7
      %v1286 = vsub.s32 1, %v1285
      %v1287 = vrot.slane %v1210, %v1286
      %v1288 = vmul.f32 %v1268, %v1287
      %v1289 = vmul.f32 %v1269, %v1287
      %v1290 = vmul.f32 %v1270, %v1287
      %v1291 = vmul.f32 %v1271, %v1287
      %v1292 = vmul.f32 %v1272, %v1287
      %v1293 = vmul.f32 %v1273, %v1287
      %v1294 = vmul.f32 %v1274, %v1287
      %v1295 = vmul.f32 %v1275, %v1287
      %v1296 = vmul.f32 %v1276, %v1287
      %v1297 = vmul.f32 %v1277, %v1287
      %v1298 = vmul.f32 %v1278, %v1287
      %v1299 = vmul.f32 %v1279, %v1287
      %v1300 = vmul.f32 %v1280, %v1287
      %v1301 = vmul.f32 %v1281, %v1287
      %v1302 = vmul.f32 %v1282, %v1287
      %v1303 = vmul.f32 %v1283, %v1287
      %v1304 = vadd.f32 %v1252, %v1288
      %v1305 = vadd.f32 %v1253, %v1289
      %v1306 = vadd.f32 %v1254, %v1290
      %v1307 = vadd.f32 %v1255, %v1291
      %v1308 = vadd.f32 %v1256, %v1292
      %v1309 = vadd.f32 %v1257, %v1293
      %v1310 = vadd.f32 %v1258, %v1294
      %v1311 = vadd.f32 %v1259, %v1295
      %v1312 = vadd.f32 %v1260, %v1296
      %v1313 = vadd.f32 %v1261, %v1297
      %v1314 = vadd.f32 %v1262, %v1298
      %v1315 = vadd.f32 %v1263, %v1299
      %v1316 = vadd.f32 %v1264, %v1300
      %v1317 = vadd.f32 %v1265, %v1301
      %v1318 = vadd.f32 %v1266, %v1302
      %v1319 = vadd.f32 %v1267, %v1303
      %v1320 = vld [vmem:[#allocation2 + $0x2] sm:$0xff]
      %v1321 = vld [vmem:[#allocation2 + $0xa] sm:$0xff]
      %v1322 = vld [vmem:[#allocation2 + $0x1a] sm:$0xff]
      %v1323 = vld [vmem:[#allocation2 + $0x22] sm:$0xff]
      %v1324 = vld [vmem:[#allocation2 + $0x32] sm:$0xff]
      %v1325 = vld [vmem:[#allocation2 + $0x3a] sm:$0xff]
      %v1326 = vld [vmem:[#allocation2 + $0x4a] sm:$0xff]
      %v1327 = vld [vmem:[#allocation2 + $0x52] sm:$0xff]
      %v1328 = vld [vmem:[#allocation2 + $0x62] sm:$0xff]
      %v1329 = vld [vmem:[#allocation2 + $0x6a] sm:$0xff]
      %v1330 = vld [vmem:[#allocation2 + $0x7a] sm:$0xff]
      %v1331 = vld [vmem:[#allocation2 + $0x82] sm:$0xff]
      %v1332 = vld [vmem:[#allocation2 + $0x92] sm:$0xff]
      %v1333 = vld [vmem:[#allocation2 + $0x9a] sm:$0xff]
      %v1334 = vld [vmem:[#allocation2 + $0xaa] sm:$0xff]
      %v1335 = vld [vmem:[#allocation2 + $0xb2] sm:$0xff]
      %v1336 = vlaneseq
      %v1337 = vshrl.u32 %v1336, 7
      %v1338 = vsub.s32 2, %v1337
      %v1339 = vrot.slane %v1210, %v1338
      %v1340 = vmul.f32 %v1320, %v1339
      %v1341 = vmul.f32 %v1321, %v1339
      %v1342 = vmul.f32 %v1322, %v1339
      %v1343 = vmul.f32 %v1323, %v1339
      %v1344 = vmul.f32 %v1324, %v1339
      %v1345 = vmul.f32 %v1325, %v1339
      %v1346 = vmul.f32 %v1326, %v1339
      %v1347 = vmul.f32 %v1327, %v1339
      %v1348 = vmul.f32 %v1328, %v1339
      %v1349 = vmul.f32 %v1329, %v1339
      %v1350 = vmul.f32 %v1330, %v1339
      %v1351 = vmul.f32 %v1331, %v1339
      %v1352 = vmul.f32 %v1332, %v1339
      %v1353 = vmul.f32 %v1333, %v1339
      %v1354 = vmul.f32 %v1334, %v1339
      %v1355 = vmul.f32 %v1335, %v1339
      %v1356 = vadd.f32 %v1304, %v1340
      %v1357 = vadd.f32 %v1305, %v1341
      %v1358 = vadd.f32 %v1306, %v1342
      %v1359 = vadd.f32 %v1307, %v1343
      %v1360 = vadd.f32 %v1308, %v1344
      %v1361 = vadd.f32 %v1309, %v1345
      %v1362 = vadd.f32 %v1310, %v1346
      %v1363 = vadd.f32 %v1311, %v1347
      %v1364 = vadd.f32 %v1312, %v1348
      %v1365 = vadd.f32 %v1313, %v1349
      %v1366 = vadd.f32 %v1314, %v1350
      %v1367 = vadd.f32 %v1315, %v1351
      %v1368 = vadd.f32 %v1316, %v1352
      %v1369 = vadd.f32 %v1317, %v1353
      %v1370 = vadd.f32 %v1318, %v1354
      %v1371 = vadd.f32 %v1319, %v1355
      %v1372 = vld [vmem:[#allocation2 + $0x3] sm:$0xff]
      %v1373 = vld [vmem:[#allocation2 + $0xb] sm:$0xff]
      %v1374 = vld [vmem:[#allocation2 + $0x1b] sm:$0xff]
      %v1375 = vld [vmem:[#allocation2 + $0x23] sm:$0xff]
      %v1376 = vld [vmem:[#allocation2 + $0x33] sm:$0xff]
      %v1377 = vld [vmem:[#allocation2 + $0x3b] sm:$0xff]
      %v1378 = vld [vmem:[#allocation2 + $0x4b] sm:$0xff]
      %v1379 = vld [vmem:[#allocation2 + $0x53] sm:$0xff]
      %v1380 = vld [vmem:[#allocation2 + $0x63] sm:$0xff]
      %v1381 = vld [vmem:[#allocation2 + $0x6b] sm:$0xff]
      %v1382 = vld [vmem:[#allocation2 + $0x7b] sm:$0xff]
      %v1383 = vld [vmem:[#allocation2 + $0x83] sm:$0xff]
      %v1384 = vld [vmem:[#allocation2 + $0x93] sm:$0xff]
      %v1385 = vld [vmem:[#allocation2 + $0x9b] sm:$0xff]
      %v1386 = vld [vmem:[#allocation2 + $0xab] sm:$0xff]
      %v1387 = vld [vmem:[#allocation2 + $0xb3] sm:$0xff]
      %v1388 = vlaneseq
      %v1389 = vshrl.u32 %v1388, 7
      %v1390 = vsub.s32 3, %v1389
      %v1391 = vrot.slane %v1210, %v1390
      %v1392 = vmul.f32 %v1372, %v1391
      %v1393 = vmul.f32 %v1373, %v1391
      %v1394 = vmul.f32 %v1374, %v1391
      %v1395 = vmul.f32 %v1375, %v1391
      %v1396 = vmul.f32 %v1376, %v1391
      %v1397 = vmul.f32 %v1377, %v1391
      %v1398 = vmul.f32 %v1378, %v1391
      %v1399 = vmul.f32 %v1379, %v1391
      %v1400 = vmul.f32 %v1380, %v1391
      %v1401 = vmul.f32 %v1381, %v1391
      %v1402 = vmul.f32 %v1382, %v1391
      %v1403 = vmul.f32 %v1383, %v1391
      %v1404 = vmul.f32 %v1384, %v1391
      %v1405 = vmul.f32 %v1385, %v1391
      %v1406 = vmul.f32 %v1386, %v1391
      %v1407 = vmul.f32 %v1387, %v1391
      %v1408 = vadd.f32 %v1356, %v1392
      %v1409 = vadd.f32 %v1357, %v1393
      %v1410 = vadd.f32 %v1358, %v1394
      %v1411 = vadd.f32 %v1359, %v1395
      %v1412 = vadd.f32 %v1360, %v1396
      %v1413 = vadd.f32 %v1361, %v1397
      %v1414 = vadd.f32 %v1362, %v1398
      %v1415 = vadd.f32 %v1363, %v1399
      %v1416 = vadd.f32 %v1364, %v1400
      %v1417 = vadd.f32 %v1365, %v1401
      %v1418 = vadd.f32 %v1366, %v1402
      %v1419 = vadd.f32 %v1367, %v1403
      %v1420 = vadd.f32 %v1368, %v1404
      %v1421 = vadd.f32 %v1369, %v1405
      %v1422 = vadd.f32 %v1370, %v1406
      %v1423 = vadd.f32 %v1371, %v1407
      %v1424 = vld [vmem:[#allocation2 + $0x4] sm:$0xff]
      %v1425 = vld [vmem:[#allocation2 + $0xc] sm:$0xff]
      %v1426 = vld [vmem:[#allocation2 + $0x1c] sm:$0xff]
      %v1427 = vld [vmem:[#allocation2 + $0x24] sm:$0xff]
      %v1428 = vld [vmem:[#allocation2 + $0x34] sm:$0xff]
      %v1429 = vld [vmem:[#allocation2 + $0x3c] sm:$0xff]
      %v1430 = vld [vmem:[#allocation2 + $0x4c] sm:$0xff]
      %v1431 = vld [vmem:[#allocation2 + $0x54] sm:$0xff]
      %v1432 = vld [vmem:[#allocation2 + $0x64] sm:$0xff]
      %v1433 = vld [vmem:[#allocation2 + $0x6c] sm:$0xff]
      %v1434 = vld [vmem:[#allocation2 + $0x7c] sm:$0xff]
      %v1435 = vld [vmem:[#allocation2 + $0x84] sm:$0xff]
      %v1436 = vld [vmem:[#allocation2 + $0x94] sm:$0xff]
      %v1437 = vld [vmem:[#allocation2 + $0x9c] sm:$0xff]
      %v1438 = vld [vmem:[#allocation2 + $0xac] sm:$0xff]
      %v1439 = vld [vmem:[#allocation2 + $0xb4] sm:$0xff]
      %v1440 = vlaneseq
      %v1441 = vshrl.u32 %v1440, 7
      %v1442 = vsub.s32 4, %v1441
      %v1443 = vrot.slane %v1210, %v1442
      %v1444 = vmul.f32 %v1424, %v1443
      %v1445 = vmul.f32 %v1425, %v1443
      %v1446 = vmul.f32 %v1426, %v1443
      %v1447 = vmul.f32 %v1427, %v1443
      %v1448 = vmul.f32 %v1428, %v1443
      %v1449 = vmul.f32 %v1429, %v1443
      %v1450 = vmul.f32 %v1430, %v1443
      %v1451 = vmul.f32 %v1431, %v1443
      %v1452 = vmul.f32 %v1432, %v1443
      %v1453 = vmul.f32 %v1433, %v1443
      %v1454 = vmul.f32 %v1434, %v1443
      %v1455 = vmul.f32 %v1435, %v1443
      %v1456 = vmul.f32 %v1436, %v1443
      %v1457 = vmul.f32 %v1437, %v1443
      %v1458 = vmul.f32 %v1438, %v1443
      %v1459 = vmul.f32 %v1439, %v1443
      %v1460 = vadd.f32 %v1408, %v1444
      %v1461 = vadd.f32 %v1409, %v1445
      %v1462 = vadd.f32 %v1410, %v1446
      %v1463 = vadd.f32 %v1411, %v1447
      %v1464 = vadd.f32 %v1412, %v1448
      %v1465 = vadd.f32 %v1413, %v1449
      %v1466 = vadd.f32 %v1414, %v1450
      %v1467 = vadd.f32 %v1415, %v1451
      %v1468 = vadd.f32 %v1416, %v1452
      %v1469 = vadd.f32 %v1417, %v1453
      %v1470 = vadd.f32 %v1418, %v1454
      %v1471 = vadd.f32 %v1419, %v1455
      %v1472 = vadd.f32 %v1420, %v1456
      %v1473 = vadd.f32 %v1421, %v1457
      %v1474 = vadd.f32 %v1422, %v1458
      %v1475 = vadd.f32 %v1423, %v1459
      %v1476 = vld [vmem:[%s718] sm:$0xff]
      %v1477 = vld [vmem:[%s718 + $0x8] sm:$0xff]
      %v1478 = vld [vmem:[%s718 + $0x18] sm:$0xff]
      %v1479 = vld [vmem:[%s718 + $0x20] sm:$0xff]
      %v1480 = vld [vmem:[%s718 + $0x30] sm:$0xff]
      %v1481 = vld [vmem:[%s718 + $0x38] sm:$0xff]
      %v1482 = vld [vmem:[%s718 + $0x48] sm:$0xff]
      %v1483 = vld [vmem:[%s718 + $0x50] sm:$0xff]
      %v1484 = vld [vmem:[%s718 + $0x60] sm:$0xff]
      %v1485 = vld [vmem:[%s718 + $0x68] sm:$0xff]
      %v1486 = vld [vmem:[%s718 + $0x78] sm:$0xff]
      %v1487 = vld [vmem:[%s718 + $0x80] sm:$0xff]
      %v1488 = vld [vmem:[%s718 + $0x90] sm:$0xff]
      %v1489 = vld [vmem:[%s718 + $0x98] sm:$0xff]
      %v1490 = vld [vmem:[%s718 + $0xa8] sm:$0xff]
      %v1491 = vld [vmem:[%s718 + $0xb0] sm:$0xff]
      %v1492 = vlaneseq
      %v1493 = vshrl.u32 %v1492, 7
      %v1494 = vsub.s32 0, %v1493
      %v1495 = vrot.slane %v1211, %v1494
      %v1496 = vmul.f32 %v1476, %v1495
      %v1497 = vmul.f32 %v1477, %v1495
      %v1498 = vmul.f32 %v1478, %v1495
      %v1499 = vmul.f32 %v1479, %v1495
      %v1500 = vmul.f32 %v1480, %v1495
      %v1501 = vmul.f32 %v1481, %v1495
      %v1502 = vmul.f32 %v1482, %v1495
      %v1503 = vmul.f32 %v1483, %v1495
      %v1504 = vmul.f32 %v1484, %v1495
      %v1505 = vmul.f32 %v1485, %v1495
      %v1506 = vmul.f32 %v1486, %v1495
      %v1507 = vmul.f32 %v1487, %v1495
      %v1508 = vmul.f32 %v1488, %v1495
      %v1509 = vmul.f32 %v1489, %v1495
      %v1510 = vmul.f32 %v1490, %v1495
      %v1511 = vmul.f32 %v1491, %v1495
      %v1512 = vadd.f32 %v1460, %v1496
      %v1513 = vadd.f32 %v1461, %v1497
      %v1514 = vadd.f32 %v1462, %v1498
      %v1515 = vadd.f32 %v1463, %v1499
      %v1516 = vadd.f32 %v1464, %v1500
      %v1517 = vadd.f32 %v1465, %v1501
      %v1518 = vadd.f32 %v1466, %v1502
      %v1519 = vadd.f32 %v1467, %v1503
      %v1520 = vadd.f32 %v1468, %v1504
      %v1521 = vadd.f32 %v1469, %v1505
      %v1522 = vadd.f32 %v1470, %v1506
      %v1523 = vadd.f32 %v1471, %v1507
      %v1524 = vadd.f32 %v1472, %v1508
      %v1525 = vadd.f32 %v1473, %v1509
      %v1526 = vadd.f32 %v1474, %v1510
      %v1527 = vadd.f32 %v1475, %v1511
      %v1528 = vlaneseq
      %v1529 = vshrl.u32 %v1528, 7
      %v1530 = vsub.s32 1, %v1529
      %v1531 = vrot.slane %v1211, %v1530
      %v1532 = vmul.f32 %v719, %v1531
      %v1533 = vmul.f32 %v720, %v1531
      %v1534 = vmul.f32 %v721, %v1531
      %v1535 = vmul.f32 %v722, %v1531
      %v1536 = vmul.f32 %v723, %v1531
      %v1537 = vmul.f32 %v724, %v1531
      %v1538 = vmul.f32 %v725, %v1531
      %v1539 = vmul.f32 %v726, %v1531
      %v1540 = vmul.f32 %v727, %v1531
      %v1541 = vmul.f32 %v728, %v1531
      %v1542 = vmul.f32 %v729, %v1531
      %v1543 = vmul.f32 %v730, %v1531
      %v1544 = vmul.f32 %v731, %v1531
      %v1545 = vmul.f32 %v732, %v1531
      %v1546 = vmul.f32 %v733, %v1531
      %v1547 = vmul.f32 %v734, %v1531
      %v1548 = vadd.f32 %v1512, %v1532
      %v1549 = vadd.f32 %v1513, %v1533
      %v1550 = vadd.f32 %v1514, %v1534
      %v1551 = vadd.f32 %v1515, %v1535
      %v1552 = vadd.f32 %v1516, %v1536
      %v1553 = vadd.f32 %v1517, %v1537
      %v1554 = vadd.f32 %v1518, %v1538
      %v1555 = vadd.f32 %v1519, %v1539
      %v1556 = vadd.f32 %v1520, %v1540
      %v1557 = vadd.f32 %v1521, %v1541
      %v1558 = vadd.f32 %v1522, %v1542
      %v1559 = vadd.f32 %v1523, %v1543
      %v1560 = vadd.f32 %v1524, %v1544
      %v1561 = vadd.f32 %v1525, %v1545
      %v1562 = vadd.f32 %v1526, %v1546
      %v1563 = vadd.f32 %v1527, %v1547
      %v1564 = vlaneseq
      %v1565 = vshrl.u32 %v1564, 7
      %v1566 = vsub.s32 2, %v1565
      %v1567 = vrot.slane %v1211, %v1566
      %v1568 = vmul.f32 %v771, %v1567
      %v1569 = vmul.f32 %v772, %v1567
      %v1570 = vmul.f32 %v773, %v1567
      %v1571 = vmul.f32 %v774, %v1567
      %v1572 = vmul.f32 %v775, %v1567
      %v1573 = vmul.f32 %v776, %v1567
      %v1574 = vmul.f32 %v777, %v1567
      %v1575 = vmul.f32 %v778, %v1567
      %v1576 = vmul.f32 %v779, %v1567
      %v1577 = vmul.f32 %v780, %v1567
      %v1578 = vmul.f32 %v781, %v1567
      %v1579 = vmul.f32 %v782, %v1567
      %v1580 = vmul.f32 %v783, %v1567
      %v1581 = vmul.f32 %v784, %v1567
      %v1582 = vmul.f32 %v785, %v1567
      %v1583 = vmul.f32 %v786, %v1567
      %v1584 = vadd.f32 %v1548, %v1568
      %v1585 = vadd.f32 %v1549, %v1569
      %v1586 = vadd.f32 %v1550, %v1570
      %v1587 = vadd.f32 %v1551, %v1571
      %v1588 = vadd.f32 %v1552, %v1572
      %v1589 = vadd.f32 %v1553, %v1573
      %v1590 = vadd.f32 %v1554, %v1574
      %v1591 = vadd.f32 %v1555, %v1575
      %v1592 = vadd.f32 %v1556, %v1576
      %v1593 = vadd.f32 %v1557, %v1577
      %v1594 = vadd.f32 %v1558, %v1578
      %v1595 = vadd.f32 %v1559, %v1579
      %v1596 = vadd.f32 %v1560, %v1580
      %v1597 = vadd.f32 %v1561, %v1581
      %v1598 = vadd.f32 %v1562, %v1582
      %v1599 = vadd.f32 %v1563, %v1583
      %v1600 = vlaneseq
      %v1601 = vshrl.u32 %v1600, 7
      %v1602 = vsub.s32 3, %v1601
      %v1603 = vrot.slane %v1211, %v1602
      %v1604 = vmul.f32 %v823, %v1603
      %v1605 = vmul.f32 %v824, %v1603
      %v1606 = vmul.f32 %v825, %v1603
      %v1607 = vmul.f32 %v826, %v1603
      %v1608 = vmul.f32 %v827, %v1603
      %v1609 = vmul.f32 %v828, %v1603
      %v1610 = vmul.f32 %v829, %v1603
      %v1611 = vmul.f32 %v830, %v1603
      %v1612 = vmul.f32 %v831, %v1603
      %v1613 = vmul.f32 %v832, %v1603
      %v1614 = vmul.f32 %v833, %v1603
      %v1615 = vmul.f32 %v834, %v1603
      %v1616 = vmul.f32 %v835, %v1603
      %v1617 = vmul.f32 %v836, %v1603
      %v1618 = vmul.f32 %v837, %v1603
      %v1619 = vmul.f32 %v838, %v1603
      %v1620 = vadd.f32 %v1584, %v1604
      %v1621 = vadd.f32 %v1585, %v1605
      %v1622 = vadd.f32 %v1586, %v1606
      %v1623 = vadd.f32 %v1587, %v1607
      %v1624 = vadd.f32 %v1588, %v1608
      %v1625 = vadd.f32 %v1589, %v1609
      %v1626 = vadd.f32 %v1590, %v1610
      %v1627 = vadd.f32 %v1591, %v1611
      %v1628 = vadd.f32 %v1592, %v1612
      %v1629 = vadd.f32 %v1593, %v1613
      %v1630 = vadd.f32 %v1594, %v1614
      %v1631 = vadd.f32 %v1595, %v1615
      %v1632 = vadd.f32 %v1596, %v1616
      %v1633 = vadd.f32 %v1597, %v1617
      %v1634 = vadd.f32 %v1598, %v1618
      %v1635 = vadd.f32 %v1599, %v1619
      %v1636 = vld [vmem:[%s718 + $0x4] sm:$0xff]
      %v1637 = vld [vmem:[%s718 + $0xc] sm:$0xff]
      %v1638 = vld [vmem:[%s718 + $0x1c] sm:$0xff]
      %v1639 = vld [vmem:[%s718 + $0x24] sm:$0xff]
      %v1640 = vld [vmem:[%s718 + $0x34] sm:$0xff]
      %v1641 = vld [vmem:[%s718 + $0x3c] sm:$0xff]
      %v1642 = vld [vmem:[%s718 + $0x4c] sm:$0xff]
      %v1643 = vld [vmem:[%s718 + $0x54] sm:$0xff]
      %v1644 = vld [vmem:[%s718 + $0x64] sm:$0xff]
      %v1645 = vld [vmem:[%s718 + $0x6c] sm:$0xff]
      %v1646 = vld [vmem:[%s718 + $0x7c] sm:$0xff]
      %v1647 = vld [vmem:[%s718 + $0x84] sm:$0xff]
      %v1648 = vld [vmem:[%s718 + $0x94] sm:$0xff]
      %v1649 = vld [vmem:[%s718 + $0x9c] sm:$0xff]
      %v1650 = vld [vmem:[%s718 + $0xac] sm:$0xff]
      %v1651 = vld [vmem:[%s718 + $0xb4] sm:$0xff]
      %v1652 = vlaneseq
      %v1653 = vshrl.u32 %v1652, 7
      %v1654 = vsub.s32 4, %v1653
      %v1655 = vrot.slane %v1211, %v1654
      %v1656 = vmul.f32 %v1636, %v1655
      %v1657 = vmul.f32 %v1637, %v1655
      %v1658 = vmul.f32 %v1638, %v1655
      %v1659 = vmul.f32 %v1639, %v1655
      %v1660 = vmul.f32 %v1640, %v1655
      %v1661 = vmul.f32 %v1641, %v1655
      %v1662 = vmul.f32 %v1642, %v1655
      %v1663 = vmul.f32 %v1643, %v1655
      %v1664 = vmul.f32 %v1644, %v1655
      %v1665 = vmul.f32 %v1645, %v1655
      %v1666 = vmul.f32 %v1646, %v1655
      %v1667 = vmul.f32 %v1647, %v1655
      %v1668 = vmul.f32 %v1648, %v1655
      %v1669 = vmul.f32 %v1649, %v1655
      %v1670 = vmul.f32 %v1650, %v1655
      %v1671 = vmul.f32 %v1651, %v1655
      %v1672 = vadd.f32 %v1620, %v1656
      %v1673 = vadd.f32 %v1621, %v1657
      %v1674 = vadd.f32 %v1622, %v1658
      %v1675 = vadd.f32 %v1623, %v1659
      %v1676 = vadd.f32 %v1624, %v1660
      %v1677 = vadd.f32 %v1625, %v1661
      %v1678 = vadd.f32 %v1626, %v1662
      %v1679 = vadd.f32 %v1627, %v1663
      %v1680 = vadd.f32 %v1628, %v1664
      %v1681 = vadd.f32 %v1629, %v1665
      %v1682 = vadd.f32 %v1630, %v1666
      %v1683 = vadd.f32 %v1631, %v1667
      %v1684 = vadd.f32 %v1632, %v1668
      %v1685 = vadd.f32 %v1633, %v1669
      %v1686 = vadd.f32 %v1634, %v1670
      %v1687 = vadd.f32 %v1635, %v1671
      %v1688 = vld [vmem:[%s672] sm:$0xff]
      %v1689 = vld [vmem:[%s672 + $0x8] sm:$0xff]
      %v1690 = vld [vmem:[%s672 + $0x18] sm:$0xff]
      %v1691 = vld [vmem:[%s672 + $0x20] sm:$0xff]
      %v1692 = vld [vmem:[%s672 + $0x30] sm:$0xff]
      %v1693 = vld [vmem:[%s672 + $0x38] sm:$0xff]
      %v1694 = vld [vmem:[%s672 + $0x48] sm:$0xff]
      %v1695 = vld [vmem:[%s672 + $0x50] sm:$0xff]
      %v1696 = vld [vmem:[%s672 + $0x60] sm:$0xff]
      %v1697 = vld [vmem:[%s672 + $0x68] sm:$0xff]
      %v1698 = vld [vmem:[%s672 + $0x78] sm:$0xff]
      %v1699 = vld [vmem:[%s672 + $0x80] sm:$0xff]
      %v1700 = vld [vmem:[%s672 + $0x90] sm:$0xff]
      %v1701 = vld [vmem:[%s672 + $0x98] sm:$0xff]
      %v1702 = vld [vmem:[%s672 + $0xa8] sm:$0xff]
      %v1703 = vld [vmem:[%s672 + $0xb0] sm:$0xff]
      %v1704 = vlaneseq
      %v1705 = vshrl.u32 %v1704, 7
      %v1706 = vsub.s32 0, %v1705
      %v1707 = vrot.slane %v1212, %v1706
      %v1708 = vmul.f32 %v1688, %v1707
      %v1709 = vmul.f32 %v1689, %v1707
      %v1710 = vmul.f32 %v1690, %v1707
      %v1711 = vmul.f32 %v1691, %v1707
      %v1712 = vmul.f32 %v1692, %v1707
      %v1713 = vmul.f32 %v1693, %v1707
      %v1714 = vmul.f32 %v1694, %v1707
      %v1715 = vmul.f32 %v1695, %v1707
      %v1716 = vmul.f32 %v1696, %v1707
      %v1717 = vmul.f32 %v1697, %v1707
      %v1718 = vmul.f32 %v1698, %v1707
      %v1719 = vmul.f32 %v1699, %v1707
      %v1720 = vmul.f32 %v1700, %v1707
      %v1721 = vmul.f32 %v1701, %v1707
      %v1722 = vmul.f32 %v1702, %v1707
      %v1723 = vmul.f32 %v1703, %v1707
      %v1724 = vadd.f32 %v1672, %v1708
      %v1725 = vadd.f32 %v1673, %v1709
      %v1726 = vadd.f32 %v1674, %v1710
      %v1727 = vadd.f32 %v1675, %v1711
      %v1728 = vadd.f32 %v1676, %v1712
      %v1729 = vadd.f32 %v1677, %v1713
      %v1730 = vadd.f32 %v1678, %v1714
      %v1731 = vadd.f32 %v1679, %v1715
      %v1732 = vadd.f32 %v1680, %v1716
      %v1733 = vadd.f32 %v1681, %v1717
      %v1734 = vadd.f32 %v1682, %v1718
      %v1735 = vadd.f32 %v1683, %v1719
      %v1736 = vadd.f32 %v1684, %v1720
      %v1737 = vadd.f32 %v1685, %v1721
      %v1738 = vadd.f32 %v1686, %v1722
      %v1739 = vadd.f32 %v1687, %v1723
      %v1740 = vlaneseq
      %v1741 = vshrl.u32 %v1740, 7
      %v1742 = vsub.s32 1, %v1741
      %v1743 = vrot.slane %v1212, %v1742
      %v1744 = vmul.f32 %v875, %v1743
      %v1745 = vmul.f32 %v876, %v1743
      %v1746 = vmul.f32 %v877, %v1743
      %v1747 = vmul.f32 %v878, %v1743
      %v1748 = vmul.f32 %v879, %v1743
      %v1749 = vmul.f32 %v880, %v1743
      %v1750 = vmul.f32 %v881, %v1743
      %v1751 = vmul.f32 %v882, %v1743
      %v1752 = vmul.f32 %v883, %v1743
      %v1753 = vmul.f32 %v884, %v1743
      %v1754 = vmul.f32 %v885, %v1743
      %v1755 = vmul.f32 %v886, %v1743
      %v1756 = vmul.f32 %v887, %v1743
      %v1757 = vmul.f32 %v888, %v1743
      %v1758 = vmul.f32 %v889, %v1743
      %v1759 = vmul.f32 %v890, %v1743
      %v1760 = vadd.f32 %v1724, %v1744
      %v1761 = vadd.f32 %v1725, %v1745
      %v1762 = vadd.f32 %v1726, %v1746
      %v1763 = vadd.f32 %v1727, %v1747
      %v1764 = vadd.f32 %v1728, %v1748
      %v1765 = vadd.f32 %v1729, %v1749
      %v1766 = vadd.f32 %v1730, %v1750
      %v1767 = vadd.f32 %v1731, %v1751
      %v1768 = vadd.f32 %v1732, %v1752
      %v1769 = vadd.f32 %v1733, %v1753
      %v1770 = vadd.f32 %v1734, %v1754
      %v1771 = vadd.f32 %v1735, %v1755
      %v1772 = vadd.f32 %v1736, %v1756
      %v1773 = vadd.f32 %v1737, %v1757
      %v1774 = vadd.f32 %v1738, %v1758
      %v1775 = vadd.f32 %v1739, %v1759
      %v1776 = vlaneseq
      %v1777 = vshrl.u32 %v1776, 7
      %v1778 = vsub.s32 2, %v1777
      %v1779 = vrot.slane %v1212, %v1778
      %v1780 = vmul.f32 %v927, %v1779
      %v1781 = vmul.f32 %v928, %v1779
      %v1782 = vmul.f32 %v929, %v1779
      %v1783 = vmul.f32 %v930, %v1779
      %v1784 = vmul.f32 %v931, %v1779
      %v1785 = vmul.f32 %v932, %v1779
      %v1786 = vmul.f32 %v933, %v1779
      %v1787 = vmul.f32 %v934, %v1779
      %v1788 = vmul.f32 %v935, %v1779
      %v1789 = vmul.f32 %v936, %v1779
      %v1790 = vmul.f32 %v937, %v1779
      %v1791 = vmul.f32 %v938, %v1779
      %v1792 = vmul.f32 %v939, %v1779
      %v1793 = vmul.f32 %v940, %v1779
      %v1794 = vmul.f32 %v941, %v1779
      %v1795 = vmul.f32 %v942, %v1779
      %v1796 = vadd.f32 %v1760, %v1780
      %v1797 = vadd.f32 %v1761, %v1781
      %v1798 = vadd.f32 %v1762, %v1782
      %v1799 = vadd.f32 %v1763, %v1783
      %v1800 = vadd.f32 %v1764, %v1784
      %v1801 = vadd.f32 %v1765, %v1785
      %v1802 = vadd.f32 %v1766, %v1786
      %v1803 = vadd.f32 %v1767, %v1787
      %v1804 = vadd.f32 %v1768, %v1788
      %v1805 = vadd.f32 %v1769, %v1789
      %v1806 = vadd.f32 %v1770, %v1790
      %v1807 = vadd.f32 %v1771, %v1791
      %v1808 = vadd.f32 %v1772, %v1792
      %v1809 = vadd.f32 %v1773, %v1793
      %v1810 = vadd.f32 %v1774, %v1794
      %v1811 = vadd.f32 %v1775, %v1795
      %v1812 = vlaneseq
      %v1813 = vshrl.u32 %v1812, 7
      %v1814 = vsub.s32 3, %v1813
      %v1815 = vrot.slane %v1212, %v1814
      %v1816 = vmul.f32 %v979, %v1815
      %v1817 = vmul.f32 %v980, %v1815
      %v1818 = vmul.f32 %v981, %v1815
      %v1819 = vmul.f32 %v982, %v1815
      %v1820 = vmul.f32 %v983, %v1815
      %v1821 = vmul.f32 %v984, %v1815
      %v1822 = vmul.f32 %v985, %v1815
      %v1823 = vmul.f32 %v986, %v1815
      %v1824 = vmul.f32 %v987, %v1815
      %v1825 = vmul.f32 %v988, %v1815
      %v1826 = vmul.f32 %v989, %v1815
      %v1827 = vmul.f32 %v990, %v1815
      %v1828 = vmul.f32 %v991, %v1815
      %v1829 = vmul.f32 %v992, %v1815
      %v1830 = vmul.f32 %v993, %v1815
      %v1831 = vmul.f32 %v994, %v1815
      %v1832 = vadd.f32 %v1796, %v1816
      %v1833 = vadd.f32 %v1797, %v1817
      %v1834 = vadd.f32 %v1798, %v1818
      %v1835 = vadd.f32 %v1799, %v1819
      %v1836 = vadd.f32 %v1800, %v1820
      %v1837 = vadd.f32 %v1801, %v1821
      %v1838 = vadd.f32 %v1802, %v1822
      %v1839 = vadd.f32 %v1803, %v1823
      %v1840 = vadd.f32 %v1804, %v1824
      %v1841 = vadd.f32 %v1805, %v1825
      %v1842 = vadd.f32 %v1806, %v1826
      %v1843 = vadd.f32 %v1807, %v1827
      %v1844 = vadd.f32 %v1808, %v1828
      %v1845 = vadd.f32 %v1809, %v1829
      %v1846 = vadd.f32 %v1810, %v1830
      %v1847 = vadd.f32 %v1811, %v1831
      %v1848 = vld [vmem:[%s672 + $0x4] sm:$0xff]
      %v1849 = vld [vmem:[%s672 + $0xc] sm:$0xff]
      %v1850 = vld [vmem:[%s672 + $0x1c] sm:$0xff]
      %v1851 = vld [vmem:[%s672 + $0x24] sm:$0xff]
      %v1852 = vld [vmem:[%s672 + $0x34] sm:$0xff]
      %v1853 = vld [vmem:[%s672 + $0x3c] sm:$0xff]
      %v1854 = vld [vmem:[%s672 + $0x4c] sm:$0xff]
      %v1855 = vld [vmem:[%s672 + $0x54] sm:$0xff]
      %v1856 = vld [vmem:[%s672 + $0x64] sm:$0xff]
      %v1857 = vld [vmem:[%s672 + $0x6c] sm:$0xff]
      %v1858 = vld [vmem:[%s672 + $0x7c] sm:$0xff]
      %v1859 = vld [vmem:[%s672 + $0x84] sm:$0xff]
      %v1860 = vld [vmem:[%s672 + $0x94] sm:$0xff]
      %v1861 = vld [vmem:[%s672 + $0x9c] sm:$0xff]
      %v1862 = vld [vmem:[%s672 + $0xac] sm:$0xff]
      %v1863 = vld [vmem:[%s672 + $0xb4] sm:$0xff]
      %v1864 = vlaneseq
      %v1865 = vshrl.u32 %v1864, 7
      %v1866 = vsub.s32 4, %v1865
      %v1867 = vrot.slane %v1212, %v1866
      %v1868 = vmul.f32 %v1848, %v1867
      %v1869 = vmul.f32 %v1849, %v1867
      %v1870 = vmul.f32 %v1850, %v1867
      %v1871 = vmul.f32 %v1851, %v1867
      %v1872 = vmul.f32 %v1852, %v1867
      %v1873 = vmul.f32 %v1853, %v1867
      %v1874 = vmul.f32 %v1854, %v1867
      %v1875 = vmul.f32 %v1855, %v1867
      %v1876 = vmul.f32 %v1856, %v1867
      %v1877 = vmul.f32 %v1857, %v1867
      %v1878 = vmul.f32 %v1858, %v1867
      %v1879 = vmul.f32 %v1859, %v1867
      %v1880 = vmul.f32 %v1860, %v1867
      %v1881 = vmul.f32 %v1861, %v1867
      %v1882 = vmul.f32 %v1862, %v1867
      %v1883 = vmul.f32 %v1863, %v1867
      %v1884 = vadd.f32 %v1832, %v1868
      %v1885 = vadd.f32 %v1833, %v1869
      %v1886 = vadd.f32 %v1834, %v1870
      %v1887 = vadd.f32 %v1835, %v1871
      %v1888 = vadd.f32 %v1836, %v1872
      %v1889 = vadd.f32 %v1837, %v1873
      %v1890 = vadd.f32 %v1838, %v1874
      %v1891 = vadd.f32 %v1839, %v1875
      %v1892 = vadd.f32 %v1840, %v1876
      %v1893 = vadd.f32 %v1841, %v1877
      %v1894 = vadd.f32 %v1842, %v1878
      %v1895 = vadd.f32 %v1843, %v1879
      %v1896 = vadd.f32 %v1844, %v1880
      %v1897 = vadd.f32 %v1845, %v1881
      %v1898 = vadd.f32 %v1846, %v1882
      %v1899 = vadd.f32 %v1847, %v1883
      %v1900 = vld [vmem:[%s1031] sm:$0xff]
      %v1901 = vld [vmem:[%s1031 + $0x8] sm:$0xff]
      %v1902 = vld [vmem:[%s1031 + $0x18] sm:$0xff]
      %v1903 = vld [vmem:[%s1031 + $0x20] sm:$0xff]
      %v1904 = vld [vmem:[%s1031 + $0x30] sm:$0xff]
      %v1905 = vld [vmem:[%s1031 + $0x38] sm:$0xff]
      %v1906 = vld [vmem:[%s1031 + $0x48] sm:$0xff]
      %v1907 = vld [vmem:[%s1031 + $0x50] sm:$0xff]
      %v1908 = vld [vmem:[%s1031 + $0x60] sm:$0xff]
      %v1909 = vld [vmem:[%s1031 + $0x68] sm:$0xff]
      %v1910 = vld [vmem:[%s1031 + $0x78] sm:$0xff]
      %v1911 = vld [vmem:[%s1031 + $0x80] sm:$0xff]
      %v1912 = vld [vmem:[%s1031 + $0x90] sm:$0xff]
      %v1913 = vld [vmem:[%s1031 + $0x98] sm:$0xff]
      %v1914 = vld [vmem:[%s1031 + $0xa8] sm:$0xff]
      %v1915 = vld [vmem:[%s1031 + $0xb0] sm:$0xff]
      %v1916 = vlaneseq
      %v1917 = vshrl.u32 %v1916, 7
      %v1918 = vsub.s32 0, %v1917
      %v1919 = vrot.slane %v1213, %v1918
      %v1920 = vmul.f32 %v1900, %v1919
      %v1921 = vmul.f32 %v1901, %v1919
      %v1922 = vmul.f32 %v1902, %v1919
      %v1923 = vmul.f32 %v1903, %v1919
      %v1924 = vmul.f32 %v1904, %v1919
      %v1925 = vmul.f32 %v1905, %v1919
      %v1926 = vmul.f32 %v1906, %v1919
      %v1927 = vmul.f32 %v1907, %v1919
      %v1928 = vmul.f32 %v1908, %v1919
      %v1929 = vmul.f32 %v1909, %v1919
      %v1930 = vmul.f32 %v1910, %v1919
      %v1931 = vmul.f32 %v1911, %v1919
      %v1932 = vmul.f32 %v1912, %v1919
      %v1933 = vmul.f32 %v1913, %v1919
      %v1934 = vmul.f32 %v1914, %v1919
      %v1935 = vmul.f32 %v1915, %v1919
      %v1936 = vadd.f32 %v1884, %v1920
      %v1937 = vadd.f32 %v1885, %v1921
      %v1938 = vadd.f32 %v1886, %v1922
      %v1939 = vadd.f32 %v1887, %v1923
      %v1940 = vadd.f32 %v1888, %v1924
      %v1941 = vadd.f32 %v1889, %v1925
      %v1942 = vadd.f32 %v1890, %v1926
      %v1943 = vadd.f32 %v1891, %v1927
      %v1944 = vadd.f32 %v1892, %v1928
      %v1945 = vadd.f32 %v1893, %v1929
      %v1946 = vadd.f32 %v1894, %v1930
      %v1947 = vadd.f32 %v1895, %v1931
      %v1948 = vadd.f32 %v1896, %v1932
      %v1949 = vadd.f32 %v1897, %v1933
      %v1950 = vadd.f32 %v1898, %v1934
      %v1951 = vadd.f32 %v1899, %v1935
      %v1952 = vlaneseq
      %v1953 = vshrl.u32 %v1952, 7
      %v1954 = vsub.s32 1, %v1953
      %v1955 = vrot.slane %v1213, %v1954
      %v1956 = vmul.f32 %v1032, %v1955
      %v1957 = vmul.f32 %v1033, %v1955
      %v1958 = vmul.f32 %v1034, %v1955
      %v1959 = vmul.f32 %v1035, %v1955
      %v1960 = vmul.f32 %v1036, %v1955
      %v1961 = vmul.f32 %v1037, %v1955
      %v1962 = vmul.f32 %v1038, %v1955
      %v1963 = vmul.f32 %v1039, %v1955
      %v1964 = vmul.f32 %v1040, %v1955
      %v1965 = vmul.f32 %v1041, %v1955
      %v1966 = vmul.f32 %v1042, %v1955
      %v1967 = vmul.f32 %v1043, %v1955
      %v1968 = vmul.f32 %v1044, %v1955
      %v1969 = vmul.f32 %v1045, %v1955
      %v1970 = vmul.f32 %v1046, %v1955
      %v1971 = vmul.f32 %v1047, %v1955
      %v1972 = vadd.f32 %v1936, %v1956
      %v1973 = vadd.f32 %v1937, %v1957
      %v1974 = vadd.f32 %v1938, %v1958
      %v1975 = vadd.f32 %v1939, %v1959
      %v1976 = vadd.f32 %v1940, %v1960
      %v1977 = vadd.f32 %v1941, %v1961
      %v1978 = vadd.f32 %v1942, %v1962
      %v1979 = vadd.f32 %v1943, %v1963
      %v1980 = vadd.f32 %v1944, %v1964
      %v1981 = vadd.f32 %v1945, %v1965
      %v1982 = vadd.f32 %v1946, %v1966
      %v1983 = vadd.f32 %v1947, %v1967
      %v1984 = vadd.f32 %v1948, %v1968
      %v1985 = vadd.f32 %v1949, %v1969
      %v1986 = vadd.f32 %v1950, %v1970
      %v1987 = vadd.f32 %v1951, %v1971
      %v1988 = vlaneseq
      %v1989 = vshrl.u32 %v1988, 7
      %v1990 = vsub.s32 2, %v1989
      %v1991 = vrot.slane %v1213, %v1990
      %v1992 = vmul.f32 %v1084, %v1991
      %v1993 = vmul.f32 %v1085, %v1991
      %v1994 = vmul.f32 %v1086, %v1991
      %v1995 = vmul.f32 %v1087, %v1991
      %v1996 = vmul.f32 %v1088, %v1991
      %v1997 = vmul.f32 %v1089, %v1991
      %v1998 = vmul.f32 %v1090, %v1991
      %v1999 = vmul.f32 %v1091, %v1991
      %v2000 = vmul.f32 %v1092, %v1991
      %v2001 = vmul.f32 %v1093, %v1991
      %v2002 = vmul.f32 %v1094, %v1991
      %v2003 = vmul.f32 %v1095, %v1991
      %v2004 = vmul.f32 %v1096, %v1991
      %v2005 = vmul.f32 %v1097, %v1991
      %v2006 = vmul.f32 %v1098, %v1991
      %v2007 = vmul.f32 %v1099, %v1991
      %v2008 = vadd.f32 %v1972, %v1992
      %v2009 = vadd.f32 %v1973, %v1993
      %v2010 = vadd.f32 %v1974, %v1994
      %v2011 = vadd.f32 %v1975, %v1995
      %v2012 = vadd.f32 %v1976, %v1996
      %v2013 = vadd.f32 %v1977, %v1997
      %v2014 = vadd.f32 %v1978, %v1998
      %v2015 = vadd.f32 %v1979, %v1999
      %v2016 = vadd.f32 %v1980, %v2000
      %v2017 = vadd.f32 %v1981, %v2001
      %v2018 = vadd.f32 %v1982, %v2002
      %v2019 = vadd.f32 %v1983, %v2003
      %v2020 = vadd.f32 %v1984, %v2004
      %v2021 = vadd.f32 %v1985, %v2005
      %v2022 = vadd.f32 %v1986, %v2006
      %v2023 = vadd.f32 %v1987, %v2007
      %v2024 = vlaneseq
      %v2025 = vshrl.u32 %v2024, 7
      %v2026 = vsub.s32 3, %v2025
      %v2027 = vrot.slane %v1213, %v2026
      %v2028 = vmul.f32 %v1136, %v2027
      %v2029 = vmul.f32 %v1137, %v2027
      %v2030 = vmul.f32 %v1138, %v2027
      %v2031 = vmul.f32 %v1139, %v2027
      %v2032 = vmul.f32 %v1140, %v2027
      %v2033 = vmul.f32 %v1141, %v2027
      %v2034 = vmul.f32 %v1142, %v2027
      %v2035 = vmul.f32 %v1143, %v2027
      %v2036 = vmul.f32 %v1144, %v2027
      %v2037 = vmul.f32 %v1145, %v2027
      %v2038 = vmul.f32 %v1146, %v2027
      %v2039 = vmul.f32 %v1147, %v2027
      %v2040 = vmul.f32 %v1148, %v2027
      %v2041 = vmul.f32 %v1149, %v2027
      %v2042 = vmul.f32 %v1150, %v2027
      %v2043 = vmul.f32 %v1151, %v2027
      %v2044 = vadd.f32 %v2008, %v2028
      %v2045 = vadd.f32 %v2009, %v2029
      %v2046 = vadd.f32 %v2010, %v2030
      %v2047 = vadd.f32 %v2011, %v2031
      %v2048 = vadd.f32 %v2012, %v2032
      %v2049 = vadd.f32 %v2013, %v2033
      %v2050 = vadd.f32 %v2014, %v2034
      %v2051 = vadd.f32 %v2015, %v2035
      %v2052 = vadd.f32 %v2016, %v2036
      %v2053 = vadd.f32 %v2017, %v2037
      %v2054 = vadd.f32 %v2018, %v2038
      %v2055 = vadd.f32 %v2019, %v2039
      %v2056 = vadd.f32 %v2020, %v2040
      %v2057 = vadd.f32 %v2021, %v2041
      %v2058 = vadd.f32 %v2022, %v2042
      %v2059 = vadd.f32 %v2023, %v2043
      %v2060 = vld [vmem:[%s1031 + $0x4] sm:$0xff]
      %v2061 = vld [vmem:[%s1031 + $0xc] sm:$0xff]
      %v2062 = vld [vmem:[%s1031 + $0x1c] sm:$0xff]
      %v2063 = vld [vmem:[%s1031 + $0x24] sm:$0xff]
      %v2064 = vld [vmem:[%s1031 + $0x34] sm:$0xff]
      %v2065 = vld [vmem:[%s1031 + $0x3c] sm:$0xff]
      %v2066 = vld [vmem:[%s1031 + $0x4c] sm:$0xff]
      %v2067 = vld [vmem:[%s1031 + $0x54] sm:$0xff]
      %v2068 = vld [vmem:[%s1031 + $0x64] sm:$0xff]
      %v2069 = vld [vmem:[%s1031 + $0x6c] sm:$0xff]
      %v2070 = vld [vmem:[%s1031 + $0x7c] sm:$0xff]
      %v2071 = vld [vmem:[%s1031 + $0x84] sm:$0xff]
      %v2072 = vld [vmem:[%s1031 + $0x94] sm:$0xff]
      %v2073 = vld [vmem:[%s1031 + $0x9c] sm:$0xff]
      %v2074 = vld [vmem:[%s1031 + $0xac] sm:$0xff]
      %v2075 = vld [vmem:[%s1031 + $0xb4] sm:$0xff]
      %v2076 = vlaneseq
      %v2077 = vshrl.u32 %v2076, 7
      %v2078 = vsub.s32 4, %v2077
      %v2079 = vrot.slane %v1213, %v2078
      %v2080 = vmul.f32 %v2060, %v2079
      %v2081 = vmul.f32 %v2061, %v2079
      %v2082 = vmul.f32 %v2062, %v2079
      %v2083 = vmul.f32 %v2063, %v2079
      %v2084 = vmul.f32 %v2064, %v2079
      %v2085 = vmul.f32 %v2065, %v2079
      %v2086 = vmul.f32 %v2066, %v2079
      %v2087 = vmul.f32 %v2067, %v2079
      %v2088 = vmul.f32 %v2068, %v2079
      %v2089 = vmul.f32 %v2069, %v2079
      %v2090 = vmul.f32 %v2070, %v2079
      %v2091 = vmul.f32 %v2071, %v2079
      %v2092 = vmul.f32 %v2072, %v2079
      %v2093 = vmul.f32 %v2073, %v2079
      %v2094 = vmul.f32 %v2074, %v2079
      %v2095 = vmul.f32 %v2075, %v2079
      %v2096 = vadd.f32 %v2044, %v2080
      %v2097 = vadd.f32 %v2045, %v2081
      %v2098 = vadd.f32 %v2046, %v2082
      %v2099 = vadd.f32 %v2047, %v2083
      %v2100 = vadd.f32 %v2048, %v2084
      %v2101 = vadd.f32 %v2049, %v2085
      %v2102 = vadd.f32 %v2050, %v2086
      %v2103 = vadd.f32 %v2051, %v2087
      %v2104 = vadd.f32 %v2052, %v2088
      %v2105 = vadd.f32 %v2053, %v2089
      %v2106 = vadd.f32 %v2054, %v2090
      %v2107 = vadd.f32 %v2055, %v2091
      %v2108 = vadd.f32 %v2056, %v2092
      %v2109 = vadd.f32 %v2057, %v2093
      %v2110 = vadd.f32 %v2058, %v2094
      %v2111 = vadd.f32 %v2059, %v2095
      %s2112 = scalar_lea.vmem [#allocation2], 96
      %v2113 = vld [vmem:[%s2112] sm:$0xff]
      %v2114 = vld [vmem:[%s2112 + $0x8] sm:$0xff]
      %v2115 = vld [vmem:[%s2112 + $0x18] sm:$0xff]
      %v2116 = vld [vmem:[%s2112 + $0x20] sm:$0xff]
      %v2117 = vld [vmem:[%s2112 + $0x30] sm:$0xff]
      %v2118 = vld [vmem:[%s2112 + $0x38] sm:$0xff]
      %v2119 = vld [vmem:[%s2112 + $0x48] sm:$0xff]
      %v2120 = vld [vmem:[%s2112 + $0x50] sm:$0xff]
      %v2121 = vld [vmem:[%s2112 + $0x60] sm:$0xff]
      %v2122 = vld [vmem:[%s2112 + $0x68] sm:$0xff]
      %v2123 = vld [vmem:[%s2112 + $0x78] sm:$0xff]
      %v2124 = vld [vmem:[%s2112 + $0x80] sm:$0xff]
      %v2125 = vld [vmem:[%s2112 + $0x90] sm:$0xff]
      %v2126 = vld [vmem:[%s2112 + $0x98] sm:$0xff]
      %v2127 = vld [vmem:[%s2112 + $0xa8] sm:$0xff]
      %v2128 = vld [vmem:[%s2112 + $0xb0] sm:$0xff]
      %v2129 = vlaneseq
      %v2130 = vshrl.u32 %v2129, 7
      %v2131 = vsub.s32 0, %v2130
      %v2132 = vrot.slane %v1214, %v2131
      %v2133 = vmul.f32 %v2113, %v2132
      %v2134 = vmul.f32 %v2114, %v2132
      %v2135 = vmul.f32 %v2115, %v2132
      %v2136 = vmul.f32 %v2116, %v2132
      %v2137 = vmul.f32 %v2117, %v2132
      %v2138 = vmul.f32 %v2118, %v2132
      %v2139 = vmul.f32 %v2119, %v2132
      %v2140 = vmul.f32 %v2120, %v2132
      %v2141 = vmul.f32 %v2121, %v2132
      %v2142 = vmul.f32 %v2122, %v2132
      %v2143 = vmul.f32 %v2123, %v2132
      %v2144 = vmul.f32 %v2124, %v2132
      %v2145 = vmul.f32 %v2125, %v2132
      %v2146 = vmul.f32 %v2126, %v2132
      %v2147 = vmul.f32 %v2127, %v2132
      %v2148 = vmul.f32 %v2128, %v2132
      %v2149 = vadd.f32 %v2096, %v2133
      %v2150 = vadd.f32 %v2097, %v2134
      %v2151 = vadd.f32 %v2098, %v2135
      %v2152 = vadd.f32 %v2099, %v2136
      %v2153 = vadd.f32 %v2100, %v2137
      %v2154 = vadd.f32 %v2101, %v2138
      %v2155 = vadd.f32 %v2102, %v2139
      %v2156 = vadd.f32 %v2103, %v2140
      %v2157 = vadd.f32 %v2104, %v2141
      %v2158 = vadd.f32 %v2105, %v2142
      %v2159 = vadd.f32 %v2106, %v2143
      %v2160 = vadd.f32 %v2107, %v2144
      %v2161 = vadd.f32 %v2108, %v2145
      %v2162 = vadd.f32 %v2109, %v2146
      %v2163 = vadd.f32 %v2110, %v2147
      %v2164 = vadd.f32 %v2111, %v2148
      %v2165 = vld [vmem:[%s2112 + $0x1] sm:$0xff]
      %v2166 = vld [vmem:[%s2112 + $0x9] sm:$0xff]
      %v2167 = vld [vmem:[%s2112 + $0x19] sm:$0xff]
      %v2168 = vld [vmem:[%s2112 + $0x21] sm:$0xff]
      %v2169 = vld [vmem:[%s2112 + $0x31] sm:$0xff]
      %v2170 = vld [vmem:[%s2112 + $0x39] sm:$0xff]
      %v2171 = vld [vmem:[%s2112 + $0x49] sm:$0xff]
      %v2172 = vld [vmem:[%s2112 + $0x51] sm:$0xff]
      %v2173 = vld [vmem:[%s2112 + $0x61] sm:$0xff]
      %v2174 = vld [vmem:[%s2112 + $0x69] sm:$0xff]
      %v2175 = vld [vmem:[%s2112 + $0x79] sm:$0xff]
      %v2176 = vld [vmem:[%s2112 + $0x81] sm:$0xff]
      %v2177 = vld [vmem:[%s2112 + $0x91] sm:$0xff]
      %v2178 = vld [vmem:[%s2112 + $0x99] sm:$0xff]
      %v2179 = vld [vmem:[%s2112 + $0xa9] sm:$0xff]
      %v2180 = vld [vmem:[%s2112 + $0xb1] sm:$0xff]
      %v2181 = vlaneseq
      %v2182 = vshrl.u32 %v2181, 7
      %v2183 = vsub.s32 1, %v2182
      %v2184 = vrot.slane %v1214, %v2183
      %v2185 = vmul.f32 %v2165, %v2184
      %v2186 = vmul.f32 %v2166, %v2184
      %v2187 = vmul.f32 %v2167, %v2184
      %v2188 = vmul.f32 %v2168, %v2184
      %v2189 = vmul.f32 %v2169, %v2184
      %v2190 = vmul.f32 %v2170, %v2184
      %v2191 = vmul.f32 %v2171, %v2184
      %v2192 = vmul.f32 %v2172, %v2184
      %v2193 = vmul.f32 %v2173, %v2184
      %v2194 = vmul.f32 %v2174, %v2184
      %v2195 = vmul.f32 %v2175, %v2184
      %v2196 = vmul.f32 %v2176, %v2184
      %v2197 = vmul.f32 %v2177, %v2184
      %v2198 = vmul.f32 %v2178, %v2184
      %v2199 = vmul.f32 %v2179, %v2184
      %v2200 = vmul.f32 %v2180, %v2184
      %v2201 = vadd.f32 %v2149, %v2185
      %v2202 = vadd.f32 %v2150, %v2186
      %v2203 = vadd.f32 %v2151, %v2187
      %v2204 = vadd.f32 %v2152, %v2188
      %v2205 = vadd.f32 %v2153, %v2189
      %v2206 = vadd.f32 %v2154, %v2190
      %v2207 = vadd.f32 %v2155, %v2191
      %v2208 = vadd.f32 %v2156, %v2192
      %v2209 = vadd.f32 %v2157, %v2193
      %v2210 = vadd.f32 %v2158, %v2194
      %v2211 = vadd.f32 %v2159, %v2195
      %v2212 = vadd.f32 %v2160, %v2196
      %v2213 = vadd.f32 %v2161, %v2197
      %v2214 = vadd.f32 %v2162, %v2198
      %v2215 = vadd.f32 %v2163, %v2199
      %v2216 = vadd.f32 %v2164, %v2200
      %v2217 = vld [vmem:[%s2112 + $0x2] sm:$0xff]
      %v2218 = vld [vmem:[%s2112 + $0xa] sm:$0xff]
      %v2219 = vld [vmem:[%s2112 + $0x1a] sm:$0xff]
      %v2220 = vld [vmem:[%s2112 + $0x22] sm:$0xff]
      %v2221 = vld [vmem:[%s2112 + $0x32] sm:$0xff]
      %v2222 = vld [vmem:[%s2112 + $0x3a] sm:$0xff]
      %v2223 = vld [vmem:[%s2112 + $0x4a] sm:$0xff]
      %v2224 = vld [vmem:[%s2112 + $0x52] sm:$0xff]
      %v2225 = vld [vmem:[%s2112 + $0x62] sm:$0xff]
      %v2226 = vld [vmem:[%s2112 + $0x6a] sm:$0xff]
      %v2227 = vld [vmem:[%s2112 + $0x7a] sm:$0xff]
      %v2228 = vld [vmem:[%s2112 + $0x82] sm:$0xff]
      %v2229 = vld [vmem:[%s2112 + $0x92] sm:$0xff]
      %v2230 = vld [vmem:[%s2112 + $0x9a] sm:$0xff]
      %v2231 = vld [vmem:[%s2112 + $0xaa] sm:$0xff]
      %v2232 = vld [vmem:[%s2112 + $0xb2] sm:$0xff]
      %v2233 = vlaneseq
      %v2234 = vshrl.u32 %v2233, 7
      %v2235 = vsub.s32 2, %v2234
      %v2236 = vrot.slane %v1214, %v2235
      %v2237 = vmul.f32 %v2217, %v2236
      %v2238 = vmul.f32 %v2218, %v2236
      %v2239 = vmul.f32 %v2219, %v2236
      %v2240 = vmul.f32 %v2220, %v2236
      %v2241 = vmul.f32 %v2221, %v2236
      %v2242 = vmul.f32 %v2222, %v2236
      %v2243 = vmul.f32 %v2223, %v2236
      %v2244 = vmul.f32 %v2224, %v2236
      %v2245 = vmul.f32 %v2225, %v2236
      %v2246 = vmul.f32 %v2226, %v2236
      %v2247 = vmul.f32 %v2227, %v2236
      %v2248 = vmul.f32 %v2228, %v2236
      %v2249 = vmul.f32 %v2229, %v2236
      %v2250 = vmul.f32 %v2230, %v2236
      %v2251 = vmul.f32 %v2231, %v2236
      %v2252 = vmul.f32 %v2232, %v2236
      %v2253 = vadd.f32 %v2201, %v2237
      %v2254 = vadd.f32 %v2202, %v2238
      %v2255 = vadd.f32 %v2203, %v2239
      %v2256 = vadd.f32 %v2204, %v2240
      %v2257 = vadd.f32 %v2205, %v2241
      %v2258 = vadd.f32 %v2206, %v2242
      %v2259 = vadd.f32 %v2207, %v2243
      %v2260 = vadd.f32 %v2208, %v2244
      %v2261 = vadd.f32 %v2209, %v2245
      %v2262 = vadd.f32 %v2210, %v2246
      %v2263 = vadd.f32 %v2211, %v2247
      %v2264 = vadd.f32 %v2212, %v2248
      %v2265 = vadd.f32 %v2213, %v2249
      %v2266 = vadd.f32 %v2214, %v2250
      %v2267 = vadd.f32 %v2215, %v2251
      %v2268 = vadd.f32 %v2216, %v2252
      %v2269 = vld [vmem:[%s2112 + $0x3] sm:$0xff]
      %v2270 = vld [vmem:[%s2112 + $0xb] sm:$0xff]
      %v2271 = vld [vmem:[%s2112 + $0x1b] sm:$0xff]
      %v2272 = vld [vmem:[%s2112 + $0x23] sm:$0xff]
      %v2273 = vld [vmem:[%s2112 + $0x33] sm:$0xff]
      %v2274 = vld [vmem:[%s2112 + $0x3b] sm:$0xff]
      %v2275 = vld [vmem:[%s2112 + $0x4b] sm:$0xff]
      %v2276 = vld [vmem:[%s2112 + $0x53] sm:$0xff]
      %v2277 = vld [vmem:[%s2112 + $0x63] sm:$0xff]
      %v2278 = vld [vmem:[%s2112 + $0x6b] sm:$0xff]
      %v2279 = vld [vmem:[%s2112 + $0x7b] sm:$0xff]
      %v2280 = vld [vmem:[%s2112 + $0x83] sm:$0xff]
      %v2281 = vld [vmem:[%s2112 + $0x93] sm:$0xff]
      %v2282 = vld [vmem:[%s2112 + $0x9b] sm:$0xff]
      %v2283 = vld [vmem:[%s2112 + $0xab] sm:$0xff]
      %v2284 = vld [vmem:[%s2112 + $0xb3] sm:$0xff]
      %v2285 = vlaneseq
      %v2286 = vshrl.u32 %v2285, 7
      %v2287 = vsub.s32 3, %v2286
      %v2288 = vrot.slane %v1214, %v2287
      %v2289 = vmul.f32 %v2269, %v2288
      %v2290 = vmul.f32 %v2270, %v2288
      %v2291 = vmul.f32 %v2271, %v2288
      %v2292 = vmul.f32 %v2272, %v2288
      %v2293 = vmul.f32 %v2273, %v2288
      %v2294 = vmul.f32 %v2274, %v2288
      %v2295 = vmul.f32 %v2275, %v2288
      %v2296 = vmul.f32 %v2276, %v2288
      %v2297 = vmul.f32 %v2277, %v2288
      %v2298 = vmul.f32 %v2278, %v2288
      %v2299 = vmul.f32 %v2279, %v2288
      %v2300 = vmul.f32 %v2280, %v2288
      %v2301 = vmul.f32 %v2281, %v2288
      %v2302 = vmul.f32 %v2282, %v2288
      %v2303 = vmul.f32 %v2283, %v2288
      %v2304 = vmul.f32 %v2284, %v2288
      %v2305 = vadd.f32 %v2253, %v2289
      %v2306 = vadd.f32 %v2254, %v2290
      %v2307 = vadd.f32 %v2255, %v2291
      %v2308 = vadd.f32 %v2256, %v2292
      %v2309 = vadd.f32 %v2257, %v2293
      %v2310 = vadd.f32 %v2258, %v2294
      %v2311 = vadd.f32 %v2259, %v2295
      %v2312 = vadd.f32 %v2260, %v2296
      %v2313 = vadd.f32 %v2261, %v2297
      %v2314 = vadd.f32 %v2262, %v2298
      %v2315 = vadd.f32 %v2263, %v2299
      %v2316 = vadd.f32 %v2264, %v2300
      %v2317 = vadd.f32 %v2265, %v2301
      %v2318 = vadd.f32 %v2266, %v2302
      %v2319 = vadd.f32 %v2267, %v2303
      %v2320 = vadd.f32 %v2268, %v2304
      %v2321 = vld [vmem:[%s2112 + $0x4] sm:$0xff]
      %v2322 = vld [vmem:[%s2112 + $0xc] sm:$0xff]
      %v2323 = vld [vmem:[%s2112 + $0x1c] sm:$0xff]
      %v2324 = vld [vmem:[%s2112 + $0x24] sm:$0xff]
      %v2325 = vld [vmem:[%s2112 + $0x34] sm:$0xff]
      %v2326 = vld [vmem:[%s2112 + $0x3c] sm:$0xff]
      %v2327 = vld [vmem:[%s2112 + $0x4c] sm:$0xff]
      %v2328 = vld [vmem:[%s2112 + $0x54] sm:$0xff]
      %v2329 = vld [vmem:[%s2112 + $0x64] sm:$0xff]
      %v2330 = vld [vmem:[%s2112 + $0x6c] sm:$0xff]
      %v2331 = vld [vmem:[%s2112 + $0x7c] sm:$0xff]
      %v2332 = vld [vmem:[%s2112 + $0x84] sm:$0xff]
      %v2333 = vld [vmem:[%s2112 + $0x94] sm:$0xff]
      %v2334 = vld [vmem:[%s2112 + $0x9c] sm:$0xff]
      %v2335 = vld [vmem:[%s2112 + $0xac] sm:$0xff]
      %v2336 = vld [vmem:[%s2112 + $0xb4] sm:$0xff]
      %v2337 = vlaneseq
      %v2338 = vshrl.u32 %v2337, 7
      %v2339 = vsub.s32 4, %v2338
      %v2340 = vrot.slane %v1214, %v2339
      %v2341 = vmul.f32 %v2321, %v2340
      %v2342 = vmul.f32 %v2322, %v2340
      %v2343 = vmul.f32 %v2323, %v2340
      %v2344 = vmul.f32 %v2324, %v2340
      %v2345 = vmul.f32 %v2325, %v2340
      %v2346 = vmul.f32 %v2326, %v2340
      %v2347 = vmul.f32 %v2327, %v2340
      %v2348 = vmul.f32 %v2328, %v2340
      %v2349 = vmul.f32 %v2329, %v2340
      %v2350 = vmul.f32 %v2330, %v2340
      %v2351 = vmul.f32 %v2331, %v2340
      %v2352 = vmul.f32 %v2332, %v2340
      %v2353 = vmul.f32 %v2333, %v2340
      %v2354 = vmul.f32 %v2334, %v2340
      %v2355 = vmul.f32 %v2335, %v2340
      %v2356 = vmul.f32 %v2336, %v2340
      %v2357 = vadd.f32 %v2305, %v2341
      %v2358 = vadd.f32 %v2306, %v2342
      %v2359 = vadd.f32 %v2307, %v2343
      %v2360 = vadd.f32 %v2308, %v2344
      %v2361 = vadd.f32 %v2309, %v2345
      %v2362 = vadd.f32 %v2310, %v2346
      %v2363 = vadd.f32 %v2311, %v2347
      %v2364 = vadd.f32 %v2312, %v2348
      %v2365 = vadd.f32 %v2313, %v2349
      %v2366 = vadd.f32 %v2314, %v2350
      %v2367 = vadd.f32 %v2315, %v2351
      %v2368 = vadd.f32 %v2316, %v2352
      %v2369 = vadd.f32 %v2317, %v2353
      %v2370 = vadd.f32 %v2318, %v2354
      %v2371 = vadd.f32 %v2319, %v2355
      %v2372 = vadd.f32 %v2320, %v2356
      %v2374 = vlaneseq
      %v2375 = vshrl.u32 %v2374, 7
      %v2376 = vsub.s32 0, %v2375
      %v2377 = vrot.slane %v1215, %v2376
      %v2379 = vadd.f32 %v2357, %v2377
      %v2380 = vadd.f32 %v2358, %v2377
      %v2381 = vadd.f32 %v2359, %v2377
      %v2382 = vadd.f32 %v2360, %v2377
      %v2383 = vadd.f32 %v2361, %v2377
      %v2384 = vadd.f32 %v2362, %v2377
      %v2385 = vadd.f32 %v2363, %v2377
      %v2386 = vadd.f32 %v2364, %v2377
      %v2387 = vadd.f32 %v2365, %v2377
      %v2388 = vadd.f32 %v2366, %v2377
      %v2389 = vadd.f32 %v2367, %v2377
      %v2390 = vadd.f32 %v2368, %v2377
      %v2391 = vadd.f32 %v2369, %v2377
      %v2392 = vadd.f32 %v2370, %v2377
      %v2393 = vadd.f32 %v2371, %v2377
      %v2394 = vadd.f32 %v2372, %v2377
      %v2395 = vld [vmem:[%s5] sm:$0xf]
      %v2396 = vld [vmem:[%s6] sm:$0x1]
      %v2398 = vlaneseq
      %v2399 = vshrl.u32 %v2398, 7
      %v2400 = vsub.s32 0, %v2399
      %v2401 = vrot.slane %v2396, %v2400
      %v2404 = vsel %vm618, %v1194, 0
      %v2407 = vsel %vm618, %v1195, 0
      %v2410 = vsel %vm618, %v1196, 0
      %v2413 = vsel %vm618, %v1197, 0
      %v2416 = vsel %vm618, %v1198, 0
      %v2419 = vsel %vm618, %v1199, 0
      %v2422 = vsel %vm618, %v1200, 0
      %v2425 = vsel %vm618, %v1201, 0
      %v2428 = vsel %vm618, %v1202, 0
      %v2431 = vsel %vm618, %v1203, 0
      %v2434 = vsel %vm618, %v1204, 0
      %v2437 = vsel %vm618, %v1205, 0
      %v2440 = vsel %vm618, %v1206, 0
      %v2443 = vsel %vm618, %v1207, 0
      %v2446 = vsel %vm618, %v1208, 0
      %v2449 = vsel %vm618, %v1209, 0
      %vm2451 = vcmask 1043456
      %v2453 = vsel %vm2451, %v2395, 0
      %2455 = vmatprep.subr.mxu0 0.0
      %2456 = vmatpush1.msra.mxu0 0.0
      %2457 = vmatprep.subr.mxu0 0.0
      %2458 = vmatpush1.msra.mxu0 0.0
      %2459 = vmatprep.subr.mxu0 0.0
      %2460 = vmatpush1.msra.mxu0 0.0
      %2461 = vmatprep.subr.mxu0 0.0
      %2462 = vmatpush1.msra.mxu0 0.0
      %2463 = vmatprep.subr.mxu0 0.0
      %2464 = vmatpush1.msra.mxu0 0.0
      %2465 = vmatprep.subr.mxu0 0.0
      %2466 = vmatpush1.msra.mxu0 0.0
      %2467 = vmatprep.subr.mxu0 0.0
      %2468 = vmatpush1.msra.mxu0 0.0
      %2469 = vmatprep.subr.mxu0 0.0
      %2470 = vmatpush1.msra.mxu0 0.0
      %2471 = vmatprep.subr.mxu0 0.0
      %2472 = vmatpush1.msra.mxu0 0.0
      %2473 = vmatprep.subr.mxu0 0.0
      %2474 = vmatpush1.msra.mxu0 0.0
      %2475 = vmatprep.subr.mxu0 0.0
      %2476 = vmatpush1.msra.mxu0 0.0
      %2477 = vmatprep.subr.mxu0 0.0
      %2478 = vmatpush1.msra.mxu0 0.0
      %2479 = vmatprep.subr.mxu0 0.0
      %2480 = vmatpush1.msra.mxu0 0.0
      %2481 = vmatprep.subr.mxu0 0.0
      %2482 = vmatpush1.msra.mxu0 0.0
      %2483 = vmatprep.subr.mxu0 0.0
      %2484 = vmatpush1.msra.mxu0 0.0
      %2485 = vmatprep.subr.mxu0 0.0
      %2486 = vmatpush1.msra.mxu0 %v2453
      %2487 = vmatprep.subr.mxu0 0.0
      %2488 = vmatpush2.msra.mxu0 0.0
      %2489 = vmatprep.subr.mxu0 0.0
      %2490 = vmatpush2.msra.mxu0 0.0
      %2491 = vmatprep.subr.mxu0 0.0
      %2492 = vmatpush2.msra.mxu0 0.0
      %2493 = vmatprep.subr.mxu0 0.0
      %2494 = vmatpush2.msra.mxu0 0.0
      %2495 = vmatprep.subr.mxu0 0.0
      %2496 = vmatpush2.msra.mxu0 0.0
      %2497 = vmatprep.subr.mxu0 0.0
      %2498 = vmatpush2.msra.mxu0 0.0
      %2499 = vmatprep.subr.mxu0 0.0
      %2500 = vmatpush2.msra.mxu0 0.0
      %2501 = vmatprep.subr.mxu0 0.0
      %2502 = vmatpush2.msra.mxu0 0.0
      %2503 = vmatprep.subr.mxu0 0.0
      %2504 = vmatpush2.msra.mxu0 0.0
      %2505 = vmatprep.subr.mxu0 0.0
      %2506 = vmatpush2.msra.mxu0 0.0
      %2507 = vmatprep.subr.mxu0 0.0
      %2508 = vmatpush2.msra.mxu0 0.0
      %2509 = vmatprep.subr.mxu0 0.0
      %2510 = vmatpush2.msra.mxu0 0.0
      %2511 = vmatprep.subr.mxu0 0.0
      %2512 = vmatpush2.msra.mxu0 0.0
      %2513 = vmatprep.subr.mxu0 0.0
      %2514 = vmatpush2.msra.mxu0 0.0
      %2515 = vmatprep.subr.mxu0 0.0
      %2516 = vmatpush2.msra.mxu0 0.0
      %2517 = vmatprep.subr.mxu0 0.0
      %2518 = vmatpush2.msra.mxu0 0.0
      %2519 = vmatprep.mubr.f32.mxu0 0.0
      %2520 = vmatmul.mubr.f32.gmra.mxu0 %v2404
      %v2521 = vpop.f32.mrf.mxu0
      %v2522 = vadd.f32 %v2401, %v2521
      %v2523 = vpop.f32.mrf.mxu0
      %2524 = vmatprep.mubr.f32.mxu0 0.0
      %2525 = vmatmul.mubr.f32.gmra.mxu0 %v2407
      %v2526 = vpop.f32.mrf.mxu0
      %v2527 = vadd.f32 %v2401, %v2526
      %v2528 = vpop.f32.mrf.mxu0
      %2529 = vmatprep.mubr.f32.mxu0 0.0
      %2530 = vmatmul.mubr.f32.gmra.mxu0 %v2410
      %v2531 = vpop.f32.mrf.mxu0
      %v2532 = vadd.f32 %v2401, %v2531
      %v2533 = vpop.f32.mrf.mxu0
      %2534 = vmatprep.mubr.f32.mxu0 0.0
      %2535 = vmatmul.mubr.f32.gmra.mxu0 %v2413
      %v2536 = vpop.f32.mrf.mxu0
      %v2537 = vadd.f32 %v2401, %v2536
      %v2538 = vpop.f32.mrf.mxu0
      %2539 = vmatprep.mubr.f32.mxu0 0.0
      %2540 = vmatmul.mubr.f32.gmra.mxu0 %v2416
      %v2541 = vpop.f32.mrf.mxu0
      %v2542 = vadd.f32 %v2401, %v2541
      %v2543 = vpop.f32.mrf.mxu0
      %2544 = vmatprep.mubr.f32.mxu0 0.0
      %2545 = vmatmul.mubr.f32.gmra.mxu0 %v2419
      %v2546 = vpop.f32.mrf.mxu0
      %v2547 = vadd.f32 %v2401, %v2546
      %v2548 = vpop.f32.mrf.mxu0
      %2549 = vmatprep.mubr.f32.mxu0 0.0
      %2550 = vmatmul.mubr.f32.gmra.mxu0 %v2422
      %v2551 = vpop.f32.mrf.mxu0
      %v2552 = vadd.f32 %v2401, %v2551
      %v2553 = vpop.f32.mrf.mxu0
      %2554 = vmatprep.mubr.f32.mxu0 0.0
      %2555 = vmatmul.mubr.f32.gmra.mxu0 %v2425
      %v2556 = vpop.f32.mrf.mxu0
      %v2557 = vadd.f32 %v2401, %v2556
      %v2558 = vpop.f32.mrf.mxu0
      %2559 = vmatprep.mubr.f32.mxu0 0.0
      %2560 = vmatmul.mubr.f32.gmra.mxu0 %v2428
      %v2561 = vpop.f32.mrf.mxu0
      %v2562 = vadd.f32 %v2401, %v2561
      %v2563 = vpop.f32.mrf.mxu0
      %2564 = vmatprep.mubr.f32.mxu0 0.0
      %2565 = vmatmul.mubr.f32.gmra.mxu0 %v2431
      %v2566 = vpop.f32.mrf.mxu0
      %v2567 = vadd.f32 %v2401, %v2566
      %v2568 = vpop.f32.mrf.mxu0
      %2569 = vmatprep.mubr.f32.mxu0 0.0
      %2570 = vmatmul.mubr.f32.gmra.mxu0 %v2434
      %v2571 = vpop.f32.mrf.mxu0
      %v2572 = vadd.f32 %v2401, %v2571
      %v2573 = vpop.f32.mrf.mxu0
      %2574 = vmatprep.mubr.f32.mxu0 0.0
      %2575 = vmatmul.mubr.f32.gmra.mxu0 %v2437
      %v2576 = vpop.f32.mrf.mxu0
      %v2577 = vadd.f32 %v2401, %v2576
      %v2578 = vpop.f32.mrf.mxu0
      %2579 = vmatprep.mubr.f32.mxu0 0.0
      %2580 = vmatmul.mubr.f32.gmra.mxu0 %v2440
      %v2581 = vpop.f32.mrf.mxu0
      %v2582 = vadd.f32 %v2401, %v2581
      %v2583 = vpop.f32.mrf.mxu0
      %2584 = vmatprep.mubr.f32.mxu0 0.0
      %2585 = vmatmul.mubr.f32.gmra.mxu0 %v2443
      %v2586 = vpop.f32.mrf.mxu0
      %v2587 = vadd.f32 %v2401, %v2586
      %v2588 = vpop.f32.mrf.mxu0
      %2589 = vmatprep.mubr.f32.mxu0 0.0
      %2590 = vmatmul.mubr.f32.gmra.mxu0 %v2446
      %v2591 = vpop.f32.mrf.mxu0
      %v2592 = vadd.f32 %v2401, %v2591
      %v2593 = vpop.f32.mrf.mxu0
      %2594 = vmatprep.mubr.f32.mxu0 0.0
      %2595 = vmatmul.mubr.f32.gmra.mxu0 %v2449
      %v2596 = vpop.f32.mrf.mxu0
      %v2597 = vadd.f32 %v2401, %v2596
      %v2598 = vpop.f32.mrf.mxu0
      %2599 = vdwg.mxu0
      %v2600 = vmax.f32 %v2522, 0.0
      %v2601 = vmax.f32 %v2527, 0.0
      %v2602 = vmax.f32 %v2532, 0.0
      %v2603 = vmax.f32 %v2537, 0.0
      %v2604 = vmax.f32 %v2542, 0.0
      %v2605 = vmax.f32 %v2547, 0.0
      %v2606 = vmax.f32 %v2552, 0.0
      %v2607 = vmax.f32 %v2557, 0.0
      %v2608 = vmax.f32 %v2562, 0.0
      %v2609 = vmax.f32 %v2567, 0.0
      %v2610 = vmax.f32 %v2572, 0.0
      %v2611 = vmax.f32 %v2577, 0.0
      %v2612 = vmax.f32 %v2582, 0.0
      %v2613 = vmax.f32 %v2587, 0.0
      %v2614 = vmax.f32 %v2592, 0.0
      %v2615 = vmax.f32 %v2597, 0.0
      %2616 = vst.msk [vmem:[%s605] sm:$0xff] %vm618, %v2600
      %2617 = vst.msk [vmem:[%s605 + $0x8] sm:$0xff] %vm618, %v2601
      %2618 = vst.msk [vmem:[%s605 + $0x10] sm:$0xff] %vm618, %v2602
      %2619 = vst.msk [vmem:[%s605 + $0x18] sm:$0xff] %vm618, %v2603
      %2620 = vst.msk [vmem:[%s605 + $0x20] sm:$0xff] %vm618, %v2604
      %2621 = vst.msk [vmem:[%s605 + $0x28] sm:$0xff] %vm618, %v2605
      %2622 = vst.msk [vmem:[%s605 + $0x30] sm:$0xff] %vm618, %v2606
      %2623 = vst.msk [vmem:[%s605 + $0x38] sm:$0xff] %vm618, %v2607
      %2624 = vst.msk [vmem:[%s605 + $0x40] sm:$0xff] %vm618, %v2608
      %2625 = vst.msk [vmem:[%s605 + $0x48] sm:$0xff] %vm618, %v2609
      %2626 = vst.msk [vmem:[%s605 + $0x50] sm:$0xff] %vm618, %v2610
      %2627 = vst.msk [vmem:[%s605 + $0x58] sm:$0xff] %vm618, %v2611
      %2628 = vst.msk [vmem:[%s605 + $0x60] sm:$0xff] %vm618, %v2612
      %2629 = vst.msk [vmem:[%s605 + $0x68] sm:$0xff] %vm618, %v2613
      %2630 = vst.msk [vmem:[%s605 + $0x70] sm:$0xff] %vm618, %v2614
      %2631 = vst.msk [vmem:[%s605 + $0x78] sm:$0xff] %vm618, %v2615
      %v2632 = vld [vmem:[%s9] sm:$0xf]
      %v2633 = vld [vmem:[%s10] sm:$0x1]
      %v2635 = vlaneseq
      %v2636 = vshrl.u32 %v2635, 7
      %v2637 = vsub.s32 0, %v2636
      %v2638 = vrot.slane %v2633, %v2637
      %v2641 = vsel %vm618, %v2379, 0
      %v2644 = vsel %vm618, %v2380, 0
      %v2647 = vsel %vm618, %v2381, 0
      %v2650 = vsel %vm618, %v2382, 0
      %v2653 = vsel %vm618, %v2383, 0
      %v2656 = vsel %vm618, %v2384, 0
      %v2659 = vsel %vm618, %v2385, 0
      %v2662 = vsel %vm618, %v2386, 0
      %v2665 = vsel %vm618, %v2387, 0
      %v2668 = vsel %vm618, %v2388, 0
      %v2671 = vsel %vm618, %v2389, 0
      %v2674 = vsel %vm618, %v2390, 0
      %v2677 = vsel %vm618, %v2391, 0
      %v2680 = vsel %vm618, %v2392, 0
      %v2683 = vsel %vm618, %v2393, 0
      %v2686 = vsel %vm618, %v2394, 0
      %v2689 = vsel %vm2451, %v2632, 0
      %2691 = vmatprep.subr.mxu0 0.0
      %2692 = vmatpush1.msra.mxu0 0.0
      %2693 = vmatprep.subr.mxu0 0.0
      %2694 = vmatpush1.msra.mxu0 0.0
      %2695 = vmatprep.subr.mxu0 0.0
      %2696 = vmatpush1.msra.mxu0 0.0
      %2697 = vmatprep.subr.mxu0 0.0
      %2698 = vmatpush1.msra.mxu0 0.0
      %2699 = vmatprep.subr.mxu0 0.0
      %2700 = vmatpush1.msra.mxu0 0.0
      %2701 = vmatprep.subr.mxu0 0.0
      %2702 = vmatpush1.msra.mxu0 0.0
      %2703 = vmatprep.subr.mxu0 0.0
      %2704 = vmatpush1.msra.mxu0 0.0
      %2705 = vmatprep.subr.mxu0 0.0
      %2706 = vmatpush1.msra.mxu0 0.0
      %2707 = vmatprep.subr.mxu0 0.0
      %2708 = vmatpush1.msra.mxu0 0.0
      %2709 = vmatprep.subr.mxu0 0.0
      %2710 = vmatpush1.msra.mxu0 0.0
      %2711 = vmatprep.subr.mxu0 0.0
      %2712 = vmatpush1.msra.mxu0 0.0
      %2713 = vmatprep.subr.mxu0 0.0
      %2714 = vmatpush1.msra.mxu0 0.0
      %2715 = vmatprep.subr.mxu0 0.0
      %2716 = vmatpush1.msra.mxu0 0.0
      %2717 = vmatprep.subr.mxu0 0.0
      %2718 = vmatpush1.msra.mxu0 0.0
      %2719 = vmatprep.subr.mxu0 0.0
      %2720 = vmatpush1.msra.mxu0 0.0
      %2721 = vmatprep.subr.mxu0 0.0
      %2722 = vmatpush1.msra.mxu0 %v2689
      %2723 = vmatprep.subr.mxu0 0.0
      %2724 = vmatpush2.msra.mxu0 0.0
      %2725 = vmatprep.subr.mxu0 0.0
      %2726 = vmatpush2.msra.mxu0 0.0
      %2727 = vmatprep.subr.mxu0 0.0
      %2728 = vmatpush2.msra.mxu0 0.0
      %2729 = vmatprep.subr.mxu0 0.0
      %2730 = vmatpush2.msra.mxu0 0.0
      %2731 = vmatprep.subr.mxu0 0.0
      %2732 = vmatpush2.msra.mxu0 0.0
      %2733 = vmatprep.subr.mxu0 0.0
      %2734 = vmatpush2.msra.mxu0 0.0
      %2735 = vmatprep.subr.mxu0 0.0
      %2736 = vmatpush2.msra.mxu0 0.0
      %2737 = vmatprep.subr.mxu0 0.0
      %2738 = vmatpush2.msra.mxu0 0.0
      %2739 = vmatprep.subr.mxu0 0.0
      %2740 = vmatpush2.msra.mxu0 0.0
      %2741 = vmatprep.subr.mxu0 0.0
      %2742 = vmatpush2.msra.mxu0 0.0
      %2743 = vmatprep.subr.mxu0 0.0
      %2744 = vmatpush2.msra.mxu0 0.0
      %2745 = vmatprep.subr.mxu0 0.0
      %2746 = vmatpush2.msra.mxu0 0.0
      %2747 = vmatprep.subr.mxu0 0.0
      %2748 = vmatpush2.msra.mxu0 0.0
      %2749 = vmatprep.subr.mxu0 0.0
      %2750 = vmatpush2.msra.mxu0 0.0
      %2751 = vmatprep.subr.mxu0 0.0
      %2752 = vmatpush2.msra.mxu0 0.0
      %2753 = vmatprep.subr.mxu0 0.0
      %2754 = vmatpush2.msra.mxu0 0.0
      %2755 = vmatprep.mubr.f32.mxu0 0.0
      %2756 = vmatmul.mubr.f32.gmra.mxu0 %v2641
      %v2757 = vpop.f32.mrf.mxu0
      %v2758 = vadd.f32 %v2638, %v2757
      %v2759 = vpop.f32.mrf.mxu0
      %2760 = vmatprep.mubr.f32.mxu0 0.0
      %2761 = vmatmul.mubr.f32.gmra.mxu0 %v2644
      %v2762 = vpop.f32.mrf.mxu0
      %v2763 = vadd.f32 %v2638, %v2762
      %v2764 = vpop.f32.mrf.mxu0
      %2765 = vmatprep.mubr.f32.mxu0 0.0
      %2766 = vmatmul.mubr.f32.gmra.mxu0 %v2647
      %v2767 = vpop.f32.mrf.mxu0
      %v2768 = vadd.f32 %v2638, %v2767
      %v2769 = vpop.f32.mrf.mxu0
      %2770 = vmatprep.mubr.f32.mxu0 0.0
      %2771 = vmatmul.mubr.f32.gmra.mxu0 %v2650
      %v2772 = vpop.f32.mrf.mxu0
      %v2773 = vadd.f32 %v2638, %v2772
      %v2774 = vpop.f32.mrf.mxu0
      %2775 = vmatprep.mubr.f32.mxu0 0.0
      %2776 = vmatmul.mubr.f32.gmra.mxu0 %v2653
      %v2777 = vpop.f32.mrf.mxu0
      %v2778 = vadd.f32 %v2638, %v2777
      %v2779 = vpop.f32.mrf.mxu0
      %2780 = vmatprep.mubr.f32.mxu0 0.0
      %2781 = vmatmul.mubr.f32.gmra.mxu0 %v2656
      %v2782 = vpop.f32.mrf.mxu0
      %v2783 = vadd.f32 %v2638, %v2782
      %v2784 = vpop.f32.mrf.mxu0
      %2785 = vmatprep.mubr.f32.mxu0 0.0
      %2786 = vmatmul.mubr.f32.gmra.mxu0 %v2659
      %v2787 = vpop.f32.mrf.mxu0
      %v2788 = vadd.f32 %v2638, %v2787
      %v2789 = vpop.f32.mrf.mxu0
      %2790 = vmatprep.mubr.f32.mxu0 0.0
      %2791 = vmatmul.mubr.f32.gmra.mxu0 %v2662
      %v2792 = vpop.f32.mrf.mxu0
      %v2793 = vadd.f32 %v2638, %v2792
      %v2794 = vpop.f32.mrf.mxu0
      %2795 = vmatprep.mubr.f32.mxu0 0.0
      %2796 = vmatmul.mubr.f32.gmra.mxu0 %v2665
      %v2797 = vpop.f32.mrf.mxu0
      %v2798 = vadd.f32 %v2638, %v2797
      %v2799 = vpop.f32.mrf.mxu0
      %2800 = vmatprep.mubr.f32.mxu0 0.0
      %2801 = vmatmul.mubr.f32.gmra.mxu0 %v2668
      %v2802 = vpop.f32.mrf.mxu0
      %v2803 = vadd.f32 %v2638, %v2802
      %v2804 = vpop.f32.mrf.mxu0
      %2805 = vmatprep.mubr.f32.mxu0 0.0
      %2806 = vmatmul.mubr.f32.gmra.mxu0 %v2671
      %v2807 = vpop.f32.mrf.mxu0
      %v2808 = vadd.f32 %v2638, %v2807
      %v2809 = vpop.f32.mrf.mxu0
      %2810 = vmatprep.mubr.f32.mxu0 0.0
      %2811 = vmatmul.mubr.f32.gmra.mxu0 %v2674
      %v2812 = vpop.f32.mrf.mxu0
      %v2813 = vadd.f32 %v2638, %v2812
      %v2814 = vpop.f32.mrf.mxu0
      %2815 = vmatprep.mubr.f32.mxu0 0.0
      %2816 = vmatmul.mubr.f32.gmra.mxu0 %v2677
      %v2817 = vpop.f32.mrf.mxu0
      %v2818 = vadd.f32 %v2638, %v2817
      %v2819 = vpop.f32.mrf.mxu0
      %2820 = vmatprep.mubr.f32.mxu0 0.0
      %2821 = vmatmul.mubr.f32.gmra.mxu0 %v2680
      %v2822 = vpop.f32.mrf.mxu0
      %v2823 = vadd.f32 %v2638, %v2822
      %v2824 = vpop.f32.mrf.mxu0
      %2825 = vmatprep.mubr.f32.mxu0 0.0
      %2826 = vmatmul.mubr.f32.gmra.mxu0 %v2683
      %v2827 = vpop.f32.mrf.mxu0
      %v2828 = vadd.f32 %v2638, %v2827
      %v2829 = vpop.f32.mrf.mxu0
      %2830 = vmatprep.mubr.f32.mxu0 0.0
      %2831 = vmatmul.mubr.f32.gmra.mxu0 %v2686
      %v2832 = vpop.f32.mrf.mxu0
      %v2833 = vadd.f32 %v2638, %v2832
      %v2834 = vpop.f32.mrf.mxu0
      %2835 = vdwg.mxu0
      %v2836 = vmax.f32 %v2758, 0.0
      %v2837 = vmax.f32 %v2763, 0.0
      %v2838 = vmax.f32 %v2768, 0.0
      %v2839 = vmax.f32 %v2773, 0.0
      %v2840 = vmax.f32 %v2778, 0.0
      %v2841 = vmax.f32 %v2783, 0.0
      %v2842 = vmax.f32 %v2788, 0.0
      %v2843 = vmax.f32 %v2793, 0.0
      %v2844 = vmax.f32 %v2798, 0.0
      %v2845 = vmax.f32 %v2803, 0.0
      %v2846 = vmax.f32 %v2808, 0.0
      %v2847 = vmax.f32 %v2813, 0.0
      %v2848 = vmax.f32 %v2818, 0.0
      %v2849 = vmax.f32 %v2823, 0.0
      %v2850 = vmax.f32 %v2828, 0.0
      %v2851 = vmax.f32 %v2833, 0.0
      %2852 = vst.msk [vmem:[%s616] sm:$0xff] %vm618, %v2836
      %2853 = vst.msk [vmem:[%s616 + $0x8] sm:$0xff] %vm618, %v2837
      %2854 = vst.msk [vmem:[%s616 + $0x10] sm:$0xff] %vm618, %v2838
      %2855 = vst.msk [vmem:[%s616 + $0x18] sm:$0xff] %vm618, %v2839
      %2856 = vst.msk [vmem:[%s616 + $0x20] sm:$0xff] %vm618, %v2840
      %2857 = vst.msk [vmem:[%s616 + $0x28] sm:$0xff] %vm618, %v2841
      %2858 = vst.msk [vmem:[%s616 + $0x30] sm:$0xff] %vm618, %v2842
      %2859 = vst.msk [vmem:[%s616 + $0x38] sm:$0xff] %vm618, %v2843
      %2860 = vst.msk [vmem:[%s616 + $0x40] sm:$0xff] %vm618, %v2844
      %2861 = vst.msk [vmem:[%s616 + $0x48] sm:$0xff] %vm618, %v2845
      %2862 = vst.msk [vmem:[%s616 + $0x50] sm:$0xff] %vm618, %v2846
      %2863 = vst.msk [vmem:[%s616 + $0x58] sm:$0xff] %vm618, %v2847
      %2864 = vst.msk [vmem:[%s616 + $0x60] sm:$0xff] %vm618, %v2848
      %2865 = vst.msk [vmem:[%s616 + $0x68] sm:$0xff] %vm618, %v2849
      %2866 = vst.msk [vmem:[%s616 + $0x70] sm:$0xff] %vm618, %v2850
      %2867 = vst.msk [vmem:[%s616 + $0x78] sm:$0xff] %vm618, %v2851
      %s2868 = smul.u32 8, %s29
      %p2869 = scmp.lt.s32.totalorder %s28, 1
      %s2870 = scalar_select %p2869, %s28, 1
      %p2871 = scmp.lt.s32.totalorder %s2868, 15
      %s2872 = scalar_select %p2871, %s2868, 15
      %s2873 = smul.addr %s2872, 2
      %s2874 = smul.addr %s2870, 32
      %s2875 = sadd.s32 %s2873, %s2874
      %s2876 = smul.addr %s2875, 8
      %s2877 = scalar_lea.vmem %s11, %s2876
      %s2878 = smul.u32 8, %s29
      %p2879 = scmp.lt.s32.totalorder %s28, 1
      %s2880 = scalar_select %p2879, %s28, 1
      %p2881 = scmp.lt.s32.totalorder %s2878, 15
      %s2882 = scalar_select %p2881, %s2878, 15
      %s2883 = smul.addr %s2882, 2
      %s2884 = smul.addr %s2880, 32
      %s2885 = sadd.s32 %s2883, %s2884
      %s2886 = smul.addr %s2885, 8
      %s2887 = scalar_lea.vmem %s12, %s2886
      // Predicated region
      $region73: #{msrb_forward.2} parent=63 // pred_check
        %p2888 = pneg %p324
      $region74: #{msrb_forward.2} parent=63 // pred_check_branch
        %2890 = sbr.rel (%p2888) target = $region76
      $region75: #{msrb_forward.2} parent=63 // pred_region
        %s2891 = smul.u32 8, %s29
      $region76: #{msrb_forward.2} parent=63 // pred_fallthru
        _
      // Predicated region
      $region77: #{msrb_forward.2} parent=63 // pred_check
        %p2892 = pneg %p352
      $region78: #{msrb_forward.2} parent=63 // pred_check_branch
        %2894 = sbr.rel (%p2892) target = $region80
      $region79: #{msrb_forward.2} parent=63 // pred_region
        %s2895 = smul.u32 8, %s29
      $region80: #{msrb_forward.2} parent=63 // pred_fallthru
        _
    $region64: #{msrb_forward.2} parent=5 // pred_fallthru
      _
    %p2896 = scmp.le.s32.totalorder 2, %s19
    // Predicated region
    $region81: #{msrb_forward.2} parent=5 // pred_check
      %p2897 = pneg %p2896
    $region82: #{msrb_forward.2} parent=5 // pred_check_branch
      %2899 = sbr.rel (%p2897) target = $region84
    $region83: #{msrb_forward.2} parent=5 // pred_region
      %s2900 = ssub.s32 %s19, 2
      // Predicated region
      $region85: #{msrb_forward.2} parent=83 // pred_check
        %p2901 = pneg %p330
      $region86: #{msrb_forward.2} parent=83 // pred_check_branch
        %2903 = sbr.rel (%p2901) target = $region88
      $region87: #{msrb_forward.2} parent=83 // pred_region
        %s2904 = smul.u32 8, %s31
        %p2905 = scmp.lt.s32.totalorder %s30, 1
        %s2906 = scalar_select %p2905, %s30, 1
        %p2907 = scmp.lt.s32.totalorder %s2904, 15
        %s2908 = scalar_select %p2907, %s2904, 15
        %s2909 = smul.addr %s2908, 2
        %s2910 = smul.addr %s2906, 32
        %s2911 = sadd.s32 %s2909, %s2910
        %s2912 = smul.addr %s2911, 8
        %s2913 = scalar_lea.vmem %s11, %s2912
      $region88: #{msrb_forward.2} parent=83 // pred_fallthru
        _
      // Predicated region
      $region89: #{msrb_forward.2} parent=83 // pred_check
        %p2914 = pneg %p358
      $region90: #{msrb_forward.2} parent=83 // pred_check_branch
        %2916 = sbr.rel (%p2914) target = $region92
      $region91: #{msrb_forward.2} parent=83 // pred_region
        %s2917 = smul.u32 8, %s31
        %p2918 = scmp.lt.s32.totalorder %s30, 1
        %s2919 = scalar_select %p2918, %s30, 1
        %p2920 = scmp.lt.s32.totalorder %s2917, 15
        %s2921 = scalar_select %p2920, %s2917, 15
        %s2922 = smul.addr %s2921, 2
        %s2923 = smul.addr %s2919, 32
        %s2924 = sadd.s32 %s2922, %s2923
        %s2925 = smul.addr %s2924, 8
        %s2926 = scalar_lea.vmem %s12, %s2925
      $region92: #{msrb_forward.2} parent=83 // pred_fallthru
        _
    $region84: #{msrb_forward.2} parent=5 // pred_fallthru
      _
  $region6: #{msrb_forward.2} parent=0 // loop_footer
    %s23 = sadd.s32 1, %s19
  $region7: #{msrb_forward.2} parent=0 // loop_footer_branch
    %18 = sbr.rel target = $region3
  $region8: #{msrb_forward.2} parent=0 // loop_exit
    _

// kernel: msrb_forward.3
$region0: #{msrb_forward.3}
  #allocation0 [shape = 'u32[]', space=smem, size = 0x4, offset = 0x4, fixed_abs, tag = 'smem constant byte address 0x4 - core index']
  #allocation1 [shape = 'u32[144,128]{1,0:T(1,128)}', space=vmem, size = 0x12000, scoped, tag = 'internal scratch']
  #allocation2 [shape = 'f32[12,20,4]{2,1,0:T(8,128)}', space=vmem, size = 0x24000, scoped, tag = 'scratch operand']
  #allocation3 [shape = 'f32[12,20,4]{2,1,0:T(8,128)}', space=vmem, size = 0x24000, scoped, tag = 'scratch operand']
  %s0 = inlined_call_operand.vmem [shape: f32[2,16,16,4], index: 0, kind: input, shape index: {}, may-alias: {0,1,2}]
  %s1 = inlined_call_operand.vmem [shape: f32[2,16,16,4], index: 1, kind: input, shape index: {}, may-alias: {0,1,2}]
  %s2 = inlined_call_operand.vmem [shape: f32[2,16,16,4], index: 2, kind: input, shape index: {}, may-alias: {0,1,2}]
  %s3 = inlined_call_operand.vmem [shape: f32[2,16,16,4], index: 3, kind: input, shape index: {}, may-alias: {3,4,5}]
  %s4 = inlined_call_operand.vmem [shape: f32[2,16,16,4], index: 4, kind: input, shape index: {}, may-alias: {3,4,5}]
  %s5 = inlined_call_operand.vmem [shape: f32[2,16,16,4], index: 5, kind: input, shape index: {}, may-alias: {3,4,5}]
  %s6 = inlined_call_operand.vmem [shape: f32[2,16,16,4], index: 6, kind: input, shape index: {}]
  %s7 = inlined_call_operand.vmem [shape: f32[2,3,3,4], index: 7, kind: input, shape index: {}]
  %s8 = inlined_call_operand.vmem [shape: f32[2,1,4], index: 8, kind: input, shape index: {}]
  %s9 = inlined_call_operand.vmem [shape: f32[2,4,8], index: 9, kind: input, shape index: {}]
  %s10 = inlined_call_operand.vmem [shape: f32[1,8], index: 10, kind: input, shape index: {}]
  %s11 = inlined_call_operand.vmem [shape: f32[2,5,5,4], index: 11, kind: input, shape index: {}]
  %s12 = inlined_call_operand.vmem [shape: f32[2,1,4], index: 12, kind: input, shape index: {}]
  %s13 = inlined_call_operand.vmem [shape: f32[2,4,8], index: 13, kind: input, shape index: {}]
  %s14 = inlined_call_operand.vmem [shape: f32[1,8], index: 14, kind: input, shape index: {}]
  %s15 = inlined_call_operand.vmem [shape: f32[2,8,4], index: 15, kind: input, shape index: {}]
  %s16 = inlined_call_operand.vmem [shape: f32[1,4], index: 16, kind: input, shape index: {}]
  %s17 = inlined_call_operand.vmem [shape: f32[2,16,16,4], index: 17, kind: output, shape index: {}]
  %s18 = sld [smem:[#allocation0]]
  $region117: #{msrb_forward.3} parent=0
    _
  %s20 = ssub.s32 1, %s18
  %s21 = scalar_select 0, %s20, %s18
  loop: start=0, step=1, limit=6
  $region2: #{msrb_forward.3} parent=0 // loop_pre_header
    _
  $region3: #{msrb_forward.3} parent=0 // loop_header
    %s23 = sphi 0, %s27
    %p24 = scmp.ge.s32.totalorder %s23, 6
    %s30 = sphi 0, %s42
    %s31 = sphi 0, %s38
    %s32 = sphi 0, %s30
    %s33 = sphi 0, %s31
    %s34 = sphi 0, %s32
    %s35 = sphi 0, %s33
    %s47 = sphi 0, %s49
    %s50 = sphi 0, %s47
    %s51 = sphi 0, %s50
    %s67 = sphi 0, %s51
    %s83 = sphi 0, %s85
    %s86 = sphi 0, %s83
    %s87 = sphi 0, %s86
    %s103 = sphi 0, %s87
    %s119 = sphi 0, %s121
    %s122 = sphi 0, %s119
    %s123 = sphi 0, %s122
    %s139 = sphi 0, %s123
    %s147 = sphi 0, %s149
    %s150 = sphi 0, %s147
    %s151 = sphi 0, %s150
    %s167 = sphi 0, %s151
    %s183 = sphi 0, %s185
    %s186 = sphi 0, %s183
    %s187 = sphi 0, %s186
    %s203 = sphi 0, %s187
    %s219 = sphi 0, %s221
    %s222 = sphi 0, %s219
    %s223 = sphi 0, %s222
    %s239 = sphi 0, %s223
    %s247 = sphi 0, %s249
    %s250 = sphi 0, %s247
    %s251 = sphi 0, %s250
    %s267 = sphi 0, %s251
    %s271 = sphi 0, %s271
    %s273 = sphi 0, %s271
    %s274 = sphi 0, %s273
    %s288 = sphi 0, %s274
    %s292 = sphi 0, %s292
    %s294 = sphi 0, %s292
    %s295 = sphi 0, %s294
    %s309 = sphi 0, %s295
    %s313 = sphi 0, %s313
    %s315 = sphi 0, %s313
    %s316 = sphi 0, %s315
    %s330 = sphi 0, %s316
    %s334 = sphi 0, %s334
    %s336 = sphi 0, %s334
    %s337 = sphi 0, %s336
    %s351 = sphi 0, %s337
    %s355 = sphi 0, %s355
    %s357 = sphi 0, %s355
    %s358 = sphi 0, %s357
    %s372 = sphi 0, %s358
    %s376 = sphi 0, %s376
    %s378 = sphi 0, %s376
    %s379 = sphi 0, %s378
    %s393 = sphi 0, %s379
    %s397 = sphi 0, %s397
    %s399 = sphi 0, %s397
    %s400 = sphi 0, %s399
    %s414 = sphi 0, %s400
    %s418 = sphi 0, %s418
    %s420 = sphi 0, %s418
    %s421 = sphi 0, %s420
    %s435 = sphi 0, %s421
    %s439 = sphi 0, %s439
    %s441 = sphi 0, %s439
    %s442 = sphi 0, %s441
    %s456 = sphi 0, %s442
    %s460 = sphi 0, %s460
    %s462 = sphi 0, %s460
    %s463 = sphi 0, %s462
    %s477 = sphi 0, %s463
    %s485 = sphi 0, %s487
    %s488 = sphi 0, %s485
    %s489 = sphi 0, %s488
    %s505 = sphi 0, %s489
  $region4: #{msrb_forward.3} parent=0 // loop_header_branch
    %26 = sbr.rel (%p24) target = $region8
  $region5: #{msrb_forward.3} parent=0 // loop_body
    %s28 = ssub.s32 %s23, 1
    %s29 = ssub.s32 %s23, 2
    %s36 = sadd.s32 1, %s31
    %p37 = scmp.ge.s32.totalorder %s36, 2
    %s38 = scalar_select %p37, 0, %s36
    %s39 = sadd.s32 1, %s30
    %s40 = scalar_select %p37, %s39, %s30
    %p41 = scmp.ge.s32.totalorder %s40, 2
    %s42 = scalar_select %p41, 0, %s40
    %s43 = ssub.s32 %s30, %s42
    %s44 = ssub.s32 %s31, %s38
    %s45 = sor.u32 %s43, %s44
    %p46 = scmp.eq.s32.totalorder %s45, 0
    %s48 = sadd.s32 %s47, 1
    %s49 = scalar_select %p46, %s47, %s48
    %p52 = pneg %p46
    %p53 = scmp.eq.s32.totalorder %s23, 3
    %p54 = por %p52, %p53
    %p55 = scmp.ne.s32.totalorder %s47, %s50
    %p56 = scmp.eq.s32.totalorder %s23, 0
    %p57 = por %p55, %p56
    %p58 = scmp.ne.s32.totalorder %s47, %s50
    %p59 = scmp.eq.s32.totalorder %s28, 3
    %p60 = por %p58, %p59
    %p61 = scmp.ne.s32.totalorder %s50, %s51
    %p62 = scmp.eq.s32.totalorder %s28, 0
    %p63 = por %p61, %p62
    %p64 = scmp.ne.s32.totalorder %s50, %s51
    %p65 = scmp.eq.s32.totalorder %s29, 3
    %p66 = por %p64, %p65
    %p68 = scmp.ne.s32.totalorder %s51, %s67
    %p69 = scmp.eq.s32.totalorder %s29, 0
    %p70 = por %p68, %p69
    %s71 = smul.u32 %s31, 4
    %s72 = ssub.s32 %s71, 1
    %p73 = scmp.gt.s32.totalorder %s72, 0
    %s74 = scalar_select %p73, %s72, 0
    %s75 = smul.u32 %s38, 4
    %s76 = ssub.s32 %s75, 1
    %p77 = scmp.gt.s32.totalorder %s76, 0
    %s78 = scalar_select %p77, %s76, 0
    %s79 = ssub.s32 %s30, %s42
    %s80 = ssub.s32 %s74, %s78
    %s81 = sor.u32 %s79, %s80
    %p82 = scmp.eq.s32.totalorder %s81, 0
    %s84 = sadd.s32 %s83, 1
    %s85 = scalar_select %p82, %s83, %s84
    %p88 = pneg %p82
    %p89 = scmp.eq.s32.totalorder %s23, 3
    %p90 = por %p88, %p89
    %p91 = scmp.ne.s32.totalorder %s83, %s86
    %p92 = scmp.eq.s32.totalorder %s23, 0
    %p93 = por %p91, %p92
    %p94 = scmp.ne.s32.totalorder %s83, %s86
    %p95 = scmp.eq.s32.totalorder %s28, 3
    %p96 = por %p94, %p95
    %p97 = scmp.ne.s32.totalorder %s86, %s87
    %p98 = scmp.eq.s32.totalorder %s28, 0
    %p99 = por %p97, %p98
    %p100 = scmp.ne.s32.totalorder %s86, %s87
    %p101 = scmp.eq.s32.totalorder %s29, 3
    %p102 = por %p100, %p101
    %p104 = scmp.ne.s32.totalorder %s87, %s103
    %p105 = scmp.eq.s32.totalorder %s29, 0
    %p106 = por %p104, %p105
    %s107 = sadd.s32 %s31, 1
    %s108 = smul.u32 %s107, 4
    %p109 = scmp.lt.s32.totalorder %s108, 7
    %s110 = scalar_select %p109, %s108, 7
    %s111 = sadd.s32 %s38, 1
    %s112 = smul.u32 %s111, 4
    %p113 = scmp.lt.s32.totalorder %s112, 7
    %s114 = scalar_select %p113, %s112, 7
    %s115 = ssub.s32 %s30, %s42
    %s116 = ssub.s32 %s110, %s114
    %s117 = sor.u32 %s115, %s116
    %p118 = scmp.eq.s32.totalorder %s117, 0
    %s120 = sadd.s32 %s119, 1
    %s121 = scalar_select %p118, %s119, %s120
    %p124 = pneg %p118
    %p125 = scmp.eq.s32.totalorder %s23, 3
    %p126 = por %p124, %p125
    %p127 = scmp.ne.s32.totalorder %s119, %s122
    %p128 = scmp.eq.s32.totalorder %s23, 0
    %p129 = por %p127, %p128
    %p130 = scmp.ne.s32.totalorder %s119, %s122
    %p131 = scmp.eq.s32.totalorder %s28, 3
    %p132 = por %p130, %p131
    %p133 = scmp.ne.s32.totalorder %s122, %s123
    %p134 = scmp.eq.s32.totalorder %s28, 0
    %p135 = por %p133, %p134
    %p136 = scmp.ne.s32.totalorder %s122, %s123
    %p137 = scmp.eq.s32.totalorder %s29, 3
    %p138 = por %p136, %p137
    %p140 = scmp.ne.s32.totalorder %s123, %s139
    %p141 = scmp.eq.s32.totalorder %s29, 0
    %p142 = por %p140, %p141
    %s143 = ssub.s32 %s30, %s42
    %s144 = ssub.s32 %s31, %s38
    %s145 = sor.u32 %s143, %s144
    %p146 = scmp.eq.s32.totalorder %s145, 0
    %s148 = sadd.s32 %s147, 1
    %s149 = scalar_select %p146, %s147, %s148
    %p152 = pneg %p146
    %p153 = scmp.eq.s32.totalorder %s23, 3
    %p154 = por %p152, %p153
    %p155 = scmp.ne.s32.totalorder %s147, %s150
    %p156 = scmp.eq.s32.totalorder %s23, 0
    %p157 = por %p155, %p156
    %p158 = scmp.ne.s32.totalorder %s147, %s150
    %p159 = scmp.eq.s32.totalorder %s28, 3
    %p160 = por %p158, %p159
    %p161 = scmp.ne.s32.totalorder %s150, %s151
    %p162 = scmp.eq.s32.totalorder %s28, 0
    %p163 = por %p161, %p162
    %p164 = scmp.ne.s32.totalorder %s150, %s151
    %p165 = scmp.eq.s32.totalorder %s29, 3
    %p166 = por %p164, %p165
    %p168 = scmp.ne.s32.totalorder %s151, %s167
    %p169 = scmp.eq.s32.totalorder %s29, 0
    %p170 = por %p168, %p169
    %s171 = smul.u32 %s31, 4
    %s172 = ssub.s32 %s171, 1
    %p173 = scmp.gt.s32.totalorder %s172, 0
    %s174 = scalar_select %p173, %s172, 0
    %s175 = smul.u32 %s38, 4
    %s176 = ssub.s32 %s175, 1
    %p177 = scmp.gt.s32.totalorder %s176, 0
    %s178 = scalar_select %p177, %s176, 0
    %s179 = ssub.s32 %s30, %s42
    %s180 = ssub.s32 %s174, %s178
    %s181 = sor.u32 %s179, %s180
    %p182 = scmp.eq.s32.totalorder %s181, 0
    %s184 = sadd.s32 %s183, 1
    %s185 = scalar_select %p182, %s183, %s184
    %p188 = pneg %p182
    %p189 = scmp.eq.s32.totalorder %s23, 3
    %p190 = por %p188, %p189
    %p191 = scmp.ne.s32.totalorder %s183, %s186
    %p192 = scmp.eq.s32.totalorder %s23, 0
    %p193 = por %p191, %p192
    %p194 = scmp.ne.s32.totalorder %s183, %s186
    %p195 = scmp.eq.s32.totalorder %s28, 3
    %p196 = por %p194, %p195
    %p197 = scmp.ne.s32.totalorder %s186, %s187
    %p198 = scmp.eq.s32.totalorder %s28, 0
    %p199 = por %p197, %p198
    %p200 = scmp.ne.s32.totalorder %s186, %s187
    %p201 = scmp.eq.s32.totalorder %s29, 3
    %p202 = por %p200, %p201
    %p204 = scmp.ne.s32.totalorder %s187, %s203
    %p205 = scmp.eq.s32.totalorder %s29, 0
    %p206 = por %p204, %p205
    %s207 = sadd.s32 %s31, 1
    %s208 = smul.u32 %s207, 4
    %p209 = scmp.lt.s32.totalorder %s208, 7
    %s210 = scalar_select %p209, %s208, 7
    %s211 = sadd.s32 %s38, 1
    %s212 = smul.u32 %s211, 4
    %p213 = scmp.lt.s32.totalorder %s212, 7
    %s214 = scalar_select %p213, %s212, 7
    %s215 = ssub.s32 %s30, %s42
    %s216 = ssub.s32 %s210, %s214
    %s217 = sor.u32 %s215, %s216
    %p218 = scmp.eq.s32.totalorder %s217, 0
    %s220 = sadd.s32 %s219, 1
    %s221 = scalar_select %p218, %s219, %s220
    %p224 = pneg %p218
    %p225 = scmp.eq.s32.totalorder %s23, 3
    %p226 = por %p224, %p225
    %p227 = scmp.ne.s32.totalorder %s219, %s222
    %p228 = scmp.eq.s32.totalorder %s23, 0
    %p229 = por %p227, %p228
    %p230 = scmp.ne.s32.totalorder %s219, %s222
    %p231 = scmp.eq.s32.totalorder %s28, 3
    %p232 = por %p230, %p231
    %p233 = scmp.ne.s32.totalorder %s222, %s223
    %p234 = scmp.eq.s32.totalorder %s28, 0
    %p235 = por %p233, %p234
    %p236 = scmp.ne.s32.totalorder %s222, %s223
    %p237 = scmp.eq.s32.totalorder %s29, 3
    %p238 = por %p236, %p237
    %p240 = scmp.ne.s32.totalorder %s223, %s239
    %p241 = scmp.eq.s32.totalorder %s29, 0
    %p242 = por %p240, %p241
    %s243 = ssub.s32 %s30, %s42
    %s244 = ssub.s32 %s31, %s38
    %s245 = sor.u32 %s243, %s244
    %p246 = scmp.eq.s32.totalorder %s245, 0
    %s248 = sadd.s32 %s247, 1
    %s249 = scalar_select %p246, %s247, %s248
    %p252 = pneg %p246
    %p253 = scmp.eq.s32.totalorder %s23, 3
    %p254 = por %p252, %p253
    %p255 = scmp.ne.s32.totalorder %s247, %s250
    %p256 = scmp.eq.s32.totalorder %s23, 0
    %p257 = por %p255, %p256
    %p258 = scmp.ne.s32.totalorder %s247, %s250
    %p259 = scmp.eq.s32.totalorder %s28, 3
    %p260 = por %p258, %p259
    %p261 = scmp.ne.s32.totalorder %s250, %s251
    %p262 = scmp.eq.s32.totalorder %s28, 0
    %p263 = por %p261, %p262
    %p264 = scmp.ne.s32.totalorder %s250, %s251
    %p265 = scmp.eq.s32.totalorder %s29, 3
    %p266 = por %p264, %p265
    %p268 = scmp.ne.s32.totalorder %s251, %s267
    %p269 = scmp.eq.s32.totalorder %s29, 0
    %p270 = por %p268, %p269
    %s272 = sadd.s32 %s271, 1
    %p275 = scmp.eq.s32.totalorder %s23, 3
    %p276 = scmp.ne.s32.totalorder %s271, %s273
    %p277 = scmp.eq.s32.totalorder %s23, 0
    %p278 = por %p276, %p277
    %p279 = scmp.ne.s32.totalorder %s271, %s273
    %p280 = scmp.eq.s32.totalorder %s28, 3
    %p281 = por %p279, %p280
    %p282 = scmp.ne.s32.totalorder %s273, %s274
    %p283 = scmp.eq.s32.totalorder %s28, 0
    %p284 = por %p282, %p283
    %p285 = scmp.ne.s32.totalorder %s273, %s274
    %p286 = scmp.eq.s32.totalorder %s29, 3
    %p287 = por %p285, %p286
    %p289 = scmp.ne.s32.totalorder %s274, %s288
    %p290 = scmp.eq.s32.totalorder %s29, 0
    %p291 = por %p289, %p290
    %s293 = sadd.s32 %s292, 1
    %p296 = scmp.eq.s32.totalorder %s23, 3
    %p297 = scmp.ne.s32.totalorder %s292, %s294
    %p298 = scmp.eq.s32.totalorder %s23, 0
    %p299 = por %p297, %p298
    %p300 = scmp.ne.s32.totalorder %s292, %s294
    %p301 = scmp.eq.s32.totalorder %s28, 3
    %p302 = por %p300, %p301
    %p303 = scmp.ne.s32.totalorder %s294, %s295
    %p304 = scmp.eq.s32.totalorder %s28, 0
    %p305 = por %p303, %p304
    %p306 = scmp.ne.s32.totalorder %s294, %s295
    %p307 = scmp.eq.s32.totalorder %s29, 3
    %p308 = por %p306, %p307
    %p310 = scmp.ne.s32.totalorder %s295, %s309
    %p311 = scmp.eq.s32.totalorder %s29, 0
    %p312 = por %p310, %p311
    %s314 = sadd.s32 %s313, 1
    %p317 = scmp.eq.s32.totalorder %s23, 3
    %p318 = scmp.ne.s32.totalorder %s313, %s315
    %p319 = scmp.eq.s32.totalorder %s23, 0
    %p320 = por %p318, %p319
    %p321 = scmp.ne.s32.totalorder %s313, %s315
    %p322 = scmp.eq.s32.totalorder %s28, 3
    %p323 = por %p321, %p322
    %p324 = scmp.ne.s32.totalorder %s315, %s316
    %p325 = scmp.eq.s32.totalorder %s28, 0
    %p326 = por %p324, %p325
    %p327 = scmp.ne.s32.totalorder %s315, %s316
    %p328 = scmp.eq.s32.totalorder %s29, 3
    %p329 = por %p327, %p328
    %p331 = scmp.ne.s32.totalorder %s316, %s330
    %p332 = scmp.eq.s32.totalorder %s29, 0
    %p333 = por %p331, %p332
    %s335 = sadd.s32 %s334, 1
    %p338 = scmp.eq.s32.totalorder %s23, 3
    %p339 = scmp.ne.s32.totalorder %s334, %s336
    %p340 = scmp.eq.s32.totalorder %s23, 0
    %p341 = por %p339, %p340
    %p342 = scmp.ne.s32.totalorder %s334, %s336
    %p343 = scmp.eq.s32.totalorder %s28, 3
    %p344 = por %p342, %p343
    %p345 = scmp.ne.s32.totalorder %s336, %s337
    %p346 = scmp.eq.s32.totalorder %s28, 0
    %p347 = por %p345, %p346
    %p348 = scmp.ne.s32.totalorder %s336, %s337
    %p349 = scmp.eq.s32.totalorder %s29, 3
    %p350 = por %p348, %p349
    %p352 = scmp.ne.s32.totalorder %s337, %s351
    %p353 = scmp.eq.s32.totalorder %s29, 0
    %p354 = por %p352, %p353
    %s356 = sadd.s32 %s355, 1
    %p359 = scmp.eq.s32.totalorder %s23, 3
    %p360 = scmp.ne.s32.totalorder %s355, %s357
    %p361 = scmp.eq.s32.totalorder %s23, 0
    %p362 = por %p360, %p361
    %p363 = scmp.ne.s32.totalorder %s355, %s357
    %p364 = scmp.eq.s32.totalorder %s28, 3
    %p365 = por %p363, %p364
    %p366 = scmp.ne.s32.totalorder %s357, %s358
    %p367 = scmp.eq.s32.totalorder %s28, 0
    %p368 = por %p366, %p367
    %p369 = scmp.ne.s32.totalorder %s357, %s358
    %p370 = scmp.eq.s32.totalorder %s29, 3
    %p371 = por %p369, %p370
    %p373 = scmp.ne.s32.totalorder %s358, %s372
    %p374 = scmp.eq.s32.totalorder %s29, 0
    %p375 = por %p373, %p374
    %s377 = sadd.s32 %s376, 1
    %p380 = scmp.eq.s32.totalorder %s23, 3
    %p381 = scmp.ne.s32.totalorder %s376, %s378
    %p382 = scmp.eq.s32.totalorder %s23, 0
    %p383 = por %p381, %p382
    %p384 = scmp.ne.s32.totalorder %s376, %s378
    %p385 = scmp.eq.s32.totalorder %s28, 3
    %p386 = por %p384, %p385
    %p387 = scmp.ne.s32.totalorder %s378, %s379
    %p388 = scmp.eq.s32.totalorder %s28, 0
    %p389 = por %p387, %p388
    %p390 = scmp.ne.s32.totalorder %s378, %s379
    %p391 = scmp.eq.s32.totalorder %s29, 3
    %p392 = por %p390, %p391
    %p394 = scmp.ne.s32.totalorder %s379, %s393
    %p395 = scmp.eq.s32.totalorder %s29, 0
    %p396 = por %p394, %p395
    %s398 = sadd.s32 %s397, 1
    %p401 = scmp.eq.s32.totalorder %s23, 3
    %p402 = scmp.ne.s32.totalorder %s397, %s399
    %p403 = scmp.eq.s32.totalorder %s23, 0
    %p404 = por %p402, %p403
    %p405 = scmp.ne.s32.totalorder %s397, %s399
    %p406 = scmp.eq.s32.totalorder %s28, 3
    %p407 = por %p405, %p406
    %p408 = scmp.ne.s32.totalorder %s399, %s400
    %p409 = scmp.eq.s32.totalorder %s28, 0
    %p410 = por %p408, %p409
    %p411 = scmp.ne.s32.totalorder %s399, %s400
    %p412 = scmp.eq.s32.totalorder %s29, 3
    %p413 = por %p411, %p412
    %p415 = scmp.ne.s32.totalorder %s400, %s414
    %p416 = scmp.eq.s32.totalorder %s29, 0
    %p417 = por %p415, %p416
    %s419 = sadd.s32 %s418, 1
    %p422 = scmp.eq.s32.totalorder %s23, 3
    %p423 = scmp.ne.s32.totalorder %s418, %s420
    %p424 = scmp.eq.s32.totalorder %s23, 0
    %p425 = por %p423, %p424
    %p426 = scmp.ne.s32.totalorder %s418, %s420
    %p427 = scmp.eq.s32.totalorder %s28, 3
    %p428 = por %p426, %p427
    %p429 = scmp.ne.s32.totalorder %s420, %s421
    %p430 = scmp.eq.s32.totalorder %s28, 0
    %p431 = por %p429, %p430
    %p432 = scmp.ne.s32.totalorder %s420, %s421
    %p433 = scmp.eq.s32.totalorder %s29, 3
    %p434 = por %p432, %p433
    %p436 = scmp.ne.s32.totalorder %s421, %s435
    %p437 = scmp.eq.s32.totalorder %s29, 0
    %p438 = por %p436, %p437
    %s440 = sadd.s32 %s439, 1
    %p443 = scmp.eq.s32.totalorder %s23, 3
    %p444 = scmp.ne.s32.totalorder %s439, %s441
    %p445 = scmp.eq.s32.totalorder %s23, 0
    %p446 = por %p444, %p445
    %p447 = scmp.ne.s32.totalorder %s439, %s441
    %p448 = scmp.eq.s32.totalorder %s28, 3
    %p449 = por %p447, %p448
    %p450 = scmp.ne.s32.totalorder %s441, %s442
    %p451 = scmp.eq.s32.totalorder %s28, 0
    %p452 = por %p450, %p451
    %p453 = scmp.ne.s32.totalorder %s441, %s442
    %p454 = scmp.eq.s32.totalorder %s29, 3
    %p455 = por %p453, %p454
    %p457 = scmp.ne.s32.totalorder %s442, %s456
    %p458 = scmp.eq.s32.totalorder %s29, 0
    %p459 = por %p457, %p458
    %s461 = sadd.s32 %s460, 1
    %p464 = scmp.eq.s32.totalorder %s23, 3
    %p465 = scmp.ne.s32.totalorder %s460, %s462
    %p466 = scmp.eq.s32.totalorder %s23, 0
    %p467 = por %p465, %p466
    %p468 = scmp.ne.s32.totalorder %s460, %s462
    %p469 = scmp.eq.s32.totalorder %s28, 3
    %p470 = por %p468, %p469
    %p471 = scmp.ne.s32.totalorder %s462, %s463
    %p472 = scmp.eq.s32.totalorder %s28, 0
    %p473 = por %p471, %p472
    %p474 = scmp.ne.s32.totalorder %s462, %s463
    %p475 = scmp.eq.s32.totalorder %s29, 3
    %p476 = por %p474, %p475
    %p478 = scmp.ne.s32.totalorder %s463, %s477
    %p479 = scmp.eq.s32.totalorder %s29, 0
    %p480 = por %p478, %p479
    %s481 = ssub.s32 %s30, %s42
    %s482 = ssub.s32 %s31, %s38
    %s483 = sor.u32 %s481, %s482
    %p484 = scmp.eq.s32.totalorder %s483, 0
    %s486 = sadd.s32 %s485, 1
    %s487 = scalar_select %p484, %s485, %s486
    %p490 = pneg %p484
    %p491 = scmp.eq.s32.totalorder %s23, 3
    %p492 = por %p490, %p491
    %p493 = scmp.ne.s32.totalorder %s485, %s488
    %p494 = scmp.eq.s32.totalorder %s23, 0
    %p495 = por %p493, %p494
    %p496 = scmp.ne.s32.totalorder %s485, %s488
    %p497 = scmp.eq.s32.totalorder %s28, 3
    %p498 = por %p496, %p497
    %p499 = scmp.ne.s32.totalorder %s488, %s489
    %p500 = scmp.eq.s32.totalorder %s28, 0
    %p501 = por %p499, %p500
    %p502 = scmp.ne.s32.totalorder %s488, %s489
    %p503 = scmp.eq.s32.totalorder %s29, 3
    %p504 = por %p502, %p503
    %p506 = scmp.ne.s32.totalorder %s489, %s505
    %p507 = scmp.eq.s32.totalorder %s29, 0
    %p508 = por %p506, %p507
    %p509 = scmp.le.s32.totalorder 1, %s23
    %p510 = scmp.lt.s32.totalorder %s23, 5
    %p511 = pnand %p509, %p510
    %p512 = pneg %p511
    // Predicated region
    $region9: #{msrb_forward.3} parent=5 // pred_check
      _
    $region10: #{msrb_forward.3} parent=5 // pred_check_branch
      %514 = sbr.rel (%p511) target = $region12
    $region11: #{msrb_forward.3} parent=5 // pred_region
      %s515 = ssub.s32 %s23, 1
      // Predicated region
      $region13: #{msrb_forward.3} parent=11 // pred_check
        %p516 = pneg %p284
      $region14: #{msrb_forward.3} parent=11 // pred_check_branch
        %518 = sbr.rel (%p516) target = $region16
      $region15: #{msrb_forward.3} parent=11 // pred_region
        _
      $region16: #{msrb_forward.3} parent=11 // pred_fallthru
        _
      // Predicated region
      $region17: #{msrb_forward.3} parent=11 // pred_check
        %p519 = pneg %p305
      $region18: #{msrb_forward.3} parent=11 // pred_check_branch
        %521 = sbr.rel (%p519) target = $region20
      $region19: #{msrb_forward.3} parent=11 // pred_region
        _
      $region20: #{msrb_forward.3} parent=11 // pred_fallthru
        _
      // Predicated region
      $region21: #{msrb_forward.3} parent=11 // pred_check
        %p522 = pneg %p326
      $region22: #{msrb_forward.3} parent=11 // pred_check_branch
        %524 = sbr.rel (%p522) target = $region24
      $region23: #{msrb_forward.3} parent=11 // pred_region
        _
      $region24: #{msrb_forward.3} parent=11 // pred_fallthru
        _
      // Predicated region
      $region25: #{msrb_forward.3} parent=11 // pred_check
        %p525 = pneg %p347
      $region26: #{msrb_forward.3} parent=11 // pred_check_branch
        %527 = sbr.rel (%p525) target = $region28
      $region27: #{msrb_forward.3} parent=11 // pred_region
        _
      $region28: #{msrb_forward.3} parent=11 // pred_fallthru
        _
      // Predicated region
      $region29: #{msrb_forward.3} parent=11 // pred_check
        %p528 = pneg %p368
      $region30: #{msrb_forward.3} parent=11 // pred_check_branch
        %530 = sbr.rel (%p528) target = $region32
      $region31: #{msrb_forward.3} parent=11 // pred_region
        _
      $region32: #{msrb_forward.3} parent=11 // pred_fallthru
        _
      // Predicated region
      $region33: #{msrb_forward.3} parent=11 // pred_check
        %p531 = pneg %p389
      $region34: #{msrb_forward.3} parent=11 // pred_check_branch
        %533 = sbr.rel (%p531) target = $region36
      $region35: #{msrb_forward.3} parent=11 // pred_region
        _
      $region36: #{msrb_forward.3} parent=11 // pred_fallthru
        _
      // Predicated region
      $region37: #{msrb_forward.3} parent=11 // pred_check
        %p534 = pneg %p410
      $region38: #{msrb_forward.3} parent=11 // pred_check_branch
        %536 = sbr.rel (%p534) target = $region40
      $region39: #{msrb_forward.3} parent=11 // pred_region
        _
      $region40: #{msrb_forward.3} parent=11 // pred_fallthru
        _
      // Predicated region
      $region41: #{msrb_forward.3} parent=11 // pred_check
        %p537 = pneg %p431
      $region42: #{msrb_forward.3} parent=11 // pred_check_branch
        %539 = sbr.rel (%p537) target = $region44
      $region43: #{msrb_forward.3} parent=11 // pred_region
        _
      $region44: #{msrb_forward.3} parent=11 // pred_fallthru
        _
      // Predicated region
      $region45: #{msrb_forward.3} parent=11 // pred_check
        %p540 = pneg %p452
      $region46: #{msrb_forward.3} parent=11 // pred_check_branch
        %542 = sbr.rel (%p540) target = $region48
      $region47: #{msrb_forward.3} parent=11 // pred_region
        _
      $region48: #{msrb_forward.3} parent=11 // pred_fallthru
        _
      // Predicated region
      $region49: #{msrb_forward.3} parent=11 // pred_check
        %p543 = pneg %p473
      $region50: #{msrb_forward.3} parent=11 // pred_check_branch
        %545 = sbr.rel (%p543) target = $region52
      $region51: #{msrb_forward.3} parent=11 // pred_region
        _
      $region52: #{msrb_forward.3} parent=11 // pred_fallthru
        _
    $region12: #{msrb_forward.3} parent=5 // pred_fallthru
      _
    %p546 = scmp.lt.s32.totalorder %s23, 4
    // Predicated region
    $region53: #{msrb_forward.3} parent=5 // pred_check
      %p547 = pneg %p546
    $region54: #{msrb_forward.3} parent=5 // pred_check_branch
      %549 = sbr.rel (%p547) target = $region56
    $region55: #{msrb_forward.3} parent=5 // pred_region
      // Predicated region
      $region57: #{msrb_forward.3} parent=55 // pred_check
        %p550 = pneg %p57
      $region58: #{msrb_forward.3} parent=55 // pred_check_branch
        %552 = sbr.rel (%p550) target = $region60
      $region59: #{msrb_forward.3} parent=55 // pred_region
        %s553 = smul.u32 8, %s31
        %p554 = scmp.lt.s32.totalorder %s30, 1
        %s555 = scalar_select %p554, %s30, 1
        %p556 = scmp.lt.s32.totalorder %s553, 15
        %s557 = scalar_select %p556, %s553, 15
        %s558 = smul.addr %s557, 2
        %s559 = smul.addr %s555, 32
        %s560 = sadd.s32 %s558, %s559
        %s561 = smul.addr %s560, 8
        %s562 = scalar_lea.vmem %s0, %s561
        %s563 = smul.u32 8, %s31
      $region60: #{msrb_forward.3} parent=55 // pred_fallthru
        _
      // Predicated region
      $region61: #{msrb_forward.3} parent=55 // pred_check
        %p564 = pneg %p93
      $region62: #{msrb_forward.3} parent=55 // pred_check_branch
        %566 = sbr.rel (%p564) target = $region64
      $region63: #{msrb_forward.3} parent=55 // pred_region
        %s567 = smul.u32 %s31, 4
        %s568 = ssub.s32 %s567, 1
        %p569 = scmp.gt.s32.totalorder %s568, 0
        %s570 = scalar_select %p569, %s568, 0
        %s571 = smul.u32 2, %s570
        %p572 = scmp.lt.s32.totalorder %s30, 1
        %s573 = scalar_select %p572, %s30, 1
        %p574 = scmp.lt.s32.totalorder %s571, 15
        %s575 = scalar_select %p574, %s571, 15
        %s576 = smul.addr %s575, 2
        %s577 = smul.addr %s573, 32
        %s578 = sadd.s32 %s576, %s577
        %s579 = smul.addr %s578, 8
        %s580 = scalar_lea.vmem %s1, %s579
        %s581 = smul.u32 %s31, 4
        %s582 = ssub.s32 %s581, 1
        %p583 = scmp.gt.s32.totalorder %s582, 0
        %s584 = scalar_select %p583, %s582, 0
        %s585 = smul.u32 2, %s584
      $region64: #{msrb_forward.3} parent=55 // pred_fallthru
        _
      // Predicated region
      $region65: #{msrb_forward.3} parent=55 // pred_check
        %p586 = pneg %p129
      $region66: #{msrb_forward.3} parent=55 // pred_check_branch
        %588 = sbr.rel (%p586) target = $region68
      $region67: #{msrb_forward.3} parent=55 // pred_region
        %s589 = sadd.s32 %s31, 1
        %s590 = smul.u32 %s589, 4
        %p591 = scmp.lt.s32.totalorder %s590, 7
        %s592 = scalar_select %p591, %s590, 7
        %s593 = smul.u32 2, %s592
        %p594 = scmp.lt.s32.totalorder %s30, 1
        %s595 = scalar_select %p594, %s30, 1
        %p596 = scmp.lt.s32.totalorder %s593, 15
        %s597 = scalar_select %p596, %s593, 15
        %s598 = smul.addr %s597, 2
        %s599 = smul.addr %s595, 32
        %s600 = sadd.s32 %s598, %s599
        %s601 = smul.addr %s600, 8
        %s602 = scalar_lea.vmem %s2, %s601
        %s603 = sadd.s32 %s31, 1
        %s604 = smul.u32 %s603, 4
        %p605 = scmp.lt.s32.totalorder %s604, 7
        %s606 = scalar_select %p605, %s604, 7
        %s607 = smul.u32 2, %s606
      $region68: #{msrb_forward.3} parent=55 // pred_fallthru
        _
      // Predicated region
      $region69: #{msrb_forward.3} parent=55 // pred_check
        %p608 = pneg %p157
      $region70: #{msrb_forward.3} parent=55 // pred_check_branch
        %610 = sbr.rel (%p608) target = $region72
      $region71: #{msrb_forward.3} parent=55 // pred_region
        %s611 = smul.u32 8, %s31
        %p612 = scmp.lt.s32.totalorder %s30, 1
        %s613 = scalar_select %p612, %s30, 1
        %p614 = scmp.lt.s32.totalorder %s611, 15
        %s615 = scalar_select %p614, %s611, 15
        %s616 = smul.addr %s615, 2
        %s617 = smul.addr %s613, 32
        %s618 = sadd.s32 %s616, %s617
        %s619 = smul.addr %s618, 8
        %s620 = scalar_lea.vmem %s3, %s619
        %s621 = smul.u32 8, %s31
      $region72: #{msrb_forward.3} parent=55 // pred_fallthru
        _
      // Predicated region
      $region73: #{msrb_forward.3} parent=55 // pred_check
        %p622 = pneg %p193
      $region74: #{msrb_forward.3} parent=55 // pred_check_branch
        %624 = sbr.rel (%p622) target = $region76
      $region75: #{msrb_forward.3} parent=55 // pred_region
        %s625 = smul.u32 %s31, 4
        %s626 = ssub.s32 %s625, 1
        %p627 = scmp.gt.s32.totalorder %s626, 0
        %s628 = scalar_select %p627, %s626, 0
        %s629 = smul.u32 2, %s628
        %p630 = scmp.lt.s32.totalorder %s30, 1
        %s631 = scalar_select %p630, %s30, 1
        %p632 = scmp.lt.s32.totalorder %s629, 15
        %s633 = scalar_select %p632, %s629, 15
        %s634 = smul.addr %s633, 2
        %s635 = smul.addr %s631, 32
        %s636 = sadd.s32 %s634, %s635
        %s637 = smul.addr %s636, 8
        %s638 = scalar_lea.vmem %s4, %s637
        %s639 = smul.u32 %s31, 4
        %s640 = ssub.s32 %s639, 1
        %p641 = scmp.gt.s32.totalorder %s640, 0
        %s642 = scalar_select %p641, %s640, 0
        %s643 = smul.u32 2, %s642
      $region76: #{msrb_forward.3} parent=55 // pred_fallthru
        _
      // Predicated region
      $region77: #{msrb_forward.3} parent=55 // pred_check
        %p644 = pneg %p229
      $region78: #{msrb_forward.3} parent=55 // pred_check_branch
        %646 = sbr.rel (%p644) target = $region80
      $region79: #{msrb_forward.3} parent=55 // pred_region
        %s647 = sadd.s32 %s31, 1
        %s648 = smul.u32 %s647, 4
        %p649 = scmp.lt.s32.totalorder %s648, 7
        %s650 = scalar_select %p649, %s648, 7
        %s651 = smul.u32 2, %s650
        %p652 = scmp.lt.s32.totalorder %s30, 1
        %s653 = scalar_select %p652, %s30, 1
        %p654 = scmp.lt.s32.totalorder %s651, 15
        %s655 = scalar_select %p654, %s651, 15
        %s656 = smul.addr %s655, 2
        %s657 = smul.addr %s653, 32
        %s658 = sadd.s32 %s656, %s657
        %s659 = smul.addr %s658, 8
        %s660 = scalar_lea.vmem %s5, %s659
        %s661 = sadd.s32 %s31, 1
        %s662 = smul.u32 %s661, 4
        %p663 = scmp.lt.s32.totalorder %s662, 7
        %s664 = scalar_select %p663, %s662, 7
        %s665 = smul.u32 2, %s664
      $region80: #{msrb_forward.3} parent=55 // pred_fallthru
        _
      // Predicated region
      $region81: #{msrb_forward.3} parent=55 // pred_check
        %p666 = pneg %p257
      $region82: #{msrb_forward.3} parent=55 // pred_check_branch
        %668 = sbr.rel (%p666) target = $region84
      $region83: #{msrb_forward.3} parent=55 // pred_region
        %s669 = smul.u32 8, %s31
        %p670 = scmp.lt.s32.totalorder %s30, 1
        %s671 = scalar_select %p670, %s30, 1
        %p672 = scmp.lt.s32.totalorder %s669, 15
        %s673 = scalar_select %p672, %s669, 15
        %s674 = smul.addr %s673, 2
        %s675 = smul.addr %s671, 32
        %s676 = sadd.s32 %s674, %s675
        %s677 = smul.addr %s676, 8
        %s678 = scalar_lea.vmem %s6, %s677
        %s679 = smul.u32 8, %s31
      $region84: #{msrb_forward.3} parent=55 // pred_fallthru
        _
    $region56: #{msrb_forward.3} parent=5 // pred_fallthru
      _
    %p680 = scmp.le.s32.totalorder 1, %s23
    %p681 = scmp.lt.s32.totalorder %s23, 5
    %p682 = pnand %p680, %p681
    %p683 = pneg %p682
    // Predicated region
    $region85: #{msrb_forward.3} parent=5 // pred_check
      _
    $region86: #{msrb_forward.3} parent=5 // pred_check_branch
      %685 = sbr.rel (%p682) target = $region88
    $region87: #{msrb_forward.3} parent=5 // pred_region
      %s686 = ssub.s32 %s23, 1
      %s687 = smul.u32 8, %s33
      %p688 = scmp.lt.s32.totalorder %s32, 1
      %s689 = scalar_select %p688, %s32, 1
      %p690 = scmp.lt.s32.totalorder %s687, 15
      %s691 = scalar_select %p690, %s687, 15
      %s692 = smul.addr %s691, 2
      %s693 = smul.addr %s689, 32
      %s694 = sadd.s32 %s692, %s693
      %s695 = smul.addr %s694, 8
      %s696 = scalar_lea.vmem %s0, %s695
      %p697 = pneg %p63
      %p698 = pneg %p60
      %s699 = smul.u32 %s33, 4
      %s700 = ssub.s32 %s699, 1
      %p701 = scmp.gt.s32.totalorder %s700, 0
      %s702 = scalar_select %p701, %s700, 0
      %s703 = smul.u32 2, %s702
      %p704 = scmp.lt.s32.totalorder %s32, 1
      %s705 = scalar_select %p704, %s32, 1
      %p706 = scmp.lt.s32.totalorder %s703, 15
      %s707 = scalar_select %p706, %s703, 15
      %s708 = smul.addr %s707, 2
      %s709 = smul.addr %s705, 32
      %s710 = sadd.s32 %s708, %s709
      %s711 = smul.addr %s710, 8
      %s712 = scalar_lea.vmem %s1, %s711
      %p713 = pneg %p99
      %p714 = pneg %p96
      %s715 = sadd.s32 %s33, 1
      %s716 = smul.u32 %s715, 4
      %p717 = scmp.lt.s32.totalorder %s716, 7
      %s718 = scalar_select %p717, %s716, 7
      %s719 = smul.u32 2, %s718
      %p720 = scmp.lt.s32.totalorder %s32, 1
      %s721 = scalar_select %p720, %s32, 1
      %p722 = scmp.lt.s32.totalorder %s719, 15
      %s723 = scalar_select %p722, %s719, 15
      %s724 = smul.addr %s723, 2
      %s725 = smul.addr %s721, 32
      %s726 = sadd.s32 %s724, %s725
      %s727 = smul.addr %s726, 8
      %s728 = scalar_lea.vmem %s2, %s727
      %p729 = pneg %p135
      %p730 = pneg %p132
      %s731 = smul.u32 8, %s33
      %p732 = scmp.lt.s32.totalorder %s32, 1
      %s733 = scalar_select %p732, %s32, 1
      %p734 = scmp.lt.s32.totalorder %s731, 15
      %s735 = scalar_select %p734, %s731, 15
      %s736 = smul.addr %s735, 2
      %s737 = smul.addr %s733, 32
      %s738 = sadd.s32 %s736, %s737
      %s739 = smul.addr %s738, 8
      %s740 = scalar_lea.vmem %s3, %s739
      %p741 = pneg %p163
      %p742 = pneg %p160
      %s743 = smul.u32 %s33, 4
      %s744 = ssub.s32 %s743, 1
      %p745 = scmp.gt.s32.totalorder %s744, 0
      %s746 = scalar_select %p745, %s744, 0
      %s747 = smul.u32 2, %s746
      %p748 = scmp.lt.s32.totalorder %s32, 1
      %s749 = scalar_select %p748, %s32, 1
      %p750 = scmp.lt.s32.totalorder %s747, 15
      %s751 = scalar_select %p750, %s747, 15
      %s752 = smul.addr %s751, 2
      %s753 = smul.addr %s749, 32
      %s754 = sadd.s32 %s752, %s753
      %s755 = smul.addr %s754, 8
      %s756 = scalar_lea.vmem %s4, %s755
      %p757 = pneg %p199
      %p758 = pneg %p196
      %s759 = sadd.s32 %s33, 1
      %s760 = smul.u32 %s759, 4
      %p761 = scmp.lt.s32.totalorder %s760, 7
      %s762 = scalar_select %p761, %s760, 7
      %s763 = smul.u32 2, %s762
      %p764 = scmp.lt.s32.totalorder %s32, 1
      %s765 = scalar_select %p764, %s32, 1
      %p766 = scmp.lt.s32.totalorder %s763, 15
      %s767 = scalar_select %p766, %s763, 15
      %s768 = smul.addr %s767, 2
      %s769 = smul.addr %s765, 32
      %s770 = sadd.s32 %s768, %s769
      %s771 = smul.addr %s770, 8
      %s772 = scalar_lea.vmem %s5, %s771
      %p773 = pneg %p235
      %p774 = pneg %p232
      %s775 = smul.u32 8, %s33
      %p776 = scmp.lt.s32.totalorder %s32, 1
      %s777 = scalar_select %p776, %s32, 1
      %p778 = scmp.lt.s32.totalorder %s775, 15
      %s779 = scalar_select %p778, %s775, 15
      %s780 = smul.addr %s779, 2
      %s781 = smul.addr %s777, 32
      %s782 = sadd.s32 %s780, %s781
      %s783 = smul.addr %s782, 8
      %s784 = scalar_lea.vmem %s6, %s783
      %p785 = pneg %p263
      %p786 = pneg %p260
      %p787 = pneg %p284
      %p788 = pneg %p281
      %p789 = pneg %p305
      %p790 = pneg %p302
      %p791 = pneg %p326
      %p792 = pneg %p323
      %p793 = pneg %p347
      %p794 = pneg %p344
      %p795 = pneg %p368
      %p796 = pneg %p365
      %p797 = pneg %p389
      %p798 = pneg %p386
      %p799 = pneg %p410
      %p800 = pneg %p407
      %p801 = pneg %p431
      %p802 = pneg %p428
      %p803 = pneg %p452
      %p804 = pneg %p449
      %p805 = pneg %p473
      %p806 = pneg %p470
      %p807 = pneg %p501
      %p808 = pneg %p498
      %s809 = smul.u32 8, %s33
      %p810 = scmp.lt.s32.totalorder %s32, 1
      %s811 = scalar_select %p810, %s32, 1
      %p812 = scmp.lt.s32.totalorder %s809, 15
      %s813 = scalar_select %p812, %s809, 15
      %s814 = smul.addr %s813, 2
      %s815 = smul.addr %s811, 32
      %s816 = sadd.s32 %s814, %s815
      %s817 = smul.addr %s816, 8
      %s818 = scalar_lea.vmem %s17, %s817
      %s819 = smul.u32 8, %s33
      %p820 = scmp.lt.s32.totalorder %s32, 1
      %s821 = scalar_select %p820, %s32, 1
      %p822 = scmp.lt.s32.totalorder %s819, 15
      %s823 = scalar_select %p822, %s819, 15
      %s824 = smul.addr %s823, 2
      %s825 = smul.addr %s821, 32
      %s826 = sadd.s32 %s824, %s825
      %s827 = smul.addr %s826, 8
      %s828 = scalar_lea.vmem %s0, %s827
      %s829 = smul.u32 8, %s33
      %s830 = smul.u32 %s33, 4
      %s831 = ssub.s32 %s830, 1
      %p832 = scmp.gt.s32.totalorder %s831, 0
      %s833 = scalar_select %p832, %s831, 0
      %s834 = smul.u32 2, %s833
      %p835 = scmp.lt.s32.totalorder %s32, 1
      %s836 = scalar_select %p835, %s32, 1
      %p837 = scmp.lt.s32.totalorder %s834, 15
      %s838 = scalar_select %p837, %s834, 15
      %s839 = smul.addr %s838, 2
      %s840 = smul.addr %s836, 32
      %s841 = sadd.s32 %s839, %s840
      %s842 = smul.addr %s841, 8
      %s843 = scalar_lea.vmem %s1, %s842
      %s844 = smul.u32 %s33, 4
      %s845 = ssub.s32 %s844, 1
      %p846 = scmp.gt.s32.totalorder %s845, 0
      %s847 = scalar_select %p846, %s845, 0
      %s848 = smul.u32 2, %s847
      %s849 = sadd.s32 %s33, 1
      %s850 = smul.u32 %s849, 4
      %p851 = scmp.lt.s32.totalorder %s850, 7
      %s852 = scalar_select %p851, %s850, 7
      %s853 = smul.u32 2, %s852
      %p854 = scmp.lt.s32.totalorder %s32, 1
      %s855 = scalar_select %p854, %s32, 1
      %p856 = scmp.lt.s32.totalorder %s853, 15
      %s857 = scalar_select %p856, %s853, 15
      %s858 = smul.addr %s857, 2
      %s859 = smul.addr %s855, 32
      %s860 = sadd.s32 %s858, %s859
      %s861 = smul.addr %s860, 8
      %s862 = scalar_lea.vmem %s2, %s861
      %s863 = sadd.s32 %s33, 1
      %s864 = smul.u32 %s863, 4
      %p865 = scmp.lt.s32.totalorder %s864, 7
      %s866 = scalar_select %p865, %s864, 7
      %s867 = smul.u32 2, %s866
      %s868 = smul.u32 8, %s33
      %p869 = scmp.lt.s32.totalorder %s32, 1
      %s870 = scalar_select %p869, %s32, 1
      %p871 = scmp.lt.s32.totalorder %s868, 15
      %s872 = scalar_select %p871, %s868, 15
      %s873 = smul.addr %s872, 2
      %s874 = smul.addr %s870, 32
      %s875 = sadd.s32 %s873, %s874
      %s876 = smul.addr %s875, 8
      %s877 = scalar_lea.vmem %s3, %s876
      %s878 = smul.u32 8, %s33
      %s879 = smul.u32 %s33, 4
      %s880 = ssub.s32 %s879, 1
      %p881 = scmp.gt.s32.totalorder %s880, 0
      %s882 = scalar_select %p881, %s880, 0
      %s883 = smul.u32 2, %s882
      %p884 = scmp.lt.s32.totalorder %s32, 1
      %s885 = scalar_select %p884, %s32, 1
      %p886 = scmp.lt.s32.totalorder %s883, 15
      %s887 = scalar_select %p886, %s883, 15
      %s888 = smul.addr %s887, 2
      %s889 = smul.addr %s885, 32
      %s890 = sadd.s32 %s888, %s889
      %s891 = smul.addr %s890, 8
      %s892 = scalar_lea.vmem %s4, %s891
      %s893 = smul.u32 %s33, 4
      %s894 = ssub.s32 %s893, 1
      %p895 = scmp.gt.s32.totalorder %s894, 0
      %s896 = scalar_select %p895, %s894, 0
      %s897 = smul.u32 2, %s896
      %s898 = sadd.s32 %s33, 1
      %s899 = smul.u32 %s898, 4
      %p900 = scmp.lt.s32.totalorder %s899, 7
      %s901 = scalar_select %p900, %s899, 7
      %s902 = smul.u32 2, %s901
      %p903 = scmp.lt.s32.totalorder %s32, 1
      %s904 = scalar_select %p903, %s32, 1
      %p905 = scmp.lt.s32.totalorder %s902, 15
      %s906 = scalar_select %p905, %s902, 15
      %s907 = smul.addr %s906, 2
      %s908 = smul.addr %s904, 32
      %s909 = sadd.s32 %s907, %s908
      %s910 = smul.addr %s909, 8
      %s911 = scalar_lea.vmem %s5, %s910
      %s912 = sadd.s32 %s33, 1
      %s913 = smul.u32 %s912, 4
      %p914 = scmp.lt.s32.totalorder %s913, 7
      %s915 = scalar_select %p914, %s913, 7
      %s916 = smul.u32 2, %s915
      %s917 = smul.u32 8, %s33
      %p918 = scmp.lt.s32.totalorder %s32, 1
      %s919 = scalar_select %p918, %s32, 1
      %p920 = scmp.lt.s32.totalorder %s917, 15
      %s921 = scalar_select %p920, %s917, 15
      %s922 = smul.addr %s921, 2
      %s923 = smul.addr %s919, 32
      %s924 = sadd.s32 %s922, %s923
      %s925 = smul.addr %s924, 8
      %s926 = scalar_lea.vmem %s6, %s925
      %s927 = smul.u32 8, %s33
      %s928 = smul.u32 8, %s33
      %p929 = scmp.lt.s32.totalorder %s32, 1
      %s930 = scalar_select %p929, %s32, 1
      %p931 = scmp.lt.s32.totalorder %s928, 15
      %s932 = scalar_select %p931, %s928, 15
      %s933 = smul.addr %s932, 2
      %s934 = smul.addr %s930, 32
      %s935 = sadd.s32 %s933, %s934
      %s936 = smul.addr %s935, 8
      %s937 = scalar_lea.vmem %s17, %s936
      %s938 = smul.u32 8, %s33
      %vm939 = vcmask 31744
      %940 = vst.msk [vmem:[#allocation2] sm:$0xff] %vm939, 0.0
      %941 = vst.msk [vmem:[#allocation2 + $0x8] sm:$0xff] %vm939, 0.0
      %vm942 = vcmask 27648
      %943 = vst.msk [vmem:[#allocation2 + $0x10] sm:$0xf] %vm942, 0.0
      %944 = vst.msk [vmem:[#allocation2 + $0x18] sm:$0xff] %vm939, 0.0
      %945 = vst.msk [vmem:[#allocation2 + $0x20] sm:$0xff] %vm939, 0.0
      %946 = vst.msk [vmem:[#allocation2 + $0x28] sm:$0xf] %vm942, 0.0
      %947 = vst.msk [vmem:[#allocation2 + $0x30] sm:$0xff] %vm939, 0.0
      %948 = vst.msk [vmem:[#allocation2 + $0x38] sm:$0xff] %vm939, 0.0
      %949 = vst.msk [vmem:[#allocation2 + $0x40] sm:$0xf] %vm942, 0.0
      %950 = vst.msk [vmem:[#allocation2 + $0x48] sm:$0xff] %vm939, 0.0
      %951 = vst.msk [vmem:[#allocation2 + $0x50] sm:$0xff] %vm939, 0.0
      %952 = vst.msk [vmem:[#allocation2 + $0x58] sm:$0xf] %vm942, 0.0
      %953 = vst.msk [vmem:[#allocation2 + $0x60] sm:$0xff] %vm939, 0.0
      %954 = vst.msk [vmem:[#allocation2 + $0x68] sm:$0xff] %vm939, 0.0
      %955 = vst.msk [vmem:[#allocation2 + $0x70] sm:$0xf] %vm942, 0.0
      %956 = vst.msk [vmem:[#allocation2 + $0x78] sm:$0xff] %vm939, 0.0
      %957 = vst.msk [vmem:[#allocation2 + $0x80] sm:$0xff] %vm939, 0.0
      %958 = vst.msk [vmem:[#allocation2 + $0x88] sm:$0xf] %vm942, 0.0
      %959 = vst.msk [vmem:[#allocation2 + $0x90] sm:$0xff] %vm939, 0.0
      %960 = vst.msk [vmem:[#allocation2 + $0x98] sm:$0xff] %vm939, 0.0
      %961 = vst.msk [vmem:[#allocation2 + $0xa0] sm:$0xf] %vm942, 0.0
      %962 = vst.msk [vmem:[#allocation2 + $0xa8] sm:$0xff] %vm939, 0.0
      %963 = vst.msk [vmem:[#allocation2 + $0xb0] sm:$0xff] %vm939, 0.0
      %964 = vst.msk [vmem:[#allocation2 + $0xb8] sm:$0xf] %vm942, 0.0
      %965 = vst.msk [vmem:[#allocation2 + $0xc0] sm:$0xff] %vm939, 0.0
      %966 = vst.msk [vmem:[#allocation2 + $0xc8] sm:$0xff] %vm939, 0.0
      %967 = vst.msk [vmem:[#allocation2 + $0xd0] sm:$0xf] %vm942, 0.0
      %968 = vst.msk [vmem:[#allocation2 + $0xd8] sm:$0xff] %vm939, 0.0
      %969 = vst.msk [vmem:[#allocation2 + $0xe0] sm:$0xff] %vm939, 0.0
      %970 = vst.msk [vmem:[#allocation2 + $0xe8] sm:$0xf] %vm942, 0.0
      %971 = vst.msk [vmem:[#allocation2 + $0xf0] sm:$0xff] %vm939, 0.0
      %972 = vst.msk [vmem:[#allocation2 + $0xf8] sm:$0xff] %vm939, 0.0
      %973 = vst.msk [vmem:[#allocation2 + $0x100] sm:$0xf] %vm942, 0.0
      %974 = vst.msk [vmem:[#allocation2 + $0x108] sm:$0xff] %vm939, 0.0
      %975 = vst.msk [vmem:[#allocation2 + $0x110] sm:$0xff] %vm939, 0.0
      %976 = vst.msk [vmem:[#allocation2 + $0x118] sm:$0xf] %vm942, 0.0
      %v977 = vld [vmem:[%s828] sm:$0xff]
      %v978 = vld [vmem:[%s828 + $0x8] sm:$0xff]
      %v979 = vld [vmem:[%s828 + $0x10] sm:$0xff]
      %v980 = vld [vmem:[%s828 + $0x18] sm:$0xff]
      %v981 = vld [vmem:[%s828 + $0x20] sm:$0xff]
      %v982 = vld [vmem:[%s828 + $0x28] sm:$0xff]
      %v983 = vld [vmem:[%s828 + $0x30] sm:$0xff]
      %v984 = vld [vmem:[%s828 + $0x38] sm:$0xff]
      %v985 = vld [vmem:[%s828 + $0x40] sm:$0xff]
      %v986 = vld [vmem:[%s828 + $0x48] sm:$0xff]
      %v987 = vld [vmem:[%s828 + $0x50] sm:$0xff]
      %v988 = vld [vmem:[%s828 + $0x58] sm:$0xff]
      %v989 = vld [vmem:[%s828 + $0x60] sm:$0xff]
      %v990 = vld [vmem:[%s828 + $0x68] sm:$0xff]
      %v991 = vld [vmem:[%s828 + $0x70] sm:$0xff]
      %v992 = vld [vmem:[%s828 + $0x78] sm:$0xff]
      %s993 = scalar_lea.vmem [#allocation2], 48
      %994 = vst.msk [vmem:[%s993 + $0x2] sm:$0xff] %vm939, %v977
      %995 = vst.msk [vmem:[%s993 + $0xa] sm:$0xff] %vm939, %v978
      %996 = vst.msk [vmem:[%s993 + $0x1a] sm:$0xff] %vm939, %v979
      %997 = vst.msk [vmem:[%s993 + $0x22] sm:$0xff] %vm939, %v980
      %998 = vst.msk [vmem:[%s993 + $0x32] sm:$0xff] %vm939, %v981
      %999 = vst.msk [vmem:[%s993 + $0x3a] sm:$0xff] %vm939, %v982
      %1000 = vst.msk [vmem:[%s993 + $0x4a] sm:$0xff] %vm939, %v983
      %1001 = vst.msk [vmem:[%s993 + $0x52] sm:$0xff] %vm939, %v984
      %1002 = vst.msk [vmem:[%s993 + $0x62] sm:$0xff] %vm939, %v985
      %1003 = vst.msk [vmem:[%s993 + $0x6a] sm:$0xff] %vm939, %v986
      %1004 = vst.msk [vmem:[%s993 + $0x7a] sm:$0xff] %vm939, %v987
      %1005 = vst.msk [vmem:[%s993 + $0x82] sm:$0xff] %vm939, %v988
      %1006 = vst.msk [vmem:[%s993 + $0x92] sm:$0xff] %vm939, %v989
      %1007 = vst.msk [vmem:[%s993 + $0x9a] sm:$0xff] %vm939, %v990
      %1008 = vst.msk [vmem:[%s993 + $0xaa] sm:$0xff] %vm939, %v991
      %1009 = vst.msk [vmem:[%s993 + $0xb2] sm:$0xff] %vm939, %v992
      %p1010 = scmp.gt.s32.totalorder %s33, 0
      // Predicated region
      $region89: #{msrb_forward.3} parent=87 // pred_check
        %p1011 = pneg %p1010
      $region90: #{msrb_forward.3} parent=87 // pred_check_branch
        %1013 = sbr.rel (%p1011) target = $region92
      $region91: #{msrb_forward.3} parent=87 // pred_region
        %v1014 = vld [vmem:[%s843] sm:$0xff]
        %v1015 = vld [vmem:[%s843 + $0x8] sm:$0xff]
        %v1016 = vld [vmem:[%s843 + $0x10] sm:$0xff]
        %v1017 = vld [vmem:[%s843 + $0x18] sm:$0xff]
        %1018 = vst.msk [vmem:[#allocation2 + $0x2] sm:$0xff] %vm939, %v1014
        %1019 = vst.msk [vmem:[#allocation2 + $0xa] sm:$0xff] %vm939, %v1015
        %1020 = vst.msk [vmem:[#allocation2 + $0x1a] sm:$0xff] %vm939, %v1016
        %1021 = vst.msk [vmem:[#allocation2 + $0x22] sm:$0xff] %vm939, %v1017
      $region92: #{msrb_forward.3} parent=87 // pred_fallthru
        _
      %p1022 = scmp.lt.s32.totalorder %s33, 1
      // Predicated region
      $region93: #{msrb_forward.3} parent=87 // pred_check
        %p1023 = pneg %p1022
      $region94: #{msrb_forward.3} parent=87 // pred_check_branch
        %1025 = sbr.rel (%p1023) target = $region96
      $region95: #{msrb_forward.3} parent=87 // pred_region
        %v1026 = vld [vmem:[%s862] sm:$0xff]
        %v1027 = vld [vmem:[%s862 + $0x8] sm:$0xff]
        %v1028 = vld [vmem:[%s862 + $0x10] sm:$0xff]
        %v1029 = vld [vmem:[%s862 + $0x18] sm:$0xff]
        %s1030 = scalar_lea.vmem [#allocation2], 240
        %1031 = vst.msk [vmem:[%s1030 + $0x2] sm:$0xff] %vm939, %v1026
        %1032 = vst.msk [vmem:[%s1030 + $0xa] sm:$0xff] %vm939, %v1027
        %1033 = vst.msk [vmem:[%s1030 + $0x1a] sm:$0xff] %vm939, %v1028
        %1034 = vst.msk [vmem:[%s1030 + $0x22] sm:$0xff] %vm939, %v1029
      $region96: #{msrb_forward.3} parent=87 // pred_fallthru
        _
      %1035 = vst.msk [vmem:[#allocation3] sm:$0xff] %vm939, 0.0
      %1036 = vst.msk [vmem:[#allocation3 + $0x8] sm:$0xff] %vm939, 0.0
      %1037 = vst.msk [vmem:[#allocation3 + $0x10] sm:$0xf] %vm942, 0.0
      %1038 = vst.msk [vmem:[#allocation3 + $0x18] sm:$0xff] %vm939, 0.0
      %1039 = vst.msk [vmem:[#allocation3 + $0x20] sm:$0xff] %vm939, 0.0
      %1040 = vst.msk [vmem:[#allocation3 + $0x28] sm:$0xf] %vm942, 0.0
      %1041 = vst.msk [vmem:[#allocation3 + $0x30] sm:$0xff] %vm939, 0.0
      %1042 = vst.msk [vmem:[#allocation3 + $0x38] sm:$0xff] %vm939, 0.0
      %1043 = vst.msk [vmem:[#allocation3 + $0x40] sm:$0xf] %vm942, 0.0
      %1044 = vst.msk [vmem:[#allocation3 + $0x48] sm:$0xff] %vm939, 0.0
      %1045 = vst.msk [vmem:[#allocation3 + $0x50] sm:$0xff] %vm939, 0.0
      %1046 = vst.msk [vmem:[#allocation3 + $0x58] sm:$0xf] %vm942, 0.0
      %1047 = vst.msk [vmem:[#allocation3 + $0x60] sm:$0xff] %vm939, 0.0
      %1048 = vst.msk [vmem:[#allocation3 + $0x68] sm:$0xff] %vm939, 0.0
      %1049 = vst.msk [vmem:[#allocation3 + $0x70] sm:$0xf] %vm942, 0.0
      %1050 = vst.msk [vmem:[#allocation3 + $0x78] sm:$0xff] %vm939, 0.0
      %1051 = vst.msk [vmem:[#allocation3 + $0x80] sm:$0xff] %vm939, 0.0
      %1052 = vst.msk [vmem:[#allocation3 + $0x88] sm:$0xf] %vm942, 0.0
      %1053 = vst.msk [vmem:[#allocation3 + $0x90] sm:$0xff] %vm939, 0.0
      %1054 = vst.msk [vmem:[#allocation3 + $0x98] sm:$0xff] %vm939, 0.0
      %1055 = vst.msk [vmem:[#allocation3 + $0xa0] sm:$0xf] %vm942, 0.0
      %1056 = vst.msk [vmem:[#allocation3 + $0xa8] sm:$0xff] %vm939, 0.0
      %1057 = vst.msk [vmem:[#allocation3 + $0xb0] sm:$0xff] %vm939, 0.0
      %1058 = vst.msk [vmem:[#allocation3 + $0xb8] sm:$0xf] %vm942, 0.0
      %1059 = vst.msk [vmem:[#allocation3 + $0xc0] sm:$0xff] %vm939, 0.0
      %1060 = vst.msk [vmem:[#allocation3 + $0xc8] sm:$0xff] %vm939, 0.0
      %1061 = vst.msk [vmem:[#allocation3 + $0xd0] sm:$0xf] %vm942, 0.0
      %1062 = vst.msk [vmem:[#allocation3 + $0xd8] sm:$0xff] %vm939, 0.0
      %1063 = vst.msk [vmem:[#allocation3 + $0xe0] sm:$0xff] %vm939, 0.0
      %1064 = vst.msk [vmem:[#allocation3 + $0xe8] sm:$0xf] %vm942, 0.0
      %1065 = vst.msk [vmem:[#allocation3 + $0xf0] sm:$0xff] %vm939, 0.0
      %1066 = vst.msk [vmem:[#allocation3 + $0xf8] sm:$0xff] %vm939, 0.0
      %1067 = vst.msk [vmem:[#allocation3 + $0x100] sm:$0xf] %vm942, 0.0
      %1068 = vst.msk [vmem:[#allocation3 + $0x108] sm:$0xff] %vm939, 0.0
      %1069 = vst.msk [vmem:[#allocation3 + $0x110] sm:$0xff] %vm939, 0.0
      %1070 = vst.msk [vmem:[#allocation3 + $0x118] sm:$0xf] %vm942, 0.0
      %v1071 = vld [vmem:[%s877] sm:$0xff]
      %v1072 = vld [vmem:[%s877 + $0x8] sm:$0xff]
      %v1073 = vld [vmem:[%s877 + $0x10] sm:$0xff]
      %v1074 = vld [vmem:[%s877 + $0x18] sm:$0xff]
      %v1075 = vld [vmem:[%s877 + $0x20] sm:$0xff]
      %v1076 = vld [vmem:[%s877 + $0x28] sm:$0xff]
      %v1077 = vld [vmem:[%s877 + $0x30] sm:$0xff]
      %v1078 = vld [vmem:[%s877 + $0x38] sm:$0xff]
      %v1079 = vld [vmem:[%s877 + $0x40] sm:$0xff]
      %v1080 = vld [vmem:[%s877 + $0x48] sm:$0xff]
      %v1081 = vld [vmem:[%s877 + $0x50] sm:$0xff]
      %v1082 = vld [vmem:[%s877 + $0x58] sm:$0xff]
      %v1083 = vld [vmem:[%s877 + $0x60] sm:$0xff]
      %v1084 = vld [vmem:[%s877 + $0x68] sm:$0xff]
      %v1085 = vld [vmem:[%s877 + $0x70] sm:$0xff]
      %v1086 = vld [vmem:[%s877 + $0x78] sm:$0xff]
      %s1087 = scalar_lea.vmem [#allocation3], 48
      %1088 = vst.msk [vmem:[%s1087 + $0x2] sm:$0xff] %vm939, %v1071
      %1089 = vst.msk [vmem:[%s1087 + $0xa] sm:$0xff] %vm939, %v1072
      %1090 = vst.msk [vmem:[%s1087 + $0x1a] sm:$0xff] %vm939, %v1073
      %1091 = vst.msk [vmem:[%s1087 + $0x22] sm:$0xff] %vm939, %v1074
      %1092 = vst.msk [vmem:[%s1087 + $0x32] sm:$0xff] %vm939, %v1075
      %1093 = vst.msk [vmem:[%s1087 + $0x3a] sm:$0xff] %vm939, %v1076
      %1094 = vst.msk [vmem:[%s1087 + $0x4a] sm:$0xff] %vm939, %v1077
      %1095 = vst.msk [vmem:[%s1087 + $0x52] sm:$0xff] %vm939, %v1078
      %1096 = vst.msk [vmem:[%s1087 + $0x62] sm:$0xff] %vm939, %v1079
      %1097 = vst.msk [vmem:[%s1087 + $0x6a] sm:$0xff] %vm939, %v1080
      %1098 = vst.msk [vmem:[%s1087 + $0x7a] sm:$0xff] %vm939, %v1081
      %1099 = vst.msk [vmem:[%s1087 + $0x82] sm:$0xff] %vm939, %v1082
      %1100 = vst.msk [vmem:[%s1087 + $0x92] sm:$0xff] %vm939, %v1083
      %1101 = vst.msk [vmem:[%s1087 + $0x9a] sm:$0xff] %vm939, %v1084
      %1102 = vst.msk [vmem:[%s1087 + $0xaa] sm:$0xff] %vm939, %v1085
      %1103 = vst.msk [vmem:[%s1087 + $0xb2] sm:$0xff] %vm939, %v1086
      // Predicated region
      $region97: #{msrb_forward.3} parent=87 // pred_check
        %p1104 = pneg %p1010
      $region98: #{msrb_forward.3} parent=87 // pred_check_branch
        %1106 = sbr.rel (%p1104) target = $region100
      $region99: #{msrb_forward.3} parent=87 // pred_region
        %v1107 = vld [vmem:[%s892] sm:$0xff]
        %v1108 = vld [vmem:[%s892 + $0x8] sm:$0xff]
        %v1109 = vld [vmem:[%s892 + $0x10] sm:$0xff]
        %v1110 = vld [vmem:[%s892 + $0x18] sm:$0xff]
        %1111 = vst.msk [vmem:[#allocation3 + $0x2] sm:$0xff] %vm939, %v1107
        %1112 = vst.msk [vmem:[#allocation3 + $0xa] sm:$0xff] %vm939, %v1108
        %1113 = vst.msk [vmem:[#allocation3 + $0x1a] sm:$0xff] %vm939, %v1109
        %1114 = vst.msk [vmem:[#allocation3 + $0x22] sm:$0xff] %vm939, %v1110
      $region100: #{msrb_forward.3} parent=87 // pred_fallthru
        _
      // Predicated region
      $region101: #{msrb_forward.3} parent=87 // pred_check
        %p1115 = pneg %p1022
      $region102: #{msrb_forward.3} parent=87 // pred_check_branch
        %1117 = sbr.rel (%p1115) target = $region104
      $region103: #{msrb_forward.3} parent=87 // pred_region
        %v1118 = vld [vmem:[%s911] sm:$0xff]
        %v1119 = vld [vmem:[%s911 + $0x8] sm:$0xff]
        %v1120 = vld [vmem:[%s911 + $0x10] sm:$0xff]
        %v1121 = vld [vmem:[%s911 + $0x18] sm:$0xff]
        %s1122 = scalar_lea.vmem [#allocation3], 240
        %1123 = vst.msk [vmem:[%s1122 + $0x2] sm:$0xff] %vm939, %v1118
        %1124 = vst.msk [vmem:[%s1122 + $0xa] sm:$0xff] %vm939, %v1119
        %1125 = vst.msk [vmem:[%s1122 + $0x1a] sm:$0xff] %vm939, %v1120
        %1126 = vst.msk [vmem:[%s1122 + $0x22] sm:$0xff] %vm939, %v1121
      $region104: #{msrb_forward.3} parent=87 // pred_fallthru
        _
      %v1127 = vld [vmem:[%s7] sm:$0x7]
      %v1128 = vld [vmem:[%s7 + $0x4] sm:$0x7]
      %v1129 = vld [vmem:[%s7 + $0x8] sm:$0x7]
      %v1130 = vld [vmem:[%s8] sm:$0x1]
      %s1131 = scalar_lea.vmem [#allocation2], 24
      %v1132 = vld [vmem:[%s1131 + $0x1] sm:$0xff]
      %v1133 = vld [vmem:[%s1131 + $0x9] sm:$0xff]
      %v1134 = vld [vmem:[%s1131 + $0x19] sm:$0xff]
      %v1135 = vld [vmem:[%s1131 + $0x21] sm:$0xff]
      %v1136 = vld [vmem:[%s1131 + $0x31] sm:$0xff]
      %v1137 = vld [vmem:[%s1131 + $0x39] sm:$0xff]
      %v1138 = vld [vmem:[%s1131 + $0x49] sm:$0xff]
      %v1139 = vld [vmem:[%s1131 + $0x51] sm:$0xff]
      %v1140 = vld [vmem:[%s1131 + $0x61] sm:$0xff]
      %v1141 = vld [vmem:[%s1131 + $0x69] sm:$0xff]
      %v1142 = vld [vmem:[%s1131 + $0x79] sm:$0xff]
      %v1143 = vld [vmem:[%s1131 + $0x81] sm:$0xff]
      %v1144 = vld [vmem:[%s1131 + $0x91] sm:$0xff]
      %v1145 = vld [vmem:[%s1131 + $0x99] sm:$0xff]
      %v1146 = vld [vmem:[%s1131 + $0xa9] sm:$0xff]
      %v1147 = vld [vmem:[%s1131 + $0xb1] sm:$0xff]
      %v1148 = vlaneseq
      %v1149 = vshrl.u32 %v1148, 7
      %v1150 = vsub.s32 0, %v1149
      %v1151 = vrot.slane %v1127, %v1150
      %v1152 = vmul.f32 %v1132, %v1151
      %v1153 = vmul.f32 %v1133, %v1151
      %v1154 = vmul.f32 %v1134, %v1151
      %v1155 = vmul.f32 %v1135, %v1151
      %v1156 = vmul.f32 %v1136, %v1151
      %v1157 = vmul.f32 %v1137, %v1151
      %v1158 = vmul.f32 %v1138, %v1151
      %v1159 = vmul.f32 %v1139, %v1151
      %v1160 = vmul.f32 %v1140, %v1151
      %v1161 = vmul.f32 %v1141, %v1151
      %v1162 = vmul.f32 %v1142, %v1151
      %v1163 = vmul.f32 %v1143, %v1151
      %v1164 = vmul.f32 %v1144, %v1151
      %v1165 = vmul.f32 %v1145, %v1151
      %v1166 = vmul.f32 %v1146, %v1151
      %v1167 = vmul.f32 %v1147, %v1151
      %v1168 = vadd.f32 %v1152, 0.0
      %v1169 = vadd.f32 %v1153, 0.0
      %v1170 = vadd.f32 %v1154, 0.0
      %v1171 = vadd.f32 %v1155, 0.0
      %v1172 = vadd.f32 %v1156, 0.0
      %v1173 = vadd.f32 %v1157, 0.0
      %v1174 = vadd.f32 %v1158, 0.0
      %v1175 = vadd.f32 %v1159, 0.0
      %v1176 = vadd.f32 %v1160, 0.0
      %v1177 = vadd.f32 %v1161, 0.0
      %v1178 = vadd.f32 %v1162, 0.0
      %v1179 = vadd.f32 %v1163, 0.0
      %v1180 = vadd.f32 %v1164, 0.0
      %v1181 = vadd.f32 %v1165, 0.0
      %v1182 = vadd.f32 %v1166, 0.0
      %v1183 = vadd.f32 %v1167, 0.0
      %v1184 = vld [vmem:[%s1131 + $0x2] sm:$0xff]
      %v1185 = vld [vmem:[%s1131 + $0xa] sm:$0xff]
      %v1186 = vld [vmem:[%s1131 + $0x1a] sm:$0xff]
      %v1187 = vld [vmem:[%s1131 + $0x22] sm:$0xff]
      %v1188 = vld [vmem:[%s1131 + $0x32] sm:$0xff]
      %v1189 = vld [vmem:[%s1131 + $0x3a] sm:$0xff]
      %v1190 = vld [vmem:[%s1131 + $0x4a] sm:$0xff]
      %v1191 = vld [vmem:[%s1131 + $0x52] sm:$0xff]
      %v1192 = vld [vmem:[%s1131 + $0x62] sm:$0xff]
      %v1193 = vld [vmem:[%s1131 + $0x6a] sm:$0xff]
      %v1194 = vld [vmem:[%s1131 + $0x7a] sm:$0xff]
      %v1195 = vld [vmem:[%s1131 + $0x82] sm:$0xff]
      %v1196 = vld [vmem:[%s1131 + $0x92] sm:$0xff]
      %v1197 = vld [vmem:[%s1131 + $0x9a] sm:$0xff]
      %v1198 = vld [vmem:[%s1131 + $0xaa] sm:$0xff]
      %v1199 = vld [vmem:[%s1131 + $0xb2] sm:$0xff]
      %v1200 = vlaneseq
      %v1201 = vshrl.u32 %v1200, 7
      %v1202 = vsub.s32 1, %v1201
      %v1203 = vrot.slane %v1127, %v1202
      %v1204 = vmul.f32 %v1184, %v1203
      %v1205 = vmul.f32 %v1185, %v1203
      %v1206 = vmul.f32 %v1186, %v1203
      %v1207 = vmul.f32 %v1187, %v1203
      %v1208 = vmul.f32 %v1188, %v1203
      %v1209 = vmul.f32 %v1189, %v1203
      %v1210 = vmul.f32 %v1190, %v1203
      %v1211 = vmul.f32 %v1191, %v1203
      %v1212 = vmul.f32 %v1192, %v1203
      %v1213 = vmul.f32 %v1193, %v1203
      %v1214 = vmul.f32 %v1194, %v1203
      %v1215 = vmul.f32 %v1195, %v1203
      %v1216 = vmul.f32 %v1196, %v1203
      %v1217 = vmul.f32 %v1197, %v1203
      %v1218 = vmul.f32 %v1198, %v1203
      %v1219 = vmul.f32 %v1199, %v1203
      %v1220 = vadd.f32 %v1168, %v1204
      %v1221 = vadd.f32 %v1169, %v1205
      %v1222 = vadd.f32 %v1170, %v1206
      %v1223 = vadd.f32 %v1171, %v1207
      %v1224 = vadd.f32 %v1172, %v1208
      %v1225 = vadd.f32 %v1173, %v1209
      %v1226 = vadd.f32 %v1174, %v1210
      %v1227 = vadd.f32 %v1175, %v1211
      %v1228 = vadd.f32 %v1176, %v1212
      %v1229 = vadd.f32 %v1177, %v1213
      %v1230 = vadd.f32 %v1178, %v1214
      %v1231 = vadd.f32 %v1179, %v1215
      %v1232 = vadd.f32 %v1180, %v1216
      %v1233 = vadd.f32 %v1181, %v1217
      %v1234 = vadd.f32 %v1182, %v1218
      %v1235 = vadd.f32 %v1183, %v1219
      %v1236 = vld [vmem:[%s1131 + $0x3] sm:$0xff]
      %v1237 = vld [vmem:[%s1131 + $0xb] sm:$0xff]
      %v1238 = vld [vmem:[%s1131 + $0x1b] sm:$0xff]
      %v1239 = vld [vmem:[%s1131 + $0x23] sm:$0xff]
      %v1240 = vld [vmem:[%s1131 + $0x33] sm:$0xff]
      %v1241 = vld [vmem:[%s1131 + $0x3b] sm:$0xff]
      %v1242 = vld [vmem:[%s1131 + $0x4b] sm:$0xff]
      %v1243 = vld [vmem:[%s1131 + $0x53] sm:$0xff]
      %v1244 = vld [vmem:[%s1131 + $0x63] sm:$0xff]
      %v1245 = vld [vmem:[%s1131 + $0x6b] sm:$0xff]
      %v1246 = vld [vmem:[%s1131 + $0x7b] sm:$0xff]
      %v1247 = vld [vmem:[%s1131 + $0x83] sm:$0xff]
      %v1248 = vld [vmem:[%s1131 + $0x93] sm:$0xff]
      %v1249 = vld [vmem:[%s1131 + $0x9b] sm:$0xff]
      %v1250 = vld [vmem:[%s1131 + $0xab] sm:$0xff]
      %v1251 = vld [vmem:[%s1131 + $0xb3] sm:$0xff]
      %v1252 = vlaneseq
      %v1253 = vshrl.u32 %v1252, 7
      %v1254 = vsub.s32 2, %v1253
      %v1255 = vrot.slane %v1127, %v1254
      %v1256 = vmul.f32 %v1236, %v1255
      %v1257 = vmul.f32 %v1237, %v1255
      %v1258 = vmul.f32 %v1238, %v1255
      %v1259 = vmul.f32 %v1239, %v1255
      %v1260 = vmul.f32 %v1240, %v1255
      %v1261 = vmul.f32 %v1241, %v1255
      %v1262 = vmul.f32 %v1242, %v1255
      %v1263 = vmul.f32 %v1243, %v1255
      %v1264 = vmul.f32 %v1244, %v1255
      %v1265 = vmul.f32 %v1245, %v1255
      %v1266 = vmul.f32 %v1246, %v1255
      %v1267 = vmul.f32 %v1247, %v1255
      %v1268 = vmul.f32 %v1248, %v1255
      %v1269 = vmul.f32 %v1249, %v1255
      %v1270 = vmul.f32 %v1250, %v1255
      %v1271 = vmul.f32 %v1251, %v1255
      %v1272 = vadd.f32 %v1220, %v1256
      %v1273 = vadd.f32 %v1221, %v1257
      %v1274 = vadd.f32 %v1222, %v1258
      %v1275 = vadd.f32 %v1223, %v1259
      %v1276 = vadd.f32 %v1224, %v1260
      %v1277 = vadd.f32 %v1225, %v1261
      %v1278 = vadd.f32 %v1226, %v1262
      %v1279 = vadd.f32 %v1227, %v1263
      %v1280 = vadd.f32 %v1228, %v1264
      %v1281 = vadd.f32 %v1229, %v1265
      %v1282 = vadd.f32 %v1230, %v1266
      %v1283 = vadd.f32 %v1231, %v1267
      %v1284 = vadd.f32 %v1232, %v1268
      %v1285 = vadd.f32 %v1233, %v1269
      %v1286 = vadd.f32 %v1234, %v1270
      %v1287 = vadd.f32 %v1235, %v1271
      %v1288 = vld [vmem:[%s993 + $0x1] sm:$0xff]
      %v1289 = vld [vmem:[%s993 + $0x9] sm:$0xff]
      %v1290 = vld [vmem:[%s993 + $0x19] sm:$0xff]
      %v1291 = vld [vmem:[%s993 + $0x21] sm:$0xff]
      %v1292 = vld [vmem:[%s993 + $0x31] sm:$0xff]
      %v1293 = vld [vmem:[%s993 + $0x39] sm:$0xff]
      %v1294 = vld [vmem:[%s993 + $0x49] sm:$0xff]
      %v1295 = vld [vmem:[%s993 + $0x51] sm:$0xff]
      %v1296 = vld [vmem:[%s993 + $0x61] sm:$0xff]
      %v1297 = vld [vmem:[%s993 + $0x69] sm:$0xff]
      %v1298 = vld [vmem:[%s993 + $0x79] sm:$0xff]
      %v1299 = vld [vmem:[%s993 + $0x81] sm:$0xff]
      %v1300 = vld [vmem:[%s993 + $0x91] sm:$0xff]
      %v1301 = vld [vmem:[%s993 + $0x99] sm:$0xff]
      %v1302 = vld [vmem:[%s993 + $0xa9] sm:$0xff]
      %v1303 = vld [vmem:[%s993 + $0xb1] sm:$0xff]
      %v1304 = vlaneseq
      %v1305 = vshrl.u32 %v1304, 7
      %v1306 = vsub.s32 0, %v1305
      %v1307 = vrot.slane %v1128, %v1306
      %v1308 = vmul.f32 %v1288, %v1307
      %v1309 = vmul.f32 %v1289, %v1307
      %v1310 = vmul.f32 %v1290, %v1307
      %v1311 = vmul.f32 %v1291, %v1307
      %v1312 = vmul.f32 %v1292, %v1307
      %v1313 = vmul.f32 %v1293, %v1307
      %v1314 = vmul.f32 %v1294, %v1307
      %v1315 = vmul.f32 %v1295, %v1307
      %v1316 = vmul.f32 %v1296, %v1307
      %v1317 = vmul.f32 %v1297, %v1307
      %v1318 = vmul.f32 %v1298, %v1307
      %v1319 = vmul.f32 %v1299, %v1307
      %v1320 = vmul.f32 %v1300, %v1307
      %v1321 = vmul.f32 %v1301, %v1307
      %v1322 = vmul.f32 %v1302, %v1307
      %v1323 = vmul.f32 %v1303, %v1307
      %v1324 = vadd.f32 %v1272, %v1308
      %v1325 = vadd.f32 %v1273, %v1309
      %v1326 = vadd.f32 %v1274, %v1310
      %v1327 = vadd.f32 %v1275, %v1311
      %v1328 = vadd.f32 %v1276, %v1312
      %v1329 = vadd.f32 %v1277, %v1313
      %v1330 = vadd.f32 %v1278, %v1314
      %v1331 = vadd.f32 %v1279, %v1315
      %v1332 = vadd.f32 %v1280, %v1316
      %v1333 = vadd.f32 %v1281, %v1317
      %v1334 = vadd.f32 %v1282, %v1318
      %v1335 = vadd.f32 %v1283, %v1319
      %v1336 = vadd.f32 %v1284, %v1320
      %v1337 = vadd.f32 %v1285, %v1321
      %v1338 = vadd.f32 %v1286, %v1322
      %v1339 = vadd.f32 %v1287, %v1323
      %v1340 = vld [vmem:[%s993 + $0x2] sm:$0xff]
      %v1341 = vld [vmem:[%s993 + $0xa] sm:$0xff]
      %v1342 = vld [vmem:[%s993 + $0x1a] sm:$0xff]
      %v1343 = vld [vmem:[%s993 + $0x22] sm:$0xff]
      %v1344 = vld [vmem:[%s993 + $0x32] sm:$0xff]
      %v1345 = vld [vmem:[%s993 + $0x3a] sm:$0xff]
      %v1346 = vld [vmem:[%s993 + $0x4a] sm:$0xff]
      %v1347 = vld [vmem:[%s993 + $0x52] sm:$0xff]
      %v1348 = vld [vmem:[%s993 + $0x62] sm:$0xff]
      %v1349 = vld [vmem:[%s993 + $0x6a] sm:$0xff]
      %v1350 = vld [vmem:[%s993 + $0x7a] sm:$0xff]
      %v1351 = vld [vmem:[%s993 + $0x82] sm:$0xff]
      %v1352 = vld [vmem:[%s993 + $0x92] sm:$0xff]
      %v1353 = vld [vmem:[%s993 + $0x9a] sm:$0xff]
      %v1354 = vld [vmem:[%s993 + $0xaa] sm:$0xff]
      %v1355 = vld [vmem:[%s993 + $0xb2] sm:$0xff]
      %v1356 = vlaneseq
      %v1357 = vshrl.u32 %v1356, 7
      %v1358 = vsub.s32 1, %v1357
      %v1359 = vrot.slane %v1128, %v1358
      %v1360 = vmul.f32 %v1340, %v1359
      %v1361 = vmul.f32 %v1341, %v1359
      %v1362 = vmul.f32 %v1342, %v1359
      %v1363 = vmul.f32 %v1343, %v1359
      %v1364 = vmul.f32 %v1344, %v1359
      %v1365 = vmul.f32 %v1345, %v1359
      %v1366 = vmul.f32 %v1346, %v1359
      %v1367 = vmul.f32 %v1347, %v1359
      %v1368 = vmul.f32 %v1348, %v1359
      %v1369 = vmul.f32 %v1349, %v1359
      %v1370 = vmul.f32 %v1350, %v1359
      %v1371 = vmul.f32 %v1351, %v1359
      %v1372 = vmul.f32 %v1352, %v1359
      %v1373 = vmul.f32 %v1353, %v1359
      %v1374 = vmul.f32 %v1354, %v1359
      %v1375 = vmul.f32 %v1355, %v1359
      %v1376 = vadd.f32 %v1324, %v1360
      %v1377 = vadd.f32 %v1325, %v1361
      %v1378 = vadd.f32 %v1326, %v1362
      %v1379 = vadd.f32 %v1327, %v1363
      %v1380 = vadd.f32 %v1328, %v1364
      %v1381 = vadd.f32 %v1329, %v1365
      %v1382 = vadd.f32 %v1330, %v1366
      %v1383 = vadd.f32 %v1331, %v1367
      %v1384 = vadd.f32 %v1332, %v1368
      %v1385 = vadd.f32 %v1333, %v1369
      %v1386 = vadd.f32 %v1334, %v1370
      %v1387 = vadd.f32 %v1335, %v1371
      %v1388 = vadd.f32 %v1336, %v1372
      %v1389 = vadd.f32 %v1337, %v1373
      %v1390 = vadd.f32 %v1338, %v1374
      %v1391 = vadd.f32 %v1339, %v1375
      %v1392 = vld [vmem:[%s993 + $0x3] sm:$0xff]
      %v1393 = vld [vmem:[%s993 + $0xb] sm:$0xff]
      %v1394 = vld [vmem:[%s993 + $0x1b] sm:$0xff]
      %v1395 = vld [vmem:[%s993 + $0x23] sm:$0xff]
      %v1396 = vld [vmem:[%s993 + $0x33] sm:$0xff]
      %v1397 = vld [vmem:[%s993 + $0x3b] sm:$0xff]
      %v1398 = vld [vmem:[%s993 + $0x4b] sm:$0xff]
      %v1399 = vld [vmem:[%s993 + $0x53] sm:$0xff]
      %v1400 = vld [vmem:[%s993 + $0x63] sm:$0xff]
      %v1401 = vld [vmem:[%s993 + $0x6b] sm:$0xff]
      %v1402 = vld [vmem:[%s993 + $0x7b] sm:$0xff]
      %v1403 = vld [vmem:[%s993 + $0x83] sm:$0xff]
      %v1404 = vld [vmem:[%s993 + $0x93] sm:$0xff]
      %v1405 = vld [vmem:[%s993 + $0x9b] sm:$0xff]
      %v1406 = vld [vmem:[%s993 + $0xab] sm:$0xff]
      %v1407 = vld [vmem:[%s993 + $0xb3] sm:$0xff]
      %v1408 = vlaneseq
      %v1409 = vshrl.u32 %v1408, 7
      %v1410 = vsub.s32 2, %v1409
      %v1411 = vrot.slane %v1128, %v1410
      %v1412 = vmul.f32 %v1392, %v1411
      %v1413 = vmul.f32 %v1393, %v1411
      %v1414 = vmul.f32 %v1394, %v1411
      %v1415 = vmul.f32 %v1395, %v1411
      %v1416 = vmul.f32 %v1396, %v1411
      %v1417 = vmul.f32 %v1397, %v1411
      %v1418 = vmul.f32 %v1398, %v1411
      %v1419 = vmul.f32 %v1399, %v1411
      %v1420 = vmul.f32 %v1400, %v1411
      %v1421 = vmul.f32 %v1401, %v1411
      %v1422 = vmul.f32 %v1402, %v1411
      %v1423 = vmul.f32 %v1403, %v1411
      %v1424 = vmul.f32 %v1404, %v1411
      %v1425 = vmul.f32 %v1405, %v1411
      %v1426 = vmul.f32 %v1406, %v1411
      %v1427 = vmul.f32 %v1407, %v1411
      %v1428 = vadd.f32 %v1376, %v1412
      %v1429 = vadd.f32 %v1377, %v1413
      %v1430 = vadd.f32 %v1378, %v1414
      %v1431 = vadd.f32 %v1379, %v1415
      %v1432 = vadd.f32 %v1380, %v1416
      %v1433 = vadd.f32 %v1381, %v1417
      %v1434 = vadd.f32 %v1382, %v1418
      %v1435 = vadd.f32 %v1383, %v1419
      %v1436 = vadd.f32 %v1384, %v1420
      %v1437 = vadd.f32 %v1385, %v1421
      %v1438 = vadd.f32 %v1386, %v1422
      %v1439 = vadd.f32 %v1387, %v1423
      %v1440 = vadd.f32 %v1388, %v1424
      %v1441 = vadd.f32 %v1389, %v1425
      %v1442 = vadd.f32 %v1390, %v1426
      %v1443 = vadd.f32 %v1391, %v1427
      %s1444 = scalar_lea.vmem [#allocation2], 72
      %v1445 = vld [vmem:[%s1444 + $0x1] sm:$0xff]
      %v1446 = vld [vmem:[%s1444 + $0x9] sm:$0xff]
      %v1447 = vld [vmem:[%s1444 + $0x19] sm:$0xff]
      %v1448 = vld [vmem:[%s1444 + $0x21] sm:$0xff]
      %v1449 = vld [vmem:[%s1444 + $0x31] sm:$0xff]
      %v1450 = vld [vmem:[%s1444 + $0x39] sm:$0xff]
      %v1451 = vld [vmem:[%s1444 + $0x49] sm:$0xff]
      %v1452 = vld [vmem:[%s1444 + $0x51] sm:$0xff]
      %v1453 = vld [vmem:[%s1444 + $0x61] sm:$0xff]
      %v1454 = vld [vmem:[%s1444 + $0x69] sm:$0xff]
      %v1455 = vld [vmem:[%s1444 + $0x79] sm:$0xff]
      %v1456 = vld [vmem:[%s1444 + $0x81] sm:$0xff]
      %v1457 = vld [vmem:[%s1444 + $0x91] sm:$0xff]
      %v1458 = vld [vmem:[%s1444 + $0x99] sm:$0xff]
      %v1459 = vld [vmem:[%s1444 + $0xa9] sm:$0xff]
      %v1460 = vld [vmem:[%s1444 + $0xb1] sm:$0xff]
      %v1461 = vlaneseq
      %v1462 = vshrl.u32 %v1461, 7
      %v1463 = vsub.s32 0, %v1462
      %v1464 = vrot.slane %v1129, %v1463
      %v1465 = vmul.f32 %v1445, %v1464
      %v1466 = vmul.f32 %v1446, %v1464
      %v1467 = vmul.f32 %v1447, %v1464
      %v1468 = vmul.f32 %v1448, %v1464
      %v1469 = vmul.f32 %v1449, %v1464
      %v1470 = vmul.f32 %v1450, %v1464
      %v1471 = vmul.f32 %v1451, %v1464
      %v1472 = vmul.f32 %v1452, %v1464
      %v1473 = vmul.f32 %v1453, %v1464
      %v1474 = vmul.f32 %v1454, %v1464
      %v1475 = vmul.f32 %v1455, %v1464
      %v1476 = vmul.f32 %v1456, %v1464
      %v1477 = vmul.f32 %v1457, %v1464
      %v1478 = vmul.f32 %v1458, %v1464
      %v1479 = vmul.f32 %v1459, %v1464
      %v1480 = vmul.f32 %v1460, %v1464
      %v1481 = vadd.f32 %v1428, %v1465
      %v1482 = vadd.f32 %v1429, %v1466
      %v1483 = vadd.f32 %v1430, %v1467
      %v1484 = vadd.f32 %v1431, %v1468
      %v1485 = vadd.f32 %v1432, %v1469
      %v1486 = vadd.f32 %v1433, %v1470
      %v1487 = vadd.f32 %v1434, %v1471
      %v1488 = vadd.f32 %v1435, %v1472
      %v1489 = vadd.f32 %v1436, %v1473
      %v1490 = vadd.f32 %v1437, %v1474
      %v1491 = vadd.f32 %v1438, %v1475
      %v1492 = vadd.f32 %v1439, %v1476
      %v1493 = vadd.f32 %v1440, %v1477
      %v1494 = vadd.f32 %v1441, %v1478
      %v1495 = vadd.f32 %v1442, %v1479
      %v1496 = vadd.f32 %v1443, %v1480
      %v1497 = vld [vmem:[%s1444 + $0x2] sm:$0xff]
      %v1498 = vld [vmem:[%s1444 + $0xa] sm:$0xff]
      %v1499 = vld [vmem:[%s1444 + $0x1a] sm:$0xff]
      %v1500 = vld [vmem:[%s1444 + $0x22] sm:$0xff]
      %v1501 = vld [vmem:[%s1444 + $0x32] sm:$0xff]
      %v1502 = vld [vmem:[%s1444 + $0x3a] sm:$0xff]
      %v1503 = vld [vmem:[%s1444 + $0x4a] sm:$0xff]
      %v1504 = vld [vmem:[%s1444 + $0x52] sm:$0xff]
      %v1505 = vld [vmem:[%s1444 + $0x62] sm:$0xff]
      %v1506 = vld [vmem:[%s1444 + $0x6a] sm:$0xff]
      %v1507 = vld [vmem:[%s1444 + $0x7a] sm:$0xff]
      %v1508 = vld [vmem:[%s1444 + $0x82] sm:$0xff]
      %v1509 = vld [vmem:[%s1444 + $0x92] sm:$0xff]
      %v1510 = vld [vmem:[%s1444 + $0x9a] sm:$0xff]
      %v1511 = vld [vmem:[%s1444 + $0xaa] sm:$0xff]
      %v1512 = vld [vmem:[%s1444 + $0xb2] sm:$0xff]
      %v1513 = vlaneseq
      %v1514 = vshrl.u32 %v1513, 7
      %v1515 = vsub.s32 1, %v1514
      %v1516 = vrot.slane %v1129, %v1515
      %v1517 = vmul.f32 %v1497, %v1516
      %v1518 = vmul.f32 %v1498, %v1516
      %v1519 = vmul.f32 %v1499, %v1516
      %v1520 = vmul.f32 %v1500, %v1516
      %v1521 = vmul.f32 %v1501, %v1516
      %v1522 = vmul.f32 %v1502, %v1516
      %v1523 = vmul.f32 %v1503, %v1516
      %v1524 = vmul.f32 %v1504, %v1516
      %v1525 = vmul.f32 %v1505, %v1516
      %v1526 = vmul.f32 %v1506, %v1516
      %v1527 = vmul.f32 %v1507, %v1516
      %v1528 = vmul.f32 %v1508, %v1516
      %v1529 = vmul.f32 %v1509, %v1516
      %v1530 = vmul.f32 %v1510, %v1516
      %v1531 = vmul.f32 %v1511, %v1516
      %v1532 = vmul.f32 %v1512, %v1516
      %v1533 = vadd.f32 %v1481, %v1517
      %v1534 = vadd.f32 %v1482, %v1518
      %v1535 = vadd.f32 %v1483, %v1519
      %v1536 = vadd.f32 %v1484, %v1520
      %v1537 = vadd.f32 %v1485, %v1521
      %v1538 = vadd.f32 %v1486, %v1522
      %v1539 = vadd.f32 %v1487, %v1523
      %v1540 = vadd.f32 %v1488, %v1524
      %v1541 = vadd.f32 %v1489, %v1525
      %v1542 = vadd.f32 %v1490, %v1526
      %v1543 = vadd.f32 %v1491, %v1527
      %v1544 = vadd.f32 %v1492, %v1528
      %v1545 = vadd.f32 %v1493, %v1529
      %v1546 = vadd.f32 %v1494, %v1530
      %v1547 = vadd.f32 %v1495, %v1531
      %v1548 = vadd.f32 %v1496, %v1532
      %v1549 = vld [vmem:[%s1444 + $0x3] sm:$0xff]
      %v1550 = vld [vmem:[%s1444 + $0xb] sm:$0xff]
      %v1551 = vld [vmem:[%s1444 + $0x1b] sm:$0xff]
      %v1552 = vld [vmem:[%s1444 + $0x23] sm:$0xff]
      %v1553 = vld [vmem:[%s1444 + $0x33] sm:$0xff]
      %v1554 = vld [vmem:[%s1444 + $0x3b] sm:$0xff]
      %v1555 = vld [vmem:[%s1444 + $0x4b] sm:$0xff]
      %v1556 = vld [vmem:[%s1444 + $0x53] sm:$0xff]
      %v1557 = vld [vmem:[%s1444 + $0x63] sm:$0xff]
      %v1558 = vld [vmem:[%s1444 + $0x6b] sm:$0xff]
      %v1559 = vld [vmem:[%s1444 + $0x7b] sm:$0xff]
      %v1560 = vld [vmem:[%s1444 + $0x83] sm:$0xff]
      %v1561 = vld [vmem:[%s1444 + $0x93] sm:$0xff]
      %v1562 = vld [vmem:[%s1444 + $0x9b] sm:$0xff]
      %v1563 = vld [vmem:[%s1444 + $0xab] sm:$0xff]
      %v1564 = vld [vmem:[%s1444 + $0xb3] sm:$0xff]
      %v1565 = vlaneseq
      %v1566 = vshrl.u32 %v1565, 7
      %v1567 = vsub.s32 2, %v1566
      %v1568 = vrot.slane %v1129, %v1567
      %v1569 = vmul.f32 %v1549, %v1568
      %v1570 = vmul.f32 %v1550, %v1568
      %v1571 = vmul.f32 %v1551, %v1568
      %v1572 = vmul.f32 %v1552, %v1568
      %v1573 = vmul.f32 %v1553, %v1568
      %v1574 = vmul.f32 %v1554, %v1568
      %v1575 = vmul.f32 %v1555, %v1568
      %v1576 = vmul.f32 %v1556, %v1568
      %v1577 = vmul.f32 %v1557, %v1568
      %v1578 = vmul.f32 %v1558, %v1568
      %v1579 = vmul.f32 %v1559, %v1568
      %v1580 = vmul.f32 %v1560, %v1568
      %v1581 = vmul.f32 %v1561, %v1568
      %v1582 = vmul.f32 %v1562, %v1568
      %v1583 = vmul.f32 %v1563, %v1568
      %v1584 = vmul.f32 %v1564, %v1568
      %v1585 = vadd.f32 %v1533, %v1569
      %v1586 = vadd.f32 %v1534, %v1570
      %v1587 = vadd.f32 %v1535, %v1571
      %v1588 = vadd.f32 %v1536, %v1572
      %v1589 = vadd.f32 %v1537, %v1573
      %v1590 = vadd.f32 %v1538, %v1574
      %v1591 = vadd.f32 %v1539, %v1575
      %v1592 = vadd.f32 %v1540, %v1576
      %v1593 = vadd.f32 %v1541, %v1577
      %v1594 = vadd.f32 %v1542, %v1578
      %v1595 = vadd.f32 %v1543, %v1579
      %v1596 = vadd.f32 %v1544, %v1580
      %v1597 = vadd.f32 %v1545, %v1581
      %v1598 = vadd.f32 %v1546, %v1582
      %v1599 = vadd.f32 %v1547, %v1583
      %v1600 = vadd.f32 %v1548, %v1584
      %v1602 = vlaneseq
      %v1603 = vshrl.u32 %v1602, 7
      %v1604 = vsub.s32 0, %v1603
      %v1605 = vrot.slane %v1130, %v1604
      %v1607 = vadd.f32 %v1585, %v1605
      %v1608 = vadd.f32 %v1586, %v1605
      %v1609 = vadd.f32 %v1587, %v1605
      %v1610 = vadd.f32 %v1588, %v1605
      %v1611 = vadd.f32 %v1589, %v1605
      %v1612 = vadd.f32 %v1590, %v1605
      %v1613 = vadd.f32 %v1591, %v1605
      %v1614 = vadd.f32 %v1592, %v1605
      %v1615 = vadd.f32 %v1593, %v1605
      %v1616 = vadd.f32 %v1594, %v1605
      %v1617 = vadd.f32 %v1595, %v1605
      %v1618 = vadd.f32 %v1596, %v1605
      %v1619 = vadd.f32 %v1597, %v1605
      %v1620 = vadd.f32 %v1598, %v1605
      %v1621 = vadd.f32 %v1599, %v1605
      %v1622 = vadd.f32 %v1600, %v1605
      %s1623 = scalar_lea.vmem %s7, 12
      %v1624 = vld [vmem:[%s1623] sm:$0x7]
      %v1625 = vld [vmem:[%s1623 + $0x4] sm:$0x7]
      %v1626 = vld [vmem:[%s1623 + $0x8] sm:$0x7]
      %s1627 = scalar_lea.vmem %s8, 1
      %v1628 = vld [vmem:[%s1627] sm:$0x1]
      %s1629 = scalar_lea.vmem [#allocation3], 24
      %v1630 = vld [vmem:[%s1629 + $0x1] sm:$0xff]
      %v1631 = vld [vmem:[%s1629 + $0x9] sm:$0xff]
      %v1632 = vld [vmem:[%s1629 + $0x19] sm:$0xff]
      %v1633 = vld [vmem:[%s1629 + $0x21] sm:$0xff]
      %v1634 = vld [vmem:[%s1629 + $0x31] sm:$0xff]
      %v1635 = vld [vmem:[%s1629 + $0x39] sm:$0xff]
      %v1636 = vld [vmem:[%s1629 + $0x49] sm:$0xff]
      %v1637 = vld [vmem:[%s1629 + $0x51] sm:$0xff]
      %v1638 = vld [vmem:[%s1629 + $0x61] sm:$0xff]
      %v1639 = vld [vmem:[%s1629 + $0x69] sm:$0xff]
      %v1640 = vld [vmem:[%s1629 + $0x79] sm:$0xff]
      %v1641 = vld [vmem:[%s1629 + $0x81] sm:$0xff]
      %v1642 = vld [vmem:[%s1629 + $0x91] sm:$0xff]
      %v1643 = vld [vmem:[%s1629 + $0x99] sm:$0xff]
      %v1644 = vld [vmem:[%s1629 + $0xa9] sm:$0xff]
      %v1645 = vld [vmem:[%s1629 + $0xb1] sm:$0xff]
      %v1646 = vlaneseq
      %v1647 = vshrl.u32 %v1646, 7
      %v1648 = vsub.s32 0, %v1647
      %v1649 = vrot.slane %v1624, %v1648
      %v1650 = vmul.f32 %v1630, %v1649
      %v1651 = vmul.f32 %v1631, %v1649
      %v1652 = vmul.f32 %v1632, %v1649
      %v1653 = vmul.f32 %v1633, %v1649
      %v1654 = vmul.f32 %v1634, %v1649
      %v1655 = vmul.f32 %v1635, %v1649
      %v1656 = vmul.f32 %v1636, %v1649
      %v1657 = vmul.f32 %v1637, %v1649
      %v1658 = vmul.f32 %v1638, %v1649
      %v1659 = vmul.f32 %v1639, %v1649
      %v1660 = vmul.f32 %v1640, %v1649
      %v1661 = vmul.f32 %v1641, %v1649
      %v1662 = vmul.f32 %v1642, %v1649
      %v1663 = vmul.f32 %v1643, %v1649
      %v1664 = vmul.f32 %v1644, %v1649
      %v1665 = vmul.f32 %v1645, %v1649
      %v1666 = vadd.f32 %v1650, 0.0
      %v1667 = vadd.f32 %v1651, 0.0
      %v1668 = vadd.f32 %v1652, 0.0
      %v1669 = vadd.f32 %v1653, 0.0
      %v1670 = vadd.f32 %v1654, 0.0
      %v1671 = vadd.f32 %v1655, 0.0
      %v1672 = vadd.f32 %v1656, 0.0
      %v1673 = vadd.f32 %v1657, 0.0
      %v1674 = vadd.f32 %v1658, 0.0
      %v1675 = vadd.f32 %v1659, 0.0
      %v1676 = vadd.f32 %v1660, 0.0
      %v1677 = vadd.f32 %v1661, 0.0
      %v1678 = vadd.f32 %v1662, 0.0
      %v1679 = vadd.f32 %v1663, 0.0
      %v1680 = vadd.f32 %v1664, 0.0
      %v1681 = vadd.f32 %v1665, 0.0
      %v1682 = vld [vmem:[%s1629 + $0x2] sm:$0xff]
      %v1683 = vld [vmem:[%s1629 + $0xa] sm:$0xff]
      %v1684 = vld [vmem:[%s1629 + $0x1a] sm:$0xff]
      %v1685 = vld [vmem:[%s1629 + $0x22] sm:$0xff]
      %v1686 = vld [vmem:[%s1629 + $0x32] sm:$0xff]
      %v1687 = vld [vmem:[%s1629 + $0x3a] sm:$0xff]
      %v1688 = vld [vmem:[%s1629 + $0x4a] sm:$0xff]
      %v1689 = vld [vmem:[%s1629 + $0x52] sm:$0xff]
      %v1690 = vld [vmem:[%s1629 + $0x62] sm:$0xff]
      %v1691 = vld [vmem:[%s1629 + $0x6a] sm:$0xff]
      %v1692 = vld [vmem:[%s1629 + $0x7a] sm:$0xff]
      %v1693 = vld [vmem:[%s1629 + $0x82] sm:$0xff]
      %v1694 = vld [vmem:[%s1629 + $0x92] sm:$0xff]
      %v1695 = vld [vmem:[%s1629 + $0x9a] sm:$0xff]
      %v1696 = vld [vmem:[%s1629 + $0xaa] sm:$0xff]
      %v1697 = vld [vmem:[%s1629 + $0xb2] sm:$0xff]
      %v1698 = vlaneseq
      %v1699 = vshrl.u32 %v1698, 7
      %v1700 = vsub.s32 1, %v1699
      %v1701 = vrot.slane %v1624, %v1700
      %v1702 = vmul.f32 %v1682, %v1701
      %v1703 = vmul.f32 %v1683, %v1701
      %v1704 = vmul.f32 %v1684, %v1701
      %v1705 = vmul.f32 %v1685, %v1701
      %v1706 = vmul.f32 %v1686, %v1701
      %v1707 = vmul.f32 %v1687, %v1701
      %v1708 = vmul.f32 %v1688, %v1701
      %v1709 = vmul.f32 %v1689, %v1701
      %v1710 = vmul.f32 %v1690, %v1701
      %v1711 = vmul.f32 %v1691, %v1701
      %v1712 = vmul.f32 %v1692, %v1701
      %v1713 = vmul.f32 %v1693, %v1701
      %v1714 = vmul.f32 %v1694, %v1701
      %v1715 = vmul.f32 %v1695, %v1701
      %v1716 = vmul.f32 %v1696, %v1701
      %v1717 = vmul.f32 %v1697, %v1701
      %v1718 = vadd.f32 %v1666, %v1702
      %v1719 = vadd.f32 %v1667, %v1703
      %v1720 = vadd.f32 %v1668, %v1704
      %v1721 = vadd.f32 %v1669, %v1705
      %v1722 = vadd.f32 %v1670, %v1706
      %v1723 = vadd.f32 %v1671, %v1707
      %v1724 = vadd.f32 %v1672, %v1708
      %v1725 = vadd.f32 %v1673, %v1709
      %v1726 = vadd.f32 %v1674, %v1710
      %v1727 = vadd.f32 %v1675, %v1711
      %v1728 = vadd.f32 %v1676, %v1712
      %v1729 = vadd.f32 %v1677, %v1713
      %v1730 = vadd.f32 %v1678, %v1714
      %v1731 = vadd.f32 %v1679, %v1715
      %v1732 = vadd.f32 %v1680, %v1716
      %v1733 = vadd.f32 %v1681, %v1717
      %v1734 = vld [vmem:[%s1629 + $0x3] sm:$0xff]
      %v1735 = vld [vmem:[%s1629 + $0xb] sm:$0xff]
      %v1736 = vld [vmem:[%s1629 + $0x1b] sm:$0xff]
      %v1737 = vld [vmem:[%s1629 + $0x23] sm:$0xff]
      %v1738 = vld [vmem:[%s1629 + $0x33] sm:$0xff]
      %v1739 = vld [vmem:[%s1629 + $0x3b] sm:$0xff]
      %v1740 = vld [vmem:[%s1629 + $0x4b] sm:$0xff]
      %v1741 = vld [vmem:[%s1629 + $0x53] sm:$0xff]
      %v1742 = vld [vmem:[%s1629 + $0x63] sm:$0xff]
      %v1743 = vld [vmem:[%s1629 + $0x6b] sm:$0xff]
      %v1744 = vld [vmem:[%s1629 + $0x7b] sm:$0xff]
      %v1745 = vld [vmem:[%s1629 + $0x83] sm:$0xff]
      %v1746 = vld [vmem:[%s1629 + $0x93] sm:$0xff]
      %v1747 = vld [vmem:[%s1629 + $0x9b] sm:$0xff]
      %v1748 = vld [vmem:[%s1629 + $0xab] sm:$0xff]
      %v1749 = vld [vmem:[%s1629 + $0xb3] sm:$0xff]
      %v1750 = vlaneseq
      %v1751 = vshrl.u32 %v1750, 7
      %v1752 = vsub.s32 2, %v1751
      %v1753 = vrot.slane %v1624, %v1752
      %v1754 = vmul.f32 %v1734, %v1753
      %v1755 = vmul.f32 %v1735, %v1753
      %v1756 = vmul.f32 %v1736, %v1753
      %v1757 = vmul.f32 %v1737, %v1753
      %v1758 = vmul.f32 %v1738, %v1753
      %v1759 = vmul.f32 %v1739, %v1753
      %v1760 = vmul.f32 %v1740, %v1753
      %v1761 = vmul.f32 %v1741, %v1753
      %v1762 = vmul.f32 %v1742, %v1753
      %v1763 = vmul.f32 %v1743, %v1753
      %v1764 = vmul.f32 %v1744, %v1753
      %v1765 = vmul.f32 %v1745, %v1753
      %v1766 = vmul.f32 %v1746, %v1753
      %v1767 = vmul.f32 %v1747, %v1753
      %v1768 = vmul.f32 %v1748, %v1753
      %v1769 = vmul.f32 %v1749, %v1753
      %v1770 = vadd.f32 %v1718, %v1754
      %v1771 = vadd.f32 %v1719, %v1755
      %v1772 = vadd.f32 %v1720, %v1756
      %v1773 = vadd.f32 %v1721, %v1757
      %v1774 = vadd.f32 %v1722, %v1758
      %v1775 = vadd.f32 %v1723, %v1759
      %v1776 = vadd.f32 %v1724, %v1760
      %v1777 = vadd.f32 %v1725, %v1761
      %v1778 = vadd.f32 %v1726, %v1762
      %v1779 = vadd.f32 %v1727, %v1763
      %v1780 = vadd.f32 %v1728, %v1764
      %v1781 = vadd.f32 %v1729, %v1765
      %v1782 = vadd.f32 %v1730, %v1766
      %v1783 = vadd.f32 %v1731, %v1767
      %v1784 = vadd.f32 %v1732, %v1768
      %v1785 = vadd.f32 %v1733, %v1769
      %v1786 = vld [vmem:[%s1087 + $0x1] sm:$0xff]
      %v1787 = vld [vmem:[%s1087 + $0x9] sm:$0xff]
      %v1788 = vld [vmem:[%s1087 + $0x19] sm:$0xff]
      %v1789 = vld [vmem:[%s1087 + $0x21] sm:$0xff]
      %v1790 = vld [vmem:[%s1087 + $0x31] sm:$0xff]
      %v1791 = vld [vmem:[%s1087 + $0x39] sm:$0xff]
      %v1792 = vld [vmem:[%s1087 + $0x49] sm:$0xff]
      %v1793 = vld [vmem:[%s1087 + $0x51] sm:$0xff]
      %v1794 = vld [vmem:[%s1087 + $0x61] sm:$0xff]
      %v1795 = vld [vmem:[%s1087 + $0x69] sm:$0xff]
      %v1796 = vld [vmem:[%s1087 + $0x79] sm:$0xff]
      %v1797 = vld [vmem:[%s1087 + $0x81] sm:$0xff]
      %v1798 = vld [vmem:[%s1087 + $0x91] sm:$0xff]
      %v1799 = vld [vmem:[%s1087 + $0x99] sm:$0xff]
      %v1800 = vld [vmem:[%s1087 + $0xa9] sm:$0xff]
      %v1801 = vld [vmem:[%s1087 + $0xb1] sm:$0xff]
      %v1802 = vlaneseq
      %v1803 = vshrl.u32 %v1802, 7
      %v1804 = vsub.s32 0, %v1803
      %v1805 = vrot.slane %v1625, %v1804
      %v1806 = vmul.f32 %v1786, %v1805
      %v1807 = vmul.f32 %v1787, %v1805
      %v1808 = vmul.f32 %v1788, %v1805
      %v1809 = vmul.f32 %v1789, %v1805
      %v1810 = vmul.f32 %v1790, %v1805
      %v1811 = vmul.f32 %v1791, %v1805
      %v1812 = vmul.f32 %v1792, %v1805
      %v1813 = vmul.f32 %v1793, %v1805
      %v1814 = vmul.f32 %v1794, %v1805
      %v1815 = vmul.f32 %v1795, %v1805
      %v1816 = vmul.f32 %v1796, %v1805
      %v1817 = vmul.f32 %v1797, %v1805
      %v1818 = vmul.f32 %v1798, %v1805
      %v1819 = vmul.f32 %v1799, %v1805
      %v1820 = vmul.f32 %v1800, %v1805
      %v1821 = vmul.f32 %v1801, %v1805
      %v1822 = vadd.f32 %v1770, %v1806
      %v1823 = vadd.f32 %v1771, %v1807
      %v1824 = vadd.f32 %v1772, %v1808
      %v1825 = vadd.f32 %v1773, %v1809
      %v1826 = vadd.f32 %v1774, %v1810
      %v1827 = vadd.f32 %v1775, %v1811
      %v1828 = vadd.f32 %v1776, %v1812
      %v1829 = vadd.f32 %v1777, %v1813
      %v1830 = vadd.f32 %v1778, %v1814
      %v1831 = vadd.f32 %v1779, %v1815
      %v1832 = vadd.f32 %v1780, %v1816
      %v1833 = vadd.f32 %v1781, %v1817
      %v1834 = vadd.f32 %v1782, %v1818
      %v1835 = vadd.f32 %v1783, %v1819
      %v1836 = vadd.f32 %v1784, %v1820
      %v1837 = vadd.f32 %v1785, %v1821
      %v1838 = vld [vmem:[%s1087 + $0x2] sm:$0xff]
      %v1839 = vld [vmem:[%s1087 + $0xa] sm:$0xff]
      %v1840 = vld [vmem:[%s1087 + $0x1a] sm:$0xff]
      %v1841 = vld [vmem:[%s1087 + $0x22] sm:$0xff]
      %v1842 = vld [vmem:[%s1087 + $0x32] sm:$0xff]
      %v1843 = vld [vmem:[%s1087 + $0x3a] sm:$0xff]
      %v1844 = vld [vmem:[%s1087 + $0x4a] sm:$0xff]
      %v1845 = vld [vmem:[%s1087 + $0x52] sm:$0xff]
      %v1846 = vld [vmem:[%s1087 + $0x62] sm:$0xff]
      %v1847 = vld [vmem:[%s1087 + $0x6a] sm:$0xff]
      %v1848 = vld [vmem:[%s1087 + $0x7a] sm:$0xff]
      %v1849 = vld [vmem:[%s1087 + $0x82] sm:$0xff]
      %v1850 = vld [vmem:[%s1087 + $0x92] sm:$0xff]
      %v1851 = vld [vmem:[%s1087 + $0x9a] sm:$0xff]
      %v1852 = vld [vmem:[%s1087 + $0xaa] sm:$0xff]
      %v1853 = vld [vmem:[%s1087 + $0xb2] sm:$0xff]
      %v1854 = vlaneseq
      %v1855 = vshrl.u32 %v1854, 7
      %v1856 = vsub.s32 1, %v1855
      %v1857 = vrot.slane %v1625, %v1856
      %v1858 = vmul.f32 %v1838, %v1857
      %v1859 = vmul.f32 %v1839, %v1857
      %v1860 = vmul.f32 %v1840, %v1857
      %v1861 = vmul.f32 %v1841, %v1857
      %v1862 = vmul.f32 %v1842, %v1857
      %v1863 = vmul.f32 %v1843, %v1857
      %v1864 = vmul.f32 %v1844, %v1857
      %v1865 = vmul.f32 %v1845, %v1857
      %v1866 = vmul.f32 %v1846, %v1857
      %v1867 = vmul.f32 %v1847, %v1857
      %v1868 = vmul.f32 %v1848, %v1857
      %v1869 = vmul.f32 %v1849, %v1857
      %v1870 = vmul.f32 %v1850, %v1857
      %v1871 = vmul.f32 %v1851, %v1857
      %v1872 = vmul.f32 %v1852, %v1857
      %v1873 = vmul.f32 %v1853, %v1857
      %v1874 = vadd.f32 %v1822, %v1858
      %v1875 = vadd.f32 %v1823, %v1859
      %v1876 = vadd.f32 %v1824, %v1860
      %v1877 = vadd.f32 %v1825, %v1861
      %v1878 = vadd.f32 %v1826, %v1862
      %v1879 = vadd.f32 %v1827, %v1863
      %v1880 = vadd.f32 %v1828, %v1864
      %v1881 = vadd.f32 %v1829, %v1865
      %v1882 = vadd.f32 %v1830, %v1866
      %v1883 = vadd.f32 %v1831, %v1867
      %v1884 = vadd.f32 %v1832, %v1868
      %v1885 = vadd.f32 %v1833, %v1869
      %v1886 = vadd.f32 %v1834, %v1870
      %v1887 = vadd.f32 %v1835, %v1871
      %v1888 = vadd.f32 %v1836, %v1872
      %v1889 = vadd.f32 %v1837, %v1873
      %v1890 = vld [vmem:[%s1087 + $0x3] sm:$0xff]
      %v1891 = vld [vmem:[%s1087 + $0xb] sm:$0xff]
      %v1892 = vld [vmem:[%s1087 + $0x1b] sm:$0xff]
      %v1893 = vld [vmem:[%s1087 + $0x23] sm:$0xff]
      %v1894 = vld [vmem:[%s1087 + $0x33] sm:$0xff]
      %v1895 = vld [vmem:[%s1087 + $0x3b] sm:$0xff]
      %v1896 = vld [vmem:[%s1087 + $0x4b] sm:$0xff]
      %v1897 = vld [vmem:[%s1087 + $0x53] sm:$0xff]
      %v1898 = vld [vmem:[%s1087 + $0x63] sm:$0xff]
      %v1899 = vld [vmem:[%s1087 + $0x6b] sm:$0xff]
      %v1900 = vld [vmem:[%s1087 + $0x7b] sm:$0xff]
      %v1901 = vld [vmem:[%s1087 + $0x83] sm:$0xff]
      %v1902 = vld [vmem:[%s1087 + $0x93] sm:$0xff]
      %v1903 = vld [vmem:[%s1087 + $0x9b] sm:$0xff]
      %v1904 = vld [vmem:[%s1087 + $0xab] sm:$0xff]
      %v1905 = vld [vmem:[%s1087 + $0xb3] sm:$0xff]
      %v1906 = vlaneseq
      %v1907 = vshrl.u32 %v1906, 7
      %v1908 = vsub.s32 2, %v1907
      %v1909 = vrot.slane %v1625, %v1908
      %v1910 = vmul.f32 %v1890, %v1909
      %v1911 = vmul.f32 %v1891, %v1909
      %v1912 = vmul.f32 %v1892, %v1909
      %v1913 = vmul.f32 %v1893, %v1909
      %v1914 = vmul.f32 %v1894, %v1909
      %v1915 = vmul.f32 %v1895, %v1909
      %v1916 = vmul.f32 %v1896, %v1909
      %v1917 = vmul.f32 %v1897, %v1909
      %v1918 = vmul.f32 %v1898, %v1909
      %v1919 = vmul.f32 %v1899, %v1909
      %v1920 = vmul.f32 %v1900, %v1909
      %v1921 = vmul.f32 %v1901, %v1909
      %v1922 = vmul.f32 %v1902, %v1909
      %v1923 = vmul.f32 %v1903, %v1909
      %v1924 = vmul.f32 %v1904, %v1909
      %v1925 = vmul.f32 %v1905, %v1909
      %v1926 = vadd.f32 %v1874, %v1910
      %v1927 = vadd.f32 %v1875, %v1911
      %v1928 = vadd.f32 %v1876, %v1912
      %v1929 = vadd.f32 %v1877, %v1913
      %v1930 = vadd.f32 %v1878, %v1914
      %v1931 = vadd.f32 %v1879, %v1915
      %v1932 = vadd.f32 %v1880, %v1916
      %v1933 = vadd.f32 %v1881, %v1917
      %v1934 = vadd.f32 %v1882, %v1918
      %v1935 = vadd.f32 %v1883, %v1919
      %v1936 = vadd.f32 %v1884, %v1920
      %v1937 = vadd.f32 %v1885, %v1921
      %v1938 = vadd.f32 %v1886, %v1922
      %v1939 = vadd.f32 %v1887, %v1923
      %v1940 = vadd.f32 %v1888, %v1924
      %v1941 = vadd.f32 %v1889, %v1925
      %s1942 = scalar_lea.vmem [#allocation3], 72
      %v1943 = vld [vmem:[%s1942 + $0x1] sm:$0xff]
      %v1944 = vld [vmem:[%s1942 + $0x9] sm:$0xff]
      %v1945 = vld [vmem:[%s1942 + $0x19] sm:$0xff]
      %v1946 = vld [vmem:[%s1942 + $0x21] sm:$0xff]
      %v1947 = vld [vmem:[%s1942 + $0x31] sm:$0xff]
      %v1948 = vld [vmem:[%s1942 + $0x39] sm:$0xff]
      %v1949 = vld [vmem:[%s1942 + $0x49] sm:$0xff]
      %v1950 = vld [vmem:[%s1942 + $0x51] sm:$0xff]
      %v1951 = vld [vmem:[%s1942 + $0x61] sm:$0xff]
      %v1952 = vld [vmem:[%s1942 + $0x69] sm:$0xff]
      %v1953 = vld [vmem:[%s1942 + $0x79] sm:$0xff]
      %v1954 = vld [vmem:[%s1942 + $0x81] sm:$0xff]
      %v1955 = vld [vmem:[%s1942 + $0x91] sm:$0xff]
      %v1956 = vld [vmem:[%s1942 + $0x99] sm:$0xff]
      %v1957 = vld [vmem:[%s1942 + $0xa9] sm:$0xff]
      %v1958 = vld [vmem:[%s1942 + $0xb1] sm:$0xff]
      %v1959 = vlaneseq
      %v1960 = vshrl.u32 %v1959, 7
      %v1961 = vsub.s32 0, %v1960
      %v1962 = vrot.slane %v1626, %v1961
      %v1963 = vmul.f32 %v1943, %v1962
      %v1964 = vmul.f32 %v1944, %v1962
      %v1965 = vmul.f32 %v1945, %v1962
      %v1966 = vmul.f32 %v1946, %v1962
      %v1967 = vmul.f32 %v1947, %v1962
      %v1968 = vmul.f32 %v1948, %v1962
      %v1969 = vmul.f32 %v1949, %v1962
      %v1970 = vmul.f32 %v1950, %v1962
      %v1971 = vmul.f32 %v1951, %v1962
      %v1972 = vmul.f32 %v1952, %v1962
      %v1973 = vmul.f32 %v1953, %v1962
      %v1974 = vmul.f32 %v1954, %v1962
      %v1975 = vmul.f32 %v1955, %v1962
      %v1976 = vmul.f32 %v1956, %v1962
      %v1977 = vmul.f32 %v1957, %v1962
      %v1978 = vmul.f32 %v1958, %v1962
      %v1979 = vadd.f32 %v1926, %v1963
      %v1980 = vadd.f32 %v1927, %v1964
      %v1981 = vadd.f32 %v1928, %v1965
      %v1982 = vadd.f32 %v1929, %v1966
      %v1983 = vadd.f32 %v1930, %v1967
      %v1984 = vadd.f32 %v1931, %v1968
      %v1985 = vadd.f32 %v1932, %v1969
      %v1986 = vadd.f32 %v1933, %v1970
      %v1987 = vadd.f32 %v1934, %v1971
      %v1988 = vadd.f32 %v1935, %v1972
      %v1989 = vadd.f32 %v1936, %v1973
      %v1990 = vadd.f32 %v1937, %v1974
      %v1991 = vadd.f32 %v1938, %v1975
      %v1992 = vadd.f32 %v1939, %v1976
      %v1993 = vadd.f32 %v1940, %v1977
      %v1994 = vadd.f32 %v1941, %v1978
      %v1995 = vld [vmem:[%s1942 + $0x2] sm:$0xff]
      %v1996 = vld [vmem:[%s1942 + $0xa] sm:$0xff]
      %v1997 = vld [vmem:[%s1942 + $0x1a] sm:$0xff]
      %v1998 = vld [vmem:[%s1942 + $0x22] sm:$0xff]
      %v1999 = vld [vmem:[%s1942 + $0x32] sm:$0xff]
      %v2000 = vld [vmem:[%s1942 + $0x3a] sm:$0xff]
      %v2001 = vld [vmem:[%s1942 + $0x4a] sm:$0xff]
      %v2002 = vld [vmem:[%s1942 + $0x52] sm:$0xff]
      %v2003 = vld [vmem:[%s1942 + $0x62] sm:$0xff]
      %v2004 = vld [vmem:[%s1942 + $0x6a] sm:$0xff]
      %v2005 = vld [vmem:[%s1942 + $0x7a] sm:$0xff]
      %v2006 = vld [vmem:[%s1942 + $0x82] sm:$0xff]
      %v2007 = vld [vmem:[%s1942 + $0x92] sm:$0xff]
      %v2008 = vld [vmem:[%s1942 + $0x9a] sm:$0xff]
      %v2009 = vld [vmem:[%s1942 + $0xaa] sm:$0xff]
      %v2010 = vld [vmem:[%s1942 + $0xb2] sm:$0xff]
      %v2011 = vlaneseq
      %v2012 = vshrl.u32 %v2011, 7
      %v2013 = vsub.s32 1, %v2012
      %v2014 = vrot.slane %v1626, %v2013
      %v2015 = vmul.f32 %v1995, %v2014
      %v2016 = vmul.f32 %v1996, %v2014
      %v2017 = vmul.f32 %v1997, %v2014
      %v2018 = vmul.f32 %v1998, %v2014
      %v2019 = vmul.f32 %v1999, %v2014
      %v2020 = vmul.f32 %v2000, %v2014
      %v2021 = vmul.f32 %v2001, %v2014
      %v2022 = vmul.f32 %v2002, %v2014
      %v2023 = vmul.f32 %v2003, %v2014
      %v2024 = vmul.f32 %v2004, %v2014
      %v2025 = vmul.f32 %v2005, %v2014
      %v2026 = vmul.f32 %v2006, %v2014
      %v2027 = vmul.f32 %v2007, %v2014
      %v2028 = vmul.f32 %v2008, %v2014
      %v2029 = vmul.f32 %v2009, %v2014
      %v2030 = vmul.f32 %v2010, %v2014
      %v2031 = vadd.f32 %v1979, %v2015
      %v2032 = vadd.f32 %v1980, %v2016
      %v2033 = vadd.f32 %v1981, %v2017
      %v2034 = vadd.f32 %v1982, %v2018
      %v2035 = vadd.f32 %v1983, %v2019
      %v2036 = vadd.f32 %v1984, %v2020
      %v2037 = vadd.f32 %v1985, %v2021
      %v2038 = vadd.f32 %v1986, %v2022
      %v2039 = vadd.f32 %v1987, %v2023
      %v2040 = vadd.f32 %v1988, %v2024
      %v2041 = vadd.f32 %v1989, %v2025
      %v2042 = vadd.f32 %v1990, %v2026
      %v2043 = vadd.f32 %v1991, %v2027
      %v2044 = vadd.f32 %v1992, %v2028
      %v2045 = vadd.f32 %v1993, %v2029
      %v2046 = vadd.f32 %v1994, %v2030
      %v2047 = vld [vmem:[%s1942 + $0x3] sm:$0xff]
      %v2048 = vld [vmem:[%s1942 + $0xb] sm:$0xff]
      %v2049 = vld [vmem:[%s1942 + $0x1b] sm:$0xff]
      %v2050 = vld [vmem:[%s1942 + $0x23] sm:$0xff]
      %v2051 = vld [vmem:[%s1942 + $0x33] sm:$0xff]
      %v2052 = vld [vmem:[%s1942 + $0x3b] sm:$0xff]
      %v2053 = vld [vmem:[%s1942 + $0x4b] sm:$0xff]
      %v2054 = vld [vmem:[%s1942 + $0x53] sm:$0xff]
      %v2055 = vld [vmem:[%s1942 + $0x63] sm:$0xff]
      %v2056 = vld [vmem:[%s1942 + $0x6b] sm:$0xff]
      %v2057 = vld [vmem:[%s1942 + $0x7b] sm:$0xff]
      %v2058 = vld [vmem:[%s1942 + $0x83] sm:$0xff]
      %v2059 = vld [vmem:[%s1942 + $0x93] sm:$0xff]
      %v2060 = vld [vmem:[%s1942 + $0x9b] sm:$0xff]
      %v2061 = vld [vmem:[%s1942 + $0xab] sm:$0xff]
      %v2062 = vld [vmem:[%s1942 + $0xb3] sm:$0xff]
      %v2063 = vlaneseq
      %v2064 = vshrl.u32 %v2063, 7
      %v2065 = vsub.s32 2, %v2064
      %v2066 = vrot.slane %v1626, %v2065
      %v2067 = vmul.f32 %v2047, %v2066
      %v2068 = vmul.f32 %v2048, %v2066
      %v2069 = vmul.f32 %v2049, %v2066
      %v2070 = vmul.f32 %v2050, %v2066
      %v2071 = vmul.f32 %v2051, %v2066
      %v2072 = vmul.f32 %v2052, %v2066
      %v2073 = vmul.f32 %v2053, %v2066
      %v2074 = vmul.f32 %v2054, %v2066
      %v2075 = vmul.f32 %v2055, %v2066
      %v2076 = vmul.f32 %v2056, %v2066
      %v2077 = vmul.f32 %v2057, %v2066
      %v2078 = vmul.f32 %v2058, %v2066
      %v2079 = vmul.f32 %v2059, %v2066
      %v2080 = vmul.f32 %v2060, %v2066
      %v2081 = vmul.f32 %v2061, %v2066
      %v2082 = vmul.f32 %v2062, %v2066
      %v2083 = vadd.f32 %v2031, %v2067
      %v2084 = vadd.f32 %v2032, %v2068
      %v2085 = vadd.f32 %v2033, %v2069
      %v2086 = vadd.f32 %v2034, %v2070
      %v2087 = vadd.f32 %v2035, %v2071
      %v2088 = vadd.f32 %v2036, %v2072
      %v2089 = vadd.f32 %v2037, %v2073
      %v2090 = vadd.f32 %v2038, %v2074
      %v2091 = vadd.f32 %v2039, %v2075
      %v2092 = vadd.f32 %v2040, %v2076
      %v2093 = vadd.f32 %v2041, %v2077
      %v2094 = vadd.f32 %v2042, %v2078
      %v2095 = vadd.f32 %v2043, %v2079
      %v2096 = vadd.f32 %v2044, %v2080
      %v2097 = vadd.f32 %v2045, %v2081
      %v2098 = vadd.f32 %v2046, %v2082
      %v2100 = vlaneseq
      %v2101 = vshrl.u32 %v2100, 7
      %v2102 = vsub.s32 0, %v2101
      %v2103 = vrot.slane %v1628, %v2102
      %v2105 = vadd.f32 %v2083, %v2103
      %v2106 = vadd.f32 %v2084, %v2103
      %v2107 = vadd.f32 %v2085, %v2103
      %v2108 = vadd.f32 %v2086, %v2103
      %v2109 = vadd.f32 %v2087, %v2103
      %v2110 = vadd.f32 %v2088, %v2103
      %v2111 = vadd.f32 %v2089, %v2103
      %v2112 = vadd.f32 %v2090, %v2103
      %v2113 = vadd.f32 %v2091, %v2103
      %v2114 = vadd.f32 %v2092, %v2103
      %v2115 = vadd.f32 %v2093, %v2103
      %v2116 = vadd.f32 %v2094, %v2103
      %v2117 = vadd.f32 %v2095, %v2103
      %v2118 = vadd.f32 %v2096, %v2103
      %v2119 = vadd.f32 %v2097, %v2103
      %v2120 = vadd.f32 %v2098, %v2103
      %v2121 = vld [vmem:[%s9] sm:$0xf]
      %s2122 = scalar_lea.vmem %s9, 4
      %v2123 = vld [vmem:[%s2122] sm:$0xf]
      %v2125 = vsel %vm939, %v2105, 0
      %v2128 = vsel %vm939, %v2106, 0
      %v2131 = vsel %vm939, %v2107, 0
      %v2134 = vsel %vm939, %v2108, 0
      %v2137 = vsel %vm939, %v2109, 0
      %v2140 = vsel %vm939, %v2110, 0
      %v2143 = vsel %vm939, %v2111, 0
      %v2146 = vsel %vm939, %v2112, 0
      %v2149 = vsel %vm939, %v2113, 0
      %v2152 = vsel %vm939, %v2114, 0
      %v2155 = vsel %vm939, %v2115, 0
      %v2158 = vsel %vm939, %v2116, 0
      %v2161 = vsel %vm939, %v2117, 0
      %v2164 = vsel %vm939, %v2118, 0
      %v2167 = vsel %vm939, %v2119, 0
      %v2170 = vsel %vm939, %v2120, 0
      %vm2172 = vcmask 1043456
      %v2174 = vsel %vm2172, %v2123, 0
      %2176 = vmatprep.subr.mxu0 0.0
      %2177 = vmatpush1.msra.mxu0 0.0
      %2178 = vmatprep.subr.mxu0 0.0
      %2179 = vmatpush1.msra.mxu0 0.0
      %2180 = vmatprep.subr.mxu0 0.0
      %2181 = vmatpush1.msra.mxu0 0.0
      %2182 = vmatprep.subr.mxu0 0.0
      %2183 = vmatpush1.msra.mxu0 0.0
      %2184 = vmatprep.subr.mxu0 0.0
      %2185 = vmatpush1.msra.mxu0 0.0
      %2186 = vmatprep.subr.mxu0 0.0
      %2187 = vmatpush1.msra.mxu0 0.0
      %2188 = vmatprep.subr.mxu0 0.0
      %2189 = vmatpush1.msra.mxu0 0.0
      %2190 = vmatprep.subr.mxu0 0.0
      %2191 = vmatpush1.msra.mxu0 0.0
      %2192 = vmatprep.subr.mxu0 0.0
      %2193 = vmatpush1.msra.mxu0 0.0
      %2194 = vmatprep.subr.mxu0 0.0
      %2195 = vmatpush1.msra.mxu0 0.0
      %2196 = vmatprep.subr.mxu0 0.0
      %2197 = vmatpush1.msra.mxu0 0.0
      %2198 = vmatprep.subr.mxu0 0.0
      %2199 = vmatpush1.msra.mxu0 0.0
      %2200 = vmatprep.subr.mxu0 0.0
      %2201 = vmatpush1.msra.mxu0 0.0
      %2202 = vmatprep.subr.mxu0 0.0
      %2203 = vmatpush1.msra.mxu0 0.0
      %2204 = vmatprep.subr.mxu0 0.0
      %2205 = vmatpush1.msra.mxu0 0.0
      %2206 = vmatprep.subr.mxu0 0.0
      %2207 = vmatpush1.msra.mxu0 %v2174
      %2208 = vmatprep.subr.mxu0 0.0
      %2209 = vmatpush2.msra.mxu0 0.0
      %2210 = vmatprep.subr.mxu0 0.0
      %2211 = vmatpush2.msra.mxu0 0.0
      %2212 = vmatprep.subr.mxu0 0.0
      %2213 = vmatpush2.msra.mxu0 0.0
      %2214 = vmatprep.subr.mxu0 0.0
      %2215 = vmatpush2.msra.mxu0 0.0
      %2216 = vmatprep.subr.mxu0 0.0
      %2217 = vmatpush2.msra.mxu0 0.0
      %2218 = vmatprep.subr.mxu0 0.0
      %2219 = vmatpush2.msra.mxu0 0.0
      %2220 = vmatprep.subr.mxu0 0.0
      %2221 = vmatpush2.msra.mxu0 0.0
      %2222 = vmatprep.subr.mxu0 0.0
      %2223 = vmatpush2.msra.mxu0 0.0
      %2224 = vmatprep.subr.mxu0 0.0
      %2225 = vmatpush2.msra.mxu0 0.0
      %2226 = vmatprep.subr.mxu0 0.0
      %2227 = vmatpush2.msra.mxu0 0.0
      %2228 = vmatprep.subr.mxu0 0.0
      %2229 = vmatpush2.msra.mxu0 0.0
      %2230 = vmatprep.subr.mxu0 0.0
      %2231 = vmatpush2.msra.mxu0 0.0
      %2232 = vmatprep.subr.mxu0 0.0
      %2233 = vmatpush2.msra.mxu0 0.0
      %2234 = vmatprep.subr.mxu0 0.0
      %2235 = vmatpush2.msra.mxu0 0.0
      %2236 = vmatprep.subr.mxu0 0.0
      %2237 = vmatpush2.msra.mxu0 0.0
      %2238 = vmatprep.subr.mxu0 0.0
      %2239 = vmatpush2.msra.mxu0 0.0
      %2240 = vmatprep.mubr.f32.mxu0 0.0
      %2241 = vmatmul.mubr.f32.gmra.mxu0 %v2125
      %v2242 = vpop.f32.mrf.mxu0
      %v2243 = vadd.f32 0.0, %v2242
      %v2244 = vpop.f32.mrf.mxu0
      %2245 = vmatprep.mubr.f32.mxu0 0.0
      %2246 = vmatmul.mubr.f32.gmra.mxu0 %v2128
      %v2247 = vpop.f32.mrf.mxu0
      %v2248 = vadd.f32 0.0, %v2247
      %v2249 = vpop.f32.mrf.mxu0
      %2250 = vmatprep.mubr.f32.mxu0 0.0
      %2251 = vmatmul.mubr.f32.gmra.mxu0 %v2131
      %v2252 = vpop.f32.mrf.mxu0
      %v2253 = vadd.f32 0.0, %v2252
      %v2254 = vpop.f32.mrf.mxu0
      %2255 = vmatprep.mubr.f32.mxu0 0.0
      %2256 = vmatmul.mubr.f32.gmra.mxu0 %v2134
      %v2257 = vpop.f32.mrf.mxu0
      %v2258 = vadd.f32 0.0, %v2257
      %v2259 = vpop.f32.mrf.mxu0
      %2260 = vmatprep.mubr.f32.mxu0 0.0
      %2261 = vmatmul.mubr.f32.gmra.mxu0 %v2137
      %v2262 = vpop.f32.mrf.mxu0
      %v2263 = vadd.f32 0.0, %v2262
      %v2264 = vpop.f32.mrf.mxu0
      %2265 = vmatprep.mubr.f32.mxu0 0.0
      %2266 = vmatmul.mubr.f32.gmra.mxu0 %v2140
      %v2267 = vpop.f32.mrf.mxu0
      %v2268 = vadd.f32 0.0, %v2267
      %v2269 = vpop.f32.mrf.mxu0
      %2270 = vmatprep.mubr.f32.mxu0 0.0
      %2271 = vmatmul.mubr.f32.gmra.mxu0 %v2143
      %v2272 = vpop.f32.mrf.mxu0
      %v2273 = vadd.f32 0.0, %v2272
      %v2274 = vpop.f32.mrf.mxu0
      %2275 = vmatprep.mubr.f32.mxu0 0.0
      %2276 = vmatmul.mubr.f32.gmra.mxu0 %v2146
      %v2277 = vpop.f32.mrf.mxu0
      %v2278 = vadd.f32 0.0, %v2277
      %v2279 = vpop.f32.mrf.mxu0
      %2280 = vmatprep.mubr.f32.mxu0 0.0
      %2281 = vmatmul.mubr.f32.gmra.mxu0 %v2149
      %v2282 = vpop.f32.mrf.mxu0
      %v2283 = vadd.f32 0.0, %v2282
      %v2284 = vpop.f32.mrf.mxu0
      %2285 = vmatprep.mubr.f32.mxu0 0.0
      %2286 = vmatmul.mubr.f32.gmra.mxu0 %v2152
      %v2287 = vpop.f32.mrf.mxu0
      %v2288 = vadd.f32 0.0, %v2287
      %v2289 = vpop.f32.mrf.mxu0
      %2290 = vmatprep.mubr.f32.mxu0 0.0
      %2291 = vmatmul.mubr.f32.gmra.mxu0 %v2155
      %v2292 = vpop.f32.mrf.mxu0
      %v2293 = vadd.f32 0.0, %v2292
      %v2294 = vpop.f32.mrf.mxu0
      %2295 = vmatprep.mubr.f32.mxu0 0.0
      %2296 = vmatmul.mubr.f32.gmra.mxu0 %v2158
      %v2297 = vpop.f32.mrf.mxu0
      %v2298 = vadd.f32 0.0, %v2297
      %v2299 = vpop.f32.mrf.mxu0
      %2300 = vmatprep.mubr.f32.mxu0 0.0
      %2301 = vmatmul.mubr.f32.gmra.mxu0 %v2161
      %v2302 = vpop.f32.mrf.mxu0
      %v2303 = vadd.f32 0.0, %v2302
      %v2304 = vpop.f32.mrf.mxu0
      %2305 = vmatprep.mubr.f32.mxu0 0.0
      %2306 = vmatmul.mubr.f32.gmra.mxu0 %v2164
      %v2307 = vpop.f32.mrf.mxu0
      %v2308 = vadd.f32 0.0, %v2307
      %v2309 = vpop.f32.mrf.mxu0
      %2310 = vmatprep.mubr.f32.mxu0 0.0
      %2311 = vmatmul.mubr.f32.gmra.mxu0 %v2167
      %v2312 = vpop.f32.mrf.mxu0
      %v2313 = vadd.f32 0.0, %v2312
      %v2314 = vpop.f32.mrf.mxu0
      %2315 = vmatprep.mubr.f32.mxu0 0.0
      %2316 = vmatmul.mubr.f32.gmra.mxu0 %v2170
      %v2317 = vpop.f32.mrf.mxu0
      %v2318 = vadd.f32 0.0, %v2317
      %v2319 = vpop.f32.mrf.mxu0
      %2320 = vdwg.mxu0
      %v2322 = vsel %vm939, %v1607, 0
      %v2325 = vsel %vm939, %v1608, 0
      %v2328 = vsel %vm939, %v1609, 0
      %v2331 = vsel %vm939, %v1610, 0
      %v2334 = vsel %vm939, %v1611, 0
      %v2337 = vsel %vm939, %v1612, 0
      %v2340 = vsel %vm939, %v1613, 0
      %v2343 = vsel %vm939, %v1614, 0
      %v2346 = vsel %vm939, %v1615, 0
      %v2349 = vsel %vm939, %v1616, 0
      %v2352 = vsel %vm939, %v1617, 0
      %v2355 = vsel %vm939, %v1618, 0
      %v2358 = vsel %vm939, %v1619, 0
      %v2361 = vsel %vm939, %v1620, 0
      %v2364 = vsel %vm939, %v1621, 0
      %v2367 = vsel %vm939, %v1622, 0
      %v2370 = vsel %vm2172, %v2121, 0
      %2372 = vmatprep.subr.mxu0 0.0
      %2373 = vmatpush1.msra.mxu0 0.0
      %2374 = vmatprep.subr.mxu0 0.0
      %2375 = vmatpush1.msra.mxu0 0.0
      %2376 = vmatprep.subr.mxu0 0.0
      %2377 = vmatpush1.msra.mxu0 0.0
      %2378 = vmatprep.subr.mxu0 0.0
      %2379 = vmatpush1.msra.mxu0 0.0
      %2380 = vmatprep.subr.mxu0 0.0
      %2381 = vmatpush1.msra.mxu0 0.0
      %2382 = vmatprep.subr.mxu0 0.0
      %2383 = vmatpush1.msra.mxu0 0.0
      %2384 = vmatprep.subr.mxu0 0.0
      %2385 = vmatpush1.msra.mxu0 0.0
      %2386 = vmatprep.subr.mxu0 0.0
      %2387 = vmatpush1.msra.mxu0 0.0
      %2388 = vmatprep.subr.mxu0 0.0
      %2389 = vmatpush1.msra.mxu0 0.0
      %2390 = vmatprep.subr.mxu0 0.0
      %2391 = vmatpush1.msra.mxu0 0.0
      %2392 = vmatprep.subr.mxu0 0.0
      %2393 = vmatpush1.msra.mxu0 0.0
      %2394 = vmatprep.subr.mxu0 0.0
      %2395 = vmatpush1.msra.mxu0 0.0
      %2396 = vmatprep.subr.mxu0 0.0
      %2397 = vmatpush1.msra.mxu0 0.0
      %2398 = vmatprep.subr.mxu0 0.0
      %2399 = vmatpush1.msra.mxu0 0.0
      %2400 = vmatprep.subr.mxu0 0.0
      %2401 = vmatpush1.msra.mxu0 0.0
      %2402 = vmatprep.subr.mxu0 0.0
      %2403 = vmatpush1.msra.mxu0 %v2370
      %2404 = vmatprep.subr.mxu0 0.0
      %2405 = vmatpush2.msra.mxu0 0.0
      %2406 = vmatprep.subr.mxu0 0.0
      %2407 = vmatpush2.msra.mxu0 0.0
      %2408 = vmatprep.subr.mxu0 0.0
      %2409 = vmatpush2.msra.mxu0 0.0
      %2410 = vmatprep.subr.mxu0 0.0
      %2411 = vmatpush2.msra.mxu0 0.0
      %2412 = vmatprep.subr.mxu0 0.0
      %2413 = vmatpush2.msra.mxu0 0.0
      %2414 = vmatprep.subr.mxu0 0.0
      %2415 = vmatpush2.msra.mxu0 0.0
      %2416 = vmatprep.subr.mxu0 0.0
      %2417 = vmatpush2.msra.mxu0 0.0
      %2418 = vmatprep.subr.mxu0 0.0
      %2419 = vmatpush2.msra.mxu0 0.0
      %2420 = vmatprep.subr.mxu0 0.0
      %2421 = vmatpush2.msra.mxu0 0.0
      %2422 = vmatprep.subr.mxu0 0.0
      %2423 = vmatpush2.msra.mxu0 0.0
      %2424 = vmatprep.subr.mxu0 0.0
      %2425 = vmatpush2.msra.mxu0 0.0
      %2426 = vmatprep.subr.mxu0 0.0
      %2427 = vmatpush2.msra.mxu0 0.0
      %2428 = vmatprep.subr.mxu0 0.0
      %2429 = vmatpush2.msra.mxu0 0.0
      %2430 = vmatprep.subr.mxu0 0.0
      %2431 = vmatpush2.msra.mxu0 0.0
      %2432 = vmatprep.subr.mxu0 0.0
      %2433 = vmatpush2.msra.mxu0 0.0
      %2434 = vmatprep.subr.mxu0 0.0
      %2435 = vmatpush2.msra.mxu0 0.0
      %2436 = vmatprep.mubr.f32.mxu0 0.0
      %2437 = vmatmul.mubr.f32.gmra.mxu0 %v2322
      %v2438 = vpop.f32.mrf.mxu0
      %v2439 = vadd.f32 %v2243, %v2438
      %v2440 = vpop.f32.mrf.mxu0
      %2441 = vmatprep.mubr.f32.mxu0 0.0
      %2442 = vmatmul.mubr.f32.gmra.mxu0 %v2325
      %v2443 = vpop.f32.mrf.mxu0
      %v2444 = vadd.f32 %v2248, %v2443
      %v2445 = vpop.f32.mrf.mxu0
      %2446 = vmatprep.mubr.f32.mxu0 0.0
      %2447 = vmatmul.mubr.f32.gmra.mxu0 %v2328
      %v2448 = vpop.f32.mrf.mxu0
      %v2449 = vadd.f32 %v2253, %v2448
      %v2450 = vpop.f32.mrf.mxu0
      %2451 = vmatprep.mubr.f32.mxu0 0.0
      %2452 = vmatmul.mubr.f32.gmra.mxu0 %v2331
      %v2453 = vpop.f32.mrf.mxu0
      %v2454 = vadd.f32 %v2258, %v2453
      %v2455 = vpop.f32.mrf.mxu0
      %2456 = vmatprep.mubr.f32.mxu0 0.0
      %2457 = vmatmul.mubr.f32.gmra.mxu0 %v2334
      %v2458 = vpop.f32.mrf.mxu0
      %v2459 = vadd.f32 %v2263, %v2458
      %v2460 = vpop.f32.mrf.mxu0
      %2461 = vmatprep.mubr.f32.mxu0 0.0
      %2462 = vmatmul.mubr.f32.gmra.mxu0 %v2337
      %v2463 = vpop.f32.mrf.mxu0
      %v2464 = vadd.f32 %v2268, %v2463
      %v2465 = vpop.f32.mrf.mxu0
      %2466 = vmatprep.mubr.f32.mxu0 0.0
      %2467 = vmatmul.mubr.f32.gmra.mxu0 %v2340
      %v2468 = vpop.f32.mrf.mxu0
      %v2469 = vadd.f32 %v2273, %v2468
      %v2470 = vpop.f32.mrf.mxu0
      %2471 = vmatprep.mubr.f32.mxu0 0.0
      %2472 = vmatmul.mubr.f32.gmra.mxu0 %v2343
      %v2473 = vpop.f32.mrf.mxu0
      %v2474 = vadd.f32 %v2278, %v2473
      %v2475 = vpop.f32.mrf.mxu0
      %2476 = vmatprep.mubr.f32.mxu0 0.0
      %2477 = vmatmul.mubr.f32.gmra.mxu0 %v2346
      %v2478 = vpop.f32.mrf.mxu0
      %v2479 = vadd.f32 %v2283, %v2478
      %v2480 = vpop.f32.mrf.mxu0
      %2481 = vmatprep.mubr.f32.mxu0 0.0
      %2482 = vmatmul.mubr.f32.gmra.mxu0 %v2349
      %v2483 = vpop.f32.mrf.mxu0
      %v2484 = vadd.f32 %v2288, %v2483
      %v2485 = vpop.f32.mrf.mxu0
      %2486 = vmatprep.mubr.f32.mxu0 0.0
      %2487 = vmatmul.mubr.f32.gmra.mxu0 %v2352
      %v2488 = vpop.f32.mrf.mxu0
      %v2489 = vadd.f32 %v2293, %v2488
      %v2490 = vpop.f32.mrf.mxu0
      %2491 = vmatprep.mubr.f32.mxu0 0.0
      %2492 = vmatmul.mubr.f32.gmra.mxu0 %v2355
      %v2493 = vpop.f32.mrf.mxu0
      %v2494 = vadd.f32 %v2298, %v2493
      %v2495 = vpop.f32.mrf.mxu0
      %2496 = vmatprep.mubr.f32.mxu0 0.0
      %2497 = vmatmul.mubr.f32.gmra.mxu0 %v2358
      %v2498 = vpop.f32.mrf.mxu0
      %v2499 = vadd.f32 %v2303, %v2498
      %v2500 = vpop.f32.mrf.mxu0
      %2501 = vmatprep.mubr.f32.mxu0 0.0
      %2502 = vmatmul.mubr.f32.gmra.mxu0 %v2361
      %v2503 = vpop.f32.mrf.mxu0
      %v2504 = vadd.f32 %v2308, %v2503
      %v2505 = vpop.f32.mrf.mxu0
      %2506 = vmatprep.mubr.f32.mxu0 0.0
      %2507 = vmatmul.mubr.f32.gmra.mxu0 %v2364
      %v2508 = vpop.f32.mrf.mxu0
      %v2509 = vadd.f32 %v2313, %v2508
      %v2510 = vpop.f32.mrf.mxu0
      %2511 = vmatprep.mubr.f32.mxu0 0.0
      %2512 = vmatmul.mubr.f32.gmra.mxu0 %v2367
      %v2513 = vpop.f32.mrf.mxu0
      %v2514 = vadd.f32 %v2318, %v2513
      %v2515 = vpop.f32.mrf.mxu0
      %2516 = vdwg.mxu0
      %v2517 = vld [vmem:[%s10] sm:$0x1]
      %v2519 = vlaneseq
      %v2520 = vshrl.u32 %v2519, 7
      %v2521 = vsub.s32 0, %v2520
      %v2522 = vrot.slane %v2517, %v2521
      %v2524 = vadd.f32 %v2439, %v2522
      %v2525 = vadd.f32 %v2444, %v2522
      %v2526 = vadd.f32 %v2449, %v2522
      %v2527 = vadd.f32 %v2454, %v2522
      %v2528 = vadd.f32 %v2459, %v2522
      %v2529 = vadd.f32 %v2464, %v2522
      %v2530 = vadd.f32 %v2469, %v2522
      %v2531 = vadd.f32 %v2474, %v2522
      %v2532 = vadd.f32 %v2479, %v2522
      %v2533 = vadd.f32 %v2484, %v2522
      %v2534 = vadd.f32 %v2489, %v2522
      %v2535 = vadd.f32 %v2494, %v2522
      %v2536 = vadd.f32 %v2499, %v2522
      %v2537 = vadd.f32 %v2504, %v2522
      %v2538 = vadd.f32 %v2509, %v2522
      %v2539 = vadd.f32 %v2514, %v2522
      %v2540 = vmax.f32 %v2524, 0.0
      %v2541 = vmax.f32 %v2525, 0.0
      %v2542 = vmax.f32 %v2526, 0.0
      %v2543 = vmax.f32 %v2527, 0.0
      %v2544 = vmax.f32 %v2528, 0.0
      %v2545 = vmax.f32 %v2529, 0.0
      %v2546 = vmax.f32 %v2530, 0.0
      %v2547 = vmax.f32 %v2531, 0.0
      %v2548 = vmax.f32 %v2532, 0.0
      %v2549 = vmax.f32 %v2533, 0.0
      %v2550 = vmax.f32 %v2534, 0.0
      %v2551 = vmax.f32 %v2535, 0.0
      %v2552 = vmax.f32 %v2536, 0.0
      %v2553 = vmax.f32 %v2537, 0.0
      %v2554 = vmax.f32 %v2538, 0.0
      %v2555 = vmax.f32 %v2539, 0.0
      %v2556 = vld [vmem:[%s11] sm:$0x1f]
      %v2557 = vld [vmem:[%s11 + $0x8] sm:$0x1f]
      %v2558 = vld [vmem:[%s11 + $0x10] sm:$0x1f]
      %v2559 = vld [vmem:[%s11 + $0x18] sm:$0x1f]
      %v2560 = vld [vmem:[%s11 + $0x20] sm:$0x1f]
      %v2561 = vld [vmem:[%s12] sm:$0x1]
      %v2562 = vld [vmem:[#allocation2] sm:$0xff]
      %v2563 = vld [vmem:[#allocation2 + $0x8] sm:$0xff]
      %v2564 = vld [vmem:[#allocation2 + $0x18] sm:$0xff]
      %v2565 = vld [vmem:[#allocation2 + $0x20] sm:$0xff]
      %v2566 = vld [vmem:[#allocation2 + $0x30] sm:$0xff]
      %v2567 = vld [vmem:[#allocation2 + $0x38] sm:$0xff]
      %v2568 = vld [vmem:[#allocation2 + $0x48] sm:$0xff]
      %v2569 = vld [vmem:[#allocation2 + $0x50] sm:$0xff]
      %v2570 = vld [vmem:[#allocation2 + $0x60] sm:$0xff]
      %v2571 = vld [vmem:[#allocation2 + $0x68] sm:$0xff]
      %v2572 = vld [vmem:[#allocation2 + $0x78] sm:$0xff]
      %v2573 = vld [vmem:[#allocation2 + $0x80] sm:$0xff]
      %v2574 = vld [vmem:[#allocation2 + $0x90] sm:$0xff]
      %v2575 = vld [vmem:[#allocation2 + $0x98] sm:$0xff]
      %v2576 = vld [vmem:[#allocation2 + $0xa8] sm:$0xff]
      %v2577 = vld [vmem:[#allocation2 + $0xb0] sm:$0xff]
      %v2578 = vlaneseq
      %v2579 = vshrl.u32 %v2578, 7
      %v2580 = vsub.s32 0, %v2579
      %v2581 = vrot.slane %v2556, %v2580
      %v2582 = vmul.f32 %v2562, %v2581
      %v2583 = vmul.f32 %v2563, %v2581
      %v2584 = vmul.f32 %v2564, %v2581
      %v2585 = vmul.f32 %v2565, %v2581
      %v2586 = vmul.f32 %v2566, %v2581
      %v2587 = vmul.f32 %v2567, %v2581
      %v2588 = vmul.f32 %v2568, %v2581
      %v2589 = vmul.f32 %v2569, %v2581
      %v2590 = vmul.f32 %v2570, %v2581
      %v2591 = vmul.f32 %v2571, %v2581
      %v2592 = vmul.f32 %v2572, %v2581
      %v2593 = vmul.f32 %v2573, %v2581
      %v2594 = vmul.f32 %v2574, %v2581
      %v2595 = vmul.f32 %v2575, %v2581
      %v2596 = vmul.f32 %v2576, %v2581
      %v2597 = vmul.f32 %v2577, %v2581
      %v2598 = vadd.f32 %v2582, 0.0
      %v2599 = vadd.f32 %v2583, 0.0
      %v2600 = vadd.f32 %v2584, 0.0
      %v2601 = vadd.f32 %v2585, 0.0
      %v2602 = vadd.f32 %v2586, 0.0
      %v2603 = vadd.f32 %v2587, 0.0
      %v2604 = vadd.f32 %v2588, 0.0
      %v2605 = vadd.f32 %v2589, 0.0
      %v2606 = vadd.f32 %v2590, 0.0
      %v2607 = vadd.f32 %v2591, 0.0
      %v2608 = vadd.f32 %v2592, 0.0
      %v2609 = vadd.f32 %v2593, 0.0
      %v2610 = vadd.f32 %v2594, 0.0
      %v2611 = vadd.f32 %v2595, 0.0
      %v2612 = vadd.f32 %v2596, 0.0
      %v2613 = vadd.f32 %v2597, 0.0
      %v2614 = vld [vmem:[#allocation2 + $0x1] sm:$0xff]
      %v2615 = vld [vmem:[#allocation2 + $0x9] sm:$0xff]
      %v2616 = vld [vmem:[#allocation2 + $0x19] sm:$0xff]
      %v2617 = vld [vmem:[#allocation2 + $0x21] sm:$0xff]
      %v2618 = vld [vmem:[#allocation2 + $0x31] sm:$0xff]
      %v2619 = vld [vmem:[#allocation2 + $0x39] sm:$0xff]
      %v2620 = vld [vmem:[#allocation2 + $0x49] sm:$0xff]
      %v2621 = vld [vmem:[#allocation2 + $0x51] sm:$0xff]
      %v2622 = vld [vmem:[#allocation2 + $0x61] sm:$0xff]
      %v2623 = vld [vmem:[#allocation2 + $0x69] sm:$0xff]
      %v2624 = vld [vmem:[#allocation2 + $0x79] sm:$0xff]
      %v2625 = vld [vmem:[#allocation2 + $0x81] sm:$0xff]
      %v2626 = vld [vmem:[#allocation2 + $0x91] sm:$0xff]
      %v2627 = vld [vmem:[#allocation2 + $0x99] sm:$0xff]
      %v2628 = vld [vmem:[#allocation2 + $0xa9] sm:$0xff]
      %v2629 = vld [vmem:[#allocation2 + $0xb1] sm:$0xff]
      %v2630 = vlaneseq
      %v2631 = vshrl.u32 %v2630, 7
      %v2632 = vsub.s32 1, %v2631
      %v2633 = vrot.slane %v2556, %v2632
      %v2634 = vmul.f32 %v2614, %v2633
      %v2635 = vmul.f32 %v2615, %v2633
      %v2636 = vmul.f32 %v2616, %v2633
      %v2637 = vmul.f32 %v2617, %v2633
      %v2638 = vmul.f32 %v2618, %v2633
      %v2639 = vmul.f32 %v2619, %v2633
      %v2640 = vmul.f32 %v2620, %v2633
      %v2641 = vmul.f32 %v2621, %v2633
      %v2642 = vmul.f32 %v2622, %v2633
      %v2643 = vmul.f32 %v2623, %v2633
      %v2644 = vmul.f32 %v2624, %v2633
      %v2645 = vmul.f32 %v2625, %v2633
      %v2646 = vmul.f32 %v2626, %v2633
      %v2647 = vmul.f32 %v2627, %v2633
      %v2648 = vmul.f32 %v2628, %v2633
      %v2649 = vmul.f32 %v2629, %v2633
      %v2650 = vadd.f32 %v2598, %v2634
      %v2651 = vadd.f32 %v2599, %v2635
      %v2652 = vadd.f32 %v2600, %v2636
      %v2653 = vadd.f32 %v2601, %v2637
      %v2654 = vadd.f32 %v2602, %v2638
      %v2655 = vadd.f32 %v2603, %v2639
      %v2656 = vadd.f32 %v2604, %v2640
      %v2657 = vadd.f32 %v2605, %v2641
      %v2658 = vadd.f32 %v2606, %v2642
      %v2659 = vadd.f32 %v2607, %v2643
      %v2660 = vadd.f32 %v2608, %v2644
      %v2661 = vadd.f32 %v2609, %v2645
      %v2662 = vadd.f32 %v2610, %v2646
      %v2663 = vadd.f32 %v2611, %v2647
      %v2664 = vadd.f32 %v2612, %v2648
      %v2665 = vadd.f32 %v2613, %v2649
      %v2666 = vld [vmem:[#allocation2 + $0x2] sm:$0xff]
      %v2667 = vld [vmem:[#allocation2 + $0xa] sm:$0xff]
      %v2668 = vld [vmem:[#allocation2 + $0x1a] sm:$0xff]
      %v2669 = vld [vmem:[#allocation2 + $0x22] sm:$0xff]
      %v2670 = vld [vmem:[#allocation2 + $0x32] sm:$0xff]
      %v2671 = vld [vmem:[#allocation2 + $0x3a] sm:$0xff]
      %v2672 = vld [vmem:[#allocation2 + $0x4a] sm:$0xff]
      %v2673 = vld [vmem:[#allocation2 + $0x52] sm:$0xff]
      %v2674 = vld [vmem:[#allocation2 + $0x62] sm:$0xff]
      %v2675 = vld [vmem:[#allocation2 + $0x6a] sm:$0xff]
      %v2676 = vld [vmem:[#allocation2 + $0x7a] sm:$0xff]
      %v2677 = vld [vmem:[#allocation2 + $0x82] sm:$0xff]
      %v2678 = vld [vmem:[#allocation2 + $0x92] sm:$0xff]
      %v2679 = vld [vmem:[#allocation2 + $0x9a] sm:$0xff]
      %v2680 = vld [vmem:[#allocation2 + $0xaa] sm:$0xff]
      %v2681 = vld [vmem:[#allocation2 + $0xb2] sm:$0xff]
      %v2682 = vlaneseq
      %v2683 = vshrl.u32 %v2682, 7
      %v2684 = vsub.s32 2, %v2683
      %v2685 = vrot.slane %v2556, %v2684
      %v2686 = vmul.f32 %v2666, %v2685
      %v2687 = vmul.f32 %v2667, %v2685
      %v2688 = vmul.f32 %v2668, %v2685
      %v2689 = vmul.f32 %v2669, %v2685
      %v2690 = vmul.f32 %v2670, %v2685
      %v2691 = vmul.f32 %v2671, %v2685
      %v2692 = vmul.f32 %v2672, %v2685
      %v2693 = vmul.f32 %v2673, %v2685
      %v2694 = vmul.f32 %v2674, %v2685
      %v2695 = vmul.f32 %v2675, %v2685
      %v2696 = vmul.f32 %v2676, %v2685
      %v2697 = vmul.f32 %v2677, %v2685
      %v2698 = vmul.f32 %v2678, %v2685
      %v2699 = vmul.f32 %v2679, %v2685
      %v2700 = vmul.f32 %v2680, %v2685
      %v2701 = vmul.f32 %v2681, %v2685
      %v2702 = vadd.f32 %v2650, %v2686
      %v2703 = vadd.f32 %v2651, %v2687
      %v2704 = vadd.f32 %v2652, %v2688
      %v2705 = vadd.f32 %v2653, %v2689
      %v2706 = vadd.f32 %v2654, %v2690
      %v2707 = vadd.f32 %v2655, %v2691
      %v2708 = vadd.f32 %v2656, %v2692
      %v2709 = vadd.f32 %v2657, %v2693
      %v2710 = vadd.f32 %v2658, %v2694
      %v2711 = vadd.f32 %v2659, %v2695
      %v2712 = vadd.f32 %v2660, %v2696
      %v2713 = vadd.f32 %v2661, %v2697
      %v2714 = vadd.f32 %v2662, %v2698
      %v2715 = vadd.f32 %v2663, %v2699
      %v2716 = vadd.f32 %v2664, %v2700
      %v2717 = vadd.f32 %v2665, %v2701
      %v2718 = vld [vmem:[#allocation2 + $0x3] sm:$0xff]
      %v2719 = vld [vmem:[#allocation2 + $0xb] sm:$0xff]
      %v2720 = vld [vmem:[#allocation2 + $0x1b] sm:$0xff]
      %v2721 = vld [vmem:[#allocation2 + $0x23] sm:$0xff]
      %v2722 = vld [vmem:[#allocation2 + $0x33] sm:$0xff]
      %v2723 = vld [vmem:[#allocation2 + $0x3b] sm:$0xff]
      %v2724 = vld [vmem:[#allocation2 + $0x4b] sm:$0xff]
      %v2725 = vld [vmem:[#allocation2 + $0x53] sm:$0xff]
      %v2726 = vld [vmem:[#allocation2 + $0x63] sm:$0xff]
      %v2727 = vld [vmem:[#allocation2 + $0x6b] sm:$0xff]
      %v2728 = vld [vmem:[#allocation2 + $0x7b] sm:$0xff]
      %v2729 = vld [vmem:[#allocation2 + $0x83] sm:$0xff]
      %v2730 = vld [vmem:[#allocation2 + $0x93] sm:$0xff]
      %v2731 = vld [vmem:[#allocation2 + $0x9b] sm:$0xff]
      %v2732 = vld [vmem:[#allocation2 + $0xab] sm:$0xff]
      %v2733 = vld [vmem:[#allocation2 + $0xb3] sm:$0xff]
      %v2734 = vlaneseq
      %v2735 = vshrl.u32 %v2734, 7
      %v2736 = vsub.s32 3, %v2735
      %v2737 = vrot.slane %v2556, %v2736
      %v2738 = vmul.f32 %v2718, %v2737
      %v2739 = vmul.f32 %v2719, %v2737
      %v2740 = vmul.f32 %v2720, %v2737
      %v2741 = vmul.f32 %v2721, %v2737
      %v2742 = vmul.f32 %v2722, %v2737
      %v2743 = vmul.f32 %v2723, %v2737
      %v2744 = vmul.f32 %v2724, %v2737
      %v2745 = vmul.f32 %v2725, %v2737
      %v2746 = vmul.f32 %v2726, %v2737
      %v2747 = vmul.f32 %v2727, %v2737
      %v2748 = vmul.f32 %v2728, %v2737
      %v2749 = vmul.f32 %v2729, %v2737
      %v2750 = vmul.f32 %v2730, %v2737
      %v2751 = vmul.f32 %v2731, %v2737
      %v2752 = vmul.f32 %v2732, %v2737
      %v2753 = vmul.f32 %v2733, %v2737
      %v2754 = vadd.f32 %v2702, %v2738
      %v2755 = vadd.f32 %v2703, %v2739
      %v2756 = vadd.f32 %v2704, %v2740
      %v2757 = vadd.f32 %v2705, %v2741
      %v2758 = vadd.f32 %v2706, %v2742
      %v2759 = vadd.f32 %v2707, %v2743
      %v2760 = vadd.f32 %v2708, %v2744
      %v2761 = vadd.f32 %v2709, %v2745
      %v2762 = vadd.f32 %v2710, %v2746
      %v2763 = vadd.f32 %v2711, %v2747
      %v2764 = vadd.f32 %v2712, %v2748
      %v2765 = vadd.f32 %v2713, %v2749
      %v2766 = vadd.f32 %v2714, %v2750
      %v2767 = vadd.f32 %v2715, %v2751
      %v2768 = vadd.f32 %v2716, %v2752
      %v2769 = vadd.f32 %v2717, %v2753
      %v2770 = vld [vmem:[#allocation2 + $0x4] sm:$0xff]
      %v2771 = vld [vmem:[#allocation2 + $0xc] sm:$0xff]
      %v2772 = vld [vmem:[#allocation2 + $0x1c] sm:$0xff]
      %v2773 = vld [vmem:[#allocation2 + $0x24] sm:$0xff]
      %v2774 = vld [vmem:[#allocation2 + $0x34] sm:$0xff]
      %v2775 = vld [vmem:[#allocation2 + $0x3c] sm:$0xff]
      %v2776 = vld [vmem:[#allocation2 + $0x4c] sm:$0xff]
      %v2777 = vld [vmem:[#allocation2 + $0x54] sm:$0xff]
      %v2778 = vld [vmem:[#allocation2 + $0x64] sm:$0xff]
      %v2779 = vld [vmem:[#allocation2 + $0x6c] sm:$0xff]
      %v2780 = vld [vmem:[#allocation2 + $0x7c] sm:$0xff]
      %v2781 = vld [vmem:[#allocation2 + $0x84] sm:$0xff]
      %v2782 = vld [vmem:[#allocation2 + $0x94] sm:$0xff]
      %v2783 = vld [vmem:[#allocation2 + $0x9c] sm:$0xff]
      %v2784 = vld [vmem:[#allocation2 + $0xac] sm:$0xff]
      %v2785 = vld [vmem:[#allocation2 + $0xb4] sm:$0xff]
      %v2786 = vlaneseq
      %v2787 = vshrl.u32 %v2786, 7
      %v2788 = vsub.s32 4, %v2787
      %v2789 = vrot.slane %v2556, %v2788
      %v2790 = vmul.f32 %v2770, %v2789
      %v2791 = vmul.f32 %v2771, %v2789
      %v2792 = vmul.f32 %v2772, %v2789
      %v2793 = vmul.f32 %v2773, %v2789
      %v2794 = vmul.f32 %v2774, %v2789
      %v2795 = vmul.f32 %v2775, %v2789
      %v2796 = vmul.f32 %v2776, %v2789
      %v2797 = vmul.f32 %v2777, %v2789
      %v2798 = vmul.f32 %v2778, %v2789
      %v2799 = vmul.f32 %v2779, %v2789
      %v2800 = vmul.f32 %v2780, %v2789
      %v2801 = vmul.f32 %v2781, %v2789
      %v2802 = vmul.f32 %v2782, %v2789
      %v2803 = vmul.f32 %v2783, %v2789
      %v2804 = vmul.f32 %v2784, %v2789
      %v2805 = vmul.f32 %v2785, %v2789
      %v2806 = vadd.f32 %v2754, %v2790
      %v2807 = vadd.f32 %v2755, %v2791
      %v2808 = vadd.f32 %v2756, %v2792
      %v2809 = vadd.f32 %v2757, %v2793
      %v2810 = vadd.f32 %v2758, %v2794
      %v2811 = vadd.f32 %v2759, %v2795
      %v2812 = vadd.f32 %v2760, %v2796
      %v2813 = vadd.f32 %v2761, %v2797
      %v2814 = vadd.f32 %v2762, %v2798
      %v2815 = vadd.f32 %v2763, %v2799
      %v2816 = vadd.f32 %v2764, %v2800
      %v2817 = vadd.f32 %v2765, %v2801
      %v2818 = vadd.f32 %v2766, %v2802
      %v2819 = vadd.f32 %v2767, %v2803
      %v2820 = vadd.f32 %v2768, %v2804
      %v2821 = vadd.f32 %v2769, %v2805
      %v2822 = vld [vmem:[%s1131] sm:$0xff]
      %v2823 = vld [vmem:[%s1131 + $0x8] sm:$0xff]
      %v2824 = vld [vmem:[%s1131 + $0x18] sm:$0xff]
      %v2825 = vld [vmem:[%s1131 + $0x20] sm:$0xff]
      %v2826 = vld [vmem:[%s1131 + $0x30] sm:$0xff]
      %v2827 = vld [vmem:[%s1131 + $0x38] sm:$0xff]
      %v2828 = vld [vmem:[%s1131 + $0x48] sm:$0xff]
      %v2829 = vld [vmem:[%s1131 + $0x50] sm:$0xff]
      %v2830 = vld [vmem:[%s1131 + $0x60] sm:$0xff]
      %v2831 = vld [vmem:[%s1131 + $0x68] sm:$0xff]
      %v2832 = vld [vmem:[%s1131 + $0x78] sm:$0xff]
      %v2833 = vld [vmem:[%s1131 + $0x80] sm:$0xff]
      %v2834 = vld [vmem:[%s1131 + $0x90] sm:$0xff]
      %v2835 = vld [vmem:[%s1131 + $0x98] sm:$0xff]
      %v2836 = vld [vmem:[%s1131 + $0xa8] sm:$0xff]
      %v2837 = vld [vmem:[%s1131 + $0xb0] sm:$0xff]
      %v2838 = vlaneseq
      %v2839 = vshrl.u32 %v2838, 7
      %v2840 = vsub.s32 0, %v2839
      %v2841 = vrot.slane %v2557, %v2840
      %v2842 = vmul.f32 %v2822, %v2841
      %v2843 = vmul.f32 %v2823, %v2841
      %v2844 = vmul.f32 %v2824, %v2841
      %v2845 = vmul.f32 %v2825, %v2841
      %v2846 = vmul.f32 %v2826, %v2841
      %v2847 = vmul.f32 %v2827, %v2841
      %v2848 = vmul.f32 %v2828, %v2841
      %v2849 = vmul.f32 %v2829, %v2841
      %v2850 = vmul.f32 %v2830, %v2841
      %v2851 = vmul.f32 %v2831, %v2841
      %v2852 = vmul.f32 %v2832, %v2841
      %v2853 = vmul.f32 %v2833, %v2841
      %v2854 = vmul.f32 %v2834, %v2841
      %v2855 = vmul.f32 %v2835, %v2841
      %v2856 = vmul.f32 %v2836, %v2841
      %v2857 = vmul.f32 %v2837, %v2841
      %v2858 = vadd.f32 %v2806, %v2842
      %v2859 = vadd.f32 %v2807, %v2843
      %v2860 = vadd.f32 %v2808, %v2844
      %v2861 = vadd.f32 %v2809, %v2845
      %v2862 = vadd.f32 %v2810, %v2846
      %v2863 = vadd.f32 %v2811, %v2847
      %v2864 = vadd.f32 %v2812, %v2848
      %v2865 = vadd.f32 %v2813, %v2849
      %v2866 = vadd.f32 %v2814, %v2850
      %v2867 = vadd.f32 %v2815, %v2851
      %v2868 = vadd.f32 %v2816, %v2852
      %v2869 = vadd.f32 %v2817, %v2853
      %v2870 = vadd.f32 %v2818, %v2854
      %v2871 = vadd.f32 %v2819, %v2855
      %v2872 = vadd.f32 %v2820, %v2856
      %v2873 = vadd.f32 %v2821, %v2857
      %v2874 = vlaneseq
      %v2875 = vshrl.u32 %v2874, 7
      %v2876 = vsub.s32 1, %v2875
      %v2877 = vrot.slane %v2557, %v2876
      %v2878 = vmul.f32 %v1132, %v2877
      %v2879 = vmul.f32 %v1133, %v2877
      %v2880 = vmul.f32 %v1134, %v2877
      %v2881 = vmul.f32 %v1135, %v2877
      %v2882 = vmul.f32 %v1136, %v2877
      %v2883 = vmul.f32 %v1137, %v2877
      %v2884 = vmul.f32 %v1138, %v2877
      %v2885 = vmul.f32 %v1139, %v2877
      %v2886 = vmul.f32 %v1140, %v2877
      %v2887 = vmul.f32 %v1141, %v2877
      %v2888 = vmul.f32 %v1142, %v2877
      %v2889 = vmul.f32 %v1143, %v2877
      %v2890 = vmul.f32 %v1144, %v2877
      %v2891 = vmul.f32 %v1145, %v2877
      %v2892 = vmul.f32 %v1146, %v2877
      %v2893 = vmul.f32 %v1147, %v2877
      %v2894 = vadd.f32 %v2858, %v2878
      %v2895 = vadd.f32 %v2859, %v2879
      %v2896 = vadd.f32 %v2860, %v2880
      %v2897 = vadd.f32 %v2861, %v2881
      %v2898 = vadd.f32 %v2862, %v2882
      %v2899 = vadd.f32 %v2863, %v2883
      %v2900 = vadd.f32 %v2864, %v2884
      %v2901 = vadd.f32 %v2865, %v2885
      %v2902 = vadd.f32 %v2866, %v2886
      %v2903 = vadd.f32 %v2867, %v2887
      %v2904 = vadd.f32 %v2868, %v2888
      %v2905 = vadd.f32 %v2869, %v2889
      %v2906 = vadd.f32 %v2870, %v2890
      %v2907 = vadd.f32 %v2871, %v2891
      %v2908 = vadd.f32 %v2872, %v2892
      %v2909 = vadd.f32 %v2873, %v2893
      %v2910 = vlaneseq
      %v2911 = vshrl.u32 %v2910, 7
      %v2912 = vsub.s32 2, %v2911
      %v2913 = vrot.slane %v2557, %v2912
      %v2914 = vmul.f32 %v1184, %v2913
      %v2915 = vmul.f32 %v1185, %v2913
      %v2916 = vmul.f32 %v1186, %v2913
      %v2917 = vmul.f32 %v1187, %v2913
      %v2918 = vmul.f32 %v1188, %v2913
      %v2919 = vmul.f32 %v1189, %v2913
      %v2920 = vmul.f32 %v1190, %v2913
      %v2921 = vmul.f32 %v1191, %v2913
      %v2922 = vmul.f32 %v1192, %v2913
      %v2923 = vmul.f32 %v1193, %v2913
      %v2924 = vmul.f32 %v1194, %v2913
      %v2925 = vmul.f32 %v1195, %v2913
      %v2926 = vmul.f32 %v1196, %v2913
      %v2927 = vmul.f32 %v1197, %v2913
      %v2928 = vmul.f32 %v1198, %v2913
      %v2929 = vmul.f32 %v1199, %v2913
      %v2930 = vadd.f32 %v2894, %v2914
      %v2931 = vadd.f32 %v2895, %v2915
      %v2932 = vadd.f32 %v2896, %v2916
      %v2933 = vadd.f32 %v2897, %v2917
      %v2934 = vadd.f32 %v2898, %v2918
      %v2935 = vadd.f32 %v2899, %v2919
      %v2936 = vadd.f32 %v2900, %v2920
      %v2937 = vadd.f32 %v2901, %v2921
      %v2938 = vadd.f32 %v2902, %v2922
      %v2939 = vadd.f32 %v2903, %v2923
      %v2940 = vadd.f32 %v2904, %v2924
      %v2941 = vadd.f32 %v2905, %v2925
      %v2942 = vadd.f32 %v2906, %v2926
      %v2943 = vadd.f32 %v2907, %v2927
      %v2944 = vadd.f32 %v2908, %v2928
      %v2945 = vadd.f32 %v2909, %v2929
      %v2946 = vlaneseq
      %v2947 = vshrl.u32 %v2946, 7
      %v2948 = vsub.s32 3, %v2947
      %v2949 = vrot.slane %v2557, %v2948
      %v2950 = vmul.f32 %v1236, %v2949
      %v2951 = vmul.f32 %v1237, %v2949
      %v2952 = vmul.f32 %v1238, %v2949
      %v2953 = vmul.f32 %v1239, %v2949
      %v2954 = vmul.f32 %v1240, %v2949
      %v2955 = vmul.f32 %v1241, %v2949
      %v2956 = vmul.f32 %v1242, %v2949
      %v2957 = vmul.f32 %v1243, %v2949
      %v2958 = vmul.f32 %v1244, %v2949
      %v2959 = vmul.f32 %v1245, %v2949
      %v2960 = vmul.f32 %v1246, %v2949
      %v2961 = vmul.f32 %v1247, %v2949
      %v2962 = vmul.f32 %v1248, %v2949
      %v2963 = vmul.f32 %v1249, %v2949
      %v2964 = vmul.f32 %v1250, %v2949
      %v2965 = vmul.f32 %v1251, %v2949
      %v2966 = vadd.f32 %v2930, %v2950
      %v2967 = vadd.f32 %v2931, %v2951
      %v2968 = vadd.f32 %v2932, %v2952
      %v2969 = vadd.f32 %v2933, %v2953
      %v2970 = vadd.f32 %v2934, %v2954
      %v2971 = vadd.f32 %v2935, %v2955
      %v2972 = vadd.f32 %v2936, %v2956
      %v2973 = vadd.f32 %v2937, %v2957
      %v2974 = vadd.f32 %v2938, %v2958
      %v2975 = vadd.f32 %v2939, %v2959
      %v2976 = vadd.f32 %v2940, %v2960
      %v2977 = vadd.f32 %v2941, %v2961
      %v2978 = vadd.f32 %v2942, %v2962
      %v2979 = vadd.f32 %v2943, %v2963
      %v2980 = vadd.f32 %v2944, %v2964
      %v2981 = vadd.f32 %v2945, %v2965
      %v2982 = vld [vmem:[%s1131 + $0x4] sm:$0xff]
      %v2983 = vld [vmem:[%s1131 + $0xc] sm:$0xff]
      %v2984 = vld [vmem:[%s1131 + $0x1c] sm:$0xff]
      %v2985 = vld [vmem:[%s1131 + $0x24] sm:$0xff]
      %v2986 = vld [vmem:[%s1131 + $0x34] sm:$0xff]
      %v2987 = vld [vmem:[%s1131 + $0x3c] sm:$0xff]
      %v2988 = vld [vmem:[%s1131 + $0x4c] sm:$0xff]
      %v2989 = vld [vmem:[%s1131 + $0x54] sm:$0xff]
      %v2990 = vld [vmem:[%s1131 + $0x64] sm:$0xff]
      %v2991 = vld [vmem:[%s1131 + $0x6c] sm:$0xff]
      %v2992 = vld [vmem:[%s1131 + $0x7c] sm:$0xff]
      %v2993 = vld [vmem:[%s1131 + $0x84] sm:$0xff]
      %v2994 = vld [vmem:[%s1131 + $0x94] sm:$0xff]
      %v2995 = vld [vmem:[%s1131 + $0x9c] sm:$0xff]
      %v2996 = vld [vmem:[%s1131 + $0xac] sm:$0xff]
      %v2997 = vld [vmem:[%s1131 + $0xb4] sm:$0xff]
      %v2998 = vlaneseq
      %v2999 = vshrl.u32 %v2998, 7
      %v3000 = vsub.s32 4, %v2999
      %v3001 = vrot.slane %v2557, %v3000
      %v3002 = vmul.f32 %v2982, %v3001
      %v3003 = vmul.f32 %v2983, %v3001
      %v3004 = vmul.f32 %v2984, %v3001
      %v3005 = vmul.f32 %v2985, %v3001
      %v3006 = vmul.f32 %v2986, %v3001
      %v3007 = vmul.f32 %v2987, %v3001
      %v3008 = vmul.f32 %v2988, %v3001
      %v3009 = vmul.f32 %v2989, %v3001
      %v3010 = vmul.f32 %v2990, %v3001
      %v3011 = vmul.f32 %v2991, %v3001
      %v3012 = vmul.f32 %v2992, %v3001
      %v3013 = vmul.f32 %v2993, %v3001
      %v3014 = vmul.f32 %v2994, %v3001
      %v3015 = vmul.f32 %v2995, %v3001
      %v3016 = vmul.f32 %v2996, %v3001
      %v3017 = vmul.f32 %v2997, %v3001
      %v3018 = vadd.f32 %v2966, %v3002
      %v3019 = vadd.f32 %v2967, %v3003
      %v3020 = vadd.f32 %v2968, %v3004
      %v3021 = vadd.f32 %v2969, %v3005
      %v3022 = vadd.f32 %v2970, %v3006
      %v3023 = vadd.f32 %v2971, %v3007
      %v3024 = vadd.f32 %v2972, %v3008
      %v3025 = vadd.f32 %v2973, %v3009
      %v3026 = vadd.f32 %v2974, %v3010
      %v3027 = vadd.f32 %v2975, %v3011
      %v3028 = vadd.f32 %v2976, %v3012
      %v3029 = vadd.f32 %v2977, %v3013
      %v3030 = vadd.f32 %v2978, %v3014
      %v3031 = vadd.f32 %v2979, %v3015
      %v3032 = vadd.f32 %v2980, %v3016
      %v3033 = vadd.f32 %v2981, %v3017
      %v3034 = vld [vmem:[%s993] sm:$0xff]
      %v3035 = vld [vmem:[%s993 + $0x8] sm:$0xff]
      %v3036 = vld [vmem:[%s993 + $0x18] sm:$0xff]
      %v3037 = vld [vmem:[%s993 + $0x20] sm:$0xff]
      %v3038 = vld [vmem:[%s993 + $0x30] sm:$0xff]
      %v3039 = vld [vmem:[%s993 + $0x38] sm:$0xff]
      %v3040 = vld [vmem:[%s993 + $0x48] sm:$0xff]
      %v3041 = vld [vmem:[%s993 + $0x50] sm:$0xff]
      %v3042 = vld [vmem:[%s993 + $0x60] sm:$0xff]
      %v3043 = vld [vmem:[%s993 + $0x68] sm:$0xff]
      %v3044 = vld [vmem:[%s993 + $0x78] sm:$0xff]
      %v3045 = vld [vmem:[%s993 + $0x80] sm:$0xff]
      %v3046 = vld [vmem:[%s993 + $0x90] sm:$0xff]
      %v3047 = vld [vmem:[%s993 + $0x98] sm:$0xff]
      %v3048 = vld [vmem:[%s993 + $0xa8] sm:$0xff]
      %v3049 = vld [vmem:[%s993 + $0xb0] sm:$0xff]
      %v3050 = vlaneseq
      %v3051 = vshrl.u32 %v3050, 7
      %v3052 = vsub.s32 0, %v3051
      %v3053 = vrot.slane %v2558, %v3052
      %v3054 = vmul.f32 %v3034, %v3053
      %v3055 = vmul.f32 %v3035, %v3053
      %v3056 = vmul.f32 %v3036, %v3053
      %v3057 = vmul.f32 %v3037, %v3053
      %v3058 = vmul.f32 %v3038, %v3053
      %v3059 = vmul.f32 %v3039, %v3053
      %v3060 = vmul.f32 %v3040, %v3053
      %v3061 = vmul.f32 %v3041, %v3053
      %v3062 = vmul.f32 %v3042, %v3053
      %v3063 = vmul.f32 %v3043, %v3053
      %v3064 = vmul.f32 %v3044, %v3053
      %v3065 = vmul.f32 %v3045, %v3053
      %v3066 = vmul.f32 %v3046, %v3053
      %v3067 = vmul.f32 %v3047, %v3053
      %v3068 = vmul.f32 %v3048, %v3053
      %v3069 = vmul.f32 %v3049, %v3053
      %v3070 = vadd.f32 %v3018, %v3054
      %v3071 = vadd.f32 %v3019, %v3055
      %v3072 = vadd.f32 %v3020, %v3056
      %v3073 = vadd.f32 %v3021, %v3057
      %v3074 = vadd.f32 %v3022, %v3058
      %v3075 = vadd.f32 %v3023, %v3059
      %v3076 = vadd.f32 %v3024, %v3060
      %v3077 = vadd.f32 %v3025, %v3061
      %v3078 = vadd.f32 %v3026, %v3062
      %v3079 = vadd.f32 %v3027, %v3063
      %v3080 = vadd.f32 %v3028, %v3064
      %v3081 = vadd.f32 %v3029, %v3065
      %v3082 = vadd.f32 %v3030, %v3066
      %v3083 = vadd.f32 %v3031, %v3067
      %v3084 = vadd.f32 %v3032, %v3068
      %v3085 = vadd.f32 %v3033, %v3069
      %v3086 = vlaneseq
      %v3087 = vshrl.u32 %v3086, 7
      %v3088 = vsub.s32 1, %v3087
      %v3089 = vrot.slane %v2558, %v3088
      %v3090 = vmul.f32 %v1288, %v3089
      %v3091 = vmul.f32 %v1289, %v3089
      %v3092 = vmul.f32 %v1290, %v3089
      %v3093 = vmul.f32 %v1291, %v3089
      %v3094 = vmul.f32 %v1292, %v3089
      %v3095 = vmul.f32 %v1293, %v3089
      %v3096 = vmul.f32 %v1294, %v3089
      %v3097 = vmul.f32 %v1295, %v3089
      %v3098 = vmul.f32 %v1296, %v3089
      %v3099 = vmul.f32 %v1297, %v3089
      %v3100 = vmul.f32 %v1298, %v3089
      %v3101 = vmul.f32 %v1299, %v3089
      %v3102 = vmul.f32 %v1300, %v3089
      %v3103 = vmul.f32 %v1301, %v3089
      %v3104 = vmul.f32 %v1302, %v3089
      %v3105 = vmul.f32 %v1303, %v3089
      %v3106 = vadd.f32 %v3070, %v3090
      %v3107 = vadd.f32 %v3071, %v3091
      %v3108 = vadd.f32 %v3072, %v3092
      %v3109 = vadd.f32 %v3073, %v3093
      %v3110 = vadd.f32 %v3074, %v3094
      %v3111 = vadd.f32 %v3075, %v3095
      %v3112 = vadd.f32 %v3076, %v3096
      %v3113 = vadd.f32 %v3077, %v3097
      %v3114 = vadd.f32 %v3078, %v3098
      %v3115 = vadd.f32 %v3079, %v3099
      %v3116 = vadd.f32 %v3080, %v3100
      %v3117 = vadd.f32 %v3081, %v3101
      %v3118 = vadd.f32 %v3082, %v3102
      %v3119 = vadd.f32 %v3083, %v3103
      %v3120 = vadd.f32 %v3084, %v3104
      %v3121 = vadd.f32 %v3085, %v3105
      %v3122 = vlaneseq
      %v3123 = vshrl.u32 %v3122, 7
      %v3124 = vsub.s32 2, %v3123
      %v3125 = vrot.slane %v2558, %v3124
      %v3126 = vmul.f32 %v1340, %v3125
      %v3127 = vmul.f32 %v1341, %v3125
      %v3128 = vmul.f32 %v1342, %v3125
      %v3129 = vmul.f32 %v1343, %v3125
      %v3130 = vmul.f32 %v1344, %v3125
      %v3131 = vmul.f32 %v1345, %v3125
      %v3132 = vmul.f32 %v1346, %v3125
      %v3133 = vmul.f32 %v1347, %v3125
      %v3134 = vmul.f32 %v1348, %v3125
      %v3135 = vmul.f32 %v1349, %v3125
      %v3136 = vmul.f32 %v1350, %v3125
      %v3137 = vmul.f32 %v1351, %v3125
      %v3138 = vmul.f32 %v1352, %v3125
      %v3139 = vmul.f32 %v1353, %v3125
      %v3140 = vmul.f32 %v1354, %v3125
      %v3141 = vmul.f32 %v1355, %v3125
      %v3142 = vadd.f32 %v3106, %v3126
      %v3143 = vadd.f32 %v3107, %v3127
      %v3144 = vadd.f32 %v3108, %v3128
      %v3145 = vadd.f32 %v3109, %v3129
      %v3146 = vadd.f32 %v3110, %v3130
      %v3147 = vadd.f32 %v3111, %v3131
      %v3148 = vadd.f32 %v3112, %v3132
      %v3149 = vadd.f32 %v3113, %v3133
      %v3150 = vadd.f32 %v3114, %v3134
      %v3151 = vadd.f32 %v3115, %v3135
      %v3152 = vadd.f32 %v3116, %v3136
      %v3153 = vadd.f32 %v3117, %v3137
      %v3154 = vadd.f32 %v3118, %v3138
      %v3155 = vadd.f32 %v3119, %v3139
      %v3156 = vadd.f32 %v3120, %v3140
      %v3157 = vadd.f32 %v3121, %v3141
      %v3158 = vlaneseq
      %v3159 = vshrl.u32 %v3158, 7
      %v3160 = vsub.s32 3, %v3159
      %v3161 = vrot.slane %v2558, %v3160
      %v3162 = vmul.f32 %v1392, %v3161
      %v3163 = vmul.f32 %v1393, %v3161
      %v3164 = vmul.f32 %v1394, %v3161
      %v3165 = vmul.f32 %v1395, %v3161
      %v3166 = vmul.f32 %v1396, %v3161
      %v3167 = vmul.f32 %v1397, %v3161
      %v3168 = vmul.f32 %v1398, %v3161
      %v3169 = vmul.f32 %v1399, %v3161
      %v3170 = vmul.f32 %v1400, %v3161
      %v3171 = vmul.f32 %v1401, %v3161
      %v3172 = vmul.f32 %v1402, %v3161
      %v3173 = vmul.f32 %v1403, %v3161
      %v3174 = vmul.f32 %v1404, %v3161
      %v3175 = vmul.f32 %v1405, %v3161
      %v3176 = vmul.f32 %v1406, %v3161
      %v3177 = vmul.f32 %v1407, %v3161
      %v3178 = vadd.f32 %v3142, %v3162
      %v3179 = vadd.f32 %v3143, %v3163
      %v3180 = vadd.f32 %v3144, %v3164
      %v3181 = vadd.f32 %v3145, %v3165
      %v3182 = vadd.f32 %v3146, %v3166
      %v3183 = vadd.f32 %v3147, %v3167
      %v3184 = vadd.f32 %v3148, %v3168
      %v3185 = vadd.f32 %v3149, %v3169
      %v3186 = vadd.f32 %v3150, %v3170
      %v3187 = vadd.f32 %v3151, %v3171
      %v3188 = vadd.f32 %v3152, %v3172
      %v3189 = vadd.f32 %v3153, %v3173
      %v3190 = vadd.f32 %v3154, %v3174
      %v3191 = vadd.f32 %v3155, %v3175
      %v3192 = vadd.f32 %v3156, %v3176
      %v3193 = vadd.f32 %v3157, %v3177
      %v3194 = vld [vmem:[%s993 + $0x4] sm:$0xff]
      %v3195 = vld [vmem:[%s993 + $0xc] sm:$0xff]
      %v3196 = vld [vmem:[%s993 + $0x1c] sm:$0xff]
      %v3197 = vld [vmem:[%s993 + $0x24] sm:$0xff]
      %v3198 = vld [vmem:[%s993 + $0x34] sm:$0xff]
      %v3199 = vld [vmem:[%s993 + $0x3c] sm:$0xff]
      %v3200 = vld [vmem:[%s993 + $0x4c] sm:$0xff]
      %v3201 = vld [vmem:[%s993 + $0x54] sm:$0xff]
      %v3202 = vld [vmem:[%s993 + $0x64] sm:$0xff]
      %v3203 = vld [vmem:[%s993 + $0x6c] sm:$0xff]
      %v3204 = vld [vmem:[%s993 + $0x7c] sm:$0xff]
      %v3205 = vld [vmem:[%s993 + $0x84] sm:$0xff]
      %v3206 = vld [vmem:[%s993 + $0x94] sm:$0xff]
      %v3207 = vld [vmem:[%s993 + $0x9c] sm:$0xff]
      %v3208 = vld [vmem:[%s993 + $0xac] sm:$0xff]
      %v3209 = vld [vmem:[%s993 + $0xb4] sm:$0xff]
      %v3210 = vlaneseq
      %v3211 = vshrl.u32 %v3210, 7
      %v3212 = vsub.s32 4, %v3211
      %v3213 = vrot.slane %v2558, %v3212
      %v3214 = vmul.f32 %v3194, %v3213
      %v3215 = vmul.f32 %v3195, %v3213
      %v3216 = vmul.f32 %v3196, %v3213
      %v3217 = vmul.f32 %v3197, %v3213
      %v3218 = vmul.f32 %v3198, %v3213
      %v3219 = vmul.f32 %v3199, %v3213
      %v3220 = vmul.f32 %v3200, %v3213
      %v3221 = vmul.f32 %v3201, %v3213
      %v3222 = vmul.f32 %v3202, %v3213
      %v3223 = vmul.f32 %v3203, %v3213
      %v3224 = vmul.f32 %v3204, %v3213
      %v3225 = vmul.f32 %v3205, %v3213
      %v3226 = vmul.f32 %v3206, %v3213
      %v3227 = vmul.f32 %v3207, %v3213
      %v3228 = vmul.f32 %v3208, %v3213
      %v3229 = vmul.f32 %v3209, %v3213
      %v3230 = vadd.f32 %v3178, %v3214
      %v3231 = vadd.f32 %v3179, %v3215
      %v3232 = vadd.f32 %v3180, %v3216
      %v3233 = vadd.f32 %v3181, %v3217
      %v3234 = vadd.f32 %v3182, %v3218
      %v3235 = vadd.f32 %v3183, %v3219
      %v3236 = vadd.f32 %v3184, %v3220
      %v3237 = vadd.f32 %v3185, %v3221
      %v3238 = vadd.f32 %v3186, %v3222
      %v3239 = vadd.f32 %v3187, %v3223
      %v3240 = vadd.f32 %v3188, %v3224
      %v3241 = vadd.f32 %v3189, %v3225
      %v3242 = vadd.f32 %v3190, %v3226
      %v3243 = vadd.f32 %v3191, %v3227
      %v3244 = vadd.f32 %v3192, %v3228
      %v3245 = vadd.f32 %v3193, %v3229
      %v3246 = vld [vmem:[%s1444] sm:$0xff]
      %v3247 = vld [vmem:[%s1444 + $0x8] sm:$0xff]
      %v3248 = vld [vmem:[%s1444 + $0x18] sm:$0xff]
      %v3249 = vld [vmem:[%s1444 + $0x20] sm:$0xff]
      %v3250 = vld [vmem:[%s1444 + $0x30] sm:$0xff]
      %v3251 = vld [vmem:[%s1444 + $0x38] sm:$0xff]
      %v3252 = vld [vmem:[%s1444 + $0x48] sm:$0xff]
      %v3253 = vld [vmem:[%s1444 + $0x50] sm:$0xff]
      %v3254 = vld [vmem:[%s1444 + $0x60] sm:$0xff]
      %v3255 = vld [vmem:[%s1444 + $0x68] sm:$0xff]
      %v3256 = vld [vmem:[%s1444 + $0x78] sm:$0xff]
      %v3257 = vld [vmem:[%s1444 + $0x80] sm:$0xff]
      %v3258 = vld [vmem:[%s1444 + $0x90] sm:$0xff]
      %v3259 = vld [vmem:[%s1444 + $0x98] sm:$0xff]
      %v3260 = vld [vmem:[%s1444 + $0xa8] sm:$0xff]
      %v3261 = vld [vmem:[%s1444 + $0xb0] sm:$0xff]
      %v3262 = vlaneseq
      %v3263 = vshrl.u32 %v3262, 7
      %v3264 = vsub.s32 0, %v3263
      %v3265 = vrot.slane %v2559, %v3264
      %v3266 = vmul.f32 %v3246, %v3265
      %v3267 = vmul.f32 %v3247, %v3265
      %v3268 = vmul.f32 %v3248, %v3265
      %v3269 = vmul.f32 %v3249, %v3265
      %v3270 = vmul.f32 %v3250, %v3265
      %v3271 = vmul.f32 %v3251, %v3265
      %v3272 = vmul.f32 %v3252, %v3265
      %v3273 = vmul.f32 %v3253, %v3265
      %v3274 = vmul.f32 %v3254, %v3265
      %v3275 = vmul.f32 %v3255, %v3265
      %v3276 = vmul.f32 %v3256, %v3265
      %v3277 = vmul.f32 %v3257, %v3265
      %v3278 = vmul.f32 %v3258, %v3265
      %v3279 = vmul.f32 %v3259, %v3265
      %v3280 = vmul.f32 %v3260, %v3265
      %v3281 = vmul.f32 %v3261, %v3265
      %v3282 = vadd.f32 %v3230, %v3266
      %v3283 = vadd.f32 %v3231, %v3267
      %v3284 = vadd.f32 %v3232, %v3268
      %v3285 = vadd.f32 %v3233, %v3269
      %v3286 = vadd.f32 %v3234, %v3270
      %v3287 = vadd.f32 %v3235, %v3271
      %v3288 = vadd.f32 %v3236, %v3272
      %v3289 = vadd.f32 %v3237, %v3273
      %v3290 = vadd.f32 %v3238, %v3274
      %v3291 = vadd.f32 %v3239, %v3275
      %v3292 = vadd.f32 %v3240, %v3276
      %v3293 = vadd.f32 %v3241, %v3277
      %v3294 = vadd.f32 %v3242, %v3278
      %v3295 = vadd.f32 %v3243, %v3279
      %v3296 = vadd.f32 %v3244, %v3280
      %v3297 = vadd.f32 %v3245, %v3281
      %v3298 = vlaneseq
      %v3299 = vshrl.u32 %v3298, 7
      %v3300 = vsub.s32 1, %v3299
      %v3301 = vrot.slane %v2559, %v3300
      %v3302 = vmul.f32 %v1445, %v3301
      %v3303 = vmul.f32 %v1446, %v3301
      %v3304 = vmul.f32 %v1447, %v3301
      %v3305 = vmul.f32 %v1448, %v3301
      %v3306 = vmul.f32 %v1449, %v3301
      %v3307 = vmul.f32 %v1450, %v3301
      %v3308 = vmul.f32 %v1451, %v3301
      %v3309 = vmul.f32 %v1452, %v3301
      %v3310 = vmul.f32 %v1453, %v3301
      %v3311 = vmul.f32 %v1454, %v3301
      %v3312 = vmul.f32 %v1455, %v3301
      %v3313 = vmul.f32 %v1456, %v3301
      %v3314 = vmul.f32 %v1457, %v3301
      %v3315 = vmul.f32 %v1458, %v3301
      %v3316 = vmul.f32 %v1459, %v3301
      %v3317 = vmul.f32 %v1460, %v3301
      %v3318 = vadd.f32 %v3282, %v3302
      %v3319 = vadd.f32 %v3283, %v3303
      %v3320 = vadd.f32 %v3284, %v3304
      %v3321 = vadd.f32 %v3285, %v3305
      %v3322 = vadd.f32 %v3286, %v3306
      %v3323 = vadd.f32 %v3287, %v3307
      %v3324 = vadd.f32 %v3288, %v3308
      %v3325 = vadd.f32 %v3289, %v3309
      %v3326 = vadd.f32 %v3290, %v3310
      %v3327 = vadd.f32 %v3291, %v3311
      %v3328 = vadd.f32 %v3292, %v3312
      %v3329 = vadd.f32 %v3293, %v3313
      %v3330 = vadd.f32 %v3294, %v3314
      %v3331 = vadd.f32 %v3295, %v3315
      %v3332 = vadd.f32 %v3296, %v3316
      %v3333 = vadd.f32 %v3297, %v3317
      %v3334 = vlaneseq
      %v3335 = vshrl.u32 %v3334, 7
      %v3336 = vsub.s32 2, %v3335
      %v3337 = vrot.slane %v2559, %v3336
      %v3338 = vmul.f32 %v1497, %v3337
      %v3339 = vmul.f32 %v1498, %v3337
      %v3340 = vmul.f32 %v1499, %v3337
      %v3341 = vmul.f32 %v1500, %v3337
      %v3342 = vmul.f32 %v1501, %v3337
      %v3343 = vmul.f32 %v1502, %v3337
      %v3344 = vmul.f32 %v1503, %v3337
      %v3345 = vmul.f32 %v1504, %v3337
      %v3346 = vmul.f32 %v1505, %v3337
      %v3347 = vmul.f32 %v1506, %v3337
      %v3348 = vmul.f32 %v1507, %v3337
      %v3349 = vmul.f32 %v1508, %v3337
      %v3350 = vmul.f32 %v1509, %v3337
      %v3351 = vmul.f32 %v1510, %v3337
      %v3352 = vmul.f32 %v1511, %v3337
      %v3353 = vmul.f32 %v1512, %v3337
      %v3354 = vadd.f32 %v3318, %v3338
      %v3355 = vadd.f32 %v3319, %v3339
      %v3356 = vadd.f32 %v3320, %v3340
      %v3357 = vadd.f32 %v3321, %v3341
      %v3358 = vadd.f32 %v3322, %v3342
      %v3359 = vadd.f32 %v3323, %v3343
      %v3360 = vadd.f32 %v3324, %v3344
      %v3361 = vadd.f32 %v3325, %v3345
      %v3362 = vadd.f32 %v3326, %v3346
      %v3363 = vadd.f32 %v3327, %v3347
      %v3364 = vadd.f32 %v3328, %v3348
      %v3365 = vadd.f32 %v3329, %v3349
      %v3366 = vadd.f32 %v3330, %v3350
      %v3367 = vadd.f32 %v3331, %v3351
      %v3368 = vadd.f32 %v3332, %v3352
      %v3369 = vadd.f32 %v3333, %v3353
      %v3370 = vlaneseq
      %v3371 = vshrl.u32 %v3370, 7
      %v3372 = vsub.s32 3, %v3371
      %v3373 = vrot.slane %v2559, %v3372
      %v3374 = vmul.f32 %v1549, %v3373
      %v3375 = vmul.f32 %v1550, %v3373
      %v3376 = vmul.f32 %v1551, %v3373
      %v3377 = vmul.f32 %v1552, %v3373
      %v3378 = vmul.f32 %v1553, %v3373
      %v3379 = vmul.f32 %v1554, %v3373
      %v3380 = vmul.f32 %v1555, %v3373
      %v3381 = vmul.f32 %v1556, %v3373
      %v3382 = vmul.f32 %v1557, %v3373
      %v3383 = vmul.f32 %v1558, %v3373
      %v3384 = vmul.f32 %v1559, %v3373
      %v3385 = vmul.f32 %v1560, %v3373
      %v3386 = vmul.f32 %v1561, %v3373
      %v3387 = vmul.f32 %v1562, %v3373
      %v3388 = vmul.f32 %v1563, %v3373
      %v3389 = vmul.f32 %v1564, %v3373
      %v3390 = vadd.f32 %v3354, %v3374
      %v3391 = vadd.f32 %v3355, %v3375
      %v3392 = vadd.f32 %v3356, %v3376
      %v3393 = vadd.f32 %v3357, %v3377
      %v3394 = vadd.f32 %v3358, %v3378
      %v3395 = vadd.f32 %v3359, %v3379
      %v3396 = vadd.f32 %v3360, %v3380
      %v3397 = vadd.f32 %v3361, %v3381
      %v3398 = vadd.f32 %v3362, %v3382
      %v3399 = vadd.f32 %v3363, %v3383
      %v3400 = vadd.f32 %v3364, %v3384
      %v3401 = vadd.f32 %v3365, %v3385
      %v3402 = vadd.f32 %v3366, %v3386
      %v3403 = vadd.f32 %v3367, %v3387
      %v3404 = vadd.f32 %v3368, %v3388
      %v3405 = vadd.f32 %v3369, %v3389
      %v3406 = vld [vmem:[%s1444 + $0x4] sm:$0xff]
      %v3407 = vld [vmem:[%s1444 + $0xc] sm:$0xff]
      %v3408 = vld [vmem:[%s1444 + $0x1c] sm:$0xff]
      %v3409 = vld [vmem:[%s1444 + $0x24] sm:$0xff]
      %v3410 = vld [vmem:[%s1444 + $0x34] sm:$0xff]
      %v3411 = vld [vmem:[%s1444 + $0x3c] sm:$0xff]
      %v3412 = vld [vmem:[%s1444 + $0x4c] sm:$0xff]
      %v3413 = vld [vmem:[%s1444 + $0x54] sm:$0xff]
      %v3414 = vld [vmem:[%s1444 + $0x64] sm:$0xff]
      %v3415 = vld [vmem:[%s1444 + $0x6c] sm:$0xff]
      %v3416 = vld [vmem:[%s1444 + $0x7c] sm:$0xff]
      %v3417 = vld [vmem:[%s1444 + $0x84] sm:$0xff]
      %v3418 = vld [vmem:[%s1444 + $0x94] sm:$0xff]
      %v3419 = vld [vmem:[%s1444 + $0x9c] sm:$0xff]
      %v3420 = vld [vmem:[%s1444 + $0xac] sm:$0xff]
      %v3421 = vld [vmem:[%s1444 + $0xb4] sm:$0xff]
      %v3422 = vlaneseq
      %v3423 = vshrl.u32 %v3422, 7
      %v3424 = vsub.s32 4, %v3423
      %v3425 = vrot.slane %v2559, %v3424
      %v3426 = vmul.f32 %v3406, %v3425
      %v3427 = vmul.f32 %v3407, %v3425
      %v3428 = vmul.f32 %v3408, %v3425
      %v3429 = vmul.f32 %v3409, %v3425
      %v3430 = vmul.f32 %v3410, %v3425
      %v3431 = vmul.f32 %v3411, %v3425
      %v3432 = vmul.f32 %v3412, %v3425
      %v3433 = vmul.f32 %v3413, %v3425
      %v3434 = vmul.f32 %v3414, %v3425
      %v3435 = vmul.f32 %v3415, %v3425
      %v3436 = vmul.f32 %v3416, %v3425
      %v3437 = vmul.f32 %v3417, %v3425
      %v3438 = vmul.f32 %v3418, %v3425
      %v3439 = vmul.f32 %v3419, %v3425
      %v3440 = vmul.f32 %v3420, %v3425
      %v3441 = vmul.f32 %v3421, %v3425
      %v3442 = vadd.f32 %v3390, %v3426
      %v3443 = vadd.f32 %v3391, %v3427
      %v3444 = vadd.f32 %v3392, %v3428
      %v3445 = vadd.f32 %v3393, %v3429
      %v3446 = vadd.f32 %v3394, %v3430
      %v3447 = vadd.f32 %v3395, %v3431
      %v3448 = vadd.f32 %v3396, %v3432
      %v3449 = vadd.f32 %v3397, %v3433
      %v3450 = vadd.f32 %v3398, %v3434
      %v3451 = vadd.f32 %v3399, %v3435
      %v3452 = vadd.f32 %v3400, %v3436
      %v3453 = vadd.f32 %v3401, %v3437
      %v3454 = vadd.f32 %v3402, %v3438
      %v3455 = vadd.f32 %v3403, %v3439
      %v3456 = vadd.f32 %v3404, %v3440
      %v3457 = vadd.f32 %v3405, %v3441
      %s3458 = scalar_lea.vmem [#allocation2], 96
      %v3459 = vld [vmem:[%s3458] sm:$0xff]
      %v3460 = vld [vmem:[%s3458 + $0x8] sm:$0xff]
      %v3461 = vld [vmem:[%s3458 + $0x18] sm:$0xff]
      %v3462 = vld [vmem:[%s3458 + $0x20] sm:$0xff]
      %v3463 = vld [vmem:[%s3458 + $0x30] sm:$0xff]
      %v3464 = vld [vmem:[%s3458 + $0x38] sm:$0xff]
      %v3465 = vld [vmem:[%s3458 + $0x48] sm:$0xff]
      %v3466 = vld [vmem:[%s3458 + $0x50] sm:$0xff]
      %v3467 = vld [vmem:[%s3458 + $0x60] sm:$0xff]
      %v3468 = vld [vmem:[%s3458 + $0x68] sm:$0xff]
      %v3469 = vld [vmem:[%s3458 + $0x78] sm:$0xff]
      %v3470 = vld [vmem:[%s3458 + $0x80] sm:$0xff]
      %v3471 = vld [vmem:[%s3458 + $0x90] sm:$0xff]
      %v3472 = vld [vmem:[%s3458 + $0x98] sm:$0xff]
      %v3473 = vld [vmem:[%s3458 + $0xa8] sm:$0xff]
      %v3474 = vld [vmem:[%s3458 + $0xb0] sm:$0xff]
      %v3475 = vlaneseq
      %v3476 = vshrl.u32 %v3475, 7
      %v3477 = vsub.s32 0, %v3476
      %v3478 = vrot.slane %v2560, %v3477
      %v3479 = vmul.f32 %v3459, %v3478
      %v3480 = vmul.f32 %v3460, %v3478
      %v3481 = vmul.f32 %v3461, %v3478
      %v3482 = vmul.f32 %v3462, %v3478
      %v3483 = vmul.f32 %v3463, %v3478
      %v3484 = vmul.f32 %v3464, %v3478
      %v3485 = vmul.f32 %v3465, %v3478
      %v3486 = vmul.f32 %v3466, %v3478
      %v3487 = vmul.f32 %v3467, %v3478
      %v3488 = vmul.f32 %v3468, %v3478
      %v3489 = vmul.f32 %v3469, %v3478
      %v3490 = vmul.f32 %v3470, %v3478
      %v3491 = vmul.f32 %v3471, %v3478
      %v3492 = vmul.f32 %v3472, %v3478
      %v3493 = vmul.f32 %v3473, %v3478
      %v3494 = vmul.f32 %v3474, %v3478
      %v3495 = vadd.f32 %v3442, %v3479
      %v3496 = vadd.f32 %v3443, %v3480
      %v3497 = vadd.f32 %v3444, %v3481
      %v3498 = vadd.f32 %v3445, %v3482
      %v3499 = vadd.f32 %v3446, %v3483
      %v3500 = vadd.f32 %v3447, %v3484
      %v3501 = vadd.f32 %v3448, %v3485
      %v3502 = vadd.f32 %v3449, %v3486
      %v3503 = vadd.f32 %v3450, %v3487
      %v3504 = vadd.f32 %v3451, %v3488
      %v3505 = vadd.f32 %v3452, %v3489
      %v3506 = vadd.f32 %v3453, %v3490
      %v3507 = vadd.f32 %v3454, %v3491
      %v3508 = vadd.f32 %v3455, %v3492
      %v3509 = vadd.f32 %v3456, %v3493
      %v3510 = vadd.f32 %v3457, %v3494
      %v3511 = vld [vmem:[%s3458 + $0x1] sm:$0xff]
      %v3512 = vld [vmem:[%s3458 + $0x9] sm:$0xff]
      %v3513 = vld [vmem:[%s3458 + $0x19] sm:$0xff]
      %v3514 = vld [vmem:[%s3458 + $0x21] sm:$0xff]
      %v3515 = vld [vmem:[%s3458 + $0x31] sm:$0xff]
      %v3516 = vld [vmem:[%s3458 + $0x39] sm:$0xff]
      %v3517 = vld [vmem:[%s3458 + $0x49] sm:$0xff]
      %v3518 = vld [vmem:[%s3458 + $0x51] sm:$0xff]
      %v3519 = vld [vmem:[%s3458 + $0x61] sm:$0xff]
      %v3520 = vld [vmem:[%s3458 + $0x69] sm:$0xff]
      %v3521 = vld [vmem:[%s3458 + $0x79] sm:$0xff]
      %v3522 = vld [vmem:[%s3458 + $0x81] sm:$0xff]
      %v3523 = vld [vmem:[%s3458 + $0x91] sm:$0xff]
      %v3524 = vld [vmem:[%s3458 + $0x99] sm:$0xff]
      %v3525 = vld [vmem:[%s3458 + $0xa9] sm:$0xff]
      %v3526 = vld [vmem:[%s3458 + $0xb1] sm:$0xff]
      %v3527 = vlaneseq
      %v3528 = vshrl.u32 %v3527, 7
      %v3529 = vsub.s32 1, %v3528
      %v3530 = vrot.slane %v2560, %v3529
      %v3531 = vmul.f32 %v3511, %v3530
      %v3532 = vmul.f32 %v3512, %v3530
      %v3533 = vmul.f32 %v3513, %v3530
      %v3534 = vmul.f32 %v3514, %v3530
      %v3535 = vmul.f32 %v3515, %v3530
      %v3536 = vmul.f32 %v3516, %v3530
      %v3537 = vmul.f32 %v3517, %v3530
      %v3538 = vmul.f32 %v3518, %v3530
      %v3539 = vmul.f32 %v3519, %v3530
      %v3540 = vmul.f32 %v3520, %v3530
      %v3541 = vmul.f32 %v3521, %v3530
      %v3542 = vmul.f32 %v3522, %v3530
      %v3543 = vmul.f32 %v3523, %v3530
      %v3544 = vmul.f32 %v3524, %v3530
      %v3545 = vmul.f32 %v3525, %v3530
      %v3546 = vmul.f32 %v3526, %v3530
      %v3547 = vadd.f32 %v3495, %v3531
      %v3548 = vadd.f32 %v3496, %v3532
      %v3549 = vadd.f32 %v3497, %v3533
      %v3550 = vadd.f32 %v3498, %v3534
      %v3551 = vadd.f32 %v3499, %v3535
      %v3552 = vadd.f32 %v3500, %v3536
      %v3553 = vadd.f32 %v3501, %v3537
      %v3554 = vadd.f32 %v3502, %v3538
      %v3555 = vadd.f32 %v3503, %v3539
      %v3556 = vadd.f32 %v3504, %v3540
      %v3557 = vadd.f32 %v3505, %v3541
      %v3558 = vadd.f32 %v3506, %v3542
      %v3559 = vadd.f32 %v3507, %v3543
      %v3560 = vadd.f32 %v3508, %v3544
      %v3561 = vadd.f32 %v3509, %v3545
      %v3562 = vadd.f32 %v3510, %v3546
      %v3563 = vld [vmem:[%s3458 + $0x2] sm:$0xff]
      %v3564 = vld [vmem:[%s3458 + $0xa] sm:$0xff]
      %v3565 = vld [vmem:[%s3458 + $0x1a] sm:$0xff]
      %v3566 = vld [vmem:[%s3458 + $0x22] sm:$0xff]
      %v3567 = vld [vmem:[%s3458 + $0x32] sm:$0xff]
      %v3568 = vld [vmem:[%s3458 + $0x3a] sm:$0xff]
      %v3569 = vld [vmem:[%s3458 + $0x4a] sm:$0xff]
      %v3570 = vld [vmem:[%s3458 + $0x52] sm:$0xff]
      %v3571 = vld [vmem:[%s3458 + $0x62] sm:$0xff]
      %v3572 = vld [vmem:[%s3458 + $0x6a] sm:$0xff]
      %v3573 = vld [vmem:[%s3458 + $0x7a] sm:$0xff]
      %v3574 = vld [vmem:[%s3458 + $0x82] sm:$0xff]
      %v3575 = vld [vmem:[%s3458 + $0x92] sm:$0xff]
      %v3576 = vld [vmem:[%s3458 + $0x9a] sm:$0xff]
      %v3577 = vld [vmem:[%s3458 + $0xaa] sm:$0xff]
      %v3578 = vld [vmem:[%s3458 + $0xb2] sm:$0xff]
      %v3579 = vlaneseq
      %v3580 = vshrl.u32 %v3579, 7
      %v3581 = vsub.s32 2, %v3580
      %v3582 = vrot.slane %v2560, %v3581
      %v3583 = vmul.f32 %v3563, %v3582
      %v3584 = vmul.f32 %v3564, %v3582
      %v3585 = vmul.f32 %v3565, %v3582
      %v3586 = vmul.f32 %v3566, %v3582
      %v3587 = vmul.f32 %v3567, %v3582
      %v3588 = vmul.f32 %v3568, %v3582
      %v3589 = vmul.f32 %v3569, %v3582
      %v3590 = vmul.f32 %v3570, %v3582
      %v3591 = vmul.f32 %v3571, %v3582
      %v3592 = vmul.f32 %v3572, %v3582
      %v3593 = vmul.f32 %v3573, %v3582
      %v3594 = vmul.f32 %v3574, %v3582
      %v3595 = vmul.f32 %v3575, %v3582
      %v3596 = vmul.f32 %v3576, %v3582
      %v3597 = vmul.f32 %v3577, %v3582
      %v3598 = vmul.f32 %v3578, %v3582
      %v3599 = vadd.f32 %v3547, %v3583
      %v3600 = vadd.f32 %v3548, %v3584
      %v3601 = vadd.f32 %v3549, %v3585
      %v3602 = vadd.f32 %v3550, %v3586
      %v3603 = vadd.f32 %v3551, %v3587
      %v3604 = vadd.f32 %v3552, %v3588
      %v3605 = vadd.f32 %v3553, %v3589
      %v3606 = vadd.f32 %v3554, %v3590
      %v3607 = vadd.f32 %v3555, %v3591
      %v3608 = vadd.f32 %v3556, %v3592
      %v3609 = vadd.f32 %v3557, %v3593
      %v3610 = vadd.f32 %v3558, %v3594
      %v3611 = vadd.f32 %v3559, %v3595
      %v3612 = vadd.f32 %v3560, %v3596
      %v3613 = vadd.f32 %v3561, %v3597
      %v3614 = vadd.f32 %v3562, %v3598
      %v3615 = vld [vmem:[%s3458 + $0x3] sm:$0xff]
      %v3616 = vld [vmem:[%s3458 + $0xb] sm:$0xff]
      %v3617 = vld [vmem:[%s3458 + $0x1b] sm:$0xff]
      %v3618 = vld [vmem:[%s3458 + $0x23] sm:$0xff]
      %v3619 = vld [vmem:[%s3458 + $0x33] sm:$0xff]
      %v3620 = vld [vmem:[%s3458 + $0x3b] sm:$0xff]
      %v3621 = vld [vmem:[%s3458 + $0x4b] sm:$0xff]
      %v3622 = vld [vmem:[%s3458 + $0x53] sm:$0xff]
      %v3623 = vld [vmem:[%s3458 + $0x63] sm:$0xff]
      %v3624 = vld [vmem:[%s3458 + $0x6b] sm:$0xff]
      %v3625 = vld [vmem:[%s3458 + $0x7b] sm:$0xff]
      %v3626 = vld [vmem:[%s3458 + $0x83] sm:$0xff]
      %v3627 = vld [vmem:[%s3458 + $0x93] sm:$0xff]
      %v3628 = vld [vmem:[%s3458 + $0x9b] sm:$0xff]
      %v3629 = vld [vmem:[%s3458 + $0xab] sm:$0xff]
      %v3630 = vld [vmem:[%s3458 + $0xb3] sm:$0xff]
      %v3631 = vlaneseq
      %v3632 = vshrl.u32 %v3631, 7
      %v3633 = vsub.s32 3, %v3632
      %v3634 = vrot.slane %v2560, %v3633
      %v3635 = vmul.f32 %v3615, %v3634
      %v3636 = vmul.f32 %v3616, %v3634
      %v3637 = vmul.f32 %v3617, %v3634
      %v3638 = vmul.f32 %v3618, %v3634
      %v3639 = vmul.f32 %v3619, %v3634
      %v3640 = vmul.f32 %v3620, %v3634
      %v3641 = vmul.f32 %v3621, %v3634
      %v3642 = vmul.f32 %v3622, %v3634
      %v3643 = vmul.f32 %v3623, %v3634
      %v3644 = vmul.f32 %v3624, %v3634
      %v3645 = vmul.f32 %v3625, %v3634
      %v3646 = vmul.f32 %v3626, %v3634
      %v3647 = vmul.f32 %v3627, %v3634
      %v3648 = vmul.f32 %v3628, %v3634
      %v3649 = vmul.f32 %v3629, %v3634
      %v3650 = vmul.f32 %v3630, %v3634
      %v3651 = vadd.f32 %v3599, %v3635
      %v3652 = vadd.f32 %v3600, %v3636
      %v3653 = vadd.f32 %v3601, %v3637
      %v3654 = vadd.f32 %v3602, %v3638
      %v3655 = vadd.f32 %v3603, %v3639
      %v3656 = vadd.f32 %v3604, %v3640
      %v3657 = vadd.f32 %v3605, %v3641
      %v3658 = vadd.f32 %v3606, %v3642
      %v3659 = vadd.f32 %v3607, %v3643
      %v3660 = vadd.f32 %v3608, %v3644
      %v3661 = vadd.f32 %v3609, %v3645
      %v3662 = vadd.f32 %v3610, %v3646
      %v3663 = vadd.f32 %v3611, %v3647
      %v3664 = vadd.f32 %v3612, %v3648
      %v3665 = vadd.f32 %v3613, %v3649
      %v3666 = vadd.f32 %v3614, %v3650
      %v3667 = vld [vmem:[%s3458 + $0x4] sm:$0xff]
      %v3668 = vld [vmem:[%s3458 + $0xc] sm:$0xff]
      %v3669 = vld [vmem:[%s3458 + $0x1c] sm:$0xff]
      %v3670 = vld [vmem:[%s3458 + $0x24] sm:$0xff]
      %v3671 = vld [vmem:[%s3458 + $0x34] sm:$0xff]
      %v3672 = vld [vmem:[%s3458 + $0x3c] sm:$0xff]
      %v3673 = vld [vmem:[%s3458 + $0x4c] sm:$0xff]
      %v3674 = vld [vmem:[%s3458 + $0x54] sm:$0xff]
      %v3675 = vld [vmem:[%s3458 + $0x64] sm:$0xff]
      %v3676 = vld [vmem:[%s3458 + $0x6c] sm:$0xff]
      %v3677 = vld [vmem:[%s3458 + $0x7c] sm:$0xff]
      %v3678 = vld [vmem:[%s3458 + $0x84] sm:$0xff]
      %v3679 = vld [vmem:[%s3458 + $0x94] sm:$0xff]
      %v3680 = vld [vmem:[%s3458 + $0x9c] sm:$0xff]
      %v3681 = vld [vmem:[%s3458 + $0xac] sm:$0xff]
      %v3682 = vld [vmem:[%s3458 + $0xb4] sm:$0xff]
      %v3683 = vlaneseq
      %v3684 = vshrl.u32 %v3683, 7
      %v3685 = vsub.s32 4, %v3684
      %v3686 = vrot.slane %v2560, %v3685
      %v3687 = vmul.f32 %v3667, %v3686
      %v3688 = vmul.f32 %v3668, %v3686
      %v3689 = vmul.f32 %v3669, %v3686
      %v3690 = vmul.f32 %v3670, %v3686
      %v3691 = vmul.f32 %v3671, %v3686
      %v3692 = vmul.f32 %v3672, %v3686
      %v3693 = vmul.f32 %v3673, %v3686
      %v3694 = vmul.f32 %v3674, %v3686
      %v3695 = vmul.f32 %v3675, %v3686
      %v3696 = vmul.f32 %v3676, %v3686
      %v3697 = vmul.f32 %v3677, %v3686
      %v3698 = vmul.f32 %v3678, %v3686
      %v3699 = vmul.f32 %v3679, %v3686
      %v3700 = vmul.f32 %v3680, %v3686
      %v3701 = vmul.f32 %v3681, %v3686
      %v3702 = vmul.f32 %v3682, %v3686
      %v3703 = vadd.f32 %v3651, %v3687
      %v3704 = vadd.f32 %v3652, %v3688
      %v3705 = vadd.f32 %v3653, %v3689
      %v3706 = vadd.f32 %v3654, %v3690
      %v3707 = vadd.f32 %v3655, %v3691
      %v3708 = vadd.f32 %v3656, %v3692
      %v3709 = vadd.f32 %v3657, %v3693
      %v3710 = vadd.f32 %v3658, %v3694
      %v3711 = vadd.f32 %v3659, %v3695
      %v3712 = vadd.f32 %v3660, %v3696
      %v3713 = vadd.f32 %v3661, %v3697
      %v3714 = vadd.f32 %v3662, %v3698
      %v3715 = vadd.f32 %v3663, %v3699
      %v3716 = vadd.f32 %v3664, %v3700
      %v3717 = vadd.f32 %v3665, %v3701
      %v3718 = vadd.f32 %v3666, %v3702
      %v3720 = vlaneseq
      %v3721 = vshrl.u32 %v3720, 7
      %v3722 = vsub.s32 0, %v3721
      %v3723 = vrot.slane %v2561, %v3722
      %v3725 = vadd.f32 %v3703, %v3723
      %v3726 = vadd.f32 %v3704, %v3723
      %v3727 = vadd.f32 %v3705, %v3723
      %v3728 = vadd.f32 %v3706, %v3723
      %v3729 = vadd.f32 %v3707, %v3723
      %v3730 = vadd.f32 %v3708, %v3723
      %v3731 = vadd.f32 %v3709, %v3723
      %v3732 = vadd.f32 %v3710, %v3723
      %v3733 = vadd.f32 %v3711, %v3723
      %v3734 = vadd.f32 %v3712, %v3723
      %v3735 = vadd.f32 %v3713, %v3723
      %v3736 = vadd.f32 %v3714, %v3723
      %v3737 = vadd.f32 %v3715, %v3723
      %v3738 = vadd.f32 %v3716, %v3723
      %v3739 = vadd.f32 %v3717, %v3723
      %v3740 = vadd.f32 %v3718, %v3723
      %s3741 = scalar_lea.vmem %s11, 40
      %v3742 = vld [vmem:[%s3741] sm:$0x1f]
      %v3743 = vld [vmem:[%s3741 + $0x8] sm:$0x1f]
      %v3744 = vld [vmem:[%s3741 + $0x10] sm:$0x1f]
      %v3745 = vld [vmem:[%s3741 + $0x18] sm:$0x1f]
      %v3746 = vld [vmem:[%s3741 + $0x20] sm:$0x1f]
      %s3747 = scalar_lea.vmem %s12, 1
      %v3748 = vld [vmem:[%s3747] sm:$0x1]
      %v3749 = vld [vmem:[#allocation3] sm:$0xff]
      %v3750 = vld [vmem:[#allocation3 + $0x8] sm:$0xff]
      %v3751 = vld [vmem:[#allocation3 + $0x18] sm:$0xff]
      %v3752 = vld [vmem:[#allocation3 + $0x20] sm:$0xff]
      %v3753 = vld [vmem:[#allocation3 + $0x30] sm:$0xff]
      %v3754 = vld [vmem:[#allocation3 + $0x38] sm:$0xff]
      %v3755 = vld [vmem:[#allocation3 + $0x48] sm:$0xff]
      %v3756 = vld [vmem:[#allocation3 + $0x50] sm:$0xff]
      %v3757 = vld [vmem:[#allocation3 + $0x60] sm:$0xff]
      %v3758 = vld [vmem:[#allocation3 + $0x68] sm:$0xff]
      %v3759 = vld [vmem:[#allocation3 + $0x78] sm:$0xff]
      %v3760 = vld [vmem:[#allocation3 + $0x80] sm:$0xff]
      %v3761 = vld [vmem:[#allocation3 + $0x90] sm:$0xff]
      %v3762 = vld [vmem:[#allocation3 + $0x98] sm:$0xff]
      %v3763 = vld [vmem:[#allocation3 + $0xa8] sm:$0xff]
      %v3764 = vld [vmem:[#allocation3 + $0xb0] sm:$0xff]
      %v3765 = vlaneseq
      %v3766 = vshrl.u32 %v3765, 7
      %v3767 = vsub.s32 0, %v3766
      %v3768 = vrot.slane %v3742, %v3767
      %v3769 = vmul.f32 %v3749, %v3768
      %v3770 = vmul.f32 %v3750, %v3768
      %v3771 = vmul.f32 %v3751, %v3768
      %v3772 = vmul.f32 %v3752, %v3768
      %v3773 = vmul.f32 %v3753, %v3768
      %v3774 = vmul.f32 %v3754, %v3768
      %v3775 = vmul.f32 %v3755, %v3768
      %v3776 = vmul.f32 %v3756, %v3768
      %v3777 = vmul.f32 %v3757, %v3768
      %v3778 = vmul.f32 %v3758, %v3768
      %v3779 = vmul.f32 %v3759, %v3768
      %v3780 = vmul.f32 %v3760, %v3768
      %v3781 = vmul.f32 %v3761, %v3768
      %v3782 = vmul.f32 %v3762, %v3768
      %v3783 = vmul.f32 %v3763, %v3768
      %v3784 = vmul.f32 %v3764, %v3768
      %v3785 = vadd.f32 %v3769, 0.0
      %v3786 = vadd.f32 %v3770, 0.0
      %v3787 = vadd.f32 %v3771, 0.0
      %v3788 = vadd.f32 %v3772, 0.0
      %v3789 = vadd.f32 %v3773, 0.0
      %v3790 = vadd.f32 %v3774, 0.0
      %v3791 = vadd.f32 %v3775, 0.0
      %v3792 = vadd.f32 %v3776, 0.0
      %v3793 = vadd.f32 %v3777, 0.0
      %v3794 = vadd.f32 %v3778, 0.0
      %v3795 = vadd.f32 %v3779, 0.0
      %v3796 = vadd.f32 %v3780, 0.0
      %v3797 = vadd.f32 %v3781, 0.0
      %v3798 = vadd.f32 %v3782, 0.0
      %v3799 = vadd.f32 %v3783, 0.0
      %v3800 = vadd.f32 %v3784, 0.0
      %v3801 = vld [vmem:[#allocation3 + $0x1] sm:$0xff]
      %v3802 = vld [vmem:[#allocation3 + $0x9] sm:$0xff]
      %v3803 = vld [vmem:[#allocation3 + $0x19] sm:$0xff]
      %v3804 = vld [vmem:[#allocation3 + $0x21] sm:$0xff]
      %v3805 = vld [vmem:[#allocation3 + $0x31] sm:$0xff]
      %v3806 = vld [vmem:[#allocation3 + $0x39] sm:$0xff]
      %v3807 = vld [vmem:[#allocation3 + $0x49] sm:$0xff]
      %v3808 = vld [vmem:[#allocation3 + $0x51] sm:$0xff]
      %v3809 = vld [vmem:[#allocation3 + $0x61] sm:$0xff]
      %v3810 = vld [vmem:[#allocation3 + $0x69] sm:$0xff]
      %v3811 = vld [vmem:[#allocation3 + $0x79] sm:$0xff]
      %v3812 = vld [vmem:[#allocation3 + $0x81] sm:$0xff]
      %v3813 = vld [vmem:[#allocation3 + $0x91] sm:$0xff]
      %v3814 = vld [vmem:[#allocation3 + $0x99] sm:$0xff]
      %v3815 = vld [vmem:[#allocation3 + $0xa9] sm:$0xff]
      %v3816 = vld [vmem:[#allocation3 + $0xb1] sm:$0xff]
      %v3817 = vlaneseq
      %v3818 = vshrl.u32 %v3817, 7
      %v3819 = vsub.s32 1, %v3818
      %v3820 = vrot.slane %v3742, %v3819
      %v3821 = vmul.f32 %v3801, %v3820
      %v3822 = vmul.f32 %v3802, %v3820
      %v3823 = vmul.f32 %v3803, %v3820
      %v3824 = vmul.f32 %v3804, %v3820
      %v3825 = vmul.f32 %v3805, %v3820
      %v3826 = vmul.f32 %v3806, %v3820
      %v3827 = vmul.f32 %v3807, %v3820
      %v3828 = vmul.f32 %v3808, %v3820
      %v3829 = vmul.f32 %v3809, %v3820
      %v3830 = vmul.f32 %v3810, %v3820
      %v3831 = vmul.f32 %v3811, %v3820
      %v3832 = vmul.f32 %v3812, %v3820
      %v3833 = vmul.f32 %v3813, %v3820
      %v3834 = vmul.f32 %v3814, %v3820
      %v3835 = vmul.f32 %v3815, %v3820
      %v3836 = vmul.f32 %v3816, %v3820
      %v3837 = vadd.f32 %v3785, %v3821
      %v3838 = vadd.f32 %v3786, %v3822
      %v3839 = vadd.f32 %v3787, %v3823
      %v3840 = vadd.f32 %v3788, %v3824
      %v3841 = vadd.f32 %v3789, %v3825
      %v3842 = vadd.f32 %v3790, %v3826
      %v3843 = vadd.f32 %v3791, %v3827
      %v3844 = vadd.f32 %v3792, %v3828
      %v3845 = vadd.f32 %v3793, %v3829
      %v3846 = vadd.f32 %v3794, %v3830
      %v3847 = vadd.f32 %v3795, %v3831
      %v3848 = vadd.f32 %v3796, %v3832
      %v3849 = vadd.f32 %v3797, %v3833
      %v3850 = vadd.f32 %v3798, %v3834
      %v3851 = vadd.f32 %v3799, %v3835
      %v3852 = vadd.f32 %v3800, %v3836
      %v3853 = vld [vmem:[#allocation3 + $0x2] sm:$0xff]
      %v3854 = vld [vmem:[#allocation3 + $0xa] sm:$0xff]
      %v3855 = vld [vmem:[#allocation3 + $0x1a] sm:$0xff]
      %v3856 = vld [vmem:[#allocation3 + $0x22] sm:$0xff]
      %v3857 = vld [vmem:[#allocation3 + $0x32] sm:$0xff]
      %v3858 = vld [vmem:[#allocation3 + $0x3a] sm:$0xff]
      %v3859 = vld [vmem:[#allocation3 + $0x4a] sm:$0xff]
      %v3860 = vld [vmem:[#allocation3 + $0x52] sm:$0xff]
      %v3861 = vld [vmem:[#allocation3 + $0x62] sm:$0xff]
      %v3862 = vld [vmem:[#allocation3 + $0x6a] sm:$0xff]
      %v3863 = vld [vmem:[#allocation3 + $0x7a] sm:$0xff]
      %v3864 = vld [vmem:[#allocation3 + $0x82] sm:$0xff]
      %v3865 = vld [vmem:[#allocation3 + $0x92] sm:$0xff]
      %v3866 = vld [vmem:[#allocation3 + $0x9a] sm:$0xff]
      %v3867 = vld [vmem:[#allocation3 + $0xaa] sm:$0xff]
      %v3868 = vld [vmem:[#allocation3 + $0xb2] sm:$0xff]
      %v3869 = vlaneseq
      %v3870 = vshrl.u32 %v3869, 7
      %v3871 = vsub.s32 2, %v3870
      %v3872 = vrot.slane %v3742, %v3871
      %v3873 = vmul.f32 %v3853, %v3872
      %v3874 = vmul.f32 %v3854, %v3872
      %v3875 = vmul.f32 %v3855, %v3872
      %v3876 = vmul.f32 %v3856, %v3872
      %v3877 = vmul.f32 %v3857, %v3872
      %v3878 = vmul.f32 %v3858, %v3872
      %v3879 = vmul.f32 %v3859, %v3872
      %v3880 = vmul.f32 %v3860, %v3872
      %v3881 = vmul.f32 %v3861, %v3872
      %v3882 = vmul.f32 %v3862, %v3872
      %v3883 = vmul.f32 %v3863, %v3872
      %v3884 = vmul.f32 %v3864, %v3872
      %v3885 = vmul.f32 %v3865, %v3872
      %v3886 = vmul.f32 %v3866, %v3872
      %v3887 = vmul.f32 %v3867, %v3872
      %v3888 = vmul.f32 %v3868, %v3872
      %v3889 = vadd.f32 %v3837, %v3873
      %v3890 = vadd.f32 %v3838, %v3874
      %v3891 = vadd.f32 %v3839, %v3875
      %v3892 = vadd.f32 %v3840, %v3876
      %v3893 = vadd.f32 %v3841, %v3877
      %v3894 = vadd.f32 %v3842, %v3878
      %v3895 = vadd.f32 %v3843, %v3879
      %v3896 = vadd.f32 %v3844, %v3880
      %v3897 = vadd.f32 %v3845, %v3881
      %v3898 = vadd.f32 %v3846, %v3882
      %v3899 = vadd.f32 %v3847, %v3883
      %v3900 = vadd.f32 %v3848, %v3884
      %v3901 = vadd.f32 %v3849, %v3885
      %v3902 = vadd.f32 %v3850, %v3886
      %v3903 = vadd.f32 %v3851, %v3887
      %v3904 = vadd.f32 %v3852, %v3888
      %v3905 = vld [vmem:[#allocation3 + $0x3] sm:$0xff]
      %v3906 = vld [vmem:[#allocation3 + $0xb] sm:$0xff]
      %v3907 = vld [vmem:[#allocation3 + $0x1b] sm:$0xff]
      %v3908 = vld [vmem:[#allocation3 + $0x23] sm:$0xff]
      %v3909 = vld [vmem:[#allocation3 + $0x33] sm:$0xff]
      %v3910 = vld [vmem:[#allocation3 + $0x3b] sm:$0xff]
      %v3911 = vld [vmem:[#allocation3 + $0x4b] sm:$0xff]
      %v3912 = vld [vmem:[#allocation3 + $0x53] sm:$0xff]
      %v3913 = vld [vmem:[#allocation3 + $0x63] sm:$0xff]
      %v3914 = vld [vmem:[#allocation3 + $0x6b] sm:$0xff]
      %v3915 = vld [vmem:[#allocation3 + $0x7b] sm:$0xff]
      %v3916 = vld [vmem:[#allocation3 + $0x83] sm:$0xff]
      %v3917 = vld [vmem:[#allocation3 + $0x93] sm:$0xff]
      %v3918 = vld [vmem:[#allocation3 + $0x9b] sm:$0xff]
      %v3919 = vld [vmem:[#allocation3 + $0xab] sm:$0xff]
      %v3920 = vld [vmem:[#allocation3 + $0xb3] sm:$0xff]
      %v3921 = vlaneseq
      %v3922 = vshrl.u32 %v3921, 7
      %v3923 = vsub.s32 3, %v3922
      %v3924 = vrot.slane %v3742, %v3923
      %v3925 = vmul.f32 %v3905, %v3924
      %v3926 = vmul.f32 %v3906, %v3924
      %v3927 = vmul.f32 %v3907, %v3924
      %v3928 = vmul.f32 %v3908, %v3924
      %v3929 = vmul.f32 %v3909, %v3924
      %v3930 = vmul.f32 %v3910, %v3924
      %v3931 = vmul.f32 %v3911, %v3924
      %v3932 = vmul.f32 %v3912, %v3924
      %v3933 = vmul.f32 %v3913, %v3924
      %v3934 = vmul.f32 %v3914, %v3924
      %v3935 = vmul.f32 %v3915, %v3924
      %v3936 = vmul.f32 %v3916, %v3924
      %v3937 = vmul.f32 %v3917, %v3924
      %v3938 = vmul.f32 %v3918, %v3924
      %v3939 = vmul.f32 %v3919, %v3924
      %v3940 = vmul.f32 %v3920, %v3924
      %v3941 = vadd.f32 %v3889, %v3925
      %v3942 = vadd.f32 %v3890, %v3926
      %v3943 = vadd.f32 %v3891, %v3927
      %v3944 = vadd.f32 %v3892, %v3928
      %v3945 = vadd.f32 %v3893, %v3929
      %v3946 = vadd.f32 %v3894, %v3930
      %v3947 = vadd.f32 %v3895, %v3931
      %v3948 = vadd.f32 %v3896, %v3932
      %v3949 = vadd.f32 %v3897, %v3933
      %v3950 = vadd.f32 %v3898, %v3934
      %v3951 = vadd.f32 %v3899, %v3935
      %v3952 = vadd.f32 %v3900, %v3936
      %v3953 = vadd.f32 %v3901, %v3937
      %v3954 = vadd.f32 %v3902, %v3938
      %v3955 = vadd.f32 %v3903, %v3939
      %v3956 = vadd.f32 %v3904, %v3940
      %v3957 = vld [vmem:[#allocation3 + $0x4] sm:$0xff]
      %v3958 = vld [vmem:[#allocation3 + $0xc] sm:$0xff]
      %v3959 = vld [vmem:[#allocation3 + $0x1c] sm:$0xff]
      %v3960 = vld [vmem:[#allocation3 + $0x24] sm:$0xff]
      %v3961 = vld [vmem:[#allocation3 + $0x34] sm:$0xff]
      %v3962 = vld [vmem:[#allocation3 + $0x3c] sm:$0xff]
      %v3963 = vld [vmem:[#allocation3 + $0x4c] sm:$0xff]
      %v3964 = vld [vmem:[#allocation3 + $0x54] sm:$0xff]
      %v3965 = vld [vmem:[#allocation3 + $0x64] sm:$0xff]
      %v3966 = vld [vmem:[#allocation3 + $0x6c] sm:$0xff]
      %v3967 = vld [vmem:[#allocation3 + $0x7c] sm:$0xff]
      %v3968 = vld [vmem:[#allocation3 + $0x84] sm:$0xff]
      %v3969 = vld [vmem:[#allocation3 + $0x94] sm:$0xff]
      %v3970 = vld [vmem:[#allocation3 + $0x9c] sm:$0xff]
      %v3971 = vld [vmem:[#allocation3 + $0xac] sm:$0xff]
      %v3972 = vld [vmem:[#allocation3 + $0xb4] sm:$0xff]
      %v3973 = vlaneseq
      %v3974 = vshrl.u32 %v3973, 7
      %v3975 = vsub.s32 4, %v3974
      %v3976 = vrot.slane %v3742, %v3975
      %v3977 = vmul.f32 %v3957, %v3976
      %v3978 = vmul.f32 %v3958, %v3976
      %v3979 = vmul.f32 %v3959, %v3976
      %v3980 = vmul.f32 %v3960, %v3976
      %v3981 = vmul.f32 %v3961, %v3976
      %v3982 = vmul.f32 %v3962, %v3976
      %v3983 = vmul.f32 %v3963, %v3976
      %v3984 = vmul.f32 %v3964, %v3976
      %v3985 = vmul.f32 %v3965, %v3976
      %v3986 = vmul.f32 %v3966, %v3976
      %v3987 = vmul.f32 %v3967, %v3976
      %v3988 = vmul.f32 %v3968, %v3976
      %v3989 = vmul.f32 %v3969, %v3976
      %v3990 = vmul.f32 %v3970, %v3976
      %v3991 = vmul.f32 %v3971, %v3976
      %v3992 = vmul.f32 %v3972, %v3976
      %v3993 = vadd.f32 %v3941, %v3977
      %v3994 = vadd.f32 %v3942, %v3978
      %v3995 = vadd.f32 %v3943, %v3979
      %v3996 = vadd.f32 %v3944, %v3980
      %v3997 = vadd.f32 %v3945, %v3981
      %v3998 = vadd.f32 %v3946, %v3982
      %v3999 = vadd.f32 %v3947, %v3983
      %v4000 = vadd.f32 %v3948, %v3984
      %v4001 = vadd.f32 %v3949, %v3985
      %v4002 = vadd.f32 %v3950, %v3986
      %v4003 = vadd.f32 %v3951, %v3987
      %v4004 = vadd.f32 %v3952, %v3988
      %v4005 = vadd.f32 %v3953, %v3989
      %v4006 = vadd.f32 %v3954, %v3990
      %v4007 = vadd.f32 %v3955, %v3991
      %v4008 = vadd.f32 %v3956, %v3992
      %v4009 = vld [vmem:[%s1629] sm:$0xff]
      %v4010 = vld [vmem:[%s1629 + $0x8] sm:$0xff]
      %v4011 = vld [vmem:[%s1629 + $0x18] sm:$0xff]
      %v4012 = vld [vmem:[%s1629 + $0x20] sm:$0xff]
      %v4013 = vld [vmem:[%s1629 + $0x30] sm:$0xff]
      %v4014 = vld [vmem:[%s1629 + $0x38] sm:$0xff]
      %v4015 = vld [vmem:[%s1629 + $0x48] sm:$0xff]
      %v4016 = vld [vmem:[%s1629 + $0x50] sm:$0xff]
      %v4017 = vld [vmem:[%s1629 + $0x60] sm:$0xff]
      %v4018 = vld [vmem:[%s1629 + $0x68] sm:$0xff]
      %v4019 = vld [vmem:[%s1629 + $0x78] sm:$0xff]
      %v4020 = vld [vmem:[%s1629 + $0x80] sm:$0xff]
      %v4021 = vld [vmem:[%s1629 + $0x90] sm:$0xff]
      %v4022 = vld [vmem:[%s1629 + $0x98] sm:$0xff]
      %v4023 = vld [vmem:[%s1629 + $0xa8] sm:$0xff]
      %v4024 = vld [vmem:[%s1629 + $0xb0] sm:$0xff]
      %v4025 = vlaneseq
      %v4026 = vshrl.u32 %v4025, 7
      %v4027 = vsub.s32 0, %v4026
      %v4028 = vrot.slane %v3743, %v4027
      %v4029 = vmul.f32 %v4009, %v4028
      %v4030 = vmul.f32 %v4010, %v4028
      %v4031 = vmul.f32 %v4011, %v4028
      %v4032 = vmul.f32 %v4012, %v4028
      %v4033 = vmul.f32 %v4013, %v4028
      %v4034 = vmul.f32 %v4014, %v4028
      %v4035 = vmul.f32 %v4015, %v4028
      %v4036 = vmul.f32 %v4016, %v4028
      %v4037 = vmul.f32 %v4017, %v4028
      %v4038 = vmul.f32 %v4018, %v4028
      %v4039 = vmul.f32 %v4019, %v4028
      %v4040 = vmul.f32 %v4020, %v4028
      %v4041 = vmul.f32 %v4021, %v4028
      %v4042 = vmul.f32 %v4022, %v4028
      %v4043 = vmul.f32 %v4023, %v4028
      %v4044 = vmul.f32 %v4024, %v4028
      %v4045 = vadd.f32 %v3993, %v4029
      %v4046 = vadd.f32 %v3994, %v4030
      %v4047 = vadd.f32 %v3995, %v4031
      %v4048 = vadd.f32 %v3996, %v4032
      %v4049 = vadd.f32 %v3997, %v4033
      %v4050 = vadd.f32 %v3998, %v4034
      %v4051 = vadd.f32 %v3999, %v4035
      %v4052 = vadd.f32 %v4000, %v4036
      %v4053 = vadd.f32 %v4001, %v4037
      %v4054 = vadd.f32 %v4002, %v4038
      %v4055 = vadd.f32 %v4003, %v4039
      %v4056 = vadd.f32 %v4004, %v4040
      %v4057 = vadd.f32 %v4005, %v4041
      %v4058 = vadd.f32 %v4006, %v4042
      %v4059 = vadd.f32 %v4007, %v4043
      %v4060 = vadd.f32 %v4008, %v4044
      %v4061 = vlaneseq
      %v4062 = vshrl.u32 %v4061, 7
      %v4063 = vsub.s32 1, %v4062
      %v4064 = vrot.slane %v3743, %v4063
      %v4065 = vmul.f32 %v1630, %v4064
      %v4066 = vmul.f32 %v1631, %v4064
      %v4067 = vmul.f32 %v1632, %v4064
      %v4068 = vmul.f32 %v1633, %v4064
      %v4069 = vmul.f32 %v1634, %v4064
      %v4070 = vmul.f32 %v1635, %v4064
      %v4071 = vmul.f32 %v1636, %v4064
      %v4072 = vmul.f32 %v1637, %v4064
      %v4073 = vmul.f32 %v1638, %v4064
      %v4074 = vmul.f32 %v1639, %v4064
      %v4075 = vmul.f32 %v1640, %v4064
      %v4076 = vmul.f32 %v1641, %v4064
      %v4077 = vmul.f32 %v1642, %v4064
      %v4078 = vmul.f32 %v1643, %v4064
      %v4079 = vmul.f32 %v1644, %v4064
      %v4080 = vmul.f32 %v1645, %v4064
      %v4081 = vadd.f32 %v4045, %v4065
      %v4082 = vadd.f32 %v4046, %v4066
      %v4083 = vadd.f32 %v4047, %v4067
      %v4084 = vadd.f32 %v4048, %v4068
      %v4085 = vadd.f32 %v4049, %v4069
      %v4086 = vadd.f32 %v4050, %v4070
      %v4087 = vadd.f32 %v4051, %v4071
      %v4088 = vadd.f32 %v4052, %v4072
      %v4089 = vadd.f32 %v4053, %v4073
      %v4090 = vadd.f32 %v4054, %v4074
      %v4091 = vadd.f32 %v4055, %v4075
      %v4092 = vadd.f32 %v4056, %v4076
      %v4093 = vadd.f32 %v4057, %v4077
      %v4094 = vadd.f32 %v4058, %v4078
      %v4095 = vadd.f32 %v4059, %v4079
      %v4096 = vadd.f32 %v4060, %v4080
      %v4097 = vlaneseq
      %v4098 = vshrl.u32 %v4097, 7
      %v4099 = vsub.s32 2, %v4098
      %v4100 = vrot.slane %v3743, %v4099
      %v4101 = vmul.f32 %v1682, %v4100
      %v4102 = vmul.f32 %v1683, %v4100
      %v4103 = vmul.f32 %v1684, %v4100
      %v4104 = vmul.f32 %v1685, %v4100
      %v4105 = vmul.f32 %v1686, %v4100
      %v4106 = vmul.f32 %v1687, %v4100
      %v4107 = vmul.f32 %v1688, %v4100
      %v4108 = vmul.f32 %v1689, %v4100
      %v4109 = vmul.f32 %v1690, %v4100
      %v4110 = vmul.f32 %v1691, %v4100
      %v4111 = vmul.f32 %v1692, %v4100
      %v4112 = vmul.f32 %v1693, %v4100
      %v4113 = vmul.f32 %v1694, %v4100
      %v4114 = vmul.f32 %v1695, %v4100
      %v4115 = vmul.f32 %v1696, %v4100
      %v4116 = vmul.f32 %v1697, %v4100
      %v4117 = vadd.f32 %v4081, %v4101
      %v4118 = vadd.f32 %v4082, %v4102
      %v4119 = vadd.f32 %v4083, %v4103
      %v4120 = vadd.f32 %v4084, %v4104
      %v4121 = vadd.f32 %v4085, %v4105
      %v4122 = vadd.f32 %v4086, %v4106
      %v4123 = vadd.f32 %v4087, %v4107
      %v4124 = vadd.f32 %v4088, %v4108
      %v4125 = vadd.f32 %v4089, %v4109
      %v4126 = vadd.f32 %v4090, %v4110
      %v4127 = vadd.f32 %v4091, %v4111
      %v4128 = vadd.f32 %v4092, %v4112
      %v4129 = vadd.f32 %v4093, %v4113
      %v4130 = vadd.f32 %v4094, %v4114
      %v4131 = vadd.f32 %v4095, %v4115
      %v4132 = vadd.f32 %v4096, %v4116
      %v4133 = vlaneseq
      %v4134 = vshrl.u32 %v4133, 7
      %v4135 = vsub.s32 3, %v4134
      %v4136 = vrot.slane %v3743, %v4135
      %v4137 = vmul.f32 %v1734, %v4136
      %v4138 = vmul.f32 %v1735, %v4136
      %v4139 = vmul.f32 %v1736, %v4136
      %v4140 = vmul.f32 %v1737, %v4136
      %v4141 = vmul.f32 %v1738, %v4136
      %v4142 = vmul.f32 %v1739, %v4136
      %v4143 = vmul.f32 %v1740, %v4136
      %v4144 = vmul.f32 %v1741, %v4136
      %v4145 = vmul.f32 %v1742, %v4136
      %v4146 = vmul.f32 %v1743, %v4136
      %v4147 = vmul.f32 %v1744, %v4136
      %v4148 = vmul.f32 %v1745, %v4136
      %v4149 = vmul.f32 %v1746, %v4136
      %v4150 = vmul.f32 %v1747, %v4136
      %v4151 = vmul.f32 %v1748, %v4136
      %v4152 = vmul.f32 %v1749, %v4136
      %v4153 = vadd.f32 %v4117, %v4137
      %v4154 = vadd.f32 %v4118, %v4138
      %v4155 = vadd.f32 %v4119, %v4139
      %v4156 = vadd.f32 %v4120, %v4140
      %v4157 = vadd.f32 %v4121, %v4141
      %v4158 = vadd.f32 %v4122, %v4142
      %v4159 = vadd.f32 %v4123, %v4143
      %v4160 = vadd.f32 %v4124, %v4144
      %v4161 = vadd.f32 %v4125, %v4145
      %v4162 = vadd.f32 %v4126, %v4146
      %v4163 = vadd.f32 %v4127, %v4147
      %v4164 = vadd.f32 %v4128, %v4148
      %v4165 = vadd.f32 %v4129, %v4149
      %v4166 = vadd.f32 %v4130, %v4150
      %v4167 = vadd.f32 %v4131, %v4151
      %v4168 = vadd.f32 %v4132, %v4152
      %v4169 = vld [vmem:[%s1629 + $0x4] sm:$0xff]
      %v4170 = vld [vmem:[%s1629 + $0xc] sm:$0xff]
      %v4171 = vld [vmem:[%s1629 + $0x1c] sm:$0xff]
      %v4172 = vld [vmem:[%s1629 + $0x24] sm:$0xff]
      %v4173 = vld [vmem:[%s1629 + $0x34] sm:$0xff]
      %v4174 = vld [vmem:[%s1629 + $0x3c] sm:$0xff]
      %v4175 = vld [vmem:[%s1629 + $0x4c] sm:$0xff]
      %v4176 = vld [vmem:[%s1629 + $0x54] sm:$0xff]
      %v4177 = vld [vmem:[%s1629 + $0x64] sm:$0xff]
      %v4178 = vld [vmem:[%s1629 + $0x6c] sm:$0xff]
      %v4179 = vld [vmem:[%s1629 + $0x7c] sm:$0xff]
      %v4180 = vld [vmem:[%s1629 + $0x84] sm:$0xff]
      %v4181 = vld [vmem:[%s1629 + $0x94] sm:$0xff]
      %v4182 = vld [vmem:[%s1629 + $0x9c] sm:$0xff]
      %v4183 = vld [vmem:[%s1629 + $0xac] sm:$0xff]
      %v4184 = vld [vmem:[%s1629 + $0xb4] sm:$0xff]
      %v4185 = vlaneseq
      %v4186 = vshrl.u32 %v4185, 7
      %v4187 = vsub.s32 4, %v4186
      %v4188 = vrot.slane %v3743, %v4187
      %v4189 = vmul.f32 %v4169, %v4188
      %v4190 = vmul.f32 %v4170, %v4188
      %v4191 = vmul.f32 %v4171, %v4188
      %v4192 = vmul.f32 %v4172, %v4188
      %v4193 = vmul.f32 %v4173, %v4188
      %v4194 = vmul.f32 %v4174, %v4188
      %v4195 = vmul.f32 %v4175, %v4188
      %v4196 = vmul.f32 %v4176, %v4188
      %v4197 = vmul.f32 %v4177, %v4188
      %v4198 = vmul.f32 %v4178, %v4188
      %v4199 = vmul.f32 %v4179, %v4188
      %v4200 = vmul.f32 %v4180, %v4188
      %v4201 = vmul.f32 %v4181, %v4188
      %v4202 = vmul.f32 %v4182, %v4188
      %v4203 = vmul.f32 %v4183, %v4188
      %v4204 = vmul.f32 %v4184, %v4188
      %v4205 = vadd.f32 %v4153, %v4189
      %v4206 = vadd.f32 %v4154, %v4190
      %v4207 = vadd.f32 %v4155, %v4191
      %v4208 = vadd.f32 %v4156, %v4192
      %v4209 = vadd.f32 %v4157, %v4193
      %v4210 = vadd.f32 %v4158, %v4194
      %v4211 = vadd.f32 %v4159, %v4195
      %v4212 = vadd.f32 %v4160, %v4196
      %v4213 = vadd.f32 %v4161, %v4197
      %v4214 = vadd.f32 %v4162, %v4198
      %v4215 = vadd.f32 %v4163, %v4199
      %v4216 = vadd.f32 %v4164, %v4200
      %v4217 = vadd.f32 %v4165, %v4201
      %v4218 = vadd.f32 %v4166, %v4202
      %v4219 = vadd.f32 %v4167, %v4203
      %v4220 = vadd.f32 %v4168, %v4204
      %v4221 = vld [vmem:[%s1087] sm:$0xff]
      %v4222 = vld [vmem:[%s1087 + $0x8] sm:$0xff]
      %v4223 = vld [vmem:[%s1087 + $0x18] sm:$0xff]
      %v4224 = vld [vmem:[%s1087 + $0x20] sm:$0xff]
      %v4225 = vld [vmem:[%s1087 + $0x30] sm:$0xff]
      %v4226 = vld [vmem:[%s1087 + $0x38] sm:$0xff]
      %v4227 = vld [vmem:[%s1087 + $0x48] sm:$0xff]
      %v4228 = vld [vmem:[%s1087 + $0x50] sm:$0xff]
      %v4229 = vld [vmem:[%s1087 + $0x60] sm:$0xff]
      %v4230 = vld [vmem:[%s1087 + $0x68] sm:$0xff]
      %v4231 = vld [vmem:[%s1087 + $0x78] sm:$0xff]
      %v4232 = vld [vmem:[%s1087 + $0x80] sm:$0xff]
      %v4233 = vld [vmem:[%s1087 + $0x90] sm:$0xff]
      %v4234 = vld [vmem:[%s1087 + $0x98] sm:$0xff]
      %v4235 = vld [vmem:[%s1087 + $0xa8] sm:$0xff]
      %v4236 = vld [vmem:[%s1087 + $0xb0] sm:$0xff]
      %v4237 = vlaneseq
      %v4238 = vshrl.u32 %v4237, 7
      %v4239 = vsub.s32 0, %v4238
      %v4240 = vrot.slane %v3744, %v4239
      %v4241 = vmul.f32 %v4221, %v4240
      %v4242 = vmul.f32 %v4222, %v4240
      %v4243 = vmul.f32 %v4223, %v4240
      %v4244 = vmul.f32 %v4224, %v4240
      %v4245 = vmul.f32 %v4225, %v4240
      %v4246 = vmul.f32 %v4226, %v4240
      %v4247 = vmul.f32 %v4227, %v4240
      %v4248 = vmul.f32 %v4228, %v4240
      %v4249 = vmul.f32 %v4229, %v4240
      %v4250 = vmul.f32 %v4230, %v4240
      %v4251 = vmul.f32 %v4231, %v4240
      %v4252 = vmul.f32 %v4232, %v4240
      %v4253 = vmul.f32 %v4233, %v4240
      %v4254 = vmul.f32 %v4234, %v4240
      %v4255 = vmul.f32 %v4235, %v4240
      %v4256 = vmul.f32 %v4236, %v4240
      %v4257 = vadd.f32 %v4205, %v4241
      %v4258 = vadd.f32 %v4206, %v4242
      %v4259 = vadd.f32 %v4207, %v4243
      %v4260 = vadd.f32 %v4208, %v4244
      %v4261 = vadd.f32 %v4209, %v4245
      %v4262 = vadd.f32 %v4210, %v4246
      %v4263 = vadd.f32 %v4211, %v4247
      %v4264 = vadd.f32 %v4212, %v4248
      %v4265 = vadd.f32 %v4213, %v4249
      %v4266 = vadd.f32 %v4214, %v4250
      %v4267 = vadd.f32 %v4215, %v4251
      %v4268 = vadd.f32 %v4216, %v4252
      %v4269 = vadd.f32 %v4217, %v4253
      %v4270 = vadd.f32 %v4218, %v4254
      %v4271 = vadd.f32 %v4219, %v4255
      %v4272 = vadd.f32 %v4220, %v4256
      %v4273 = vlaneseq
      %v4274 = vshrl.u32 %v4273, 7
      %v4275 = vsub.s32 1, %v4274
      %v4276 = vrot.slane %v3744, %v4275
      %v4277 = vmul.f32 %v1786, %v4276
      %v4278 = vmul.f32 %v1787, %v4276
      %v4279 = vmul.f32 %v1788, %v4276
      %v4280 = vmul.f32 %v1789, %v4276
      %v4281 = vmul.f32 %v1790, %v4276
      %v4282 = vmul.f32 %v1791, %v4276
      %v4283 = vmul.f32 %v1792, %v4276
      %v4284 = vmul.f32 %v1793, %v4276
      %v4285 = vmul.f32 %v1794, %v4276
      %v4286 = vmul.f32 %v1795, %v4276
      %v4287 = vmul.f32 %v1796, %v4276
      %v4288 = vmul.f32 %v1797, %v4276
      %v4289 = vmul.f32 %v1798, %v4276
      %v4290 = vmul.f32 %v1799, %v4276
      %v4291 = vmul.f32 %v1800, %v4276
      %v4292 = vmul.f32 %v1801, %v4276
      %v4293 = vadd.f32 %v4257, %v4277
      %v4294 = vadd.f32 %v4258, %v4278
      %v4295 = vadd.f32 %v4259, %v4279
      %v4296 = vadd.f32 %v4260, %v4280
      %v4297 = vadd.f32 %v4261, %v4281
      %v4298 = vadd.f32 %v4262, %v4282
      %v4299 = vadd.f32 %v4263, %v4283
      %v4300 = vadd.f32 %v4264, %v4284
      %v4301 = vadd.f32 %v4265, %v4285
      %v4302 = vadd.f32 %v4266, %v4286
      %v4303 = vadd.f32 %v4267, %v4287
      %v4304 = vadd.f32 %v4268, %v4288
      %v4305 = vadd.f32 %v4269, %v4289
      %v4306 = vadd.f32 %v4270, %v4290
      %v4307 = vadd.f32 %v4271, %v4291
      %v4308 = vadd.f32 %v4272, %v4292
      %v4309 = vlaneseq
      %v4310 = vshrl.u32 %v4309, 7
      %v4311 = vsub.s32 2, %v4310
      %v4312 = vrot.slane %v3744, %v4311
      %v4313 = vmul.f32 %v1838, %v4312
      %v4314 = vmul.f32 %v1839, %v4312
      %v4315 = vmul.f32 %v1840, %v4312
      %v4316 = vmul.f32 %v1841, %v4312
      %v4317 = vmul.f32 %v1842, %v4312
      %v4318 = vmul.f32 %v1843, %v4312
      %v4319 = vmul.f32 %v1844, %v4312
      %v4320 = vmul.f32 %v1845, %v4312
      %v4321 = vmul.f32 %v1846, %v4312
      %v4322 = vmul.f32 %v1847, %v4312
      %v4323 = vmul.f32 %v1848, %v4312
      %v4324 = vmul.f32 %v1849, %v4312
      %v4325 = vmul.f32 %v1850, %v4312
      %v4326 = vmul.f32 %v1851, %v4312
      %v4327 = vmul.f32 %v1852, %v4312
      %v4328 = vmul.f32 %v1853, %v4312
      %v4329 = vadd.f32 %v4293, %v4313
      %v4330 = vadd.f32 %v4294, %v4314
      %v4331 = vadd.f32 %v4295, %v4315
      %v4332 = vadd.f32 %v4296, %v4316
      %v4333 = vadd.f32 %v4297, %v4317
      %v4334 = vadd.f32 %v4298, %v4318
      %v4335 = vadd.f32 %v4299, %v4319
      %v4336 = vadd.f32 %v4300, %v4320
      %v4337 = vadd.f32 %v4301, %v4321
      %v4338 = vadd.f32 %v4302, %v4322
      %v4339 = vadd.f32 %v4303, %v4323
      %v4340 = vadd.f32 %v4304, %v4324
      %v4341 = vadd.f32 %v4305, %v4325
      %v4342 = vadd.f32 %v4306, %v4326
      %v4343 = vadd.f32 %v4307, %v4327
      %v4344 = vadd.f32 %v4308, %v4328
      %v4345 = vlaneseq
      %v4346 = vshrl.u32 %v4345, 7
      %v4347 = vsub.s32 3, %v4346
      %v4348 = vrot.slane %v3744, %v4347
      %v4349 = vmul.f32 %v1890, %v4348
      %v4350 = vmul.f32 %v1891, %v4348
      %v4351 = vmul.f32 %v1892, %v4348
      %v4352 = vmul.f32 %v1893, %v4348
      %v4353 = vmul.f32 %v1894, %v4348
      %v4354 = vmul.f32 %v1895, %v4348
      %v4355 = vmul.f32 %v1896, %v4348
      %v4356 = vmul.f32 %v1897, %v4348
      %v4357 = vmul.f32 %v1898, %v4348
      %v4358 = vmul.f32 %v1899, %v4348
      %v4359 = vmul.f32 %v1900, %v4348
      %v4360 = vmul.f32 %v1901, %v4348
      %v4361 = vmul.f32 %v1902, %v4348
      %v4362 = vmul.f32 %v1903, %v4348
      %v4363 = vmul.f32 %v1904, %v4348
      %v4364 = vmul.f32 %v1905, %v4348
      %v4365 = vadd.f32 %v4329, %v4349
      %v4366 = vadd.f32 %v4330, %v4350
      %v4367 = vadd.f32 %v4331, %v4351
      %v4368 = vadd.f32 %v4332, %v4352
      %v4369 = vadd.f32 %v4333, %v4353
      %v4370 = vadd.f32 %v4334, %v4354
      %v4371 = vadd.f32 %v4335, %v4355
      %v4372 = vadd.f32 %v4336, %v4356
      %v4373 = vadd.f32 %v4337, %v4357
      %v4374 = vadd.f32 %v4338, %v4358
      %v4375 = vadd.f32 %v4339, %v4359
      %v4376 = vadd.f32 %v4340, %v4360
      %v4377 = vadd.f32 %v4341, %v4361
      %v4378 = vadd.f32 %v4342, %v4362
      %v4379 = vadd.f32 %v4343, %v4363
      %v4380 = vadd.f32 %v4344, %v4364
      %v4381 = vld [vmem:[%s1087 + $0x4] sm:$0xff]
      %v4382 = vld [vmem:[%s1087 + $0xc] sm:$0xff]
      %v4383 = vld [vmem:[%s1087 + $0x1c] sm:$0xff]
      %v4384 = vld [vmem:[%s1087 + $0x24] sm:$0xff]
      %v4385 = vld [vmem:[%s1087 + $0x34] sm:$0xff]
      %v4386 = vld [vmem:[%s1087 + $0x3c] sm:$0xff]
      %v4387 = vld [vmem:[%s1087 + $0x4c] sm:$0xff]
      %v4388 = vld [vmem:[%s1087 + $0x54] sm:$0xff]
      %v4389 = vld [vmem:[%s1087 + $0x64] sm:$0xff]
      %v4390 = vld [vmem:[%s1087 + $0x6c] sm:$0xff]
      %v4391 = vld [vmem:[%s1087 + $0x7c] sm:$0xff]
      %v4392 = vld [vmem:[%s1087 + $0x84] sm:$0xff]
      %v4393 = vld [vmem:[%s1087 + $0x94] sm:$0xff]
      %v4394 = vld [vmem:[%s1087 + $0x9c] sm:$0xff]
      %v4395 = vld [vmem:[%s1087 + $0xac] sm:$0xff]
      %v4396 = vld [vmem:[%s1087 + $0xb4] sm:$0xff]
      %v4397 = vlaneseq
      %v4398 = vshrl.u32 %v4397, 7
      %v4399 = vsub.s32 4, %v4398
      %v4400 = vrot.slane %v3744, %v4399
      %v4401 = vmul.f32 %v4381, %v4400
      %v4402 = vmul.f32 %v4382, %v4400
      %v4403 = vmul.f32 %v4383, %v4400
      %v4404 = vmul.f32 %v4384, %v4400
      %v4405 = vmul.f32 %v4385, %v4400
      %v4406 = vmul.f32 %v4386, %v4400
      %v4407 = vmul.f32 %v4387, %v4400
      %v4408 = vmul.f32 %v4388, %v4400
      %v4409 = vmul.f32 %v4389, %v4400
      %v4410 = vmul.f32 %v4390, %v4400
      %v4411 = vmul.f32 %v4391, %v4400
      %v4412 = vmul.f32 %v4392, %v4400
      %v4413 = vmul.f32 %v4393, %v4400
      %v4414 = vmul.f32 %v4394, %v4400
      %v4415 = vmul.f32 %v4395, %v4400
      %v4416 = vmul.f32 %v4396, %v4400
      %v4417 = vadd.f32 %v4365, %v4401
      %v4418 = vadd.f32 %v4366, %v4402
      %v4419 = vadd.f32 %v4367, %v4403
      %v4420 = vadd.f32 %v4368, %v4404
      %v4421 = vadd.f32 %v4369, %v4405
      %v4422 = vadd.f32 %v4370, %v4406
      %v4423 = vadd.f32 %v4371, %v4407
      %v4424 = vadd.f32 %v4372, %v4408
      %v4425 = vadd.f32 %v4373, %v4409
      %v4426 = vadd.f32 %v4374, %v4410
      %v4427 = vadd.f32 %v4375, %v4411
      %v4428 = vadd.f32 %v4376, %v4412
      %v4429 = vadd.f32 %v4377, %v4413
      %v4430 = vadd.f32 %v4378, %v4414
      %v4431 = vadd.f32 %v4379, %v4415
      %v4432 = vadd.f32 %v4380, %v4416
      %v4433 = vld [vmem:[%s1942] sm:$0xff]
      %v4434 = vld [vmem:[%s1942 + $0x8] sm:$0xff]
      %v4435 = vld [vmem:[%s1942 + $0x18] sm:$0xff]
      %v4436 = vld [vmem:[%s1942 + $0x20] sm:$0xff]
      %v4437 = vld [vmem:[%s1942 + $0x30] sm:$0xff]
      %v4438 = vld [vmem:[%s1942 + $0x38] sm:$0xff]
      %v4439 = vld [vmem:[%s1942 + $0x48] sm:$0xff]
      %v4440 = vld [vmem:[%s1942 + $0x50] sm:$0xff]
      %v4441 = vld [vmem:[%s1942 + $0x60] sm:$0xff]
      %v4442 = vld [vmem:[%s1942 + $0x68] sm:$0xff]
      %v4443 = vld [vmem:[%s1942 + $0x78] sm:$0xff]
      %v4444 = vld [vmem:[%s1942 + $0x80] sm:$0xff]
      %v4445 = vld [vmem:[%s1942 + $0x90] sm:$0xff]
      %v4446 = vld [vmem:[%s1942 + $0x98] sm:$0xff]
      %v4447 = vld [vmem:[%s1942 + $0xa8] sm:$0xff]
      %v4448 = vld [vmem:[%s1942 + $0xb0] sm:$0xff]
      %v4449 = vlaneseq
      %v4450 = vshrl.u32 %v4449, 7
      %v4451 = vsub.s32 0, %v4450
      %v4452 = vrot.slane %v3745, %v4451
      %v4453 = vmul.f32 %v4433, %v4452
      %v4454 = vmul.f32 %v4434, %v4452
      %v4455 = vmul.f32 %v4435, %v4452
      %v4456 = vmul.f32 %v4436, %v4452
      %v4457 = vmul.f32 %v4437, %v4452
      %v4458 = vmul.f32 %v4438, %v4452
      %v4459 = vmul.f32 %v4439, %v4452
      %v4460 = vmul.f32 %v4440, %v4452
      %v4461 = vmul.f32 %v4441, %v4452
      %v4462 = vmul.f32 %v4442, %v4452
      %v4463 = vmul.f32 %v4443, %v4452
      %v4464 = vmul.f32 %v4444, %v4452
      %v4465 = vmul.f32 %v4445, %v4452
      %v4466 = vmul.f32 %v4446, %v4452
      %v4467 = vmul.f32 %v4447, %v4452
      %v4468 = vmul.f32 %v4448, %v4452
      %v4469 = vadd.f32 %v4417, %v4453
      %v4470 = vadd.f32 %v4418, %v4454
      %v4471 = vadd.f32 %v4419, %v4455
      %v4472 = vadd.f32 %v4420, %v4456
      %v4473 = vadd.f32 %v4421, %v4457
      %v4474 = vadd.f32 %v4422, %v4458
      %v4475 = vadd.f32 %v4423, %v4459
      %v4476 = vadd.f32 %v4424, %v4460
      %v4477 = vadd.f32 %v4425, %v4461
      %v4478 = vadd.f32 %v4426, %v4462
      %v4479 = vadd.f32 %v4427, %v4463
      %v4480 = vadd.f32 %v4428, %v4464
      %v4481 = vadd.f32 %v4429, %v4465
      %v4482 = vadd.f32 %v4430, %v4466
      %v4483 = vadd.f32 %v4431, %v4467
      %v4484 = vadd.f32 %v4432, %v4468
      %v4485 = vlaneseq
      %v4486 = vshrl.u32 %v4485, 7
      %v4487 = vsub.s32 1, %v4486
      %v4488 = vrot.slane %v3745, %v4487
      %v4489 = vmul.f32 %v1943, %v4488
      %v4490 = vmul.f32 %v1944, %v4488
      %v4491 = vmul.f32 %v1945, %v4488
      %v4492 = vmul.f32 %v1946, %v4488
      %v4493 = vmul.f32 %v1947, %v4488
      %v4494 = vmul.f32 %v1948, %v4488
      %v4495 = vmul.f32 %v1949, %v4488
      %v4496 = vmul.f32 %v1950, %v4488
      %v4497 = vmul.f32 %v1951, %v4488
      %v4498 = vmul.f32 %v1952, %v4488
      %v4499 = vmul.f32 %v1953, %v4488
      %v4500 = vmul.f32 %v1954, %v4488
      %v4501 = vmul.f32 %v1955, %v4488
      %v4502 = vmul.f32 %v1956, %v4488
      %v4503 = vmul.f32 %v1957, %v4488
      %v4504 = vmul.f32 %v1958, %v4488
      %v4505 = vadd.f32 %v4469, %v4489
      %v4506 = vadd.f32 %v4470, %v4490
      %v4507 = vadd.f32 %v4471, %v4491
      %v4508 = vadd.f32 %v4472, %v4492
      %v4509 = vadd.f32 %v4473, %v4493
      %v4510 = vadd.f32 %v4474, %v4494
      %v4511 = vadd.f32 %v4475, %v4495
      %v4512 = vadd.f32 %v4476, %v4496
      %v4513 = vadd.f32 %v4477, %v4497
      %v4514 = vadd.f32 %v4478, %v4498
      %v4515 = vadd.f32 %v4479, %v4499
      %v4516 = vadd.f32 %v4480, %v4500
      %v4517 = vadd.f32 %v4481, %v4501
      %v4518 = vadd.f32 %v4482, %v4502
      %v4519 = vadd.f32 %v4483, %v4503
      %v4520 = vadd.f32 %v4484, %v4504
      %v4521 = vlaneseq
      %v4522 = vshrl.u32 %v4521, 7
      %v4523 = vsub.s32 2, %v4522
      %v4524 = vrot.slane %v3745, %v4523
      %v4525 = vmul.f32 %v1995, %v4524
      %v4526 = vmul.f32 %v1996, %v4524
      %v4527 = vmul.f32 %v1997, %v4524
      %v4528 = vmul.f32 %v1998, %v4524
      %v4529 = vmul.f32 %v1999, %v4524
      %v4530 = vmul.f32 %v2000, %v4524
      %v4531 = vmul.f32 %v2001, %v4524
      %v4532 = vmul.f32 %v2002, %v4524
      %v4533 = vmul.f32 %v2003, %v4524
      %v4534 = vmul.f32 %v2004, %v4524
      %v4535 = vmul.f32 %v2005, %v4524
      %v4536 = vmul.f32 %v2006, %v4524
      %v4537 = vmul.f32 %v2007, %v4524
      %v4538 = vmul.f32 %v2008, %v4524
      %v4539 = vmul.f32 %v2009, %v4524
      %v4540 = vmul.f32 %v2010, %v4524
      %v4541 = vadd.f32 %v4505, %v4525
      %v4542 = vadd.f32 %v4506, %v4526
      %v4543 = vadd.f32 %v4507, %v4527
      %v4544 = vadd.f32 %v4508, %v4528
      %v4545 = vadd.f32 %v4509, %v4529
      %v4546 = vadd.f32 %v4510, %v4530
      %v4547 = vadd.f32 %v4511, %v4531
      %v4548 = vadd.f32 %v4512, %v4532
      %v4549 = vadd.f32 %v4513, %v4533
      %v4550 = vadd.f32 %v4514, %v4534
      %v4551 = vadd.f32 %v4515, %v4535
      %v4552 = vadd.f32 %v4516, %v4536
      %v4553 = vadd.f32 %v4517, %v4537
      %v4554 = vadd.f32 %v4518, %v4538
      %v4555 = vadd.f32 %v4519, %v4539
      %v4556 = vadd.f32 %v4520, %v4540
      %v4557 = vlaneseq
      %v4558 = vshrl.u32 %v4557, 7
      %v4559 = vsub.s32 3, %v4558
      %v4560 = vrot.slane %v3745, %v4559
      %v4561 = vmul.f32 %v2047, %v4560
      %v4562 = vmul.f32 %v2048, %v4560
      %v4563 = vmul.f32 %v2049, %v4560
      %v4564 = vmul.f32 %v2050, %v4560
      %v4565 = vmul.f32 %v2051, %v4560
      %v4566 = vmul.f32 %v2052, %v4560
      %v4567 = vmul.f32 %v2053, %v4560
      %v4568 = vmul.f32 %v2054, %v4560
      %v4569 = vmul.f32 %v2055, %v4560
      %v4570 = vmul.f32 %v2056, %v4560
      %v4571 = vmul.f32 %v2057, %v4560
      %v4572 = vmul.f32 %v2058, %v4560
      %v4573 = vmul.f32 %v2059, %v4560
      %v4574 = vmul.f32 %v2060, %v4560
      %v4575 = vmul.f32 %v2061, %v4560
      %v4576 = vmul.f32 %v2062, %v4560
      %v4577 = vadd.f32 %v4541, %v4561
      %v4578 = vadd.f32 %v4542, %v4562
      %v4579 = vadd.f32 %v4543, %v4563
      %v4580 = vadd.f32 %v4544, %v4564
      %v4581 = vadd.f32 %v4545, %v4565
      %v4582 = vadd.f32 %v4546, %v4566
      %v4583 = vadd.f32 %v4547, %v4567
      %v4584 = vadd.f32 %v4548, %v4568
      %v4585 = vadd.f32 %v4549, %v4569
      %v4586 = vadd.f32 %v4550, %v4570
      %v4587 = vadd.f32 %v4551, %v4571
      %v4588 = vadd.f32 %v4552, %v4572
      %v4589 = vadd.f32 %v4553, %v4573
      %v4590 = vadd.f32 %v4554, %v4574
      %v4591 = vadd.f32 %v4555, %v4575
      %v4592 = vadd.f32 %v4556, %v4576
      %v4593 = vld [vmem:[%s1942 + $0x4] sm:$0xff]
      %v4594 = vld [vmem:[%s1942 + $0xc] sm:$0xff]
      %v4595 = vld [vmem:[%s1942 + $0x1c] sm:$0xff]
      %v4596 = vld [vmem:[%s1942 + $0x24] sm:$0xff]
      %v4597 = vld [vmem:[%s1942 + $0x34] sm:$0xff]
      %v4598 = vld [vmem:[%s1942 + $0x3c] sm:$0xff]
      %v4599 = vld [vmem:[%s1942 + $0x4c] sm:$0xff]
      %v4600 = vld [vmem:[%s1942 + $0x54] sm:$0xff]
      %v4601 = vld [vmem:[%s1942 + $0x64] sm:$0xff]
      %v4602 = vld [vmem:[%s1942 + $0x6c] sm:$0xff]
      %v4603 = vld [vmem:[%s1942 + $0x7c] sm:$0xff]
      %v4604 = vld [vmem:[%s1942 + $0x84] sm:$0xff]
      %v4605 = vld [vmem:[%s1942 + $0x94] sm:$0xff]
      %v4606 = vld [vmem:[%s1942 + $0x9c] sm:$0xff]
      %v4607 = vld [vmem:[%s1942 + $0xac] sm:$0xff]
      %v4608 = vld [vmem:[%s1942 + $0xb4] sm:$0xff]
      %v4609 = vlaneseq
      %v4610 = vshrl.u32 %v4609, 7
      %v4611 = vsub.s32 4, %v4610
      %v4612 = vrot.slane %v3745, %v4611
      %v4613 = vmul.f32 %v4593, %v4612
      %v4614 = vmul.f32 %v4594, %v4612
      %v4615 = vmul.f32 %v4595, %v4612
      %v4616 = vmul.f32 %v4596, %v4612
      %v4617 = vmul.f32 %v4597, %v4612
      %v4618 = vmul.f32 %v4598, %v4612
      %v4619 = vmul.f32 %v4599, %v4612
      %v4620 = vmul.f32 %v4600, %v4612
      %v4621 = vmul.f32 %v4601, %v4612
      %v4622 = vmul.f32 %v4602, %v4612
      %v4623 = vmul.f32 %v4603, %v4612
      %v4624 = vmul.f32 %v4604, %v4612
      %v4625 = vmul.f32 %v4605, %v4612
      %v4626 = vmul.f32 %v4606, %v4612
      %v4627 = vmul.f32 %v4607, %v4612
      %v4628 = vmul.f32 %v4608, %v4612
      %v4629 = vadd.f32 %v4577, %v4613
      %v4630 = vadd.f32 %v4578, %v4614
      %v4631 = vadd.f32 %v4579, %v4615
      %v4632 = vadd.f32 %v4580, %v4616
      %v4633 = vadd.f32 %v4581, %v4617
      %v4634 = vadd.f32 %v4582, %v4618
      %v4635 = vadd.f32 %v4583, %v4619
      %v4636 = vadd.f32 %v4584, %v4620
      %v4637 = vadd.f32 %v4585, %v4621
      %v4638 = vadd.f32 %v4586, %v4622
      %v4639 = vadd.f32 %v4587, %v4623
      %v4640 = vadd.f32 %v4588, %v4624
      %v4641 = vadd.f32 %v4589, %v4625
      %v4642 = vadd.f32 %v4590, %v4626
      %v4643 = vadd.f32 %v4591, %v4627
      %v4644 = vadd.f32 %v4592, %v4628
      %s4645 = scalar_lea.vmem [#allocation3], 96
      %v4646 = vld [vmem:[%s4645] sm:$0xff]
      %v4647 = vld [vmem:[%s4645 + $0x8] sm:$0xff]
      %v4648 = vld [vmem:[%s4645 + $0x18] sm:$0xff]
      %v4649 = vld [vmem:[%s4645 + $0x20] sm:$0xff]
      %v4650 = vld [vmem:[%s4645 + $0x30] sm:$0xff]
      %v4651 = vld [vmem:[%s4645 + $0x38] sm:$0xff]
      %v4652 = vld [vmem:[%s4645 + $0x48] sm:$0xff]
      %v4653 = vld [vmem:[%s4645 + $0x50] sm:$0xff]
      %v4654 = vld [vmem:[%s4645 + $0x60] sm:$0xff]
      %v4655 = vld [vmem:[%s4645 + $0x68] sm:$0xff]
      %v4656 = vld [vmem:[%s4645 + $0x78] sm:$0xff]
      %v4657 = vld [vmem:[%s4645 + $0x80] sm:$0xff]
      %v4658 = vld [vmem:[%s4645 + $0x90] sm:$0xff]
      %v4659 = vld [vmem:[%s4645 + $0x98] sm:$0xff]
      %v4660 = vld [vmem:[%s4645 + $0xa8] sm:$0xff]
      %v4661 = vld [vmem:[%s4645 + $0xb0] sm:$0xff]
      %v4662 = vlaneseq
      %v4663 = vshrl.u32 %v4662, 7
      %v4664 = vsub.s32 0, %v4663
      %v4665 = vrot.slane %v3746, %v4664
      %v4666 = vmul.f32 %v4646, %v4665
      %v4667 = vmul.f32 %v4647, %v4665
      %v4668 = vmul.f32 %v4648, %v4665
      %v4669 = vmul.f32 %v4649, %v4665
      %v4670 = vmul.f32 %v4650, %v4665
      %v4671 = vmul.f32 %v4651, %v4665
      %v4672 = vmul.f32 %v4652, %v4665
      %v4673 = vmul.f32 %v4653, %v4665
      %v4674 = vmul.f32 %v4654, %v4665
      %v4675 = vmul.f32 %v4655, %v4665
      %v4676 = vmul.f32 %v4656, %v4665
      %v4677 = vmul.f32 %v4657, %v4665
      %v4678 = vmul.f32 %v4658, %v4665
      %v4679 = vmul.f32 %v4659, %v4665
      %v4680 = vmul.f32 %v4660, %v4665
      %v4681 = vmul.f32 %v4661, %v4665
      %v4682 = vadd.f32 %v4629, %v4666
      %v4683 = vadd.f32 %v4630, %v4667
      %v4684 = vadd.f32 %v4631, %v4668
      %v4685 = vadd.f32 %v4632, %v4669
      %v4686 = vadd.f32 %v4633, %v4670
      %v4687 = vadd.f32 %v4634, %v4671
      %v4688 = vadd.f32 %v4635, %v4672
      %v4689 = vadd.f32 %v4636, %v4673
      %v4690 = vadd.f32 %v4637, %v4674
      %v4691 = vadd.f32 %v4638, %v4675
      %v4692 = vadd.f32 %v4639, %v4676
      %v4693 = vadd.f32 %v4640, %v4677
      %v4694 = vadd.f32 %v4641, %v4678
      %v4695 = vadd.f32 %v4642, %v4679
      %v4696 = vadd.f32 %v4643, %v4680
      %v4697 = vadd.f32 %v4644, %v4681
      %v4698 = vld [vmem:[%s4645 + $0x1] sm:$0xff]
      %v4699 = vld [vmem:[%s4645 + $0x9] sm:$0xff]
      %v4700 = vld [vmem:[%s4645 + $0x19] sm:$0xff]
      %v4701 = vld [vmem:[%s4645 + $0x21] sm:$0xff]
      %v4702 = vld [vmem:[%s4645 + $0x31] sm:$0xff]
      %v4703 = vld [vmem:[%s4645 + $0x39] sm:$0xff]
      %v4704 = vld [vmem:[%s4645 + $0x49] sm:$0xff]
      %v4705 = vld [vmem:[%s4645 + $0x51] sm:$0xff]
      %v4706 = vld [vmem:[%s4645 + $0x61] sm:$0xff]
      %v4707 = vld [vmem:[%s4645 + $0x69] sm:$0xff]
      %v4708 = vld [vmem:[%s4645 + $0x79] sm:$0xff]
      %v4709 = vld [vmem:[%s4645 + $0x81] sm:$0xff]
      %v4710 = vld [vmem:[%s4645 + $0x91] sm:$0xff]
      %v4711 = vld [vmem:[%s4645 + $0x99] sm:$0xff]
      %v4712 = vld [vmem:[%s4645 + $0xa9] sm:$0xff]
      %v4713 = vld [vmem:[%s4645 + $0xb1] sm:$0xff]
      %v4714 = vlaneseq
      %v4715 = vshrl.u32 %v4714, 7
      %v4716 = vsub.s32 1, %v4715
      %v4717 = vrot.slane %v3746, %v4716
      %v4718 = vmul.f32 %v4698, %v4717
      %v4719 = vmul.f32 %v4699, %v4717
      %v4720 = vmul.f32 %v4700, %v4717
      %v4721 = vmul.f32 %v4701, %v4717
      %v4722 = vmul.f32 %v4702, %v4717
      %v4723 = vmul.f32 %v4703, %v4717
      %v4724 = vmul.f32 %v4704, %v4717
      %v4725 = vmul.f32 %v4705, %v4717
      %v4726 = vmul.f32 %v4706, %v4717
      %v4727 = vmul.f32 %v4707, %v4717
      %v4728 = vmul.f32 %v4708, %v4717
      %v4729 = vmul.f32 %v4709, %v4717
      %v4730 = vmul.f32 %v4710, %v4717
      %v4731 = vmul.f32 %v4711, %v4717
      %v4732 = vmul.f32 %v4712, %v4717
      %v4733 = vmul.f32 %v4713, %v4717
      %v4734 = vadd.f32 %v4682, %v4718
      %v4735 = vadd.f32 %v4683, %v4719
      %v4736 = vadd.f32 %v4684, %v4720
      %v4737 = vadd.f32 %v4685, %v4721
      %v4738 = vadd.f32 %v4686, %v4722
      %v4739 = vadd.f32 %v4687, %v4723
      %v4740 = vadd.f32 %v4688, %v4724
      %v4741 = vadd.f32 %v4689, %v4725
      %v4742 = vadd.f32 %v4690, %v4726
      %v4743 = vadd.f32 %v4691, %v4727
      %v4744 = vadd.f32 %v4692, %v4728
      %v4745 = vadd.f32 %v4693, %v4729
      %v4746 = vadd.f32 %v4694, %v4730
      %v4747 = vadd.f32 %v4695, %v4731
      %v4748 = vadd.f32 %v4696, %v4732
      %v4749 = vadd.f32 %v4697, %v4733
      %v4750 = vld [vmem:[%s4645 + $0x2] sm:$0xff]
      %v4751 = vld [vmem:[%s4645 + $0xa] sm:$0xff]
      %v4752 = vld [vmem:[%s4645 + $0x1a] sm:$0xff]
      %v4753 = vld [vmem:[%s4645 + $0x22] sm:$0xff]
      %v4754 = vld [vmem:[%s4645 + $0x32] sm:$0xff]
      %v4755 = vld [vmem:[%s4645 + $0x3a] sm:$0xff]
      %v4756 = vld [vmem:[%s4645 + $0x4a] sm:$0xff]
      %v4757 = vld [vmem:[%s4645 + $0x52] sm:$0xff]
      %v4758 = vld [vmem:[%s4645 + $0x62] sm:$0xff]
      %v4759 = vld [vmem:[%s4645 + $0x6a] sm:$0xff]
      %v4760 = vld [vmem:[%s4645 + $0x7a] sm:$0xff]
      %v4761 = vld [vmem:[%s4645 + $0x82] sm:$0xff]
      %v4762 = vld [vmem:[%s4645 + $0x92] sm:$0xff]
      %v4763 = vld [vmem:[%s4645 + $0x9a] sm:$0xff]
      %v4764 = vld [vmem:[%s4645 + $0xaa] sm:$0xff]
      %v4765 = vld [vmem:[%s4645 + $0xb2] sm:$0xff]
      %v4766 = vlaneseq
      %v4767 = vshrl.u32 %v4766, 7
      %v4768 = vsub.s32 2, %v4767
      %v4769 = vrot.slane %v3746, %v4768
      %v4770 = vmul.f32 %v4750, %v4769
      %v4771 = vmul.f32 %v4751, %v4769
      %v4772 = vmul.f32 %v4752, %v4769
      %v4773 = vmul.f32 %v4753, %v4769
      %v4774 = vmul.f32 %v4754, %v4769
      %v4775 = vmul.f32 %v4755, %v4769
      %v4776 = vmul.f32 %v4756, %v4769
      %v4777 = vmul.f32 %v4757, %v4769
      %v4778 = vmul.f32 %v4758, %v4769
      %v4779 = vmul.f32 %v4759, %v4769
      %v4780 = vmul.f32 %v4760, %v4769
      %v4781 = vmul.f32 %v4761, %v4769
      %v4782 = vmul.f32 %v4762, %v4769
      %v4783 = vmul.f32 %v4763, %v4769
      %v4784 = vmul.f32 %v4764, %v4769
      %v4785 = vmul.f32 %v4765, %v4769
      %v4786 = vadd.f32 %v4734, %v4770
      %v4787 = vadd.f32 %v4735, %v4771
      %v4788 = vadd.f32 %v4736, %v4772
      %v4789 = vadd.f32 %v4737, %v4773
      %v4790 = vadd.f32 %v4738, %v4774
      %v4791 = vadd.f32 %v4739, %v4775
      %v4792 = vadd.f32 %v4740, %v4776
      %v4793 = vadd.f32 %v4741, %v4777
      %v4794 = vadd.f32 %v4742, %v4778
      %v4795 = vadd.f32 %v4743, %v4779
      %v4796 = vadd.f32 %v4744, %v4780
      %v4797 = vadd.f32 %v4745, %v4781
      %v4798 = vadd.f32 %v4746, %v4782
      %v4799 = vadd.f32 %v4747, %v4783
      %v4800 = vadd.f32 %v4748, %v4784
      %v4801 = vadd.f32 %v4749, %v4785
      %v4802 = vld [vmem:[%s4645 + $0x3] sm:$0xff]
      %v4803 = vld [vmem:[%s4645 + $0xb] sm:$0xff]
      %v4804 = vld [vmem:[%s4645 + $0x1b] sm:$0xff]
      %v4805 = vld [vmem:[%s4645 + $0x23] sm:$0xff]
      %v4806 = vld [vmem:[%s4645 + $0x33] sm:$0xff]
      %v4807 = vld [vmem:[%s4645 + $0x3b] sm:$0xff]
      %v4808 = vld [vmem:[%s4645 + $0x4b] sm:$0xff]
      %v4809 = vld [vmem:[%s4645 + $0x53] sm:$0xff]
      %v4810 = vld [vmem:[%s4645 + $0x63] sm:$0xff]
      %v4811 = vld [vmem:[%s4645 + $0x6b] sm:$0xff]
      %v4812 = vld [vmem:[%s4645 + $0x7b] sm:$0xff]
      %v4813 = vld [vmem:[%s4645 + $0x83] sm:$0xff]
      %v4814 = vld [vmem:[%s4645 + $0x93] sm:$0xff]
      %v4815 = vld [vmem:[%s4645 + $0x9b] sm:$0xff]
      %v4816 = vld [vmem:[%s4645 + $0xab] sm:$0xff]
      %v4817 = vld [vmem:[%s4645 + $0xb3] sm:$0xff]
      %v4818 = vlaneseq
      %v4819 = vshrl.u32 %v4818, 7
      %v4820 = vsub.s32 3, %v4819
      %v4821 = vrot.slane %v3746, %v4820
      %v4822 = vmul.f32 %v4802, %v4821
      %v4823 = vmul.f32 %v4803, %v4821
      %v4824 = vmul.f32 %v4804, %v4821
      %v4825 = vmul.f32 %v4805, %v4821
      %v4826 = vmul.f32 %v4806, %v4821
      %v4827 = vmul.f32 %v4807, %v4821
      %v4828 = vmul.f32 %v4808, %v4821
      %v4829 = vmul.f32 %v4809, %v4821
      %v4830 = vmul.f32 %v4810, %v4821
      %v4831 = vmul.f32 %v4811, %v4821
      %v4832 = vmul.f32 %v4812, %v4821
      %v4833 = vmul.f32 %v4813, %v4821
      %v4834 = vmul.f32 %v4814, %v4821
      %v4835 = vmul.f32 %v4815, %v4821
      %v4836 = vmul.f32 %v4816, %v4821
      %v4837 = vmul.f32 %v4817, %v4821
      %v4838 = vadd.f32 %v4786, %v4822
      %v4839 = vadd.f32 %v4787, %v4823
      %v4840 = vadd.f32 %v4788, %v4824
      %v4841 = vadd.f32 %v4789, %v4825
      %v4842 = vadd.f32 %v4790, %v4826
      %v4843 = vadd.f32 %v4791, %v4827
      %v4844 = vadd.f32 %v4792, %v4828
      %v4845 = vadd.f32 %v4793, %v4829
      %v4846 = vadd.f32 %v4794, %v4830
      %v4847 = vadd.f32 %v4795, %v4831
      %v4848 = vadd.f32 %v4796, %v4832
      %v4849 = vadd.f32 %v4797, %v4833
      %v4850 = vadd.f32 %v4798, %v4834
      %v4851 = vadd.f32 %v4799, %v4835
      %v4852 = vadd.f32 %v4800, %v4836
      %v4853 = vadd.f32 %v4801, %v4837
      %v4854 = vld [vmem:[%s4645 + $0x4] sm:$0xff]
      %v4855 = vld [vmem:[%s4645 + $0xc] sm:$0xff]
      %v4856 = vld [vmem:[%s4645 + $0x1c] sm:$0xff]
      %v4857 = vld [vmem:[%s4645 + $0x24] sm:$0xff]
      %v4858 = vld [vmem:[%s4645 + $0x34] sm:$0xff]
      %v4859 = vld [vmem:[%s4645 + $0x3c] sm:$0xff]
      %v4860 = vld [vmem:[%s4645 + $0x4c] sm:$0xff]
      %v4861 = vld [vmem:[%s4645 + $0x54] sm:$0xff]
      %v4862 = vld [vmem:[%s4645 + $0x64] sm:$0xff]
      %v4863 = vld [vmem:[%s4645 + $0x6c] sm:$0xff]
      %v4864 = vld [vmem:[%s4645 + $0x7c] sm:$0xff]
      %v4865 = vld [vmem:[%s4645 + $0x84] sm:$0xff]
      %v4866 = vld [vmem:[%s4645 + $0x94] sm:$0xff]
      %v4867 = vld [vmem:[%s4645 + $0x9c] sm:$0xff]
      %v4868 = vld [vmem:[%s4645 + $0xac] sm:$0xff]
      %v4869 = vld [vmem:[%s4645 + $0xb4] sm:$0xff]
      %v4870 = vlaneseq
      %v4871 = vshrl.u32 %v4870, 7
      %v4872 = vsub.s32 4, %v4871
      %v4873 = vrot.slane %v3746, %v4872
      %v4874 = vmul.f32 %v4854, %v4873
      %v4875 = vmul.f32 %v4855, %v4873
      %v4876 = vmul.f32 %v4856, %v4873
      %v4877 = vmul.f32 %v4857, %v4873
      %v4878 = vmul.f32 %v4858, %v4873
      %v4879 = vmul.f32 %v4859, %v4873
      %v4880 = vmul.f32 %v4860, %v4873
      %v4881 = vmul.f32 %v4861, %v4873
      %v4882 = vmul.f32 %v4862, %v4873
      %v4883 = vmul.f32 %v4863, %v4873
      %v4884 = vmul.f32 %v4864, %v4873
      %v4885 = vmul.f32 %v4865, %v4873
      %v4886 = vmul.f32 %v4866, %v4873
      %v4887 = vmul.f32 %v4867, %v4873
      %v4888 = vmul.f32 %v4868, %v4873
      %v4889 = vmul.f32 %v4869, %v4873
      %v4890 = vadd.f32 %v4838, %v4874
      %v4891 = vadd.f32 %v4839, %v4875
      %v4892 = vadd.f32 %v4840, %v4876
      %v4893 = vadd.f32 %v4841, %v4877
      %v4894 = vadd.f32 %v4842, %v4878
      %v4895 = vadd.f32 %v4843, %v4879
      %v4896 = vadd.f32 %v4844, %v4880
      %v4897 = vadd.f32 %v4845, %v4881
      %v4898 = vadd.f32 %v4846, %v4882
      %v4899 = vadd.f32 %v4847, %v4883
      %v4900 = vadd.f32 %v4848, %v4884
      %v4901 = vadd.f32 %v4849, %v4885
      %v4902 = vadd.f32 %v4850, %v4886
      %v4903 = vadd.f32 %v4851, %v4887
      %v4904 = vadd.f32 %v4852, %v4888
      %v4905 = vadd.f32 %v4853, %v4889
      %v4907 = vlaneseq
      %v4908 = vshrl.u32 %v4907, 7
      %v4909 = vsub.s32 0, %v4908
      %v4910 = vrot.slane %v3748, %v4909
      %v4912 = vadd.f32 %v4890, %v4910
      %v4913 = vadd.f32 %v4891, %v4910
      %v4914 = vadd.f32 %v4892, %v4910
      %v4915 = vadd.f32 %v4893, %v4910
      %v4916 = vadd.f32 %v4894, %v4910
      %v4917 = vadd.f32 %v4895, %v4910
      %v4918 = vadd.f32 %v4896, %v4910
      %v4919 = vadd.f32 %v4897, %v4910
      %v4920 = vadd.f32 %v4898, %v4910
      %v4921 = vadd.f32 %v4899, %v4910
      %v4922 = vadd.f32 %v4900, %v4910
      %v4923 = vadd.f32 %v4901, %v4910
      %v4924 = vadd.f32 %v4902, %v4910
      %v4925 = vadd.f32 %v4903, %v4910
      %v4926 = vadd.f32 %v4904, %v4910
      %v4927 = vadd.f32 %v4905, %v4910
      %v4928 = vld [vmem:[%s13] sm:$0xf]
      %s4929 = scalar_lea.vmem %s13, 4
      %v4930 = vld [vmem:[%s4929] sm:$0xf]
      %v4932 = vsel %vm939, %v4912, 0
      %v4935 = vsel %vm939, %v4913, 0
      %v4938 = vsel %vm939, %v4914, 0
      %v4941 = vsel %vm939, %v4915, 0
      %v4944 = vsel %vm939, %v4916, 0
      %v4947 = vsel %vm939, %v4917, 0
      %v4950 = vsel %vm939, %v4918, 0
      %v4953 = vsel %vm939, %v4919, 0
      %v4956 = vsel %vm939, %v4920, 0
      %v4959 = vsel %vm939, %v4921, 0
      %v4962 = vsel %vm939, %v4922, 0
      %v4965 = vsel %vm939, %v4923, 0
      %v4968 = vsel %vm939, %v4924, 0
      %v4971 = vsel %vm939, %v4925, 0
      %v4974 = vsel %vm939, %v4926, 0
      %v4977 = vsel %vm939, %v4927, 0
      %v4980 = vsel %vm2172, %v4930, 0
      %4982 = vmatprep.subr.mxu0 0.0
      %4983 = vmatpush1.msra.mxu0 0.0
      %4984 = vmatprep.subr.mxu0 0.0
      %4985 = vmatpush1.msra.mxu0 0.0
      %4986 = vmatprep.subr.mxu0 0.0
      %4987 = vmatpush1.msra.mxu0 0.0
      %4988 = vmatprep.subr.mxu0 0.0
      %4989 = vmatpush1.msra.mxu0 0.0
      %4990 = vmatprep.subr.mxu0 0.0
      %4991 = vmatpush1.msra.mxu0 0.0
      %4992 = vmatprep.subr.mxu0 0.0
      %4993 = vmatpush1.msra.mxu0 0.0
      %4994 = vmatprep.subr.mxu0 0.0
      %4995 = vmatpush1.msra.mxu0 0.0
      %4996 = vmatprep.subr.mxu0 0.0
      %4997 = vmatpush1.msra.mxu0 0.0
      %4998 = vmatprep.subr.mxu0 0.0
      %4999 = vmatpush1.msra.mxu0 0.0
      %5000 = vmatprep.subr.mxu0 0.0
      %5001 = vmatpush1.msra.mxu0 0.0
      %5002 = vmatprep.subr.mxu0 0.0
      %5003 = vmatpush1.msra.mxu0 0.0
      %5004 = vmatprep.subr.mxu0 0.0
      %5005 = vmatpush1.msra.mxu0 0.0
      %5006 = vmatprep.subr.mxu0 0.0
      %5007 = vmatpush1.msra.mxu0 0.0
      %5008 = vmatprep.subr.mxu0 0.0
      %5009 = vmatpush1.msra.mxu0 0.0
      %5010 = vmatprep.subr.mxu0 0.0
      %5011 = vmatpush1.msra.mxu0 0.0
      %5012 = vmatprep.subr.mxu0 0.0
      %5013 = vmatpush1.msra.mxu0 %v4980
      %5014 = vmatprep.subr.mxu0 0.0
      %5015 = vmatpush2.msra.mxu0 0.0
      %5016 = vmatprep.subr.mxu0 0.0
      %5017 = vmatpush2.msra.mxu0 0.0
      %5018 = vmatprep.subr.mxu0 0.0
      %5019 = vmatpush2.msra.mxu0 0.0
      %5020 = vmatprep.subr.mxu0 0.0
      %5021 = vmatpush2.msra.mxu0 0.0
      %5022 = vmatprep.subr.mxu0 0.0
      %5023 = vmatpush2.msra.mxu0 0.0
      %5024 = vmatprep.subr.mxu0 0.0
      %5025 = vmatpush2.msra.mxu0 0.0
      %5026 = vmatprep.subr.mxu0 0.0
      %5027 = vmatpush2.msra.mxu0 0.0
      %5028 = vmatprep.subr.mxu0 0.0
      %5029 = vmatpush2.msra.mxu0 0.0
      %5030 = vmatprep.subr.mxu0 0.0
      %5031 = vmatpush2.msra.mxu0 0.0
      %5032 = vmatprep.subr.mxu0 0.0
      %5033 = vmatpush2.msra.mxu0 0.0
      %5034 = vmatprep.subr.mxu0 0.0
      %5035 = vmatpush2.msra.mxu0 0.0
      %5036 = vmatprep.subr.mxu0 0.0
      %5037 = vmatpush2.msra.mxu0 0.0
      %5038 = vmatprep.subr.mxu0 0.0
      %5039 = vmatpush2.msra.mxu0 0.0
      %5040 = vmatprep.subr.mxu0 0.0
      %5041 = vmatpush2.msra.mxu0 0.0
      %5042 = vmatprep.subr.mxu0 0.0
      %5043 = vmatpush2.msra.mxu0 0.0
      %5044 = vmatprep.subr.mxu0 0.0
      %5045 = vmatpush2.msra.mxu0 0.0
      %5046 = vmatprep.mubr.f32.mxu0 0.0
      %5047 = vmatmul.mubr.f32.gmra.mxu0 %v4932
      %v5048 = vpop.f32.mrf.mxu0
      %v5049 = vadd.f32 0.0, %v5048
      %v5050 = vpop.f32.mrf.mxu0
      %5051 = vmatprep.mubr.f32.mxu0 0.0
      %5052 = vmatmul.mubr.f32.gmra.mxu0 %v4935
      %v5053 = vpop.f32.mrf.mxu0
      %v5054 = vadd.f32 0.0, %v5053
      %v5055 = vpop.f32.mrf.mxu0
      %5056 = vmatprep.mubr.f32.mxu0 0.0
      %5057 = vmatmul.mubr.f32.gmra.mxu0 %v4938
      %v5058 = vpop.f32.mrf.mxu0
      %v5059 = vadd.f32 0.0, %v5058
      %v5060 = vpop.f32.mrf.mxu0
      %5061 = vmatprep.mubr.f32.mxu0 0.0
      %5062 = vmatmul.mubr.f32.gmra.mxu0 %v4941
      %v5063 = vpop.f32.mrf.mxu0
      %v5064 = vadd.f32 0.0, %v5063
      %v5065 = vpop.f32.mrf.mxu0
      %5066 = vmatprep.mubr.f32.mxu0 0.0
      %5067 = vmatmul.mubr.f32.gmra.mxu0 %v4944
      %v5068 = vpop.f32.mrf.mxu0
      %v5069 = vadd.f32 0.0, %v5068
      %v5070 = vpop.f32.mrf.mxu0
      %5071 = vmatprep.mubr.f32.mxu0 0.0
      %5072 = vmatmul.mubr.f32.gmra.mxu0 %v4947
      %v5073 = vpop.f32.mrf.mxu0
      %v5074 = vadd.f32 0.0, %v5073
      %v5075 = vpop.f32.mrf.mxu0
      %5076 = vmatprep.mubr.f32.mxu0 0.0
      %5077 = vmatmul.mubr.f32.gmra.mxu0 %v4950
      %v5078 = vpop.f32.mrf.mxu0
      %v5079 = vadd.f32 0.0, %v5078
      %v5080 = vpop.f32.mrf.mxu0
      %5081 = vmatprep.mubr.f32.mxu0 0.0
      %5082 = vmatmul.mubr.f32.gmra.mxu0 %v4953
      %v5083 = vpop.f32.mrf.mxu0
      %v5084 = vadd.f32 0.0, %v5083
      %v5085 = vpop.f32.mrf.mxu0
      %5086 = vmatprep.mubr.f32.mxu0 0.0
      %5087 = vmatmul.mubr.f32.gmra.mxu0 %v4956
      %v5088 = vpop.f32.mrf.mxu0
      %v5089 = vadd.f32 0.0, %v5088
      %v5090 = vpop.f32.mrf.mxu0
      %5091 = vmatprep.mubr.f32.mxu0 0.0
      %5092 = vmatmul.mubr.f32.gmra.mxu0 %v4959
      %v5093 = vpop.f32.mrf.mxu0
      %v5094 = vadd.f32 0.0, %v5093
      %v5095 = vpop.f32.mrf.mxu0
      %5096 = vmatprep.mubr.f32.mxu0 0.0
      %5097 = vmatmul.mubr.f32.gmra.mxu0 %v4962
      %v5098 = vpop.f32.mrf.mxu0
      %v5099 = vadd.f32 0.0, %v5098
      %v5100 = vpop.f32.mrf.mxu0
      %5101 = vmatprep.mubr.f32.mxu0 0.0
      %5102 = vmatmul.mubr.f32.gmra.mxu0 %v4965
      %v5103 = vpop.f32.mrf.mxu0
      %v5104 = vadd.f32 0.0, %v5103
      %v5105 = vpop.f32.mrf.mxu0
      %5106 = vmatprep.mubr.f32.mxu0 0.0
      %5107 = vmatmul.mubr.f32.gmra.mxu0 %v4968
      %v5108 = vpop.f32.mrf.mxu0
      %v5109 = vadd.f32 0.0, %v5108
      %v5110 = vpop.f32.mrf.mxu0
      %5111 = vmatprep.mubr.f32.mxu0 0.0
      %5112 = vmatmul.mubr.f32.gmra.mxu0 %v4971
      %v5113 = vpop.f32.mrf.mxu0
      %v5114 = vadd.f32 0.0, %v5113
      %v5115 = vpop.f32.mrf.mxu0
      %5116 = vmatprep.mubr.f32.mxu0 0.0
      %5117 = vmatmul.mubr.f32.gmra.mxu0 %v4974
      %v5118 = vpop.f32.mrf.mxu0
      %v5119 = vadd.f32 0.0, %v5118
      %v5120 = vpop.f32.mrf.mxu0
      %5121 = vmatprep.mubr.f32.mxu0 0.0
      %5122 = vmatmul.mubr.f32.gmra.mxu0 %v4977
      %v5123 = vpop.f32.mrf.mxu0
      %v5124 = vadd.f32 0.0, %v5123
      %v5125 = vpop.f32.mrf.mxu0
      %5126 = vdwg.mxu0
      %v5128 = vsel %vm939, %v3725, 0
      %v5131 = vsel %vm939, %v3726, 0
      %v5134 = vsel %vm939, %v3727, 0
      %v5137 = vsel %vm939, %v3728, 0
      %v5140 = vsel %vm939, %v3729, 0
      %v5143 = vsel %vm939, %v3730, 0
      %v5146 = vsel %vm939, %v3731, 0
      %v5149 = vsel %vm939, %v3732, 0
      %v5152 = vsel %vm939, %v3733, 0
      %v5155 = vsel %vm939, %v3734, 0
      %v5158 = vsel %vm939, %v3735, 0
      %v5161 = vsel %vm939, %v3736, 0
      %v5164 = vsel %vm939, %v3737, 0
      %v5167 = vsel %vm939, %v3738, 0
      %v5170 = vsel %vm939, %v3739, 0
      %v5173 = vsel %vm939, %v3740, 0
      %v5176 = vsel %vm2172, %v4928, 0
      %5178 = vmatprep.subr.mxu0 0.0
      %5179 = vmatpush1.msra.mxu0 0.0
      %5180 = vmatprep.subr.mxu0 0.0
      %5181 = vmatpush1.msra.mxu0 0.0
      %5182 = vmatprep.subr.mxu0 0.0
      %5183 = vmatpush1.msra.mxu0 0.0
      %5184 = vmatprep.subr.mxu0 0.0
      %5185 = vmatpush1.msra.mxu0 0.0
      %5186 = vmatprep.subr.mxu0 0.0
      %5187 = vmatpush1.msra.mxu0 0.0
      %5188 = vmatprep.subr.mxu0 0.0
      %5189 = vmatpush1.msra.mxu0 0.0
      %5190 = vmatprep.subr.mxu0 0.0
      %5191 = vmatpush1.msra.mxu0 0.0
      %5192 = vmatprep.subr.mxu0 0.0
      %5193 = vmatpush1.msra.mxu0 0.0
      %5194 = vmatprep.subr.mxu0 0.0
      %5195 = vmatpush1.msra.mxu0 0.0
      %5196 = vmatprep.subr.mxu0 0.0
      %5197 = vmatpush1.msra.mxu0 0.0
      %5198 = vmatprep.subr.mxu0 0.0
      %5199 = vmatpush1.msra.mxu0 0.0
      %5200 = vmatprep.subr.mxu0 0.0
      %5201 = vmatpush1.msra.mxu0 0.0
      %5202 = vmatprep.subr.mxu0 0.0
      %5203 = vmatpush1.msra.mxu0 0.0
      %5204 = vmatprep.subr.mxu0 0.0
      %5205 = vmatpush1.msra.mxu0 0.0
      %5206 = vmatprep.subr.mxu0 0.0
      %5207 = vmatpush1.msra.mxu0 0.0
      %5208 = vmatprep.subr.mxu0 0.0
      %5209 = vmatpush1.msra.mxu0 %v5176
      %5210 = vmatprep.subr.mxu0 0.0
      %5211 = vmatpush2.msra.mxu0 0.0
      %5212 = vmatprep.subr.mxu0 0.0
      %5213 = vmatpush2.msra.mxu0 0.0
      %5214 = vmatprep.subr.mxu0 0.0
      %5215 = vmatpush2.msra.mxu0 0.0
      %5216 = vmatprep.subr.mxu0 0.0
      %5217 = vmatpush2.msra.mxu0 0.0
      %5218 = vmatprep.subr.mxu0 0.0
      %5219 = vmatpush2.msra.mxu0 0.0
      %5220 = vmatprep.subr.mxu0 0.0
      %5221 = vmatpush2.msra.mxu0 0.0
      %5222 = vmatprep.subr.mxu0 0.0
      %5223 = vmatpush2.msra.mxu0 0.0
      %5224 = vmatprep.subr.mxu0 0.0
      %5225 = vmatpush2.msra.mxu0 0.0
      %5226 = vmatprep.subr.mxu0 0.0
      %5227 = vmatpush2.msra.mxu0 0.0
      %5228 = vmatprep.subr.mxu0 0.0
      %5229 = vmatpush2.msra.mxu0 0.0
      %5230 = vmatprep.subr.mxu0 0.0
      %5231 = vmatpush2.msra.mxu0 0.0
      %5232 = vmatprep.subr.mxu0 0.0
      %5233 = vmatpush2.msra.mxu0 0.0
      %5234 = vmatprep.subr.mxu0 0.0
      %5235 = vmatpush2.msra.mxu0 0.0
      %5236 = vmatprep.subr.mxu0 0.0
      %5237 = vmatpush2.msra.mxu0 0.0
      %5238 = vmatprep.subr.mxu0 0.0
      %5239 = vmatpush2.msra.mxu0 0.0
      %5240 = vmatprep.subr.mxu0 0.0
      %5241 = vmatpush2.msra.mxu0 0.0
      %5242 = vmatprep.mubr.f32.mxu0 0.0
      %5243 = vmatmul.mubr.f32.gmra.mxu0 %v5128
      %v5244 = vpop.f32.mrf.mxu0
      %v5245 = vadd.f32 %v5049, %v5244
      %v5246 = vpop.f32.mrf.mxu0
      %5247 = vmatprep.mubr.f32.mxu0 0.0
      %5248 = vmatmul.mubr.f32.gmra.mxu0 %v5131
      %v5249 = vpop.f32.mrf.mxu0
      %v5250 = vadd.f32 %v5054, %v5249
      %v5251 = vpop.f32.mrf.mxu0
      %5252 = vmatprep.mubr.f32.mxu0 0.0
      %5253 = vmatmul.mubr.f32.gmra.mxu0 %v5134
      %v5254 = vpop.f32.mrf.mxu0
      %v5255 = vadd.f32 %v5059, %v5254
      %v5256 = vpop.f32.mrf.mxu0
      %5257 = vmatprep.mubr.f32.mxu0 0.0
      %5258 = vmatmul.mubr.f32.gmra.mxu0 %v5137
      %v5259 = vpop.f32.mrf.mxu0
      %v5260 = vadd.f32 %v5064, %v5259
      %v5261 = vpop.f32.mrf.mxu0
      %5262 = vmatprep.mubr.f32.mxu0 0.0
      %5263 = vmatmul.mubr.f32.gmra.mxu0 %v5140
      %v5264 = vpop.f32.mrf.mxu0
      %v5265 = vadd.f32 %v5069, %v5264
      %v5266 = vpop.f32.mrf.mxu0
      %5267 = vmatprep.mubr.f32.mxu0 0.0
      %5268 = vmatmul.mubr.f32.gmra.mxu0 %v5143
      %v5269 = vpop.f32.mrf.mxu0
      %v5270 = vadd.f32 %v5074, %v5269
      %v5271 = vpop.f32.mrf.mxu0
      %5272 = vmatprep.mubr.f32.mxu0 0.0
      %5273 = vmatmul.mubr.f32.gmra.mxu0 %v5146
      %v5274 = vpop.f32.mrf.mxu0
      %v5275 = vadd.f32 %v5079, %v5274
      %v5276 = vpop.f32.mrf.mxu0
      %5277 = vmatprep.mubr.f32.mxu0 0.0
      %5278 = vmatmul.mubr.f32.gmra.mxu0 %v5149
      %v5279 = vpop.f32.mrf.mxu0
      %v5280 = vadd.f32 %v5084, %v5279
      %v5281 = vpop.f32.mrf.mxu0
      %5282 = vmatprep.mubr.f32.mxu0 0.0
      %5283 = vmatmul.mubr.f32.gmra.mxu0 %v5152
      %v5284 = vpop.f32.mrf.mxu0
      %v5285 = vadd.f32 %v5089, %v5284
      %v5286 = vpop.f32.mrf.mxu0
      %5287 = vmatprep.mubr.f32.mxu0 0.0
      %5288 = vmatmul.mubr.f32.gmra.mxu0 %v5155
      %v5289 = vpop.f32.mrf.mxu0
      %v5290 = vadd.f32 %v5094, %v5289
      %v5291 = vpop.f32.mrf.mxu0
      %5292 = vmatprep.mubr.f32.mxu0 0.0
      %5293 = vmatmul.mubr.f32.gmra.mxu0 %v5158
      %v5294 = vpop.f32.mrf.mxu0
      %v5295 = vadd.f32 %v5099, %v5294
      %v5296 = vpop.f32.mrf.mxu0
      %5297 = vmatprep.mubr.f32.mxu0 0.0
      %5298 = vmatmul.mubr.f32.gmra.mxu0 %v5161
      %v5299 = vpop.f32.mrf.mxu0
      %v5300 = vadd.f32 %v5104, %v5299
      %v5301 = vpop.f32.mrf.mxu0
      %5302 = vmatprep.mubr.f32.mxu0 0.0
      %5303 = vmatmul.mubr.f32.gmra.mxu0 %v5164
      %v5304 = vpop.f32.mrf.mxu0
      %v5305 = vadd.f32 %v5109, %v5304
      %v5306 = vpop.f32.mrf.mxu0
      %5307 = vmatprep.mubr.f32.mxu0 0.0
      %5308 = vmatmul.mubr.f32.gmra.mxu0 %v5167
      %v5309 = vpop.f32.mrf.mxu0
      %v5310 = vadd.f32 %v5114, %v5309
      %v5311 = vpop.f32.mrf.mxu0
      %5312 = vmatprep.mubr.f32.mxu0 0.0
      %5313 = vmatmul.mubr.f32.gmra.mxu0 %v5170
      %v5314 = vpop.f32.mrf.mxu0
      %v5315 = vadd.f32 %v5119, %v5314
      %v5316 = vpop.f32.mrf.mxu0
      %5317 = vmatprep.mubr.f32.mxu0 0.0
      %5318 = vmatmul.mubr.f32.gmra.mxu0 %v5173
      %v5319 = vpop.f32.mrf.mxu0
      %v5320 = vadd.f32 %v5124, %v5319
      %v5321 = vpop.f32.mrf.mxu0
      %5322 = vdwg.mxu0
      %v5323 = vld [vmem:[%s14] sm:$0x1]
      %v5325 = vlaneseq
      %v5326 = vshrl.u32 %v5325, 7
      %v5327 = vsub.s32 0, %v5326
      %v5328 = vrot.slane %v5323, %v5327
      %v5330 = vadd.f32 %v5245, %v5328
      %v5331 = vadd.f32 %v5250, %v5328
      %v5332 = vadd.f32 %v5255, %v5328
      %v5333 = vadd.f32 %v5260, %v5328
      %v5334 = vadd.f32 %v5265, %v5328
      %v5335 = vadd.f32 %v5270, %v5328
      %v5336 = vadd.f32 %v5275, %v5328
      %v5337 = vadd.f32 %v5280, %v5328
      %v5338 = vadd.f32 %v5285, %v5328
      %v5339 = vadd.f32 %v5290, %v5328
      %v5340 = vadd.f32 %v5295, %v5328
      %v5341 = vadd.f32 %v5300, %v5328
      %v5342 = vadd.f32 %v5305, %v5328
      %v5343 = vadd.f32 %v5310, %v5328
      %v5344 = vadd.f32 %v5315, %v5328
      %v5345 = vadd.f32 %v5320, %v5328
      %v5346 = vmax.f32 %v5330, 0.0
      %v5347 = vmax.f32 %v5331, 0.0
      %v5348 = vmax.f32 %v5332, 0.0
      %v5349 = vmax.f32 %v5333, 0.0
      %v5350 = vmax.f32 %v5334, 0.0
      %v5351 = vmax.f32 %v5335, 0.0
      %v5352 = vmax.f32 %v5336, 0.0
      %v5353 = vmax.f32 %v5337, 0.0
      %v5354 = vmax.f32 %v5338, 0.0
      %v5355 = vmax.f32 %v5339, 0.0
      %v5356 = vmax.f32 %v5340, 0.0
      %v5357 = vmax.f32 %v5341, 0.0
      %v5358 = vmax.f32 %v5342, 0.0
      %v5359 = vmax.f32 %v5343, 0.0
      %v5360 = vmax.f32 %v5344, 0.0
      %v5361 = vmax.f32 %v5345, 0.0
      %v5362 = vld [vmem:[%s15] sm:$0xff]
      %s5363 = scalar_lea.vmem %s15, 8
      %v5364 = vld [vmem:[%s5363] sm:$0xff]
      %vm5365 = vcmask 64512
      %v5367 = vsel %vm5365, %v5346, 0
      %v5370 = vsel %vm5365, %v5347, 0
      %v5373 = vsel %vm5365, %v5348, 0
      %v5376 = vsel %vm5365, %v5349, 0
      %v5379 = vsel %vm5365, %v5350, 0
      %v5382 = vsel %vm5365, %v5351, 0
      %v5385 = vsel %vm5365, %v5352, 0
      %v5388 = vsel %vm5365, %v5353, 0
      %v5391 = vsel %vm5365, %v5354, 0
      %v5394 = vsel %vm5365, %v5355, 0
      %v5397 = vsel %vm5365, %v5356, 0
      %v5400 = vsel %vm5365, %v5357, 0
      %v5403 = vsel %vm5365, %v5358, 0
      %v5406 = vsel %vm5365, %v5359, 0
      %v5409 = vsel %vm5365, %v5360, 0
      %v5412 = vsel %vm5365, %v5361, 0
      %5414 = vmatprep.subr.mxu0 0.0
      %5415 = vmatpush1.msra.mxu0 0.0
      %5416 = vmatprep.subr.mxu0 0.0
      %5417 = vmatpush1.msra.mxu0 0.0
      %5418 = vmatprep.subr.mxu0 0.0
      %5419 = vmatpush1.msra.mxu0 0.0
      %5420 = vmatprep.subr.mxu0 0.0
      %5421 = vmatpush1.msra.mxu0 0.0
      %5422 = vmatprep.subr.mxu0 0.0
      %5423 = vmatpush1.msra.mxu0 0.0
      %5424 = vmatprep.subr.mxu0 0.0
      %5425 = vmatpush1.msra.mxu0 0.0
      %5426 = vmatprep.subr.mxu0 0.0
      %5427 = vmatpush1.msra.mxu0 0.0
      %5428 = vmatprep.subr.mxu0 0.0
      %5429 = vmatpush1.msra.mxu0 0.0
      %5430 = vmatprep.subr.mxu0 0.0
      %5431 = vmatpush1.msra.mxu0 0.0
      %5432 = vmatprep.subr.mxu0 0.0
      %5433 = vmatpush1.msra.mxu0 0.0
      %5434 = vmatprep.subr.mxu0 0.0
      %5435 = vmatpush1.msra.mxu0 0.0
      %5436 = vmatprep.subr.mxu0 0.0
      %5437 = vmatpush1.msra.mxu0 0.0
      %5438 = vmatprep.subr.mxu0 0.0
      %5439 = vmatpush1.msra.mxu0 0.0
      %5440 = vmatprep.subr.mxu0 0.0
      %5441 = vmatpush1.msra.mxu0 0.0
      %5442 = vmatprep.subr.mxu0 0.0
      %5443 = vmatpush1.msra.mxu0 0.0
      %5444 = vmatprep.subr.mxu0 0.0
      %5445 = vmatpush1.msra.mxu0 %v5364
      %5446 = vmatprep.subr.mxu0 0.0
      %5447 = vmatpush2.msra.mxu0 0.0
      %5448 = vmatprep.subr.mxu0 0.0
      %5449 = vmatpush2.msra.mxu0 0.0
      %5450 = vmatprep.subr.mxu0 0.0
      %5451 = vmatpush2.msra.mxu0 0.0
      %5452 = vmatprep.subr.mxu0 0.0
      %5453 = vmatpush2.msra.mxu0 0.0
      %5454 = vmatprep.subr.mxu0 0.0
      %5455 = vmatpush2.msra.mxu0 0.0
      %5456 = vmatprep.subr.mxu0 0.0
      %5457 = vmatpush2.msra.mxu0 0.0
      %5458 = vmatprep.subr.mxu0 0.0
      %5459 = vmatpush2.msra.mxu0 0.0
      %5460 = vmatprep.subr.mxu0 0.0
      %5461 = vmatpush2.msra.mxu0 0.0
      %5462 = vmatprep.subr.mxu0 0.0
      %5463 = vmatpush2.msra.mxu0 0.0
      %5464 = vmatprep.subr.mxu0 0.0
      %5465 = vmatpush2.msra.mxu0 0.0
      %5466 = vmatprep.subr.mxu0 0.0
      %5467 = vmatpush2.msra.mxu0 0.0
      %5468 = vmatprep.subr.mxu0 0.0
      %5469 = vmatpush2.msra.mxu0 0.0
      %5470 = vmatprep.subr.mxu0 0.0
      %5471 = vmatpush2.msra.mxu0 0.0
      %5472 = vmatprep.subr.mxu0 0.0
      %5473 = vmatpush2.msra.mxu0 0.0
      %5474 = vmatprep.subr.mxu0 0.0
      %5475 = vmatpush2.msra.mxu0 0.0
      %5476 = vmatprep.subr.mxu0 0.0
      %5477 = vmatpush2.msra.mxu0 0.0
      %5478 = vmatprep.mubr.f32.mxu0 0.0
      %5479 = vmatmul.mubr.f32.gmra.mxu0 %v5367
      %v5480 = vpop.f32.mrf.mxu0
      %v5481 = vadd.f32 0.0, %v5480
      %v5482 = vpop.f32.mrf.mxu0
      %5483 = vmatprep.mubr.f32.mxu0 0.0
      %5484 = vmatmul.mubr.f32.gmra.mxu0 %v5370
      %v5485 = vpop.f32.mrf.mxu0
      %v5486 = vadd.f32 0.0, %v5485
      %v5487 = vpop.f32.mrf.mxu0
      %5488 = vmatprep.mubr.f32.mxu0 0.0
      %5489 = vmatmul.mubr.f32.gmra.mxu0 %v5373
      %v5490 = vpop.f32.mrf.mxu0
      %v5491 = vadd.f32 0.0, %v5490
      %v5492 = vpop.f32.mrf.mxu0
      %5493 = vmatprep.mubr.f32.mxu0 0.0
      %5494 = vmatmul.mubr.f32.gmra.mxu0 %v5376
      %v5495 = vpop.f32.mrf.mxu0
      %v5496 = vadd.f32 0.0, %v5495
      %v5497 = vpop.f32.mrf.mxu0
      %5498 = vmatprep.mubr.f32.mxu0 0.0
      %5499 = vmatmul.mubr.f32.gmra.mxu0 %v5379
      %v5500 = vpop.f32.mrf.mxu0
      %v5501 = vadd.f32 0.0, %v5500
      %v5502 = vpop.f32.mrf.mxu0
      %5503 = vmatprep.mubr.f32.mxu0 0.0
      %5504 = vmatmul.mubr.f32.gmra.mxu0 %v5382
      %v5505 = vpop.f32.mrf.mxu0
      %v5506 = vadd.f32 0.0, %v5505
      %v5507 = vpop.f32.mrf.mxu0
      %5508 = vmatprep.mubr.f32.mxu0 0.0
      %5509 = vmatmul.mubr.f32.gmra.mxu0 %v5385
      %v5510 = vpop.f32.mrf.mxu0
      %v5511 = vadd.f32 0.0, %v5510
      %v5512 = vpop.f32.mrf.mxu0
      %5513 = vmatprep.mubr.f32.mxu0 0.0
      %5514 = vmatmul.mubr.f32.gmra.mxu0 %v5388
      %v5515 = vpop.f32.mrf.mxu0
      %v5516 = vadd.f32 0.0, %v5515
      %v5517 = vpop.f32.mrf.mxu0
      %5518 = vmatprep.mubr.f32.mxu0 0.0
      %5519 = vmatmul.mubr.f32.gmra.mxu0 %v5391
      %v5520 = vpop.f32.mrf.mxu0
      %v5521 = vadd.f32 0.0, %v5520
      %v5522 = vpop.f32.mrf.mxu0
      %5523 = vmatprep.mubr.f32.mxu0 0.0
      %5524 = vmatmul.mubr.f32.gmra.mxu0 %v5394
      %v5525 = vpop.f32.mrf.mxu0
      %v5526 = vadd.f32 0.0, %v5525
      %v5527 = vpop.f32.mrf.mxu0
      %5528 = vmatprep.mubr.f32.mxu0 0.0
      %5529 = vmatmul.mubr.f32.gmra.mxu0 %v5397
      %v5530 = vpop.f32.mrf.mxu0
      %v5531 = vadd.f32 0.0, %v5530
      %v5532 = vpop.f32.mrf.mxu0
      %5533 = vmatprep.mubr.f32.mxu0 0.0
      %5534 = vmatmul.mubr.f32.gmra.mxu0 %v5400
      %v5535 = vpop.f32.mrf.mxu0
      %v5536 = vadd.f32 0.0, %v5535
      %v5537 = vpop.f32.mrf.mxu0
      %5538 = vmatprep.mubr.f32.mxu0 0.0
      %5539 = vmatmul.mubr.f32.gmra.mxu0 %v5403
      %v5540 = vpop.f32.mrf.mxu0
      %v5541 = vadd.f32 0.0, %v5540
      %v5542 = vpop.f32.mrf.mxu0
      %5543 = vmatprep.mubr.f32.mxu0 0.0
      %5544 = vmatmul.mubr.f32.gmra.mxu0 %v5406
      %v5545 = vpop.f32.mrf.mxu0
      %v5546 = vadd.f32 0.0, %v5545
      %v5547 = vpop.f32.mrf.mxu0
      %5548 = vmatprep.mubr.f32.mxu0 0.0
      %5549 = vmatmul.mubr.f32.gmra.mxu0 %v5409
      %v5550 = vpop.f32.mrf.mxu0
      %v5551 = vadd.f32 0.0, %v5550
      %v5552 = vpop.f32.mrf.mxu0
      %5553 = vmatprep.mubr.f32.mxu0 0.0
      %5554 = vmatmul.mubr.f32.gmra.mxu0 %v5412
      %v5555 = vpop.f32.mrf.mxu0
      %v5556 = vadd.f32 0.0, %v5555
      %v5557 = vpop.f32.mrf.mxu0
      %5558 = vdwg.mxu0
      %v5560 = vsel %vm5365, %v2540, 0
      %v5563 = vsel %vm5365, %v2541, 0
      %v5566 = vsel %vm5365, %v2542, 0
      %v5569 = vsel %vm5365, %v2543, 0
      %v5572 = vsel %vm5365, %v2544, 0
      %v5575 = vsel %vm5365, %v2545, 0
      %v5578 = vsel %vm5365, %v2546, 0
      %v5581 = vsel %vm5365, %v2547, 0
      %v5584 = vsel %vm5365, %v2548, 0
      %v5587 = vsel %vm5365, %v2549, 0
      %v5590 = vsel %vm5365, %v2550, 0
      %v5593 = vsel %vm5365, %v2551, 0
      %v5596 = vsel %vm5365, %v2552, 0
      %v5599 = vsel %vm5365, %v2553, 0
      %v5602 = vsel %vm5365, %v2554, 0
      %v5605 = vsel %vm5365, %v2555, 0
      %5607 = vmatprep.subr.mxu0 0.0
      %5608 = vmatpush1.msra.mxu0 0.0
      %5609 = vmatprep.subr.mxu0 0.0
      %5610 = vmatpush1.msra.mxu0 0.0
      %5611 = vmatprep.subr.mxu0 0.0
      %5612 = vmatpush1.msra.mxu0 0.0
      %5613 = vmatprep.subr.mxu0 0.0
      %5614 = vmatpush1.msra.mxu0 0.0
      %5615 = vmatprep.subr.mxu0 0.0
      %5616 = vmatpush1.msra.mxu0 0.0
      %5617 = vmatprep.subr.mxu0 0.0
      %5618 = vmatpush1.msra.mxu0 0.0
      %5619 = vmatprep.subr.mxu0 0.0
      %5620 = vmatpush1.msra.mxu0 0.0
      %5621 = vmatprep.subr.mxu0 0.0
      %5622 = vmatpush1.msra.mxu0 0.0
      %5623 = vmatprep.subr.mxu0 0.0
      %5624 = vmatpush1.msra.mxu0 0.0
      %5625 = vmatprep.subr.mxu0 0.0
      %5626 = vmatpush1.msra.mxu0 0.0
      %5627 = vmatprep.subr.mxu0 0.0
      %5628 = vmatpush1.msra.mxu0 0.0
      %5629 = vmatprep.subr.mxu0 0.0
      %5630 = vmatpush1.msra.mxu0 0.0
      %5631 = vmatprep.subr.mxu0 0.0
      %5632 = vmatpush1.msra.mxu0 0.0
      %5633 = vmatprep.subr.mxu0 0.0
      %5634 = vmatpush1.msra.mxu0 0.0
      %5635 = vmatprep.subr.mxu0 0.0
      %5636 = vmatpush1.msra.mxu0 0.0
      %5637 = vmatprep.subr.mxu0 0.0
      %5638 = vmatpush1.msra.mxu0 %v5362
      %5639 = vmatprep.subr.mxu0 0.0
      %5640 = vmatpush2.msra.mxu0 0.0
      %5641 = vmatprep.subr.mxu0 0.0
      %5642 = vmatpush2.msra.mxu0 0.0
      %5643 = vmatprep.subr.mxu0 0.0
      %5644 = vmatpush2.msra.mxu0 0.0
      %5645 = vmatprep.subr.mxu0 0.0
      %5646 = vmatpush2.msra.mxu0 0.0
      %5647 = vmatprep.subr.mxu0 0.0
      %5648 = vmatpush2.msra.mxu0 0.0
      %5649 = vmatprep.subr.mxu0 0.0
      %5650 = vmatpush2.msra.mxu0 0.0
      %5651 = vmatprep.subr.mxu0 0.0
      %5652 = vmatpush2.msra.mxu0 0.0
      %5653 = vmatprep.subr.mxu0 0.0
      %5654 = vmatpush2.msra.mxu0 0.0
      %5655 = vmatprep.subr.mxu0 0.0
      %5656 = vmatpush2.msra.mxu0 0.0
      %5657 = vmatprep.subr.mxu0 0.0
      %5658 = vmatpush2.msra.mxu0 0.0
      %5659 = vmatprep.subr.mxu0 0.0
      %5660 = vmatpush2.msra.mxu0 0.0
      %5661 = vmatprep.subr.mxu0 0.0
      %5662 = vmatpush2.msra.mxu0 0.0
      %5663 = vmatprep.subr.mxu0 0.0
      %5664 = vmatpush2.msra.mxu0 0.0
      %5665 = vmatprep.subr.mxu0 0.0
      %5666 = vmatpush2.msra.mxu0 0.0
      %5667 = vmatprep.subr.mxu0 0.0
      %5668 = vmatpush2.msra.mxu0 0.0
      %5669 = vmatprep.subr.mxu0 0.0
      %5670 = vmatpush2.msra.mxu0 0.0
      %5671 = vmatprep.mubr.f32.mxu0 0.0
      %5672 = vmatmul.mubr.f32.gmra.mxu0 %v5560
      %v5673 = vpop.f32.mrf.mxu0
      %v5674 = vadd.f32 %v5481, %v5673
      %v5675 = vpop.f32.mrf.mxu0
      %5676 = vmatprep.mubr.f32.mxu0 0.0
      %5677 = vmatmul.mubr.f32.gmra.mxu0 %v5563
      %v5678 = vpop.f32.mrf.mxu0
      %v5679 = vadd.f32 %v5486, %v5678
      %v5680 = vpop.f32.mrf.mxu0
      %5681 = vmatprep.mubr.f32.mxu0 0.0
      %5682 = vmatmul.mubr.f32.gmra.mxu0 %v5566
      %v5683 = vpop.f32.mrf.mxu0
      %v5684 = vadd.f32 %v5491, %v5683
      %v5685 = vpop.f32.mrf.mxu0
      %5686 = vmatprep.mubr.f32.mxu0 0.0
      %5687 = vmatmul.mubr.f32.gmra.mxu0 %v5569
      %v5688 = vpop.f32.mrf.mxu0
      %v5689 = vadd.f32 %v5496, %v5688
      %v5690 = vpop.f32.mrf.mxu0
      %5691 = vmatprep.mubr.f32.mxu0 0.0
      %5692 = vmatmul.mubr.f32.gmra.mxu0 %v5572
      %v5693 = vpop.f32.mrf.mxu0
      %v5694 = vadd.f32 %v5501, %v5693
      %v5695 = vpop.f32.mrf.mxu0
      %5696 = vmatprep.mubr.f32.mxu0 0.0
      %5697 = vmatmul.mubr.f32.gmra.mxu0 %v5575
      %v5698 = vpop.f32.mrf.mxu0
      %v5699 = vadd.f32 %v5506, %v5698
      %v5700 = vpop.f32.mrf.mxu0
      %5701 = vmatprep.mubr.f32.mxu0 0.0
      %5702 = vmatmul.mubr.f32.gmra.mxu0 %v5578
      %v5703 = vpop.f32.mrf.mxu0
      %v5704 = vadd.f32 %v5511, %v5703
      %v5705 = vpop.f32.mrf.mxu0
      %5706 = vmatprep.mubr.f32.mxu0 0.0
      %5707 = vmatmul.mubr.f32.gmra.mxu0 %v5581
      %v5708 = vpop.f32.mrf.mxu0
      %v5709 = vadd.f32 %v5516, %v5708
      %v5710 = vpop.f32.mrf.mxu0
      %5711 = vmatprep.mubr.f32.mxu0 0.0
      %5712 = vmatmul.mubr.f32.gmra.mxu0 %v5584
      %v5713 = vpop.f32.mrf.mxu0
      %v5714 = vadd.f32 %v5521, %v5713
      %v5715 = vpop.f32.mrf.mxu0
      %5716 = vmatprep.mubr.f32.mxu0 0.0
      %5717 = vmatmul.mubr.f32.gmra.mxu0 %v5587
      %v5718 = vpop.f32.mrf.mxu0
      %v5719 = vadd.f32 %v5526, %v5718
      %v5720 = vpop.f32.mrf.mxu0
      %5721 = vmatprep.mubr.f32.mxu0 0.0
      %5722 = vmatmul.mubr.f32.gmra.mxu0 %v5590
      %v5723 = vpop.f32.mrf.mxu0
      %v5724 = vadd.f32 %v5531, %v5723
      %v5725 = vpop.f32.mrf.mxu0
      %5726 = vmatprep.mubr.f32.mxu0 0.0
      %5727 = vmatmul.mubr.f32.gmra.mxu0 %v5593
      %v5728 = vpop.f32.mrf.mxu0
      %v5729 = vadd.f32 %v5536, %v5728
      %v5730 = vpop.f32.mrf.mxu0
      %5731 = vmatprep.mubr.f32.mxu0 0.0
      %5732 = vmatmul.mubr.f32.gmra.mxu0 %v5596
      %v5733 = vpop.f32.mrf.mxu0
      %v5734 = vadd.f32 %v5541, %v5733
      %v5735 = vpop.f32.mrf.mxu0
      %5736 = vmatprep.mubr.f32.mxu0 0.0
      %5737 = vmatmul.mubr.f32.gmra.mxu0 %v5599
      %v5738 = vpop.f32.mrf.mxu0
      %v5739 = vadd.f32 %v5546, %v5738
      %v5740 = vpop.f32.mrf.mxu0
      %5741 = vmatprep.mubr.f32.mxu0 0.0
      %5742 = vmatmul.mubr.f32.gmra.mxu0 %v5602
      %v5743 = vpop.f32.mrf.mxu0
      %v5744 = vadd.f32 %v5551, %v5743
      %v5745 = vpop.f32.mrf.mxu0
      %5746 = vmatprep.mubr.f32.mxu0 0.0
      %5747 = vmatmul.mubr.f32.gmra.mxu0 %v5605
      %v5748 = vpop.f32.mrf.mxu0
      %v5749 = vadd.f32 %v5556, %v5748
      %v5750 = vpop.f32.mrf.mxu0
      %5751 = vdwg.mxu0
      %v5752 = vld [vmem:[%s16] sm:$0x1]
      %v5754 = vlaneseq
      %v5755 = vshrl.u32 %v5754, 7
      %v5756 = vsub.s32 0, %v5755
      %v5757 = vrot.slane %v5752, %v5756
      %v5759 = vadd.f32 %v5674, %v5757
      %v5760 = vadd.f32 %v5679, %v5757
      %v5761 = vadd.f32 %v5684, %v5757
      %v5762 = vadd.f32 %v5689, %v5757
      %v5763 = vadd.f32 %v5694, %v5757
      %v5764 = vadd.f32 %v5699, %v5757
      %v5765 = vadd.f32 %v5704, %v5757
      %v5766 = vadd.f32 %v5709, %v5757
      %v5767 = vadd.f32 %v5714, %v5757
      %v5768 = vadd.f32 %v5719, %v5757
      %v5769 = vadd.f32 %v5724, %v5757
      %v5770 = vadd.f32 %v5729, %v5757
      %v5771 = vadd.f32 %v5734, %v5757
      %v5772 = vadd.f32 %v5739, %v5757
      %v5773 = vadd.f32 %v5744, %v5757
      %v5774 = vadd.f32 %v5749, %v5757
      %v5775 = vld [vmem:[%s926] sm:$0xff]
      %v5776 = vld [vmem:[%s926 + $0x8] sm:$0xff]
      %v5777 = vld [vmem:[%s926 + $0x10] sm:$0xff]
      %v5778 = vld [vmem:[%s926 + $0x18] sm:$0xff]
      %v5779 = vld [vmem:[%s926 + $0x20] sm:$0xff]
      %v5780 = vld [vmem:[%s926 + $0x28] sm:$0xff]
      %v5781 = vld [vmem:[%s926 + $0x30] sm:$0xff]
      %v5782 = vld [vmem:[%s926 + $0x38] sm:$0xff]
      %v5783 = vld [vmem:[%s926 + $0x40] sm:$0xff]
      %v5784 = vld [vmem:[%s926 + $0x48] sm:$0xff]
      %v5785 = vld [vmem:[%s926 + $0x50] sm:$0xff]
      %v5786 = vld [vmem:[%s926 + $0x58] sm:$0xff]
      %v5787 = vld [vmem:[%s926 + $0x60] sm:$0xff]
      %v5788 = vld [vmem:[%s926 + $0x68] sm:$0xff]
      %v5789 = vld [vmem:[%s926 + $0x70] sm:$0xff]
      %v5790 = vld [vmem:[%s926 + $0x78] sm:$0xff]
      %v5791 = vadd.f32 %v5759, %v5775
      %v5792 = vadd.f32 %v5760, %v5776
      %v5793 = vadd.f32 %v5761, %v5777
      %v5794 = vadd.f32 %v5762, %v5778
      %v5795 = vadd.f32 %v5763, %v5779
      %v5796 = vadd.f32 %v5764, %v5780
      %v5797 = vadd.f32 %v5765, %v5781
      %v5798 = vadd.f32 %v5766, %v5782
      %v5799 = vadd.f32 %v5767, %v5783
      %v5800 = vadd.f32 %v5768, %v5784
      %v5801 = vadd.f32 %v5769, %v5785
      %v5802 = vadd.f32 %v5770, %v5786
      %v5803 = vadd.f32 %v5771, %v5787
      %v5804 = vadd.f32 %v5772, %v5788
      %v5805 = vadd.f32 %v5773, %v5789
      %v5806 = vadd.f32 %v5774, %v5790
      %5807 = vst.msk [vmem:[%s937] sm:$0xff] %vm939, %v5791
      %5808 = vst.msk [vmem:[%s937 + $0x8] sm:$0xff] %vm939, %v5792
      %5809 = vst.msk [vmem:[%s937 + $0x10] sm:$0xff] %vm939, %v5793
      %5810 = vst.msk [vmem:[%s937 + $0x18] sm:$0xff] %vm939, %v5794
      %5811 = vst.msk [vmem:[%s937 + $0x20] sm:$0xff] %vm939, %v5795
      %5812 = vst.msk [vmem:[%s937 + $0x28] sm:$0xff] %vm939, %v5796
      %5813 = vst.msk [vmem:[%s937 + $0x30] sm:$0xff] %vm939, %v5797
      %5814 = vst.msk [vmem:[%s937 + $0x38] sm:$0xff] %vm939, %v5798
      %5815 = vst.msk [vmem:[%s937 + $0x40] sm:$0xff] %vm939, %v5799
      %5816 = vst.msk [vmem:[%s937 + $0x48] sm:$0xff] %vm939, %v5800
      %5817 = vst.msk [vmem:[%s937 + $0x50] sm:$0xff] %vm939, %v5801
      %5818 = vst.msk [vmem:[%s937 + $0x58] sm:$0xff] %vm939, %v5802
      %5819 = vst.msk [vmem:[%s937 + $0x60] sm:$0xff] %vm939, %v5803
      %5820 = vst.msk [vmem:[%s937 + $0x68] sm:$0xff] %vm939, %v5804
      %5821 = vst.msk [vmem:[%s937 + $0x70] sm:$0xff] %vm939, %v5805
      %5822 = vst.msk [vmem:[%s937 + $0x78] sm:$0xff] %vm939, %v5806
      %s5823 = smul.u32 8, %s33
      %p5824 = scmp.lt.s32.totalorder %s32, 1
      %s5825 = scalar_select %p5824, %s32, 1
      %p5826 = scmp.lt.s32.totalorder %s5823, 15
      %s5827 = scalar_select %p5826, %s5823, 15
      %s5828 = smul.addr %s5827, 2
      %s5829 = smul.addr %s5825, 32
      %s5830 = sadd.s32 %s5828, %s5829
      %s5831 = smul.addr %s5830, 8
      %s5832 = scalar_lea.vmem %s17, %s5831
      // Predicated region
      $region105: #{msrb_forward.3} parent=87 // pred_check
        %p5833 = pneg %p498
      $region106: #{msrb_forward.3} parent=87 // pred_check_branch
        %5835 = sbr.rel (%p5833) target = $region108
      $region107: #{msrb_forward.3} parent=87 // pred_region
        %s5836 = smul.u32 8, %s33
      $region108: #{msrb_forward.3} parent=87 // pred_fallthru
        _
    $region88: #{msrb_forward.3} parent=5 // pred_fallthru
      _
    %p5837 = scmp.le.s32.totalorder 2, %s23
    // Predicated region
    $region109: #{msrb_forward.3} parent=5 // pred_check
      %p5838 = pneg %p5837
    $region110: #{msrb_forward.3} parent=5 // pred_check_branch
      %5840 = sbr.rel (%p5838) target = $region112
    $region111: #{msrb_forward.3} parent=5 // pred_region
      %s5841 = ssub.s32 %s23, 2
      // Predicated region
      $region113: #{msrb_forward.3} parent=111 // pred_check
        %p5842 = pneg %p504
      $region114: #{msrb_forward.3} parent=111 // pred_check_branch
        %5844 = sbr.rel (%p5842) target = $region116
      $region115: #{msrb_forward.3} parent=111 // pred_region
        %s5845 = smul.u32 8, %s35
        %p5846 = scmp.lt.s32.totalorder %s34, 1
        %s5847 = scalar_select %p5846, %s34, 1
        %p5848 = scmp.lt.s32.totalorder %s5845, 15
        %s5849 = scalar_select %p5848, %s5845, 15
        %s5850 = smul.addr %s5849, 2
        %s5851 = smul.addr %s5847, 32
        %s5852 = sadd.s32 %s5850, %s5851
        %s5853 = smul.addr %s5852, 8
        %s5854 = scalar_lea.vmem %s17, %s5853
      $region116: #{msrb_forward.3} parent=111 // pred_fallthru
        _
    $region112: #{msrb_forward.3} parent=5 // pred_fallthru
      _
  $region6: #{msrb_forward.3} parent=0 // loop_footer
    %s27 = sadd.s32 1, %s23
  $region7: #{msrb_forward.3} parent=0 // loop_footer_branch
    %22 = sbr.rel target = $region3
  $region8: #{msrb_forward.3} parent=0 // loop_exit
    _

</llo_original>
